<compile_context>
chip_gen: v6e
topology: v6e:2x2x1
jax: 0.10.0
libtpu: 0.0.40
codegen_flags: <defaults>
</compile_context>

<pallas_src>
import functools

import jax
import jax.numpy as jnp
from jax.experimental import pallas as pl
from jax.experimental.pallas import tpu as pltpu

_BN_EPS = 1e-5
_VMEM_LIMIT = 32 * 1024 * 1024   # conservative: safe on v5e/v6e (128 MiB) and v7x (64 MiB)
_ACT_DTYPE = jnp.bfloat16        # inter-kernel activation dtype


def _round_up(x, m):
    return (x + m - 1) // m * m


# ------------------------------- Pallas kernels ------------------------------- #

def _matmul_bn_kernel(a_ref, w_ref, scale_ref, bias_ref, o_ref, *, apply_relu):
    """Fused (bf16 patches @ bf16 weights) -> f32 *scale + bias [+ ReLU] -> bf16 store."""
    acc = jnp.dot(a_ref[...], w_ref[...], preferred_element_type=jnp.float32)
    y = acc * scale_ref[...] + bias_ref[...]
    if apply_relu:
        y = jnp.maximum(y, 0.0)
    o_ref[...] = y.astype(o_ref.dtype)


def _conv_taps_kernel(*refs, taps, Ho, Wo, cin, cout, apply_relu, res_mode):
    """In-VMEM shifted-window conv + folded BN (+ fused residual / 1x1 shortcut) + ReLU.

    refs layout by res_mode:
      0: x, w, scale, bias, o
      1: x, w, scale, bias, res, o                         (identity residual, bf16)
      2: x, w, scale, bias, res, wd, scale_d, bias_d, o    (fused 1x1 projection shortcut)

    x_ref:  (P, Hph, Wph, cin) bf16 phase-packed padded input for one image.
    w_ref:  (kh*kw, cin, cout) bf16 per-tap weight matrices.
    o_ref:  (1, Ho*Wo, cout) bf16 output slab.
    """
    if res_mode == 0:
        x_ref, w_ref, scale_ref, bias_ref, o_ref = refs
        res_ref = wd_ref = scale_d_ref = bias_d_ref = None
    elif res_mode == 1:
        x_ref, w_ref, scale_ref, bias_ref, res_ref, o_ref = refs
        wd_ref = scale_d_ref = bias_d_ref = None
    else:
        (x_ref, w_ref, scale_ref, bias_ref, res_ref,
         wd_ref, scale_d_ref, bias_d_ref, o_ref) = refs

    M = Ho * Wo
    # TODO(synk): K-concatenate taps (weights as (kh*kw*cin, cout) + in-VMEM im2col
    #             scratch) for v6e/v7x MXU depth; per-tap K=cin kept for robustness here.
    acc = jnp.zeros((M, cout), jnp.float32)
    for t, (pi, ro, co) in enumerate(taps):
        xs = x_ref[pi, ro:ro + Ho, co:co + Wo, :].reshape(M, cin)
        acc = acc + jnp.dot(xs, w_ref[t], preferred_element_type=jnp.float32)

    # Epilogue arithmetic in f32 (v5e has no bf16 VALU); only the final cast is bf16.
    y = acc * scale_ref[...] + bias_ref[...]
    if res_mode == 1:
        y = y + res_ref[0].astype(jnp.float32)
    elif res_mode == 2:
        proj = jnp.dot(res_ref[0], wd_ref[...], preferred_element_type=jnp.float32)
        y = y + proj * scale_d_ref[...] + bias_d_ref[...]
    if apply_relu:
        y = jnp.maximum(y, 0.0)
    o_ref[...] = y.reshape(1, M, cout).astype(o_ref.dtype)


def _maxpool_taps_kernel(x_ref, o_ref, *, taps, Ho, Wo):
    """3x3/s2 max-pool as 9 shifted maxima on the phase-packed bf16 input."""
    pi0, ro0, co0 = taps[0]
    m = x_ref[pi0, ro0:ro0 + Ho, co0:co0 + Wo, :]
    for (pi, ro, co) in taps[1:]:
        m = jnp.maximum(m, x_ref[pi, ro:ro + Ho, co:co + Wo, :])
    o_ref[...] = m.reshape(1, Ho * Wo, m.shape[-1]).astype(o_ref.dtype)


# ----------------------------- geometry / packing ----------------------------- #

def _conv_geometry(H, W, kh, kw, stride, pad):
    """Output size + per-tap (phase_index, row_offset, col_offset) for phase packing."""
    Hp, Wp = H + 2 * pad, W + 2 * pad
    assert Hp % stride == 0 and Wp % stride == 0, "padded size must be stride-aligned"
    Ho = (Hp - kh) // stride + 1
    Wo = (Wp - kw) // stride + 1
    used = sorted({(i % stride) * stride + (j % stride)
                   for i in range(kh) for j in range(kw)})
    remap = {p: k for k, p in enumerate(used)}
    taps = tuple((remap[(i % stride) * stride + (j % stride)], i // stride, j // stride)
                 for i in range(kh) for j in range(kw))
    phase_offsets = tuple((p // stride, p % stride) for p in used)
    return Ho, Wo, taps, phase_offsets


def _pack_phases(x, stride, pad, phase_offsets, pad_value=0.0):
    """Pad (+ for stride>1: split into stride-phases).  Returns (N*P, Hph, Wph, C) bf16.

    stride==1 is just a pad + free leading-axis expand (no stack / strided slices).
    """
    N, H, W, C = x.shape
    if pad > 0:
        x = jnp.pad(x, ((0, 0), (pad, pad), (pad, pad), (0, 0)),
                    constant_values=pad_value)
    if stride == 1:
        xph = x[:, None]                                     # (N, 1, Hp, Wp, C)
    else:
        phases = [x[:, a::stride, b::stride, :] for (a, b) in phase_offsets]
        xph = jnp.stack(phases, axis=1)                      # (N, P, Hph, Wph, C)
    xph = xph.astype(_ACT_DTYPE)
    P, Hph, Wph = xph.shape[1], xph.shape[2], xph.shape[3]
    return xph.reshape(N * P, Hph, Wph, C), P, Hph, Wph


# ------------------------------- op wrappers ---------------------------------- #

def conv_bn_act(x, cp, *, kh, kw, stride, pad, relu, residual=None, proj=None):
    """Conv (kh x kw / stride / pad) + folded BN + optional fused residual / fused 1x1
    projection shortcut + ReLU.  Output stored as a (N, Ho*Wo, cout) bf16 slab."""
    N, H, W, cin = x.shape
    cout = cp["scale"].shape[-1]
    Ho, Wo, taps, phase_offsets = _conv_geometry(H, W, kh, kw, stride, pad)
    xph, P, Hph, Wph = _pack_phases(x, stride, pad, phase_offsets)
    M = Ho * Wo

    if residual is None:
        res_mode = 0
    elif proj is None:
        res_mode = 1
    else:
        res_mode = 2

    kernel = functools.partial(
        _conv_taps_kernel, taps=taps, Ho=Ho, Wo=Wo, cin=cin, cout=cout,
        apply_relu=relu, res_mode=res_mode)

    in_specs = [
        pl.BlockSpec((P, Hph, Wph, cin), lambda n: (n, 0, 0, 0)),
        pl.BlockSpec(cp["w"].shape, lambda n: (0, 0, 0)),
        pl.BlockSpec((1, cout), lambda n: (0, 0)),
        pl.BlockSpec((1, cout), lambda n: (0, 0)),
    ]
    args = [xph, cp["w"], cp["scale"], cp["bias"]]
    if res_mode >= 1:
        cres = residual.shape[-1]
        in_specs.append(pl.BlockSpec((1, M, cres), lambda n: (n, 0, 0)))
        args.append(residual.astype(_ACT_DTYPE))
    if res_mode == 2:
        in_specs += [pl.BlockSpec(proj["w"].shape, lambda n: (0, 0)),
                     pl.BlockSpec((1, cout), lambda n: (0, 0)),
                     pl.BlockSpec((1, cout), lambda n: (0, 0))]
        args += [proj["w"], proj["scale"], proj["bias"]]

    out = pl.pallas_call(
        kernel,
        out_shape=jax.ShapeDtypeStruct((N, M, cout), _ACT_DTYPE),
        grid=(N,),
        in_specs=in_specs,
        out_specs=pl.BlockSpec((1, M, cout), lambda n: (n, 0, 0)),
        compiler_params=pltpu.CompilerParams(
            dimension_semantics=("parallel",),
            vmem_limit_bytes=_VMEM_LIMIT),
    )(*args)
    return out.reshape(N, Ho, Wo, cout)   # same linear HBM layout -> free reshape


def conv1_im2col_bn_relu(x, cp, *, kh=7, kw=7, stride=2, pad=3):
    """conv1 (7x7/s2/p3, tiny cin) via bf16 im2col + grid-tiled fused matmul+BN+ReLU."""
    N, H, W, cin = x.shape
    Kp, cout = cp["w"].shape                      # K already zero-padded to Kp (160)
    Ho = (H + 2 * pad - kh) // stride + 1
    Wo = (W + 2 * pad - kw) // stride + 1
    xp = jnp.pad(x, ((0, 0), (pad, pad), (pad, pad), (0, 0)))
    cols = [xp[:, i:i + stride * Ho:stride, j:j + stride * Wo:stride, :]
            for i in range(kh) for j in range(kw)]
    patches = jnp.concatenate(cols, axis=-1).reshape(N * Ho * Wo, kh * kw * cin)
    M, K = patches.shape
    patches = jnp.pad(patches, ((0, 0), (0, Kp - K)))      # 147 -> 160, still bf16

    # Pick a row tile that divides M exactly so no tail pad / post-kernel slice is needed.
    TM = None
    for cand in (512, 256, 128, 64, 32, 16, 8):
        if M % cand == 0:
            TM = cand
            break
    if TM is None:                                          # fallback: pad + slice
        TM = min(512, _round_up(M, 8))
        Mp = _round_up(M, TM)
        patches = jnp.pad(patches, ((0, Mp - M), (0, 0)))
    else:
        Mp = M

    out = pl.pallas_call(
        functools.partial(_matmul_bn_kernel, apply_relu=True),
        out_shape=jax.ShapeDtypeStruct((Mp, cout), _ACT_DTYPE),
        grid=(Mp // TM,),
        in_specs=[pl.BlockSpec((TM, Kp), lambda i: (i, 0)),
                  pl.BlockSpec((Kp, cout), lambda i: (0, 0)),
                  pl.BlockSpec((1, cout), lambda i: (0, 0)),
                  pl.BlockSpec((1, cout), lambda i: (0, 0))],
        out_specs=pl.BlockSpec((TM, cout), lambda i: (i, 0)),
        compiler_params=pltpu.CompilerParams(
            dimension_semantics=("parallel",),
            vmem_limit_bytes=_VMEM_LIMIT),
    )(patches, cp["w"], cp["scale"], cp["bias"])
    if Mp != M:
        out = out[:M]
    return out.reshape(N, Ho, Wo, cout)


def maxpool_3x3_s2_p1(x):
    N, H, W, C = x.shape
    Ho, Wo, taps, phase_offsets = _conv_geometry(H, W, 3, 3, 2, 1)
    pad_val = float(jnp.finfo(_ACT_DTYPE).min)              # -inf surrogate for max
    xph, P, Hph, Wph = _pack_phases(x, 2, 1, phase_offsets, pad_value=pad_val)
    M = Ho * Wo
    out = pl.pallas_call(
        functools.partial(_maxpool_taps_kernel, taps=taps, Ho=Ho, Wo=Wo),
        out_shape=jax.ShapeDtypeStruct((N, M, C), _ACT_DTYPE),
        grid=(N,),
        in_specs=[pl.BlockSpec((P, Hph, Wph, C), lambda n: (n, 0, 0, 0))],
        out_specs=pl.BlockSpec((1, M, C), lambda n: (n, 0, 0)),
        compiler_params=pltpu.CompilerParams(
            dimension_semantics=("parallel",),
            vmem_limit_bytes=_VMEM_LIMIT),
    )(xph)
    return out.reshape(N, Ho, Wo, C)


# ------------------------------ module structure ------------------------------ #

def basic_block(x, bp, stride):
    """conv3x3/s -> BN -> ReLU -> conv3x3 -> BN -> (+shortcut) -> ReLU.

    The 1x1 projection shortcut (when present) is fused into the second conv's
    pallas_call as one extra [M, cin] @ [cin, cout] matmul (no separate kernel,
    no full-tensor identity round trip)."""
    N, H, W, cin = x.shape
    out = conv_bn_act(x, bp["conv1"], kh=3, kw=3, stride=stride, pad=1, relu=True)
    if "down" in bp:   # static pytree-structure check
        x_sub = x[:, ::stride, ::stride, :]          # tiny host-side subsample
        res = x_sub.reshape(N, x_sub.shape[1] * x_sub.shape[2], cin)
        return conv_bn_act(out, bp["conv2"], kh=3, kw=3, stride=1, pad=1,
                           relu=True, residual=res, proj=bp["down"])
    res = x.reshape(N, H * W, cin)                   # free reshape, bf16 identity
    return conv_bn_act(out, bp["conv2"], kh=3, kw=3, stride=1, pad=1,
                       relu=True, residual=res)


def encoder_forward(x_nchw, params, strides):
    x = jnp.transpose(x_nchw, (0, 2, 3, 1)).astype(_ACT_DTYPE)   # NCHW -> NHWC, bf16
    x = conv1_im2col_bn_relu(x, params["conv1"])                 # 7x7/s2 + BN + ReLU
    x = maxpool_3x3_s2_p1(x)                                     # 3x3/s2/p1
    for bp, s in zip(params["blocks"], strides):                 # down1, down2
        x = basic_block(x, bp, s)
    return jnp.transpose(x, (0, 3, 1, 2)).astype(jnp.float32)    # NHWC -> NCHW


# ------------------------ parameter init / preparation ------------------------ #

def _init_bn(key, c):
    k1, k2, k3 = jax.random.split(key, 3)
    gamma = 1.0 + 0.01 * jax.random.normal(k1, (c,), jnp.float32)
    beta = 0.01 * jax.random.normal(k2, (c,), jnp.float32)
    mean = 0.01 * jax.random.normal(k3, (c,), jnp.float32)
    var = jnp.ones((c,), jnp.float32)
    return gamma, beta, mean, var


def _fold_bn(bn, conv_bias, cout):
    gamma, beta, mean, var = bn
    if conv_bias is None:
        conv_bias = jnp.zeros((cout,), jnp.float32)
    scale = gamma / jnp.sqrt(var + _BN_EPS)
    bias = beta + (conv_bias - mean) * scale
    return (scale.reshape(1, cout).astype(jnp.float32),
            bias.reshape(1, cout).astype(jnp.float32))


def _prep_conv_taps(w_oihw, bn, conv_bias=None):
    cout, cin, kh, kw = w_oihw.shape
    w = jnp.transpose(w_oihw, (2, 3, 1, 0)).reshape(kh * kw, cin, cout)
    scale, bias = _fold_bn(bn, conv_bias, cout)
    return {"w": w.astype(jnp.bfloat16), "scale": scale, "bias": bias}


def _prep_proj(w_oihw, bn, conv_bias=None):
    """1x1 projection shortcut: weight as a single (cin, cout) matrix."""
    cout, cin, _, _ = w_oihw.shape
    w = jnp.transpose(w_oihw, (2, 3, 1, 0)).reshape(cin, cout)
    scale, bias = _fold_bn(bn, conv_bias, cout)
    return {"w": w.astype(jnp.bfloat16), "scale": scale, "bias": bias}


def _prep_conv1(w_oihw, conv_bias, bn, k_pad=160):
    cout, cin, kh, kw = w_oihw.shape
    K = kh * kw * cin                                  # 7*7*3 = 147
    w = jnp.transpose(w_oihw, (2, 3, 1, 0)).reshape(K, cout)
    w = jnp.pad(w, ((0, k_pad - K), (0, 0)))           # zero-pad K 147 -> 160
    scale, bias = _fold_bn(bn, conv_bias, cout)
    return {"w": w.astype(jnp.bfloat16), "scale": scale, "bias": bias}


def init_encoder(key, in_channels, layers):
    """Returns (params pytree of arrays only, static tuple of per-block strides)."""
    k1, k2, k3, kb = jax.random.split(key, 4)
    conv1_w = 0.05 * jax.random.normal(k1, (64, in_channels, 7, 7), jnp.float32)
    conv1_b = 0.01 * jax.random.normal(k2, (64,), jnp.float32)
    params = {"conv1": _prep_conv1(conv1_w, conv1_b, _init_bn(k3, 64)), "blocks": []}
    strides = []
    specs = [(64, layers[0], False), (128, layers[1], True)]   # (cout, n_blocks, downsample)
    cin_cur = 64
    for (cout, n_blocks, downsample) in specs:
        for b in range(n_blocks):
            kb, *ks = jax.random.split(kb, 7)
            stride = 2 if (downsample and b == 0) else 1
            bp = {
                "conv1": _prep_conv_taps(
                    0.05 * jax.random.normal(ks[0], (cout, cin_cur, 3, 3), jnp.float32),
                    _init_bn(ks[1], cout)),
                "conv2": _prep_conv_taps(
                    0.05 * jax.random.normal(ks[2], (cout, cout, 3, 3), jnp.float32),
                    _init_bn(ks[3], cout)),
            }
            if stride != 1 or cin_cur != cout:
                bp["down"] = _prep_proj(
                    0.05 * jax.random.normal(ks[4], (cout, cin_cur, 1, 1), jnp.float32),
                    _init_bn(ks[5], cout))
            params["blocks"].append(bp)
            strides.append(stride)
            cin_cur = cout
    return params, tuple(strides)


# ------------------------------------ main ------------------------------------ #

if __name__ == "__main__":
    key = jax.random.PRNGKey(0)
    kx, kp = jax.random.split(key)

    in_channels = 3
    layers = [1, 1]
    x = jax.random.normal(kx, (2, in_channels, 16, 16), jnp.float32)   # NCHW

    params, strides = init_encoder(kp, in_channels, layers)

    @jax.jit
    def run(x_in, p):
        return encoder_forward(x_in, p, strides)   # `strides` is static (closure)

    out = jax.block_until_ready(run(x, params))

    # conv1: 16->8, maxpool: 8->4, down1 keeps 4, down2: 4->2 with 128 channels.
    assert out.shape == (2, 128, 2, 2), out.shape
    assert bool(jnp.all(jnp.isfinite(out)))
    print("KERNEL_OK")
</pallas_src>

<mosaic_0001>
module attributes {stable_mosaic.version = 11 : i64} {
  func.func @_matmul_bn_kernel(%arg0: i32, %arg1: memref<128x160xbf16, #tpu.memory_space<vmem>>, %arg2: memref<160x64xbf16, #tpu.memory_space<vmem>>, %arg3: memref<1x64xf32, #tpu.memory_space<vmem>>, %arg4: memref<1x64xf32, #tpu.memory_space<vmem>>, %arg5: memref<128x64xbf16, #tpu.memory_space<vmem>>) attributes {dimension_semantics = [#tpu.dimension_semantics<parallel>], iteration_bounds = array<i64: 1>, scalar_prefetch = 0 : i64, scratch_operands = 0 : i64, tpu.core_type = #tpu.core_type<tc>, window_params = [{transform_indices = @transform_0, window_bounds = array<i64: 128, 160>}, {pipeline_mode = #tpu.pipeline_mode<synchronous>, transform_indices = @transform_1, window_bounds = array<i64: 160, 64>}, {pipeline_mode = #tpu.pipeline_mode<synchronous>, transform_indices = @transform_2, window_bounds = array<i64: 1, 64>}, {pipeline_mode = #tpu.pipeline_mode<synchronous>, transform_indices = @transform_3, window_bounds = array<i64: 1, 64>}, {transform_indices = @transform_4, window_bounds = array<i64: 128, 64>}]} {
    %c0 = arith.constant 0 : index
    %c0_0 = arith.constant 0 : index
    %0 = vector.load %arg1[%c0, %c0_0] : memref<128x160xbf16, #tpu.memory_space<vmem>>, vector<128x160xbf16>
    %c0_1 = arith.constant 0 : index
    %c0_2 = arith.constant 0 : index
    %1 = vector.load %arg2[%c0_1, %c0_2] : memref<160x64xbf16, #tpu.memory_space<vmem>>, vector<160x64xbf16>
    %cst = arith.constant dense<0.000000e+00> : vector<128x64xf32>
    %2 = tpu.matmul %0, %1, %cst {dimension_numbers = #tpu.dot_dimension_numbers<[1], [0], [0], [1], [0, 0, 1, 1], [], []>} : vector<128x160xbf16>, vector<160x64xbf16>, vector<128x64xf32> -> vector<128x64xf32>
    %c0_3 = arith.constant 0 : index
    %c0_4 = arith.constant 0 : index
    %3 = vector.load %arg3[%c0_3, %c0_4] : memref<1x64xf32, #tpu.memory_space<vmem>>, vector<1x64xf32>
    %4 = vector.broadcast %3 : vector<1x64xf32> to vector<128x64xf32>
    %5 = arith.mulf %2, %4 : vector<128x64xf32>
    %c0_5 = arith.constant 0 : index
    %c0_6 = arith.constant 0 : index
    %6 = vector.load %arg4[%c0_5, %c0_6] : memref<1x64xf32, #tpu.memory_space<vmem>>, vector<1x64xf32>
    %7 = vector.broadcast %6 : vector<1x64xf32> to vector<128x64xf32>
    %8 = arith.addf %5, %7 : vector<128x64xf32>
    %cst_7 = arith.constant 0.000000e+00 : f32
    %9 = vector.broadcast %cst_7 : f32 to vector<128x64xf32>
    %10 = arith.maximumf %8, %9 : vector<128x64xf32>
    %11 = arith.truncf %10 : vector<128x64xf32> to vector<128x64xbf16>
    %c0_8 = arith.constant 0 : index
    %c0_9 = arith.constant 0 : index
    %12 = vector.load %arg5[%c0_8, %c0_9] : memref<128x64xbf16, #tpu.memory_space<vmem>>, vector<128x64xbf16>
    tpu.vector_store %arg5[%c0_8, %c0_9], %11 {strides = array<i32>} : memref<128x64xbf16, #tpu.memory_space<vmem>>, vector<128x64xbf16>,
    return
  }
  func.func @transform_0(%arg0: i32) -> (i32, i32) {
    %c0_i32 = arith.constant 0 : i32
    %c0_i32_0 = arith.constant 0 : i32
    return %arg0, %c0_i32 : i32, i32
  }
  func.func @transform_1(%arg0: i32) -> (i32, i32) {
    %c0_i32 = arith.constant 0 : i32
    %c0_i32_0 = arith.constant 0 : i32
    %c0_i32_1 = arith.constant 0 : i32
    return %c0_i32, %c0_i32_0 : i32, i32
  }
  func.func @transform_2(%arg0: i32) -> (i32, i32) {
    %c0_i32 = arith.constant 0 : i32
    %c0_i32_0 = arith.constant 0 : i32
    %c0_i32_1 = arith.constant 0 : i32
    return %c0_i32, %c0_i32_0 : i32, i32
  }
  func.func @transform_3(%arg0: i32) -> (i32, i32) {
    %c0_i32 = arith.constant 0 : i32
    %c0_i32_0 = arith.constant 0 : i32
    %c0_i32_1 = arith.constant 0 : i32
    return %c0_i32, %c0_i32_0 : i32, i32
  }
  func.func @transform_4(%arg0: i32) -> (i32, i32) {
    %c0_i32 = arith.constant 0 : i32
    %c0_i32_0 = arith.constant 0 : i32
    return %arg0, %c0_i32 : i32, i32
  }
}

module attributes {stable_mosaic.version = 11 : i64} {
  func.func @_maxpool_taps_kernel(%arg0: i32, %arg1: memref<4x5x5x64xbf16, #tpu.memory_space<vmem>>, %arg2: memref<1x16x64xbf16, #tpu.memory_space<vmem>>) attributes {dimension_semantics = [#tpu.dimension_semantics<parallel>], iteration_bounds = array<i64: 2>, scalar_prefetch = 0 : i64, scratch_operands = 0 : i64, tpu.core_type = #tpu.core_type<tc>, window_params = [{transform_indices = @transform_0, window_bounds = array<i64: 4, 5, 5, 64>}, {transform_indices = @transform_1, window_bounds = array<i64: 1, 16, 64>}]} {
    %c0 = arith.constant 0 : index
    %c0_0 = arith.constant 0 : index
    %c0_1 = arith.constant 0 : index
    %c0_2 = arith.constant 0 : index
    %0 = vector.load %arg1[%c0, %c0_0, %c0_1, %c0_2] : memref<4x5x5x64xbf16, #tpu.memory_space<vmem>>, vector<1x4x4x64xbf16>
    %1 = vector.shape_cast %0 : vector<1x4x4x64xbf16> to vector<4x4x64xbf16>
    %c1 = arith.constant 1 : index
    %c0_3 = arith.constant 0 : index
    %c0_4 = arith.constant 0 : index
    %c0_5 = arith.constant 0 : index
    %2 = vector.load %arg1[%c1, %c0_3, %c0_4, %c0_5] : memref<4x5x5x64xbf16, #tpu.memory_space<vmem>>, vector<1x4x4x64xbf16>
    %3 = vector.shape_cast %2 : vector<1x4x4x64xbf16> to vector<4x4x64xbf16>
    %4 = arith.maximumf %1, %3 : vector<4x4x64xbf16>
    %c0_6 = arith.constant 0 : index
    %c0_7 = arith.constant 0 : index
    %c1_8 = arith.constant 1 : index
    %c0_9 = arith.constant 0 : index
    %5 = vector.load %arg1[%c0_6, %c0_7, %c1_8, %c0_9] : memref<4x5x5x64xbf16, #tpu.memory_space<vmem>>, vector<1x4x4x64xbf16>
    %6 = vector.shape_cast %5 : vector<1x4x4x64xbf16> to vector<4x4x64xbf16>
    %7 = arith.maximumf %4, %6 : vector<4x4x64xbf16>
    %c2 = arith.constant 2 : index
    %c0_10 = arith.constant 0 : index
    %c0_11 = arith.constant 0 : index
    %c0_12 = arith.constant 0 : index
    %8 = vector.load %arg1[%c2, %c0_10, %c0_11, %c0_12] : memref<4x5x5x64xbf16, #tpu.memory_space<vmem>>, vector<1x4x4x64xbf16>
    %9 = vector.shape_cast %8 : vector<1x4x4x64xbf16> to vector<4x4x64xbf16>
    %10 = arith.maximumf %7, %9 : vector<4x4x64xbf16>
    %c3 = arith.constant 3 : index
    %c0_13 = arith.constant 0 : index
    %c0_14 = arith.constant 0 : index
    %c0_15 = arith.constant 0 : index
    %11 = vector.load %arg1[%c3, %c0_13, %c0_14, %c0_15] : memref<4x5x5x64xbf16, #tpu.memory_space<vmem>>, vector<1x4x4x64xbf16>
    %12 = vector.shape_cast %11 : vector<1x4x4x64xbf16> to vector<4x4x64xbf16>
    %13 = arith.maximumf %10, %12 : vector<4x4x64xbf16>
    %c2_16 = arith.constant 2 : index
    %c0_17 = arith.constant 0 : index
    %c1_18 = arith.constant 1 : index
    %c0_19 = arith.constant 0 : index
    %14 = vector.load %arg1[%c2_16, %c0_17, %c1_18, %c0_19] : memref<4x5x5x64xbf16, #tpu.memory_space<vmem>>, vector<1x4x4x64xbf16>
    %15 = vector.shape_cast %14 : vector<1x4x4x64xbf16> to vector<4x4x64xbf16>
    %16 = arith.maximumf %13, %15 : vector<4x4x64xbf16>
    %c0_20 = arith.constant 0 : index
    %c1_21 = arith.constant 1 : index
    %c0_22 = arith.constant 0 : index
    %c0_23 = arith.constant 0 : index
    %17 = vector.load %arg1[%c0_20, %c1_21, %c0_22, %c0_23] : memref<4x5x5x64xbf16, #tpu.memory_space<vmem>>, vector<1x4x4x64xbf16>
    %18 = vector.shape_cast %17 : vector<1x4x4x64xbf16> to vector<4x4x64xbf16>
    %19 = arith.maximumf %16, %18 : vector<4x4x64xbf16>
    %c1_24 = arith.constant 1 : index
    %c1_25 = arith.constant 1 : index
    %c0_26 = arith.constant 0 : index
    %c0_27 = arith.constant 0 : index
    %20 = vector.load %arg1[%c1_24, %c1_25, %c0_26, %c0_27] : memref<4x5x5x64xbf16, #tpu.memory_space<vmem>>, vector<1x4x4x64xbf16>
    %21 = vector.shape_cast %20 : vector<1x4x4x64xbf16> to vector<4x4x64xbf16>
    %22 = arith.maximumf %19, %21 : vector<4x4x64xbf16>
    %c0_28 = arith.constant 0 : index
    %c1_29 = arith.constant 1 : index
    %c1_30 = arith.constant 1 : index
    %c0_31 = arith.constant 0 : index
    %23 = vector.load %arg1[%c0_28, %c1_29, %c1_30, %c0_31] : memref<4x5x5x64xbf16, #tpu.memory_space<vmem>>, vector<1x4x4x64xbf16>
    %24 = vector.shape_cast %23 : vector<1x4x4x64xbf16> to vector<4x4x64xbf16>
    %25 = arith.maximumf %22, %24 : vector<4x4x64xbf16>
    %26 = vector.shape_cast %25 : vector<4x4x64xbf16> to vector<1x16x64xbf16>
    %c0_32 = arith.constant 0 : index
    %c0_33 = arith.constant 0 : index
    %c0_34 = arith.constant 0 : index
    %27 = vector.load %arg2[%c0_32, %c0_33, %c0_34] : memref<1x16x64xbf16, #tpu.memory_space<vmem>>, vector<1x16x64xbf16>
    tpu.vector_store %arg2[%c0_32, %c0_33, %c0_34], %26 {strides = array<i32>} : memref<1x16x64xbf16, #tpu.memory_space<vmem>>, vector<1x16x64xbf16>,
    return
  }
  func.func @transform_0(%arg0: i32) -> (i32, i32, i32, i32) {
    %c0_i32 = arith.constant 0 : i32
    %c0_i32_0 = arith.constant 0 : i32
    %c0_i32_1 = arith.constant 0 : i32
    %c0_i32_2 = arith.constant 0 : i32
    return %arg0, %c0_i32, %c0_i32_0, %c0_i32_1 : i32, i32, i32, i32
  }
  func.func @transform_1(%arg0: i32) -> (i32, i32, i32) {
    %c0_i32 = arith.constant 0 : i32
    %c0_i32_0 = arith.constant 0 : i32
    %c0_i32_1 = arith.constant 0 : i32
    return %arg0, %c0_i32, %c0_i32_0 : i32, i32, i32
  }
}

module attributes {stable_mosaic.version = 11 : i64} {
  func.func @_conv_taps_kernel(%arg0: i32, %arg1: memref<1x6x6x64xbf16, #tpu.memory_space<vmem>>, %arg2: memref<9x64x64xbf16, #tpu.memory_space<vmem>>, %arg3: memref<1x64xf32, #tpu.memory_space<vmem>>, %arg4: memref<1x64xf32, #tpu.memory_space<vmem>>, %arg5: memref<1x16x64xbf16, #tpu.memory_space<vmem>>) attributes {dimension_semantics = [#tpu.dimension_semantics<parallel>], iteration_bounds = array<i64: 2>, scalar_prefetch = 0 : i64, scratch_operands = 0 : i64, tpu.core_type = #tpu.core_type<tc>, window_params = [{transform_indices = @transform_0, window_bounds = array<i64: 1, 6, 6, 64>}, {pipeline_mode = #tpu.pipeline_mode<synchronous>, transform_indices = @transform_1, window_bounds = array<i64: 9, 64, 64>}, {pipeline_mode = #tpu.pipeline_mode<synchronous>, transform_indices = @transform_2, window_bounds = array<i64: 1, 64>}, {pipeline_mode = #tpu.pipeline_mode<synchronous>, transform_indices = @transform_3, window_bounds = array<i64: 1, 64>}, {transform_indices = @transform_4, window_bounds = array<i64: 1, 16, 64>}]} {
    %cst = arith.constant 0.000000e+00 : f32
    %0 = vector.broadcast %cst : f32 to vector<16x64xf32>
    %c0 = arith.constant 0 : index
    %c0_0 = arith.constant 0 : index
    %c0_1 = arith.constant 0 : index
    %c0_2 = arith.constant 0 : index
    %1 = vector.load %arg1[%c0, %c0_0, %c0_1, %c0_2] : memref<1x6x6x64xbf16, #tpu.memory_space<vmem>>, vector<1x4x4x64xbf16>
    %2 = vector.shape_cast %1 : vector<1x4x4x64xbf16> to vector<4x4x64xbf16>
    %3 = vector.shape_cast %2 : vector<4x4x64xbf16> to vector<16x64xbf16>
    %c0_3 = arith.constant 0 : index
    %c0_4 = arith.constant 0 : index
    %c0_5 = arith.constant 0 : index
    %4 = vector.load %arg2[%c0_3, %c0_4, %c0_5] : memref<9x64x64xbf16, #tpu.memory_space<vmem>>, vector<1x64x64xbf16>
    %5 = vector.shape_cast %4 : vector<1x64x64xbf16> to vector<64x64xbf16>
    %cst_6 = arith.constant dense<0.000000e+00> : vector<16x64xf32>
    %6 = tpu.matmul %3, %5, %cst_6 {dimension_numbers = #tpu.dot_dimension_numbers<[1], [0], [0], [1], [0, 0, 1, 1], [], []>} : vector<16x64xbf16>, vector<64x64xbf16>, vector<16x64xf32> -> vector<16x64xf32>
    %7 = arith.addf %0, %6 : vector<16x64xf32>
    %c0_7 = arith.constant 0 : index
    %c0_8 = arith.constant 0 : index
    %c1 = arith.constant 1 : index
    %c0_9 = arith.constant 0 : index
    %8 = vector.load %arg1[%c0_7, %c0_8, %c1, %c0_9] : memref<1x6x6x64xbf16, #tpu.memory_space<vmem>>, vector<1x4x4x64xbf16>
    %9 = vector.shape_cast %8 : vector<1x4x4x64xbf16> to vector<4x4x64xbf16>
    %10 = vector.shape_cast %9 : vector<4x4x64xbf16> to vector<16x64xbf16>
    %c1_10 = arith.constant 1 : index
    %c0_11 = arith.constant 0 : index
    %c0_12 = arith.constant 0 : index
    %11 = vector.load %arg2[%c1_10, %c0_11, %c0_12] : memref<9x64x64xbf16, #tpu.memory_space<vmem>>, vector<1x64x64xbf16>
    %12 = vector.shape_cast %11 : vector<1x64x64xbf16> to vector<64x64xbf16>
    %cst_13 = arith.constant dense<0.000000e+00> : vector<16x64xf32>
    %13 = tpu.matmul %10, %12, %cst_13 {dimension_numbers = #tpu.dot_dimension_numbers<[1], [0], [0], [1], [0, 0, 1, 1], [], []>} : vector<16x64xbf16>, vector<64x64xbf16>, vector<16x64xf32> -> vector<16x64xf32>
    %14 = arith.addf %7, %13 : vector<16x64xf32>
    %c0_14 = arith.constant 0 : index
    %c0_15 = arith.constant 0 : index
    %c2 = arith.constant 2 : index
    %c0_16 = arith.constant 0 : index
    %15 = vector.load %arg1[%c0_14, %c0_15, %c2, %c0_16] : memref<1x6x6x64xbf16, #tpu.memory_space<vmem>>, vector<1x4x4x64xbf16>
    %16 = vector.shape_cast %15 : vector<1x4x4x64xbf16> to vector<4x4x64xbf16>
    %17 = vector.shape_cast %16 : vector<4x4x64xbf16> to vector<16x64xbf16>
    %c2_17 = arith.constant 2 : index
    %c0_18 = arith.constant 0 : index
    %c0_19 = arith.constant 0 : index
    %18 = vector.load %arg2[%c2_17, %c0_18, %c0_19] : memref<9x64x64xbf16, #tpu.memory_space<vmem>>, vector<1x64x64xbf16>
    %19 = vector.shape_cast %18 : vector<1x64x64xbf16> to vector<64x64xbf16>
    %cst_20 = arith.constant dense<0.000000e+00> : vector<16x64xf32>
    %20 = tpu.matmul %17, %19, %cst_20 {dimension_numbers = #tpu.dot_dimension_numbers<[1], [0], [0], [1], [0, 0, 1, 1], [], []>} : vector<16x64xbf16>, vector<64x64xbf16>, vector<16x64xf32> -> vector<16x64xf32>
    %21 = arith.addf %14, %20 : vector<16x64xf32>
    %c0_21 = arith.constant 0 : index
    %c1_22 = arith.constant 1 : index
    %c0_23 = arith.constant 0 : index
    %c0_24 = arith.constant 0 : index
    %22 = vector.load %arg1[%c0_21, %c1_22, %c0_23, %c0_24] : memref<1x6x6x64xbf16, #tpu.memory_space<vmem>>, vector<1x4x4x64xbf16>
    %23 = vector.shape_cast %22 : vector<1x4x4x64xbf16> to vector<4x4x64xbf16>
    %24 = vector.shape_cast %23 : vector<4x4x64xbf16> to vector<16x64xbf16>
    %c3 = arith.constant 3 : index
    %c0_25 = arith.constant 0 : index
    %c0_26 = arith.constant 0 : index
    %25 = vector.load %arg2[%c3, %c0_25, %c0_26] : memref<9x64x64xbf16, #tpu.memory_space<vmem>>, vector<1x64x64xbf16>
    %26 = vector.shape_cast %25 : vector<1x64x64xbf16> to vector<64x64xbf16>
    %cst_27 = arith.constant dense<0.000000e+00> : vector<16x64xf32>
    %27 = tpu.matmul %24, %26, %cst_27 {dimension_numbers = #tpu.dot_dimension_numbers<[1], [0], [0], [1], [0, 0, 1, 1], [], []>} : vector<16x64xbf16>, vector<64x64xbf16>, vector<16x64xf32> -> vector<16x64xf32>
    %28 = arith.addf %21, %27 : vector<16x64xf32>
    %c0_28 = arith.constant 0 : index
    %c1_29 = arith.constant 1 : index
    %c1_30 = arith.constant 1 : index
    %c0_31 = arith.constant 0 : index
    %29 = vector.load %arg1[%c0_28, %c1_29, %c1_30, %c0_31] : memref<1x6x6x64xbf16, #tpu.memory_space<vmem>>, vector<1x4x4x64xbf16>
    %30 = vector.shape_cast %29 : vector<1x4x4x64xbf16> to vector<4x4x64xbf16>
    %31 = vector.shape_cast %30 : vector<4x4x64xbf16> to vector<16x64xbf16>
    %c4 = arith.constant 4 : index
    %c0_32 = arith.constant 0 : index
    %c0_33 = arith.constant 0 : index
    %32 = vector.load %arg2[%c4, %c0_32, %c0_33] : memref<9x64x64xbf16, #tpu.memory_space<vmem>>, vector<1x64x64xbf16>
    %33 = vector.shape_cast %32 : vector<1x64x64xbf16> to vector<64x64xbf16>
    %cst_34 = arith.constant dense<0.000000e+00> : vector<16x64xf32>
    %34 = tpu.matmul %31, %33, %cst_34 {dimension_numbers = #tpu.dot_dimension_numbers<[1], [0], [0], [1], [0, 0, 1, 1], [], []>} : vector<16x64xbf16>, vector<64x64xbf16>, vector<16x64xf32> -> vector<16x64xf32>
    %35 = arith.addf %28, %34 : vector<16x64xf32>
    %c0_35 = arith.constant 0 : index
    %c1_36 = arith.constant 1 : index
    %c2_37 = arith.constant 2 : index
    %c0_38 = arith.constant 0 : index
    %36 = vector.load %arg1[%c0_35, %c1_36, %c2_37, %c0_38] : memref<1x6x6x64xbf16, #tpu.memory_space<vmem>>, vector<1x4x4x64xbf16>
    %37 = vector.shape_cast %36 : vector<1x4x4x64xbf16> to vector<4x4x64xbf16>
    %38 = vector.shape_cast %37 : vector<4x4x64xbf16> to vector<16x64xbf16>
    %c5 = arith.constant 5 : index
    %c0_39 = arith.constant 0 : index
    %c0_40 = arith.constant 0 : index
    %39 = vector.load %arg2[%c5, %c0_39, %c0_40] : memref<9x64x64xbf16, #tpu.memory_space<vmem>>, vector<1x64x64xbf16>
    %40 = vector.shape_cast %39 : vector<1x64x64xbf16> to vector<64x64xbf16>
    %cst_41 = arith.constant dense<0.000000e+00> : vector<16x64xf32>
    %41 = tpu.matmul %38, %40, %cst_41 {dimension_numbers = #tpu.dot_dimension_numbers<[1], [0], [0], [1], [0, 0, 1, 1], [], []>} : vector<16x64xbf16>, vector<64x64xbf16>, vector<16x64xf32> -> vector<16x64xf32>
    %42 = arith.addf %35, %41 : vector<16x64xf32>
    %c0_42 = arith.constant 0 : index
    %c2_43 = arith.constant 2 : index
    %c0_44 = arith.constant 0 : index
    %c0_45 = arith.constant 0 : index
    %43 = vector.load %arg1[%c0_42, %c2_43, %c0_44, %c0_45] : memref<1x6x6x64xbf16, #tpu.memory_space<vmem>>, vector<1x4x4x64xbf16>
    %44 = vector.shape_cast %43 : vector<1x4x4x64xbf16> to vector<4x4x64xbf16>
    %45 = vector.shape_cast %44 : vector<4x4x64xbf16> to vector<16x64xbf16>
    %c6 = arith.constant 6 : index
    %c0_46 = arith.constant 0 : index
    %c0_47 = arith.constant 0 : index
    %46 = vector.load %arg2[%c6, %c0_46, %c0_47] : memref<9x64x64xbf16, #tpu.memory_space<vmem>>, vector<1x64x64xbf16>
    %47 = vector.shape_cast %46 : vector<1x64x64xbf16> to vector<64x64xbf16>
    %cst_48 = arith.constant dense<0.000000e+00> : vector<16x64xf32>
    %48 = tpu.matmul %45, %47, %cst_48 {dimension_numbers = #tpu.dot_dimension_numbers<[1], [0], [0], [1], [0, 0, 1, 1], [], []>} : vector<16x64xbf16>, vector<64x64xbf16>, vector<16x64xf32> -> vector<16x64xf32>
    %49 = arith.addf %42, %48 : vector<16x64xf32>
    %c0_49 = arith.constant 0 : index
    %c2_50 = arith.constant 2 : index
    %c1_51 = arith.constant 1 : index
    %c0_52 = arith.constant 0 : index
    %50 = vector.load %arg1[%c0_49, %c2_50, %c1_51, %c0_52] : memref<1x6x6x64xbf16, #tpu.memory_space<vmem>>, vector<1x4x4x64xbf16>
    %51 = vector.shape_cast %50 : vector<1x4x4x64xbf16> to vector<4x4x64xbf16>
    %52 = vector.shape_cast %51 : vector<4x4x64xbf16> to vector<16x64xbf16>
    %c7 = arith.constant 7 : index
    %c0_53 = arith.constant 0 : index
    %c0_54 = arith.constant 0 : index
    %53 = vector.load %arg2[%c7, %c0_53, %c0_54] : memref<9x64x64xbf16, #tpu.memory_space<vmem>>, vector<1x64x64xbf16>
    %54 = vector.shape_cast %53 : vector<1x64x64xbf16> to vector<64x64xbf16>
    %cst_55 = arith.constant dense<0.000000e+00> : vector<16x64xf32>
    %55 = tpu.matmul %52, %54, %cst_55 {dimension_numbers = #tpu.dot_dimension_numbers<[1], [0], [0], [1], [0, 0, 1, 1], [], []>} : vector<16x64xbf16>, vector<64x64xbf16>, vector<16x64xf32> -> vector<16x64xf32>
    %56 = arith.addf %49, %55 : vector<16x64xf32>
    %c0_56 = arith.constant 0 : index
    %c2_57 = arith.constant 2 : index
    %c2_58 = arith.constant 2 : index
    %c0_59 = arith.constant 0 : index
    %57 = vector.load %arg1[%c0_56, %c2_57, %c2_58, %c0_59] : memref<1x6x6x64xbf16, #tpu.memory_space<vmem>>, vector<1x4x4x64xbf16>
    %58 = vector.shape_cast %57 : vector<1x4x4x64xbf16> to vector<4x4x64xbf16>
    %59 = vector.shape_cast %58 : vector<4x4x64xbf16> to vector<16x64xbf16>
    %c8 = arith.constant 8 : index
    %c0_60 = arith.constant 0 : index
    %c0_61 = arith.constant 0 : index
    %60 = vector.load %arg2[%c8, %c0_60, %c0_61] : memref<9x64x64xbf16, #tpu.memory_space<vmem>>, vector<1x64x64xbf16>
    %61 = vector.shape_cast %60 : vector<1x64x64xbf16> to vector<64x64xbf16>
    %cst_62 = arith.constant dense<0.000000e+00> : vector<16x64xf32>
    %62 = tpu.matmul %59, %61, %cst_62 {dimension_numbers = #tpu.dot_dimension_numbers<[1], [0], [0], [1], [0, 0, 1, 1], [], []>} : vector<16x64xbf16>, vector<64x64xbf16>, vector<16x64xf32> -> vector<16x64xf32>
    %63 = arith.addf %56, %62 : vector<16x64xf32>
    %c0_63 = arith.constant 0 : index
    %c0_64 = arith.constant 0 : index
    %64 = vector.load %arg3[%c0_63, %c0_64] : memref<1x64xf32, #tpu.memory_space<vmem>>, vector<1x64xf32>
    %65 = vector.broadcast %64 : vector<1x64xf32> to vector<16x64xf32>
    %66 = arith.mulf %63, %65 : vector<16x64xf32>
    %c0_65 = arith.constant 0 : index
    %c0_66 = arith.constant 0 : index
    %67 = vector.load %arg4[%c0_65, %c0_66] : memref<1x64xf32, #tpu.memory_space<vmem>>, vector<1x64xf32>
    %68 = vector.broadcast %67 : vector<1x64xf32> to vector<16x64xf32>
    %69 = arith.addf %66, %68 : vector<16x64xf32>
    %cst_67 = arith.constant 0.000000e+00 : f32
    %70 = vector.broadcast %cst_67 : f32 to vector<16x64xf32>
    %71 = arith.maximumf %69, %70 : vector<16x64xf32>
    %72 = vector.shape_cast %71 : vector<16x64xf32> to vector<1x16x64xf32>
    %73 = arith.truncf %72 : vector<1x16x64xf32> to vector<1x16x64xbf16>
    %c0_68 = arith.constant 0 : index
    %c0_69 = arith.constant 0 : index
    %c0_70 = arith.constant 0 : index
    %74 = vector.load %arg5[%c0_68, %c0_69, %c0_70] : memref<1x16x64xbf16, #tpu.memory_space<vmem>>, vector<1x16x64xbf16>
    tpu.vector_store %arg5[%c0_68, %c0_69, %c0_70], %73 {strides = array<i32>} : memref<1x16x64xbf16, #tpu.memory_space<vmem>>, vector<1x16x64xbf16>,
    return
  }
  func.func @transform_0(%arg0: i32) -> (i32, i32, i32, i32) {
    %c0_i32 = arith.constant 0 : i32
    %c0_i32_0 = arith.constant 0 : i32
    %c0_i32_1 = arith.constant 0 : i32
    %c0_i32_2 = arith.constant 0 : i32
    return %arg0, %c0_i32, %c0_i32_0, %c0_i32_1 : i32, i32, i32, i32
  }
  func.func @transform_1(%arg0: i32) -> (i32, i32, i32) {
    %c0_i32 = arith.constant 0 : i32
    %c0_i32_0 = arith.constant 0 : i32
    %c0_i32_1 = arith.constant 0 : i32
    %c0_i32_2 = arith.constant 0 : i32
    return %c0_i32, %c0_i32_0, %c0_i32_1 : i32, i32, i32
  }
  func.func @transform_2(%arg0: i32) -> (i32, i32) {
    %c0_i32 = arith.constant 0 : i32
    %c0_i32_0 = arith.constant 0 : i32
    %c0_i32_1 = arith.constant 0 : i32
    return %c0_i32, %c0_i32_0 : i32, i32
  }
  func.func @transform_3(%arg0: i32) -> (i32, i32) {
    %c0_i32 = arith.constant 0 : i32
    %c0_i32_0 = arith.constant 0 : i32
    %c0_i32_1 = arith.constant 0 : i32
    return %c0_i32, %c0_i32_0 : i32, i32
  }
  func.func @transform_4(%arg0: i32) -> (i32, i32, i32) {
    %c0_i32 = arith.constant 0 : i32
    %c0_i32_0 = arith.constant 0 : i32
    %c0_i32_1 = arith.constant 0 : i32
    return %arg0, %c0_i32, %c0_i32_0 : i32, i32, i32
  }
}

module attributes {stable_mosaic.version = 11 : i64} {
  func.func @_conv_taps_kernel(%arg0: i32, %arg1: memref<1x6x6x64xbf16, #tpu.memory_space<vmem>>, %arg2: memref<9x64x64xbf16, #tpu.memory_space<vmem>>, %arg3: memref<1x64xf32, #tpu.memory_space<vmem>>, %arg4: memref<1x64xf32, #tpu.memory_space<vmem>>, %arg5: memref<1x16x64xbf16, #tpu.memory_space<vmem>>, %arg6: memref<1x16x64xbf16, #tpu.memory_space<vmem>>) attributes {dimension_semantics = [#tpu.dimension_semantics<parallel>], iteration_bounds = array<i64: 2>, scalar_prefetch = 0 : i64, scratch_operands = 0 : i64, tpu.core_type = #tpu.core_type<tc>, window_params = [{transform_indices = @transform_0, window_bounds = array<i64: 1, 6, 6, 64>}, {pipeline_mode = #tpu.pipeline_mode<synchronous>, transform_indices = @transform_1, window_bounds = array<i64: 9, 64, 64>}, {pipeline_mode = #tpu.pipeline_mode<synchronous>, transform_indices = @transform_2, window_bounds = array<i64: 1, 64>}, {pipeline_mode = #tpu.pipeline_mode<synchronous>, transform_indices = @transform_3, window_bounds = array<i64: 1, 64>}, {transform_indices = @transform_4, window_bounds = array<i64: 1, 16, 64>}, {transform_indices = @transform_5, window_bounds = array<i64: 1, 16, 64>}]} {
    %cst = arith.constant 0.000000e+00 : f32
    %0 = vector.broadcast %cst : f32 to vector<16x64xf32>
    %c0 = arith.constant 0 : index
    %c0_0 = arith.constant 0 : index
    %c0_1 = arith.constant 0 : index
    %c0_2 = arith.constant 0 : index
    %1 = vector.load %arg1[%c0, %c0_0, %c0_1, %c0_2] : memref<1x6x6x64xbf16, #tpu.memory_space<vmem>>, vector<1x4x4x64xbf16>
    %2 = vector.shape_cast %1 : vector<1x4x4x64xbf16> to vector<4x4x64xbf16>
    %3 = vector.shape_cast %2 : vector<4x4x64xbf16> to vector<16x64xbf16>
    %c0_3 = arith.constant 0 : index
    %c0_4 = arith.constant 0 : index
    %c0_5 = arith.constant 0 : index
    %4 = vector.load %arg2[%c0_3, %c0_4, %c0_5] : memref<9x64x64xbf16, #tpu.memory_space<vmem>>, vector<1x64x64xbf16>
    %5 = vector.shape_cast %4 : vector<1x64x64xbf16> to vector<64x64xbf16>
    %cst_6 = arith.constant dense<0.000000e+00> : vector<16x64xf32>
    %6 = tpu.matmul %3, %5, %cst_6 {dimension_numbers = #tpu.dot_dimension_numbers<[1], [0], [0], [1], [0, 0, 1, 1], [], []>} : vector<16x64xbf16>, vector<64x64xbf16>, vector<16x64xf32> -> vector<16x64xf32>
    %7 = arith.addf %0, %6 : vector<16x64xf32>
    %c0_7 = arith.constant 0 : index
    %c0_8 = arith.constant 0 : index
    %c1 = arith.constant 1 : index
    %c0_9 = arith.constant 0 : index
    %8 = vector.load %arg1[%c0_7, %c0_8, %c1, %c0_9] : memref<1x6x6x64xbf16, #tpu.memory_space<vmem>>, vector<1x4x4x64xbf16>
    %9 = vector.shape_cast %8 : vector<1x4x4x64xbf16> to vector<4x4x64xbf16>
    %10 = vector.shape_cast %9 : vector<4x4x64xbf16> to vector<16x64xbf16>
    %c1_10 = arith.constant 1 : index
    %c0_11 = arith.constant 0 : index
    %c0_12 = arith.constant 0 : index
    %11 = vector.load %arg2[%c1_10, %c0_11, %c0_12] : memref<9x64x64xbf16, #tpu.memory_space<vmem>>, vector<1x64x64xbf16>
    %12 = vector.shape_cast %11 : vector<1x64x64xbf16> to vector<64x64xbf16>
    %cst_13 = arith.constant dense<0.000000e+00> : vector<16x64xf32>
    %13 = tpu.matmul %10, %12, %cst_13 {dimension_numbers = #tpu.dot_dimension_numbers<[1], [0], [0], [1], [0, 0, 1, 1], [], []>} : vector<16x64xbf16>, vector<64x64xbf16>, vector<16x64xf32> -> vector<16x64xf32>
    %14 = arith.addf %7, %13 : vector<16x64xf32>
    %c0_14 = arith.constant 0 : index
    %c0_15 = arith.constant 0 : index
    %c2 = arith.constant 2 : index
    %c0_16 = arith.constant 0 : index
    %15 = vector.load %arg1[%c0_14, %c0_15, %c2, %c0_16] : memref<1x6x6x64xbf16, #tpu.memory_space<vmem>>, vector<1x4x4x64xbf16>
    %16 = vector.shape_cast %15 : vector<1x4x4x64xbf16> to vector<4x4x64xbf16>
    %17 = vector.shape_cast %16 : vector<4x4x64xbf16> to vector<16x64xbf16>
    %c2_17 = arith.constant 2 : index
    %c0_18 = arith.constant 0 : index
    %c0_19 = arith.constant 0 : index
    %18 = vector.load %arg2[%c2_17, %c0_18, %c0_19] : memref<9x64x64xbf16, #tpu.memory_space<vmem>>, vector<1x64x64xbf16>
    %19 = vector.shape_cast %18 : vector<1x64x64xbf16> to vector<64x64xbf16>
    %cst_20 = arith.constant dense<0.000000e+00> : vector<16x64xf32>
    %20 = tpu.matmul %17, %19, %cst_20 {dimension_numbers = #tpu.dot_dimension_numbers<[1], [0], [0], [1], [0, 0, 1, 1], [], []>} : vector<16x64xbf16>, vector<64x64xbf16>, vector<16x64xf32> -> vector<16x64xf32>
    %21 = arith.addf %14, %20 : vector<16x64xf32>
    %c0_21 = arith.constant 0 : index
    %c1_22 = arith.constant 1 : index
    %c0_23 = arith.constant 0 : index
    %c0_24 = arith.constant 0 : index
    %22 = vector.load %arg1[%c0_21, %c1_22, %c0_23, %c0_24] : memref<1x6x6x64xbf16, #tpu.memory_space<vmem>>, vector<1x4x4x64xbf16>
    %23 = vector.shape_cast %22 : vector<1x4x4x64xbf16> to vector<4x4x64xbf16>
    %24 = vector.shape_cast %23 : vector<4x4x64xbf16> to vector<16x64xbf16>
    %c3 = arith.constant 3 : index
    %c0_25 = arith.constant 0 : index
    %c0_26 = arith.constant 0 : index
    %25 = vector.load %arg2[%c3, %c0_25, %c0_26] : memref<9x64x64xbf16, #tpu.memory_space<vmem>>, vector<1x64x64xbf16>
    %26 = vector.shape_cast %25 : vector<1x64x64xbf16> to vector<64x64xbf16>
    %cst_27 = arith.constant dense<0.000000e+00> : vector<16x64xf32>
    %27 = tpu.matmul %24, %26, %cst_27 {dimension_numbers = #tpu.dot_dimension_numbers<[1], [0], [0], [1], [0, 0, 1, 1], [], []>} : vector<16x64xbf16>, vector<64x64xbf16>, vector<16x64xf32> -> vector<16x64xf32>
    %28 = arith.addf %21, %27 : vector<16x64xf32>
    %c0_28 = arith.constant 0 : index
    %c1_29 = arith.constant 1 : index
    %c1_30 = arith.constant 1 : index
    %c0_31 = arith.constant 0 : index
    %29 = vector.load %arg1[%c0_28, %c1_29, %c1_30, %c0_31] : memref<1x6x6x64xbf16, #tpu.memory_space<vmem>>, vector<1x4x4x64xbf16>
    %30 = vector.shape_cast %29 : vector<1x4x4x64xbf16> to vector<4x4x64xbf16>
    %31 = vector.shape_cast %30 : vector<4x4x64xbf16> to vector<16x64xbf16>
    %c4 = arith.constant 4 : index
    %c0_32 = arith.constant 0 : index
    %c0_33 = arith.constant 0 : index
    %32 = vector.load %arg2[%c4, %c0_32, %c0_33] : memref<9x64x64xbf16, #tpu.memory_space<vmem>>, vector<1x64x64xbf16>
    %33 = vector.shape_cast %32 : vector<1x64x64xbf16> to vector<64x64xbf16>
    %cst_34 = arith.constant dense<0.000000e+00> : vector<16x64xf32>
    %34 = tpu.matmul %31, %33, %cst_34 {dimension_numbers = #tpu.dot_dimension_numbers<[1], [0], [0], [1], [0, 0, 1, 1], [], []>} : vector<16x64xbf16>, vector<64x64xbf16>, vector<16x64xf32> -> vector<16x64xf32>
    %35 = arith.addf %28, %34 : vector<16x64xf32>
    %c0_35 = arith.constant 0 : index
    %c1_36 = arith.constant 1 : index
    %c2_37 = arith.constant 2 : index
    %c0_38 = arith.constant 0 : index
    %36 = vector.load %arg1[%c0_35, %c1_36, %c2_37, %c0_38] : memref<1x6x6x64xbf16, #tpu.memory_space<vmem>>, vector<1x4x4x64xbf16>
    %37 = vector.shape_cast %36 : vector<1x4x4x64xbf16> to vector<4x4x64xbf16>
    %38 = vector.shape_cast %37 : vector<4x4x64xbf16> to vector<16x64xbf16>
    %c5 = arith.constant 5 : index
    %c0_39 = arith.constant 0 : index
    %c0_40 = arith.constant 0 : index
    %39 = vector.load %arg2[%c5, %c0_39, %c0_40] : memref<9x64x64xbf16, #tpu.memory_space<vmem>>, vector<1x64x64xbf16>
    %40 = vector.shape_cast %39 : vector<1x64x64xbf16> to vector<64x64xbf16>
    %cst_41 = arith.constant dense<0.000000e+00> : vector<16x64xf32>
    %41 = tpu.matmul %38, %40, %cst_41 {dimension_numbers = #tpu.dot_dimension_numbers<[1], [0], [0], [1], [0, 0, 1, 1], [], []>} : vector<16x64xbf16>, vector<64x64xbf16>, vector<16x64xf32> -> vector<16x64xf32>
    %42 = arith.addf %35, %41 : vector<16x64xf32>
    %c0_42 = arith.constant 0 : index
    %c2_43 = arith.constant 2 : index
    %c0_44 = arith.constant 0 : index
    %c0_45 = arith.constant 0 : index
    %43 = vector.load %arg1[%c0_42, %c2_43, %c0_44, %c0_45] : memref<1x6x6x64xbf16, #tpu.memory_space<vmem>>, vector<1x4x4x64xbf16>
    %44 = vector.shape_cast %43 : vector<1x4x4x64xbf16> to vector<4x4x64xbf16>
    %45 = vector.shape_cast %44 : vector<4x4x64xbf16> to vector<16x64xbf16>
    %c6 = arith.constant 6 : index
    %c0_46 = arith.constant 0 : index
    %c0_47 = arith.constant 0 : index
    %46 = vector.load %arg2[%c6, %c0_46, %c0_47] : memref<9x64x64xbf16, #tpu.memory_space<vmem>>, vector<1x64x64xbf16>
    %47 = vector.shape_cast %46 : vector<1x64x64xbf16> to vector<64x64xbf16>
    %cst_48 = arith.constant dense<0.000000e+00> : vector<16x64xf32>
    %48 = tpu.matmul %45, %47, %cst_48 {dimension_numbers = #tpu.dot_dimension_numbers<[1], [0], [0], [1], [0, 0, 1, 1], [], []>} : vector<16x64xbf16>, vector<64x64xbf16>, vector<16x64xf32> -> vector<16x64xf32>
    %49 = arith.addf %42, %48 : vector<16x64xf32>
    %c0_49 = arith.constant 0 : index
    %c2_50 = arith.constant 2 : index
    %c1_51 = arith.constant 1 : index
    %c0_52 = arith.constant 0 : index
    %50 = vector.load %arg1[%c0_49, %c2_50, %c1_51, %c0_52] : memref<1x6x6x64xbf16, #tpu.memory_space<vmem>>, vector<1x4x4x64xbf16>
    %51 = vector.shape_cast %50 : vector<1x4x4x64xbf16> to vector<4x4x64xbf16>
    %52 = vector.shape_cast %51 : vector<4x4x64xbf16> to vector<16x64xbf16>
    %c7 = arith.constant 7 : index
    %c0_53 = arith.constant 0 : index
    %c0_54 = arith.constant 0 : index
    %53 = vector.load %arg2[%c7, %c0_53, %c0_54] : memref<9x64x64xbf16, #tpu.memory_space<vmem>>, vector<1x64x64xbf16>
    %54 = vector.shape_cast %53 : vector<1x64x64xbf16> to vector<64x64xbf16>
    %cst_55 = arith.constant dense<0.000000e+00> : vector<16x64xf32>
    %55 = tpu.matmul %52, %54, %cst_55 {dimension_numbers = #tpu.dot_dimension_numbers<[1], [0], [0], [1], [0, 0, 1, 1], [], []>} : vector<16x64xbf16>, vector<64x64xbf16>, vector<16x64xf32> -> vector<16x64xf32>
    %56 = arith.addf %49, %55 : vector<16x64xf32>
    %c0_56 = arith.constant 0 : index
    %c2_57 = arith.constant 2 : index
    %c2_58 = arith.constant 2 : index
    %c0_59 = arith.constant 0 : index
    %57 = vector.load %arg1[%c0_56, %c2_57, %c2_58, %c0_59] : memref<1x6x6x64xbf16, #tpu.memory_space<vmem>>, vector<1x4x4x64xbf16>
    %58 = vector.shape_cast %57 : vector<1x4x4x64xbf16> to vector<4x4x64xbf16>
    %59 = vector.shape_cast %58 : vector<4x4x64xbf16> to vector<16x64xbf16>
    %c8 = arith.constant 8 : index
    %c0_60 = arith.constant 0 : index
    %c0_61 = arith.constant 0 : index
    %60 = vector.load %arg2[%c8, %c0_60, %c0_61] : memref<9x64x64xbf16, #tpu.memory_space<vmem>>, vector<1x64x64xbf16>
    %61 = vector.shape_cast %60 : vector<1x64x64xbf16> to vector<64x64xbf16>
    %cst_62 = arith.constant dense<0.000000e+00> : vector<16x64xf32>
    %62 = tpu.matmul %59, %61, %cst_62 {dimension_numbers = #tpu.dot_dimension_numbers<[1], [0], [0], [1], [0, 0, 1, 1], [], []>} : vector<16x64xbf16>, vector<64x64xbf16>, vector<16x64xf32> -> vector<16x64xf32>
    %63 = arith.addf %56, %62 : vector<16x64xf32>
    %c0_63 = arith.constant 0 : index
    %c0_64 = arith.constant 0 : index
    %64 = vector.load %arg3[%c0_63, %c0_64] : memref<1x64xf32, #tpu.memory_space<vmem>>, vector<1x64xf32>
    %65 = vector.broadcast %64 : vector<1x64xf32> to vector<16x64xf32>
    %66 = arith.mulf %63, %65 : vector<16x64xf32>
    %c0_65 = arith.constant 0 : index
    %c0_66 = arith.constant 0 : index
    %67 = vector.load %arg4[%c0_65, %c0_66] : memref<1x64xf32, #tpu.memory_space<vmem>>, vector<1x64xf32>
    %68 = vector.broadcast %67 : vector<1x64xf32> to vector<16x64xf32>
    %69 = arith.addf %66, %68 : vector<16x64xf32>
    %c0_67 = arith.constant 0 : index
    %c0_68 = arith.constant 0 : index
    %c0_69 = arith.constant 0 : index
    %70 = vector.load %arg5[%c0_67, %c0_68, %c0_69] : memref<1x16x64xbf16, #tpu.memory_space<vmem>>, vector<1x16x64xbf16>
    %71 = vector.shape_cast %70 : vector<1x16x64xbf16> to vector<16x64xbf16>
    %72 = arith.extf %71 : vector<16x64xbf16> to vector<16x64xf32>
    %73 = arith.addf %69, %72 : vector<16x64xf32>
    %cst_70 = arith.constant 0.000000e+00 : f32
    %74 = vector.broadcast %cst_70 : f32 to vector<16x64xf32>
    %75 = arith.maximumf %73, %74 : vector<16x64xf32>
    %76 = vector.shape_cast %75 : vector<16x64xf32> to vector<1x16x64xf32>
    %77 = arith.truncf %76 : vector<1x16x64xf32> to vector<1x16x64xbf16>
    %c0_71 = arith.constant 0 : index
    %c0_72 = arith.constant 0 : index
    %c0_73 = arith.constant 0 : index
    %78 = vector.load %arg6[%c0_71, %c0_72, %c0_73] : memref<1x16x64xbf16, #tpu.memory_space<vmem>>, vector<1x16x64xbf16>
    tpu.vector_store %arg6[%c0_71, %c0_72, %c0_73], %77 {strides = array<i32>} : memref<1x16x64xbf16, #tpu.memory_space<vmem>>, vector<1x16x64xbf16>,
    return
  }
  func.func @transform_0(%arg0: i32) -> (i32, i32, i32, i32) {
    %c0_i32 = arith.constant 0 : i32
    %c0_i32_0 = arith.constant 0 : i32
    %c0_i32_1 = arith.constant 0 : i32
    %c0_i32_2 = arith.constant 0 : i32
    return %arg0, %c0_i32, %c0_i32_0, %c0_i32_1 : i32, i32, i32, i32
  }
  func.func @transform_1(%arg0: i32) -> (i32, i32, i32) {
    %c0_i32 = arith.constant 0 : i32
    %c0_i32_0 = arith.constant 0 : i32
    %c0_i32_1 = arith.constant 0 : i32
    %c0_i32_2 = arith.constant 0 : i32
    return %c0_i32, %c0_i32_0, %c0_i32_1 : i32, i32, i32
  }
  func.func @transform_2(%arg0: i32) -> (i32, i32) {
    %c0_i32 = arith.constant 0 : i32
    %c0_i32_0 = arith.constant 0 : i32
    %c0_i32_1 = arith.constant 0 : i32
    return %c0_i32, %c0_i32_0 : i32, i32
  }
  func.func @transform_3(%arg0: i32) -> (i32, i32) {
    %c0_i32 = arith.constant 0 : i32
    %c0_i32_0 = arith.constant 0 : i32
    %c0_i32_1 = arith.constant 0 : i32
    return %c0_i32, %c0_i32_0 : i32, i32
  }
  func.func @transform_4(%arg0: i32) -> (i32, i32, i32) {
    %c0_i32 = arith.constant 0 : i32
    %c0_i32_0 = arith.constant 0 : i32
    %c0_i32_1 = arith.constant 0 : i32
    return %arg0, %c0_i32, %c0_i32_0 : i32, i32, i32
  }
  func.func @transform_5(%arg0: i32) -> (i32, i32, i32) {
    %c0_i32 = arith.constant 0 : i32
    %c0_i32_0 = arith.constant 0 : i32
    %c0_i32_1 = arith.constant 0 : i32
    return %arg0, %c0_i32, %c0_i32_0 : i32, i32, i32
  }
}

module attributes {stable_mosaic.version = 11 : i64} {
  func.func @_conv_taps_kernel(%arg0: i32, %arg1: memref<4x3x3x64xbf16, #tpu.memory_space<vmem>>, %arg2: memref<9x64x128xbf16, #tpu.memory_space<vmem>>, %arg3: memref<1x128xf32, #tpu.memory_space<vmem>>, %arg4: memref<1x128xf32, #tpu.memory_space<vmem>>, %arg5: memref<1x4x128xbf16, #tpu.memory_space<vmem>>) attributes {dimension_semantics = [#tpu.dimension_semantics<parallel>], iteration_bounds = array<i64: 2>, scalar_prefetch = 0 : i64, scratch_operands = 0 : i64, tpu.core_type = #tpu.core_type<tc>, window_params = [{transform_indices = @transform_0, window_bounds = array<i64: 4, 3, 3, 64>}, {pipeline_mode = #tpu.pipeline_mode<synchronous>, transform_indices = @transform_1, window_bounds = array<i64: 9, 64, 128>}, {pipeline_mode = #tpu.pipeline_mode<synchronous>, transform_indices = @transform_2, window_bounds = array<i64: 1, 128>}, {pipeline_mode = #tpu.pipeline_mode<synchronous>, transform_indices = @transform_3, window_bounds = array<i64: 1, 128>}, {transform_indices = @transform_4, window_bounds = array<i64: 1, 4, 128>}]} {
    %cst = arith.constant 0.000000e+00 : f32
    %0 = vector.broadcast %cst : f32 to vector<4x128xf32>
    %c0 = arith.constant 0 : index
    %c0_0 = arith.constant 0 : index
    %c0_1 = arith.constant 0 : index
    %c0_2 = arith.constant 0 : index
    %1 = vector.load %arg1[%c0, %c0_0, %c0_1, %c0_2] : memref<4x3x3x64xbf16, #tpu.memory_space<vmem>>, vector<1x2x2x64xbf16>
    %2 = vector.shape_cast %1 : vector<1x2x2x64xbf16> to vector<2x2x64xbf16>
    %3 = vector.shape_cast %2 : vector<2x2x64xbf16> to vector<4x64xbf16>
    %c0_3 = arith.constant 0 : index
    %c0_4 = arith.constant 0 : index
    %c0_5 = arith.constant 0 : index
    %4 = vector.load %arg2[%c0_3, %c0_4, %c0_5] : memref<9x64x128xbf16, #tpu.memory_space<vmem>>, vector<1x64x128xbf16>
    %5 = vector.shape_cast %4 : vector<1x64x128xbf16> to vector<64x128xbf16>
    %cst_6 = arith.constant dense<0.000000e+00> : vector<4x128xf32>
    %6 = tpu.matmul %3, %5, %cst_6 {dimension_numbers = #tpu.dot_dimension_numbers<[1], [0], [0], [1], [0, 0, 1, 1], [], []>} : vector<4x64xbf16>, vector<64x128xbf16>, vector<4x128xf32> -> vector<4x128xf32>
    %7 = arith.addf %0, %6 : vector<4x128xf32>
    %c1 = arith.constant 1 : index
    %c0_7 = arith.constant 0 : index
    %c0_8 = arith.constant 0 : index
    %c0_9 = arith.constant 0 : index
    %8 = vector.load %arg1[%c1, %c0_7, %c0_8, %c0_9] : memref<4x3x3x64xbf16, #tpu.memory_space<vmem>>, vector<1x2x2x64xbf16>
    %9 = vector.shape_cast %8 : vector<1x2x2x64xbf16> to vector<2x2x64xbf16>
    %10 = vector.shape_cast %9 : vector<2x2x64xbf16> to vector<4x64xbf16>
    %c1_10 = arith.constant 1 : index
    %c0_11 = arith.constant 0 : index
    %c0_12 = arith.constant 0 : index
    %11 = vector.load %arg2[%c1_10, %c0_11, %c0_12] : memref<9x64x128xbf16, #tpu.memory_space<vmem>>, vector<1x64x128xbf16>
    %12 = vector.shape_cast %11 : vector<1x64x128xbf16> to vector<64x128xbf16>
    %cst_13 = arith.constant dense<0.000000e+00> : vector<4x128xf32>
    %13 = tpu.matmul %10, %12, %cst_13 {dimension_numbers = #tpu.dot_dimension_numbers<[1], [0], [0], [1], [0, 0, 1, 1], [], []>} : vector<4x64xbf16>, vector<64x128xbf16>, vector<4x128xf32> -> vector<4x128xf32>
    %14 = arith.addf %7, %13 : vector<4x128xf32>
    %c0_14 = arith.constant 0 : index
    %c0_15 = arith.constant 0 : index
    %c1_16 = arith.constant 1 : index
    %c0_17 = arith.constant 0 : index
    %15 = vector.load %arg1[%c0_14, %c0_15, %c1_16, %c0_17] : memref<4x3x3x64xbf16, #tpu.memory_space<vmem>>, vector<1x2x2x64xbf16>
    %16 = vector.shape_cast %15 : vector<1x2x2x64xbf16> to vector<2x2x64xbf16>
    %17 = vector.shape_cast %16 : vector<2x2x64xbf16> to vector<4x64xbf16>
    %c2 = arith.constant 2 : index
    %c0_18 = arith.constant 0 : index
    %c0_19 = arith.constant 0 : index
    %18 = vector.load %arg2[%c2, %c0_18, %c0_19] : memref<9x64x128xbf16, #tpu.memory_space<vmem>>, vector<1x64x128xbf16>
    %19 = vector.shape_cast %18 : vector<1x64x128xbf16> to vector<64x128xbf16>
    %cst_20 = arith.constant dense<0.000000e+00> : vector<4x128xf32>
    %20 = tpu.matmul %17, %19, %cst_20 {dimension_numbers = #tpu.dot_dimension_numbers<[1], [0], [0], [1], [0, 0, 1, 1], [], []>} : vector<4x64xbf16>, vector<64x128xbf16>, vector<4x128xf32> -> vector<4x128xf32>
    %21 = arith.addf %14, %20 : vector<4x128xf32>
    %c2_21 = arith.constant 2 : index
    %c0_22 = arith.constant 0 : index
    %c0_23 = arith.constant 0 : index
    %c0_24 = arith.constant 0 : index
    %22 = vector.load %arg1[%c2_21, %c0_22, %c0_23, %c0_24] : memref<4x3x3x64xbf16, #tpu.memory_space<vmem>>, vector<1x2x2x64xbf16>
    %23 = vector.shape_cast %22 : vector<1x2x2x64xbf16> to vector<2x2x64xbf16>
    %24 = vector.shape_cast %23 : vector<2x2x64xbf16> to vector<4x64xbf16>
    %c3 = arith.constant 3 : index
    %c0_25 = arith.constant 0 : index
    %c0_26 = arith.constant 0 : index
    %25 = vector.load %arg2[%c3, %c0_25, %c0_26] : memref<9x64x128xbf16, #tpu.memory_space<vmem>>, vector<1x64x128xbf16>
    %26 = vector.shape_cast %25 : vector<1x64x128xbf16> to vector<64x128xbf16>
    %cst_27 = arith.constant dense<0.000000e+00> : vector<4x128xf32>
    %27 = tpu.matmul %24, %26, %cst_27 {dimension_numbers = #tpu.dot_dimension_numbers<[1], [0], [0], [1], [0, 0, 1, 1], [], []>} : vector<4x64xbf16>, vector<64x128xbf16>, vector<4x128xf32> -> vector<4x128xf32>
    %28 = arith.addf %21, %27 : vector<4x128xf32>
    %c3_28 = arith.constant 3 : index
    %c0_29 = arith.constant 0 : index
    %c0_30 = arith.constant 0 : index
    %c0_31 = arith.constant 0 : index
    %29 = vector.load %arg1[%c3_28, %c0_29, %c0_30, %c0_31] : memref<4x3x3x64xbf16, #tpu.memory_space<vmem>>, vector<1x2x2x64xbf16>
    %30 = vector.shape_cast %29 : vector<1x2x2x64xbf16> to vector<2x2x64xbf16>
    %31 = vector.shape_cast %30 : vector<2x2x64xbf16> to vector<4x64xbf16>
    %c4 = arith.constant 4 : index
    %c0_32 = arith.constant 0 : index
    %c0_33 = arith.constant 0 : index
    %32 = vector.load %arg2[%c4, %c0_32, %c0_33] : memref<9x64x128xbf16, #tpu.memory_space<vmem>>, vector<1x64x128xbf16>
    %33 = vector.shape_cast %32 : vector<1x64x128xbf16> to vector<64x128xbf16>
    %cst_34 = arith.constant dense<0.000000e+00> : vector<4x128xf32>
    %34 = tpu.matmul %31, %33, %cst_34 {dimension_numbers = #tpu.dot_dimension_numbers<[1], [0], [0], [1], [0, 0, 1, 1], [], []>} : vector<4x64xbf16>, vector<64x128xbf16>, vector<4x128xf32> -> vector<4x128xf32>
    %35 = arith.addf %28, %34 : vector<4x128xf32>
    %c2_35 = arith.constant 2 : index
    %c0_36 = arith.constant 0 : index
    %c1_37 = arith.constant 1 : index
    %c0_38 = arith.constant 0 : index
    %36 = vector.load %arg1[%c2_35, %c0_36, %c1_37, %c0_38] : memref<4x3x3x64xbf16, #tpu.memory_space<vmem>>, vector<1x2x2x64xbf16>
    %37 = vector.shape_cast %36 : vector<1x2x2x64xbf16> to vector<2x2x64xbf16>
    %38 = vector.shape_cast %37 : vector<2x2x64xbf16> to vector<4x64xbf16>
    %c5 = arith.constant 5 : index
    %c0_39 = arith.constant 0 : index
    %c0_40 = arith.constant 0 : index
    %39 = vector.load %arg2[%c5, %c0_39, %c0_40] : memref<9x64x128xbf16, #tpu.memory_space<vmem>>, vector<1x64x128xbf16>
    %40 = vector.shape_cast %39 : vector<1x64x128xbf16> to vector<64x128xbf16>
    %cst_41 = arith.constant dense<0.000000e+00> : vector<4x128xf32>
    %41 = tpu.matmul %38, %40, %cst_41 {dimension_numbers = #tpu.dot_dimension_numbers<[1], [0], [0], [1], [0, 0, 1, 1], [], []>} : vector<4x64xbf16>, vector<64x128xbf16>, vector<4x128xf32> -> vector<4x128xf32>
    %42 = arith.addf %35, %41 : vector<4x128xf32>
    %c0_42 = arith.constant 0 : index
    %c1_43 = arith.constant 1 : index
    %c0_44 = arith.constant 0 : index
    %c0_45 = arith.constant 0 : index
    %43 = vector.load %arg1[%c0_42, %c1_43, %c0_44, %c0_45] : memref<4x3x3x64xbf16, #tpu.memory_space<vmem>>, vector<1x2x2x64xbf16>
    %44 = vector.shape_cast %43 : vector<1x2x2x64xbf16> to vector<2x2x64xbf16>
    %45 = vector.shape_cast %44 : vector<2x2x64xbf16> to vector<4x64xbf16>
    %c6 = arith.constant 6 : index
    %c0_46 = arith.constant 0 : index
    %c0_47 = arith.constant 0 : index
    %46 = vector.load %arg2[%c6, %c0_46, %c0_47] : memref<9x64x128xbf16, #tpu.memory_space<vmem>>, vector<1x64x128xbf16>
    %47 = vector.shape_cast %46 : vector<1x64x128xbf16> to vector<64x128xbf16>
    %cst_48 = arith.constant dense<0.000000e+00> : vector<4x128xf32>
    %48 = tpu.matmul %45, %47, %cst_48 {dimension_numbers = #tpu.dot_dimension_numbers<[1], [0], [0], [1], [0, 0, 1, 1], [], []>} : vector<4x64xbf16>, vector<64x128xbf16>, vector<4x128xf32> -> vector<4x128xf32>
    %49 = arith.addf %42, %48 : vector<4x128xf32>
    %c1_49 = arith.constant 1 : index
    %c1_50 = arith.constant 1 : index
    %c0_51 = arith.constant 0 : index
    %c0_52 = arith.constant 0 : index
    %50 = vector.load %arg1[%c1_49, %c1_50, %c0_51, %c0_52] : memref<4x3x3x64xbf16, #tpu.memory_space<vmem>>, vector<1x2x2x64xbf16>
    %51 = vector.shape_cast %50 : vector<1x2x2x64xbf16> to vector<2x2x64xbf16>
    %52 = vector.shape_cast %51 : vector<2x2x64xbf16> to vector<4x64xbf16>
    %c7 = arith.constant 7 : index
    %c0_53 = arith.constant 0 : index
    %c0_54 = arith.constant 0 : index
    %53 = vector.load %arg2[%c7, %c0_53, %c0_54] : memref<9x64x128xbf16, #tpu.memory_space<vmem>>, vector<1x64x128xbf16>
    %54 = vector.shape_cast %53 : vector<1x64x128xbf16> to vector<64x128xbf16>
    %cst_55 = arith.constant dense<0.000000e+00> : vector<4x128xf32>
    %55 = tpu.matmul %52, %54, %cst_55 {dimension_numbers = #tpu.dot_dimension_numbers<[1], [0], [0], [1], [0, 0, 1, 1], [], []>} : vector<4x64xbf16>, vector<64x128xbf16>, vector<4x128xf32> -> vector<4x128xf32>
    %56 = arith.addf %49, %55 : vector<4x128xf32>
    %c0_56 = arith.constant 0 : index
    %c1_57 = arith.constant 1 : index
    %c1_58 = arith.constant 1 : index
    %c0_59 = arith.constant 0 : index
    %57 = vector.load %arg1[%c0_56, %c1_57, %c1_58, %c0_59] : memref<4x3x3x64xbf16, #tpu.memory_space<vmem>>, vector<1x2x2x64xbf16>
    %58 = vector.shape_cast %57 : vector<1x2x2x64xbf16> to vector<2x2x64xbf16>
    %59 = vector.shape_cast %58 : vector<2x2x64xbf16> to vector<4x64xbf16>
    %c8 = arith.constant 8 : index
    %c0_60 = arith.constant 0 : index
    %c0_61 = arith.constant 0 : index
    %60 = vector.load %arg2[%c8, %c0_60, %c0_61] : memref<9x64x128xbf16, #tpu.memory_space<vmem>>, vector<1x64x128xbf16>
    %61 = vector.shape_cast %60 : vector<1x64x128xbf16> to vector<64x128xbf16>
    %cst_62 = arith.constant dense<0.000000e+00> : vector<4x128xf32>
    %62 = tpu.matmul %59, %61, %cst_62 {dimension_numbers = #tpu.dot_dimension_numbers<[1], [0], [0], [1], [0, 0, 1, 1], [], []>} : vector<4x64xbf16>, vector<64x128xbf16>, vector<4x128xf32> -> vector<4x128xf32>
    %63 = arith.addf %56, %62 : vector<4x128xf32>
    %c0_63 = arith.constant 0 : index
    %c0_64 = arith.constant 0 : index
    %64 = vector.load %arg3[%c0_63, %c0_64] : memref<1x128xf32, #tpu.memory_space<vmem>>, vector<1x128xf32>
    %65 = vector.broadcast %64 : vector<1x128xf32> to vector<4x128xf32>
    %66 = arith.mulf %63, %65 : vector<4x128xf32>
    %c0_65 = arith.constant 0 : index
    %c0_66 = arith.constant 0 : index
    %67 = vector.load %arg4[%c0_65, %c0_66] : memref<1x128xf32, #tpu.memory_space<vmem>>, vector<1x128xf32>
    %68 = vector.broadcast %67 : vector<1x128xf32> to vector<4x128xf32>
    %69 = arith.addf %66, %68 : vector<4x128xf32>
    %cst_67 = arith.constant 0.000000e+00 : f32
    %70 = vector.broadcast %cst_67 : f32 to vector<4x128xf32>
    %71 = arith.maximumf %69, %70 : vector<4x128xf32>
    %72 = vector.shape_cast %71 : vector<4x128xf32> to vector<1x4x128xf32>
    %73 = arith.truncf %72 : vector<1x4x128xf32> to vector<1x4x128xbf16>
    %c0_68 = arith.constant 0 : index
    %c0_69 = arith.constant 0 : index
    %c0_70 = arith.constant 0 : index
    %74 = vector.load %arg5[%c0_68, %c0_69, %c0_70] : memref<1x4x128xbf16, #tpu.memory_space<vmem>>, vector<1x4x128xbf16>
    tpu.vector_store %arg5[%c0_68, %c0_69, %c0_70], %73 {strides = array<i32>} : memref<1x4x128xbf16, #tpu.memory_space<vmem>>, vector<1x4x128xbf16>,
    return
  }
  func.func @transform_0(%arg0: i32) -> (i32, i32, i32, i32) {
    %c0_i32 = arith.constant 0 : i32
    %c0_i32_0 = arith.constant 0 : i32
    %c0_i32_1 = arith.constant 0 : i32
    %c0_i32_2 = arith.constant 0 : i32
    return %arg0, %c0_i32, %c0_i32_0, %c0_i32_1 : i32, i32, i32, i32
  }
  func.func @transform_1(%arg0: i32) -> (i32, i32, i32) {
    %c0_i32 = arith.constant 0 : i32
    %c0_i32_0 = arith.constant 0 : i32
    %c0_i32_1 = arith.constant 0 : i32
    %c0_i32_2 = arith.constant 0 : i32
    return %c0_i32, %c0_i32_0, %c0_i32_1 : i32, i32, i32
  }
  func.func @transform_2(%arg0: i32) -> (i32, i32) {
    %c0_i32 = arith.constant 0 : i32
    %c0_i32_0 = arith.constant 0 : i32
    %c0_i32_1 = arith.constant 0 : i32
    return %c0_i32, %c0_i32_0 : i32, i32
  }
  func.func @transform_3(%arg0: i32) -> (i32, i32) {
    %c0_i32 = arith.constant 0 : i32
    %c0_i32_0 = arith.constant 0 : i32
    %c0_i32_1 = arith.constant 0 : i32
    return %c0_i32, %c0_i32_0 : i32, i32
  }
  func.func @transform_4(%arg0: i32) -> (i32, i32, i32) {
    %c0_i32 = arith.constant 0 : i32
    %c0_i32_0 = arith.constant 0 : i32
    %c0_i32_1 = arith.constant 0 : i32
    return %arg0, %c0_i32, %c0_i32_0 : i32, i32, i32
  }
}

module attributes {stable_mosaic.version = 11 : i64} {
  func.func @_conv_taps_kernel(%arg0: i32, %arg1: memref<1x4x4x128xbf16, #tpu.memory_space<vmem>>, %arg2: memref<9x128x128xbf16, #tpu.memory_space<vmem>>, %arg3: memref<1x128xf32, #tpu.memory_space<vmem>>, %arg4: memref<1x128xf32, #tpu.memory_space<vmem>>, %arg5: memref<1x4x64xbf16, #tpu.memory_space<vmem>>, %arg6: memref<64x128xbf16, #tpu.memory_space<vmem>>, %arg7: memref<1x128xf32, #tpu.memory_space<vmem>>, %arg8: memref<1x128xf32, #tpu.memory_space<vmem>>, %arg9: memref<1x4x128xbf16, #tpu.memory_space<vmem>>) attributes {dimension_semantics = [#tpu.dimension_semantics<parallel>], iteration_bounds = array<i64: 2>, scalar_prefetch = 0 : i64, scratch_operands = 0 : i64, tpu.core_type = #tpu.core_type<tc>, window_params = [{transform_indices = @transform_0, window_bounds = array<i64: 1, 4, 4, 128>}, {pipeline_mode = #tpu.pipeline_mode<synchronous>, transform_indices = @transform_1, window_bounds = array<i64: 9, 128, 128>}, {pipeline_mode = #tpu.pipeline_mode<synchronous>, transform_indices = @transform_2, window_bounds = array<i64: 1, 128>}, {pipeline_mode = #tpu.pipeline_mode<synchronous>, transform_indices = @transform_3, window_bounds = array<i64: 1, 128>}, {transform_indices = @transform_4, window_bounds = array<i64: 1, 4, 64>}, {pipeline_mode = #tpu.pipeline_mode<synchronous>, transform_indices = @transform_5, window_bounds = array<i64: 64, 128>}, {pipeline_mode = #tpu.pipeline_mode<synchronous>, transform_indices = @transform_6, window_bounds = array<i64: 1, 128>}, {pipeline_mode = #tpu.pipeline_mode<synchronous>, transform_indices = @transform_7, window_bounds = array<i64: 1, 128>}, {transform_indices = @transform_8, window_bounds = array<i64: 1, 4, 128>}]} {
    %cst = arith.constant 0.000000e+00 : f32
    %0 = vector.broadcast %cst : f32 to vector<4x128xf32>
    %c0 = arith.constant 0 : index
    %c0_0 = arith.constant 0 : index
    %c0_1 = arith.constant 0 : index
    %c0_2 = arith.constant 0 : index
    %1 = vector.load %arg1[%c0, %c0_0, %c0_1, %c0_2] : memref<1x4x4x128xbf16, #tpu.memory_space<vmem>>, vector<1x2x2x128xbf16>
    %2 = vector.shape_cast %1 : vector<1x2x2x128xbf16> to vector<2x2x128xbf16>
    %3 = vector.shape_cast %2 : vector<2x2x128xbf16> to vector<4x128xbf16>
    %c0_3 = arith.constant 0 : index
    %c0_4 = arith.constant 0 : index
    %c0_5 = arith.constant 0 : index
    %4 = vector.load %arg2[%c0_3, %c0_4, %c0_5] : memref<9x128x128xbf16, #tpu.memory_space<vmem>>, vector<1x128x128xbf16>
    %5 = vector.shape_cast %4 : vector<1x128x128xbf16> to vector<128x128xbf16>
    %cst_6 = arith.constant dense<0.000000e+00> : vector<4x128xf32>
    %6 = tpu.matmul %3, %5, %cst_6 {dimension_numbers = #tpu.dot_dimension_numbers<[1], [0], [0], [1], [0, 0, 1, 1], [], []>} : vector<4x128xbf16>, vector<128x128xbf16>, vector<4x128xf32> -> vector<4x128xf32>
    %7 = arith.addf %0, %6 : vector<4x128xf32>
    %c0_7 = arith.constant 0 : index
    %c0_8 = arith.constant 0 : index
    %c1 = arith.constant 1 : index
    %c0_9 = arith.constant 0 : index
    %8 = vector.load %arg1[%c0_7, %c0_8, %c1, %c0_9] : memref<1x4x4x128xbf16, #tpu.memory_space<vmem>>, vector<1x2x2x128xbf16>
    %9 = vector.shape_cast %8 : vector<1x2x2x128xbf16> to vector<2x2x128xbf16>
    %10 = vector.shape_cast %9 : vector<2x2x128xbf16> to vector<4x128xbf16>
    %c1_10 = arith.constant 1 : index
    %c0_11 = arith.constant 0 : index
    %c0_12 = arith.constant 0 : index
    %11 = vector.load %arg2[%c1_10, %c0_11, %c0_12] : memref<9x128x128xbf16, #tpu.memory_space<vmem>>, vector<1x128x128xbf16>
    %12 = vector.shape_cast %11 : vector<1x128x128xbf16> to vector<128x128xbf16>
    %cst_13 = arith.constant dense<0.000000e+00> : vector<4x128xf32>
    %13 = tpu.matmul %10, %12, %cst_13 {dimension_numbers = #tpu.dot_dimension_numbers<[1], [0], [0], [1], [0, 0, 1, 1], [], []>} : vector<4x128xbf16>, vector<128x128xbf16>, vector<4x128xf32> -> vector<4x128xf32>
    %14 = arith.addf %7, %13 : vector<4x128xf32>
    %c0_14 = arith.constant 0 : index
    %c0_15 = arith.constant 0 : index
    %c2 = arith.constant 2 : index
    %c0_16 = arith.constant 0 : index
    %15 = vector.load %arg1[%c0_14, %c0_15, %c2, %c0_16] : memref<1x4x4x128xbf16, #tpu.memory_space<vmem>>, vector<1x2x2x128xbf16>
    %16 = vector.shape_cast %15 : vector<1x2x2x128xbf16> to vector<2x2x128xbf16>
    %17 = vector.shape_cast %16 : vector<2x2x128xbf16> to vector<4x128xbf16>
    %c2_17 = arith.constant 2 : index
    %c0_18 = arith.constant 0 : index
    %c0_19 = arith.constant 0 : index
    %18 = vector.load %arg2[%c2_17, %c0_18, %c0_19] : memref<9x128x128xbf16, #tpu.memory_space<vmem>>, vector<1x128x128xbf16>
    %19 = vector.shape_cast %18 : vector<1x128x128xbf16> to vector<128x128xbf16>
    %cst_20 = arith.constant dense<0.000000e+00> : vector<4x128xf32>
    %20 = tpu.matmul %17, %19, %cst_20 {dimension_numbers = #tpu.dot_dimension_numbers<[1], [0], [0], [1], [0, 0, 1, 1], [], []>} : vector<4x128xbf16>, vector<128x128xbf16>, vector<4x128xf32> -> vector<4x128xf32>
    %21 = arith.addf %14, %20 : vector<4x128xf32>
    %c0_21 = arith.constant 0 : index
    %c1_22 = arith.constant 1 : index
    %c0_23 = arith.constant 0 : index
    %c0_24 = arith.constant 0 : index
    %22 = vector.load %arg1[%c0_21, %c1_22, %c0_23, %c0_24] : memref<1x4x4x128xbf16, #tpu.memory_space<vmem>>, vector<1x2x2x128xbf16>
    %23 = vector.shape_cast %22 : vector<1x2x2x128xbf16> to vector<2x2x128xbf16>
    %24 = vector.shape_cast %23 : vector<2x2x128xbf16> to vector<4x128xbf16>
    %c3 = arith.constant 3 : index
    %c0_25 = arith.constant 0 : index
    %c0_26 = arith.constant 0 : index
    %25 = vector.load %arg2[%c3, %c0_25, %c0_26] : memref<9x128x128xbf16, #tpu.memory_space<vmem>>, vector<1x128x128xbf16>
    %26 = vector.shape_cast %25 : vector<1x128x128xbf16> to vector<128x128xbf16>
    %cst_27 = arith.constant dense<0.000000e+00> : vector<4x128xf32>
    %27 = tpu.matmul %24, %26, %cst_27 {dimension_numbers = #tpu.dot_dimension_numbers<[1], [0], [0], [1], [0, 0, 1, 1], [], []>} : vector<4x128xbf16>, vector<128x128xbf16>, vector<4x128xf32> -> vector<4x128xf32>
    %28 = arith.addf %21, %27 : vector<4x128xf32>
    %c0_28 = arith.constant 0 : index
    %c1_29 = arith.constant 1 : index
    %c1_30 = arith.constant 1 : index
    %c0_31 = arith.constant 0 : index
    %29 = vector.load %arg1[%c0_28, %c1_29, %c1_30, %c0_31] : memref<1x4x4x128xbf16, #tpu.memory_space<vmem>>, vector<1x2x2x128xbf16>
    %30 = vector.shape_cast %29 : vector<1x2x2x128xbf16> to vector<2x2x128xbf16>
    %31 = vector.shape_cast %30 : vector<2x2x128xbf16> to vector<4x128xbf16>
    %c4 = arith.constant 4 : index
    %c0_32 = arith.constant 0 : index
    %c0_33 = arith.constant 0 : index
    %32 = vector.load %arg2[%c4, %c0_32, %c0_33] : memref<9x128x128xbf16, #tpu.memory_space<vmem>>, vector<1x128x128xbf16>
    %33 = vector.shape_cast %32 : vector<1x128x128xbf16> to vector<128x128xbf16>
    %cst_34 = arith.constant dense<0.000000e+00> : vector<4x128xf32>
    %34 = tpu.matmul %31, %33, %cst_34 {dimension_numbers = #tpu.dot_dimension_numbers<[1], [0], [0], [1], [0, 0, 1, 1], [], []>} : vector<4x128xbf16>, vector<128x128xbf16>, vector<4x128xf32> -> vector<4x128xf32>
    %35 = arith.addf %28, %34 : vector<4x128xf32>
    %c0_35 = arith.constant 0 : index
    %c1_36 = arith.constant 1 : index
    %c2_37 = arith.constant 2 : index
    %c0_38 = arith.constant 0 : index
    %36 = vector.load %arg1[%c0_35, %c1_36, %c2_37, %c0_38] : memref<1x4x4x128xbf16, #tpu.memory_space<vmem>>, vector<1x2x2x128xbf16>
    %37 = vector.shape_cast %36 : vector<1x2x2x128xbf16> to vector<2x2x128xbf16>
    %38 = vector.shape_cast %37 : vector<2x2x128xbf16> to vector<4x128xbf16>
    %c5 = arith.constant 5 : index
    %c0_39 = arith.constant 0 : index
    %c0_40 = arith.constant 0 : index
    %39 = vector.load %arg2[%c5, %c0_39, %c0_40] : memref<9x128x128xbf16, #tpu.memory_space<vmem>>, vector<1x128x128xbf16>
    %40 = vector.shape_cast %39 : vector<1x128x128xbf16> to vector<128x128xbf16>
    %cst_41 = arith.constant dense<0.000000e+00> : vector<4x128xf32>
    %41 = tpu.matmul %38, %40, %cst_41 {dimension_numbers = #tpu.dot_dimension_numbers<[1], [0], [0], [1], [0, 0, 1, 1], [], []>} : vector<4x128xbf16>, vector<128x128xbf16>, vector<4x128xf32> -> vector<4x128xf32>
    %42 = arith.addf %35, %41 : vector<4x128xf32>
    %c0_42 = arith.constant 0 : index
    %c2_43 = arith.constant 2 : index
    %c0_44 = arith.constant 0 : index
    %c0_45 = arith.constant 0 : index
    %43 = vector.load %arg1[%c0_42, %c2_43, %c0_44, %c0_45] : memref<1x4x4x128xbf16, #tpu.memory_space<vmem>>, vector<1x2x2x128xbf16>
    %44 = vector.shape_cast %43 : vector<1x2x2x128xbf16> to vector<2x2x128xbf16>
    %45 = vector.shape_cast %44 : vector<2x2x128xbf16> to vector<4x128xbf16>
    %c6 = arith.constant 6 : index
    %c0_46 = arith.constant 0 : index
    %c0_47 = arith.constant 0 : index
    %46 = vector.load %arg2[%c6, %c0_46, %c0_47] : memref<9x128x128xbf16, #tpu.memory_space<vmem>>, vector<1x128x128xbf16>
    %47 = vector.shape_cast %46 : vector<1x128x128xbf16> to vector<128x128xbf16>
    %cst_48 = arith.constant dense<0.000000e+00> : vector<4x128xf32>
    %48 = tpu.matmul %45, %47, %cst_48 {dimension_numbers = #tpu.dot_dimension_numbers<[1], [0], [0], [1], [0, 0, 1, 1], [], []>} : vector<4x128xbf16>, vector<128x128xbf16>, vector<4x128xf32> -> vector<4x128xf32>
    %49 = arith.addf %42, %48 : vector<4x128xf32>
    %c0_49 = arith.constant 0 : index
    %c2_50 = arith.constant 2 : index
    %c1_51 = arith.constant 1 : index
    %c0_52 = arith.constant 0 : index
    %50 = vector.load %arg1[%c0_49, %c2_50, %c1_51, %c0_52] : memref<1x4x4x128xbf16, #tpu.memory_space<vmem>>, vector<1x2x2x128xbf16>
    %51 = vector.shape_cast %50 : vector<1x2x2x128xbf16> to vector<2x2x128xbf16>
    %52 = vector.shape_cast %51 : vector<2x2x128xbf16> to vector<4x128xbf16>
    %c7 = arith.constant 7 : index
    %c0_53 = arith.constant 0 : index
    %c0_54 = arith.constant 0 : index
    %53 = vector.load %arg2[%c7, %c0_53, %c0_54] : memref<9x128x128xbf16, #tpu.memory_space<vmem>>, vector<1x128x128xbf16>
    %54 = vector.shape_cast %53 : vector<1x128x128xbf16> to vector<128x128xbf16>
    %cst_55 = arith.constant dense<0.000000e+00> : vector<4x128xf32>
    %55 = tpu.matmul %52, %54, %cst_55 {dimension_numbers = #tpu.dot_dimension_numbers<[1], [0], [0], [1], [0, 0, 1, 1], [], []>} : vector<4x128xbf16>, vector<128x128xbf16>, vector<4x128xf32> -> vector<4x128xf32>
    %56 = arith.addf %49, %55 : vector<4x128xf32>
    %c0_56 = arith.constant 0 : index
    %c2_57 = arith.constant 2 : index
    %c2_58 = arith.constant 2 : index
    %c0_59 = arith.constant 0 : index
    %57 = vector.load %arg1[%c0_56, %c2_57, %c2_58, %c0_59] : memref<1x4x4x128xbf16, #tpu.memory_space<vmem>>, vector<1x2x2x128xbf16>
    %58 = vector.shape_cast %57 : vector<1x2x2x128xbf16> to vector<2x2x128xbf16>
    %59 = vector.shape_cast %58 : vector<2x2x128xbf16> to vector<4x128xbf16>
    %c8 = arith.constant 8 : index
    %c0_60 = arith.constant 0 : index
    %c0_61 = arith.constant 0 : index
    %60 = vector.load %arg2[%c8, %c0_60, %c0_61] : memref<9x128x128xbf16, #tpu.memory_space<vmem>>, vector<1x128x128xbf16>
    %61 = vector.shape_cast %60 : vector<1x128x128xbf16> to vector<128x128xbf16>
    %cst_62 = arith.constant dense<0.000000e+00> : vector<4x128xf32>
    %62 = tpu.matmul %59, %61, %cst_62 {dimension_numbers = #tpu.dot_dimension_numbers<[1], [0], [0], [1], [0, 0, 1, 1], [], []>} : vector<4x128xbf16>, vector<128x128xbf16>, vector<4x128xf32> -> vector<4x128xf32>
    %63 = arith.addf %56, %62 : vector<4x128xf32>
    %c0_63 = arith.constant 0 : index
    %c0_64 = arith.constant 0 : index
    %64 = vector.load %arg3[%c0_63, %c0_64] : memref<1x128xf32, #tpu.memory_space<vmem>>, vector<1x128xf32>
    %65 = vector.broadcast %64 : vector<1x128xf32> to vector<4x128xf32>
    %66 = arith.mulf %63, %65 : vector<4x128xf32>
    %c0_65 = arith.constant 0 : index
    %c0_66 = arith.constant 0 : index
    %67 = vector.load %arg4[%c0_65, %c0_66] : memref<1x128xf32, #tpu.memory_space<vmem>>, vector<1x128xf32>
    %68 = vector.broadcast %67 : vector<1x128xf32> to vector<4x128xf32>
    %69 = arith.addf %66, %68 : vector<4x128xf32>
    %c0_67 = arith.constant 0 : index
    %c0_68 = arith.constant 0 : index
    %c0_69 = arith.constant 0 : index
    %70 = vector.load %arg5[%c0_67, %c0_68, %c0_69] : memref<1x4x64xbf16, #tpu.memory_space<vmem>>, vector<1x4x64xbf16>
    %71 = vector.shape_cast %70 : vector<1x4x64xbf16> to vector<4x64xbf16>
    %c0_70 = arith.constant 0 : index
    %c0_71 = arith.constant 0 : index
    %72 = vector.load %arg6[%c0_70, %c0_71] : memref<64x128xbf16, #tpu.memory_space<vmem>>, vector<64x128xbf16>
    %cst_72 = arith.constant dense<0.000000e+00> : vector<4x128xf32>
    %73 = tpu.matmul %71, %72, %cst_72 {dimension_numbers = #tpu.dot_dimension_numbers<[1], [0], [0], [1], [0, 0, 1, 1], [], []>} : vector<4x64xbf16>, vector<64x128xbf16>, vector<4x128xf32> -> vector<4x128xf32>
    %c0_73 = arith.constant 0 : index
    %c0_74 = arith.constant 0 : index
    %74 = vector.load %arg7[%c0_73, %c0_74] : memref<1x128xf32, #tpu.memory_space<vmem>>, vector<1x128xf32>
    %75 = vector.broadcast %74 : vector<1x128xf32> to vector<4x128xf32>
    %76 = arith.mulf %73, %75 : vector<4x128xf32>
    %77 = arith.addf %69, %76 : vector<4x128xf32>
    %c0_75 = arith.constant 0 : index
    %c0_76 = arith.constant 0 : index
    %78 = vector.load %arg8[%c0_75, %c0_76] : memref<1x128xf32, #tpu.memory_space<vmem>>, vector<1x128xf32>
    %79 = vector.broadcast %78 : vector<1x128xf32> to vector<4x128xf32>
    %80 = arith.addf %77, %79 : vector<4x128xf32>
    %cst_77 = arith.constant 0.000000e+00 : f32
    %81 = vector.broadcast %cst_77 : f32 to vector<4x128xf32>
    %82 = arith.maximumf %80, %81 : vector<4x128xf32>
    %83 = vector.shape_cast %82 : vector<4x128xf32> to vector<1x4x128xf32>
    %84 = arith.truncf %83 : vector<1x4x128xf32> to vector<1x4x128xbf16>
    %c0_78 = arith.constant 0 : index
    %c0_79 = arith.constant 0 : index
    %c0_80 = arith.constant 0 : index
    %85 = vector.load %arg9[%c0_78, %c0_79, %c0_80] : memref<1x4x128xbf16, #tpu.memory_space<vmem>>, vector<1x4x128xbf16>
    tpu.vector_store %arg9[%c0_78, %c0_79, %c0_80], %84 {strides = array<i32>} : memref<1x4x128xbf16, #tpu.memory_space<vmem>>, vector<1x4x128xbf16>,
    return
  }
  func.func @transform_0(%arg0: i32) -> (i32, i32, i32, i32) {
    %c0_i32 = arith.constant 0 : i32
    %c0_i32_0 = arith.constant 0 : i32
    %c0_i32_1 = arith.constant 0 : i32
    %c0_i32_2 = arith.constant 0 : i32
    return %arg0, %c0_i32, %c0_i32_0, %c0_i32_1 : i32, i32, i32, i32
  }
  func.func @transform_1(%arg0: i32) -> (i32, i32, i32) {
    %c0_i32 = arith.constant 0 : i32
    %c0_i32_0 = arith.constant 0 : i32
    %c0_i32_1 = arith.constant 0 : i32
    %c0_i32_2 = arith.constant 0 : i32
    return %c0_i32, %c0_i32_0, %c0_i32_1 : i32, i32, i32
  }
  func.func @transform_2(%arg0: i32) -> (i32, i32) {
    %c0_i32 = arith.constant 0 : i32
    %c0_i32_0 = arith.constant 0 : i32
    %c0_i32_1 = arith.constant 0 : i32
    return %c0_i32, %c0_i32_0 : i32, i32
  }
  func.func @transform_3(%arg0: i32) -> (i32, i32) {
    %c0_i32 = arith.constant 0 : i32
    %c0_i32_0 = arith.constant 0 : i32
    %c0_i32_1 = arith.constant 0 : i32
    return %c0_i32, %c0_i32_0 : i32, i32
  }
  func.func @transform_4(%arg0: i32) -> (i32, i32, i32) {
    %c0_i32 = arith.constant 0 : i32
    %c0_i32_0 = arith.constant 0 : i32
    %c0_i32_1 = arith.constant 0 : i32
    return %arg0, %c0_i32, %c0_i32_0 : i32, i32, i32
  }
  func.func @transform_5(%arg0: i32) -> (i32, i32) {
    %c0_i32 = arith.constant 0 : i32
    %c0_i32_0 = arith.constant 0 : i32
    %c0_i32_1 = arith.constant 0 : i32
    return %c0_i32, %c0_i32_0 : i32, i32
  }
  func.func @transform_6(%arg0: i32) -> (i32, i32) {
    %c0_i32 = arith.constant 0 : i32
    %c0_i32_0 = arith.constant 0 : i32
    %c0_i32_1 = arith.constant 0 : i32
    return %c0_i32, %c0_i32_0 : i32, i32
  }
  func.func @transform_7(%arg0: i32) -> (i32, i32) {
    %c0_i32 = arith.constant 0 : i32
    %c0_i32_0 = arith.constant 0 : i32
    %c0_i32_1 = arith.constant 0 : i32
    return %c0_i32, %c0_i32_0 : i32, i32
  }
  func.func @transform_8(%arg0: i32) -> (i32, i32, i32) {
    %c0_i32 = arith.constant 0 : i32
    %c0_i32_0 = arith.constant 0 : i32
    %c0_i32_1 = arith.constant 0 : i32
    return %arg0, %c0_i32, %c0_i32_0 : i32, i32, i32
  }
}

</mosaic_0001>

<llo_original>
// kernel: run.7
$region0: #{run.7}
  #allocation0 [shape = 'u32[]', space=smem, size = 0x4, offset = 0x4, fixed_abs, tag = 'smem constant byte address 0x4 - core index']
  #allocation1 [shape = 'u32[144,128]{1,0:T(1,128)}', space=vmem, size = 0x12000, scoped, tag = 'internal scratch']
  %s0 = inlined_call_operand.vmem [shape: bf16[8,5,5,64], index: 0, kind: input, shape index: {}]
  %s1 = inlined_call_operand.vmem [shape: bf16[2,16,64], index: 1, kind: output, shape index: {}]
  %s2 = sld [smem:[#allocation0]]
  $region37: #{run.7} parent=0
    _
  %s4 = ssub.s32 1, %s2
  %s5 = scalar_select 0, %s4, %s2
  loop: start=0, step=1, limit=4
  $region2: #{run.7} parent=0 // loop_pre_header
    _
  $region3: #{run.7} parent=0 // loop_header
    %s7 = sphi 0, %s11
    %p8 = scmp.ge.s32.totalorder %s7, 4
    %s17 = sphi 0, %s19
    %s20 = sphi 0, %s17
    %s21 = sphi 0, %s20
    %s37 = sphi 0, %s21
    %s43 = sphi 0, %s45
    %s46 = sphi 0, %s43
    %s47 = sphi 0, %s46
    %s63 = sphi 0, %s47
  $region4: #{run.7} parent=0 // loop_header_branch
    %10 = sbr.rel (%p8) target = $region8
  $region5: #{run.7} parent=0 // loop_body
    %s12 = ssub.s32 %s7, 1
    %s13 = ssub.s32 %s7, 2
    %s14 = sadd.s32 %s7, 1
    %s15 = ssub.s32 %s7, %s14
    %p16 = scmp.eq.s32.totalorder %s15, 0
    %s18 = sadd.s32 %s17, 1
    %s19 = scalar_select %p16, %s17, %s18
    %p22 = pneg %p16
    %p23 = scmp.eq.s32.totalorder %s7, 1
    %p24 = por %p22, %p23
    %p25 = scmp.ne.s32.totalorder %s17, %s20
    %p26 = scmp.eq.s32.totalorder %s7, 0
    %p27 = por %p25, %p26
    %p28 = scmp.ne.s32.totalorder %s17, %s20
    %p29 = scmp.eq.s32.totalorder %s12, 1
    %p30 = por %p28, %p29
    %p31 = scmp.ne.s32.totalorder %s20, %s21
    %p32 = scmp.eq.s32.totalorder %s12, 0
    %p33 = por %p31, %p32
    %p34 = scmp.ne.s32.totalorder %s20, %s21
    %p35 = scmp.eq.s32.totalorder %s13, 1
    %p36 = por %p34, %p35
    %p38 = scmp.ne.s32.totalorder %s21, %s37
    %p39 = scmp.eq.s32.totalorder %s13, 0
    %p40 = por %p38, %p39
    %s41 = ssub.s32 %s7, %s14
    %p42 = scmp.eq.s32.totalorder %s41, 0
    %s44 = sadd.s32 %s43, 1
    %s45 = scalar_select %p42, %s43, %s44
    %p48 = pneg %p42
    %p49 = scmp.eq.s32.totalorder %s7, 1
    %p50 = por %p48, %p49
    %p51 = scmp.ne.s32.totalorder %s43, %s46
    %p52 = scmp.eq.s32.totalorder %s7, 0
    %p53 = por %p51, %p52
    %p54 = scmp.ne.s32.totalorder %s43, %s46
    %p55 = scmp.eq.s32.totalorder %s12, 1
    %p56 = por %p54, %p55
    %p57 = scmp.ne.s32.totalorder %s46, %s47
    %p58 = scmp.eq.s32.totalorder %s12, 0
    %p59 = por %p57, %p58
    %p60 = scmp.ne.s32.totalorder %s46, %s47
    %p61 = scmp.eq.s32.totalorder %s13, 1
    %p62 = por %p60, %p61
    %p64 = scmp.ne.s32.totalorder %s47, %s63
    %p65 = scmp.eq.s32.totalorder %s13, 0
    %p66 = por %p64, %p65
    %p67 = scmp.le.s32.totalorder 1, %s7
    %p68 = scmp.lt.s32.totalorder %s7, 3
    %p69 = pnand %p67, %p68
    %p70 = pneg %p69
    // Predicated region
    $region9: #{run.7} parent=5 // pred_check
      _
    $region10: #{run.7} parent=5 // pred_check_branch
      %72 = sbr.rel (%p69) target = $region12
    $region11: #{run.7} parent=5 // pred_region
      %s73 = ssub.s32 %s7, 1
    $region12: #{run.7} parent=5 // pred_fallthru
      _
    %p74 = scmp.lt.s32.totalorder %s7, 2
    // Predicated region
    $region13: #{run.7} parent=5 // pred_check
      %p75 = pneg %p74
    $region14: #{run.7} parent=5 // pred_check_branch
      %77 = sbr.rel (%p75) target = $region16
    $region15: #{run.7} parent=5 // pred_region
      // Predicated region
      $region17: #{run.7} parent=15 // pred_check
        %p78 = pneg %p27
      $region18: #{run.7} parent=15 // pred_check_branch
        %80 = sbr.rel (%p78) target = $region20
      $region19: #{run.7} parent=15 // pred_region
        %s81 = smul.u32 4, %s7
        %p82 = scmp.lt.s32.totalorder %s81, 7
        %s83 = scalar_select %p82, %s81, 7
        %s84 = smul.addr %s83, 5
        %s85 = smul.addr %s84, 4
        %s86 = scalar_lea.vmem %s0, %s85
        %s87 = smul.u32 4, %s7
      $region20: #{run.7} parent=15 // pred_fallthru
        _
    $region16: #{run.7} parent=5 // pred_fallthru
      _
    %p88 = scmp.le.s32.totalorder 1, %s7
    %p89 = scmp.lt.s32.totalorder %s7, 3
    %p90 = pnand %p88, %p89
    %p91 = pneg %p90
    // Predicated region
    $region21: #{run.7} parent=5 // pred_check
      _
    $region22: #{run.7} parent=5 // pred_check_branch
      %93 = sbr.rel (%p90) target = $region24
    $region23: #{run.7} parent=5 // pred_region
      %s94 = ssub.s32 %s7, 1
      %s95 = smul.u32 4, %s12
      %p96 = scmp.lt.s32.totalorder %s95, 7
      %s97 = scalar_select %p96, %s95, 7
      %s98 = smul.addr %s97, 5
      %s99 = smul.addr %s98, 4
      %s100 = scalar_lea.vmem %s0, %s99
      %p101 = pneg %p33
      %p102 = pneg %p30
      %p103 = pneg %p59
      %p104 = pneg %p56
      %p105 = scmp.lt.s32.totalorder %s12, 1
      %s106 = scalar_select %p105, %s12, 1
      %s107 = smul.addr %s106, 2
      %s108 = smul.addr %s107, 4
      %s109 = scalar_lea.vmem %s1, %s108
      %s110 = smul.u32 4, %s12
      %p111 = scmp.lt.s32.totalorder %s110, 7
      %s112 = scalar_select %p111, %s110, 7
      %s113 = smul.addr %s112, 5
      %s114 = smul.addr %s113, 4
      %s115 = scalar_lea.vmem %s0, %s114
      %s116 = smul.u32 4, %s12
      %p117 = scmp.lt.s32.totalorder %s12, 1
      %s118 = scalar_select %p117, %s12, 1
      %s119 = smul.addr %s118, 2
      %s120 = smul.addr %s119, 4
      %s121 = scalar_lea.vmem %s1, %s120
      %v122 = vld [vmem:[%s115] sm:$0x3]
      %v123 = vld [vmem:[%s115 + $0x4] sm:$0x3]
      %v124 = vld [vmem:[%s115 + $0x8] sm:$0x3]
      %v125 = vld [vmem:[%s115 + $0xc] sm:$0x3]
      %s126 = scalar_lea.vmem %s115, 20
      %v127 = vld [vmem:[%s126] sm:$0x3]
      %v128 = vld [vmem:[%s126 + $0x4] sm:$0x3]
      %v129 = vld [vmem:[%s126 + $0x8] sm:$0x3]
      %v130 = vld [vmem:[%s126 + $0xc] sm:$0x3]
      %v131 = vmax.bf16 %v122, %v127
      %v132 = vmax.bf16 %v123, %v128
      %v133 = vmax.bf16 %v124, %v129
      %v134 = vmax.bf16 %v125, %v130
      %v135 = vld [vmem:[%s115] sm:$0x7]
      %v136 = vld [vmem:[%s115 + $0x4] sm:$0x7]
      %v137 = vld [vmem:[%s115 + $0x8] sm:$0x7]
      %v138 = vld [vmem:[%s115 + $0xc] sm:$0x7]
      %v140 = vshrl.u32 %v135, 16
      %v142 = vrot.slane %v140, 4
      %v143 = vshll.u32 %v135, 16
      %v145 = vrot.slane %v143, 5
      %v146 = vor.u32 %v142, %v145
      %v147 = vrot.slane %v146, 4
      %v149 = vshrl.u32 %v136, 16
      %v151 = vrot.slane %v149, 4
      %v152 = vshll.u32 %v136, 16
      %v154 = vrot.slane %v152, 5
      %v155 = vor.u32 %v151, %v154
      %v156 = vrot.slane %v155, 4
      %v158 = vshrl.u32 %v137, 16
      %v160 = vrot.slane %v158, 4
      %v161 = vshll.u32 %v137, 16
      %v163 = vrot.slane %v161, 5
      %v164 = vor.u32 %v160, %v163
      %v165 = vrot.slane %v164, 4
      %v167 = vshrl.u32 %v138, 16
      %v169 = vrot.slane %v167, 4
      %v170 = vshll.u32 %v138, 16
      %v172 = vrot.slane %v170, 5
      %v173 = vor.u32 %v169, %v172
      %v174 = vrot.slane %v173, 4
      %v179 = vmax.bf16 %v131, %v147
      %v180 = vmax.bf16 %v132, %v156
      %v181 = vmax.bf16 %v133, %v165
      %v182 = vmax.bf16 %v134, %v174
      %s183 = scalar_lea.vmem %s115, 40
      %v184 = vld [vmem:[%s183] sm:$0x3]
      %v185 = vld [vmem:[%s183 + $0x4] sm:$0x3]
      %v186 = vld [vmem:[%s183 + $0x8] sm:$0x3]
      %v187 = vld [vmem:[%s183 + $0xc] sm:$0x3]
      %v188 = vmax.bf16 %v179, %v184
      %v189 = vmax.bf16 %v180, %v185
      %v190 = vmax.bf16 %v181, %v186
      %v191 = vmax.bf16 %v182, %v187
      %s192 = scalar_lea.vmem %s115, 60
      %v193 = vld [vmem:[%s192] sm:$0x3]
      %v194 = vld [vmem:[%s192 + $0x4] sm:$0x3]
      %v195 = vld [vmem:[%s192 + $0x8] sm:$0x3]
      %v196 = vld [vmem:[%s192 + $0xc] sm:$0x3]
      %v197 = vmax.bf16 %v188, %v193
      %v198 = vmax.bf16 %v189, %v194
      %v199 = vmax.bf16 %v190, %v195
      %v200 = vmax.bf16 %v191, %v196
      %v201 = vld [vmem:[%s183] sm:$0x7]
      %v202 = vld [vmem:[%s183 + $0x4] sm:$0x7]
      %v203 = vld [vmem:[%s183 + $0x8] sm:$0x7]
      %v204 = vld [vmem:[%s183 + $0xc] sm:$0x7]
      %v206 = vshrl.u32 %v201, 16
      %v208 = vrot.slane %v206, 4
      %v209 = vshll.u32 %v201, 16
      %v211 = vrot.slane %v209, 5
      %v212 = vor.u32 %v208, %v211
      %v213 = vrot.slane %v212, 4
      %v215 = vshrl.u32 %v202, 16
      %v217 = vrot.slane %v215, 4
      %v218 = vshll.u32 %v202, 16
      %v220 = vrot.slane %v218, 5
      %v221 = vor.u32 %v217, %v220
      %v222 = vrot.slane %v221, 4
      %v224 = vshrl.u32 %v203, 16
      %v226 = vrot.slane %v224, 4
      %v227 = vshll.u32 %v203, 16
      %v229 = vrot.slane %v227, 5
      %v230 = vor.u32 %v226, %v229
      %v231 = vrot.slane %v230, 4
      %v233 = vshrl.u32 %v204, 16
      %v235 = vrot.slane %v233, 4
      %v236 = vshll.u32 %v204, 16
      %v238 = vrot.slane %v236, 5
      %v239 = vor.u32 %v235, %v238
      %v240 = vrot.slane %v239, 4
      %v245 = vmax.bf16 %v197, %v213
      %v246 = vmax.bf16 %v198, %v222
      %v247 = vmax.bf16 %v199, %v231
      %v248 = vmax.bf16 %v200, %v240
      %s249 = scalar_lea.vmem %s115, 4
      %v250 = vld [vmem:[%s249] sm:$0x3]
      %v251 = vld [vmem:[%s249 + $0x4] sm:$0x3]
      %v252 = vld [vmem:[%s249 + $0x8] sm:$0x3]
      %v253 = vld [vmem:[%s249 + $0xc] sm:$0x3]
      %v254 = vmax.bf16 %v245, %v250
      %v255 = vmax.bf16 %v246, %v251
      %v256 = vmax.bf16 %v247, %v252
      %v257 = vmax.bf16 %v248, %v253
      %s258 = scalar_lea.vmem %s115, 24
      %v259 = vld [vmem:[%s258] sm:$0x3]
      %v260 = vld [vmem:[%s258 + $0x4] sm:$0x3]
      %v261 = vld [vmem:[%s258 + $0x8] sm:$0x3]
      %v262 = vld [vmem:[%s258 + $0xc] sm:$0x3]
      %v263 = vmax.bf16 %v254, %v259
      %v264 = vmax.bf16 %v255, %v260
      %v265 = vmax.bf16 %v256, %v261
      %v266 = vmax.bf16 %v257, %v262
      %v267 = vld [vmem:[%s249] sm:$0x7]
      %v268 = vld [vmem:[%s249 + $0x4] sm:$0x7]
      %v269 = vld [vmem:[%s249 + $0x8] sm:$0x7]
      %v270 = vld [vmem:[%s249 + $0xc] sm:$0x7]
      %v272 = vshrl.u32 %v267, 16
      %v274 = vrot.slane %v272, 4
      %v275 = vshll.u32 %v267, 16
      %v277 = vrot.slane %v275, 5
      %v278 = vor.u32 %v274, %v277
      %v279 = vrot.slane %v278, 4
      %v281 = vshrl.u32 %v268, 16
      %v283 = vrot.slane %v281, 4
      %v284 = vshll.u32 %v268, 16
      %v286 = vrot.slane %v284, 5
      %v287 = vor.u32 %v283, %v286
      %v288 = vrot.slane %v287, 4
      %v290 = vshrl.u32 %v269, 16
      %v292 = vrot.slane %v290, 4
      %v293 = vshll.u32 %v269, 16
      %v295 = vrot.slane %v293, 5
      %v296 = vor.u32 %v292, %v295
      %v297 = vrot.slane %v296, 4
      %v299 = vshrl.u32 %v270, 16
      %v301 = vrot.slane %v299, 4
      %v302 = vshll.u32 %v270, 16
      %v304 = vrot.slane %v302, 5
      %v305 = vor.u32 %v301, %v304
      %v306 = vrot.slane %v305, 4
      %v311 = vmax.bf16 %v263, %v279
      %v312 = vmax.bf16 %v264, %v288
      %v313 = vmax.bf16 %v265, %v297
      %v314 = vmax.bf16 %v266, %v306
      %v319 = vcombine.low %v311, %v312
      %v321 = vunpack.c.l.s4 1983009808
      %v322 = vunpack.c.0.s8 %v321
      %v323 = vlaneseq
      %v324 = vshrl.u32 %v323, 7
      %v325 = vsub.s32 %v322, %v324
      %v326 = vrot.slane %v319, %v325
      %v327 = vcombine.low %v313, %v314
      %v329 = vunpack.c.l.s4 1983009808
      %v330 = vunpack.c.0.s8 %v329
      %v331 = vlaneseq
      %v332 = vshrl.u32 %v331, 7
      %v333 = vsub.s32 %v330, %v332
      %v334 = vrot.slane %v327, %v333
      %vm337 = vcmask 519168
      %338 = vst.msk [vmem:[%s121] sm:$0xf] %vm337, %v326
      %339 = vst.msk [vmem:[%s121 + $0x4] sm:$0xf] %vm337, %v334
      %p340 = scmp.lt.s32.totalorder %s12, 1
      %s341 = scalar_select %p340, %s12, 1
      %s342 = smul.addr %s341, 2
      %s343 = smul.addr %s342, 4
      %s344 = scalar_lea.vmem %s1, %s343
      // Predicated region
      $region25: #{run.7} parent=23 // pred_check
        %p345 = pneg %p56
      $region26: #{run.7} parent=23 // pred_check_branch
        %347 = sbr.rel (%p345) target = $region28
      $region27: #{run.7} parent=23 // pred_region
        _
      $region28: #{run.7} parent=23 // pred_fallthru
        _
    $region24: #{run.7} parent=5 // pred_fallthru
      _
    %p348 = scmp.le.s32.totalorder 2, %s7
    // Predicated region
    $region29: #{run.7} parent=5 // pred_check
      %p349 = pneg %p348
    $region30: #{run.7} parent=5 // pred_check_branch
      %351 = sbr.rel (%p349) target = $region32
    $region31: #{run.7} parent=5 // pred_region
      %s352 = ssub.s32 %s7, 2
      // Predicated region
      $region33: #{run.7} parent=31 // pred_check
        %p353 = pneg %p62
      $region34: #{run.7} parent=31 // pred_check_branch
        %355 = sbr.rel (%p353) target = $region36
      $region35: #{run.7} parent=31 // pred_region
        %p356 = scmp.lt.s32.totalorder %s13, 1
        %s357 = scalar_select %p356, %s13, 1
        %s358 = smul.addr %s357, 2
        %s359 = smul.addr %s358, 4
        %s360 = scalar_lea.vmem %s1, %s359
      $region36: #{run.7} parent=31 // pred_fallthru
        _
    $region32: #{run.7} parent=5 // pred_fallthru
      _
  $region6: #{run.7} parent=0 // loop_footer
    %s11 = sadd.s32 1, %s7
  $region7: #{run.7} parent=0 // loop_footer_branch
    %6 = sbr.rel target = $region3
  $region8: #{run.7} parent=0 // loop_exit
    _

// kernel: run.6
$region0: #{run.6}
  #allocation0 [shape = 'u32[]', space=smem, size = 0x4, offset = 0x4, fixed_abs, tag = 'smem constant byte address 0x4 - core index']
  #allocation1 [shape = 'u32[144,128]{1,0:T(1,128)}', space=vmem, size = 0x12000, scoped, tag = 'internal scratch']
  %s0 = inlined_call_operand.vmem [shape: bf16[128,160], index: 0, kind: input, shape index: {}]
  %s1 = inlined_call_operand.vmem [shape: bf16[160,64], index: 1, kind: input, shape index: {}]
  %s2 = inlined_call_operand.vmem [shape: f32[1,64], index: 2, kind: input, shape index: {}]
  %s3 = inlined_call_operand.vmem [shape: f32[1,64], index: 3, kind: input, shape index: {}]
  %s4 = inlined_call_operand.vmem [shape: bf16[128,64], index: 4, kind: output, shape index: {}]
  %s5 = sld [smem:[#allocation0]]
  $region26: #{run.6} parent=0
    _
  %s7 = ssub.s32 1, %s5
  %s8 = scalar_select 0, %s7, %s5
  // Predicated region
  $region2: #{run.6} parent=0 // pred_check
    _
  $region3: #{run.6} parent=0 // pred_check_branch
    %10 = sbr.rel (0) target = $region5
  $region4: #{run.6} parent=0 // pred_region
    _
  $region5: #{run.6} parent=0 // pred_fallthru
    _
  // Predicated region
  $region6: #{run.6} parent=0 // pred_check
    _
  $region7: #{run.6} parent=0 // pred_check_branch
    %12 = sbr.rel (0) target = $region9
  $region8: #{run.6} parent=0 // pred_region
    _
  $region9: #{run.6} parent=0 // pred_fallthru
    _
  // Predicated region
  $region10: #{run.6} parent=0 // pred_check
    _
  $region11: #{run.6} parent=0 // pred_check_branch
    %14 = sbr.rel (0) target = $region13
  $region12: #{run.6} parent=0 // pred_region
    _
  $region13: #{run.6} parent=0 // pred_fallthru
    _
  // Predicated region
  $region14: #{run.6} parent=0 // pred_check
    _
  $region15: #{run.6} parent=0 // pred_check_branch
    %16 = sbr.rel (0) target = $region17
  $region16: #{run.6} parent=0 // pred_region
    _
  $region17: #{run.6} parent=0 // pred_fallthru
    _
  %v18 = vld [vmem:[%s0] sm:$0xff]
  %v19 = vld [vmem:[%s0 + $0x8] sm:$0xff]
  %v20 = vld [vmem:[%s0 + $0x10] sm:$0xff]
  %v21 = vld [vmem:[%s0 + $0x18] sm:$0xff]
  %v22 = vld [vmem:[%s0 + $0x20] sm:$0xff]
  %v23 = vld [vmem:[%s0 + $0x28] sm:$0xff]
  %v24 = vld [vmem:[%s0 + $0x30] sm:$0xff]
  %v25 = vld [vmem:[%s0 + $0x38] sm:$0xff]
  %v26 = vld [vmem:[%s0 + $0x40] sm:$0xff]
  %v27 = vld [vmem:[%s0 + $0x48] sm:$0xff]
  %v28 = vld [vmem:[%s0 + $0x50] sm:$0xff]
  %v29 = vld [vmem:[%s0 + $0x58] sm:$0xff]
  %v30 = vld [vmem:[%s0 + $0x60] sm:$0xff]
  %v31 = vld [vmem:[%s0 + $0x68] sm:$0xff]
  %v32 = vld [vmem:[%s0 + $0x70] sm:$0xff]
  %v33 = vld [vmem:[%s0 + $0x78] sm:$0xff]
  %v34 = vld [vmem:[%s1] sm:$0xf]
  %v35 = vld [vmem:[%s1 + $0x4] sm:$0xf]
  %v36 = vld [vmem:[%s1 + $0x8] sm:$0xf]
  %v37 = vld [vmem:[%s1 + $0xc] sm:$0xf]
  %v38 = vld [vmem:[%s1 + $0x10] sm:$0xf]
  %v39 = vld [vmem:[%s1 + $0x14] sm:$0xf]
  %v40 = vld [vmem:[%s1 + $0x18] sm:$0xf]
  %v41 = vld [vmem:[%s1 + $0x1c] sm:$0xf]
  %v42 = vld [vmem:[%s1 + $0x20] sm:$0xf]
  %v43 = vld [vmem:[%s1 + $0x24] sm:$0xf]
  %v44 = vld [vmem:[%s1 + $0x28] sm:$0xf]
  %v45 = vld [vmem:[%s1 + $0x2c] sm:$0xf]
  %v46 = vld [vmem:[%s1 + $0x30] sm:$0xf]
  %v47 = vld [vmem:[%s1 + $0x34] sm:$0xf]
  %v48 = vld [vmem:[%s1 + $0x38] sm:$0xf]
  %v49 = vld [vmem:[%s1 + $0x3c] sm:$0xf]
  %v50 = vld [vmem:[%s1 + $0x40] sm:$0xf]
  %v51 = vld [vmem:[%s1 + $0x44] sm:$0xf]
  %v52 = vld [vmem:[%s1 + $0x48] sm:$0xf]
  %v53 = vld [vmem:[%s1 + $0x4c] sm:$0xf]
  %v70 = vunpack.c.l.b16 %v18
  %v71 = vunpack.c.h.b16 %v18
  %v72 = vunpack.c.l.b16 %v19
  %v73 = vunpack.c.h.b16 %v19
  %v74 = vunpack.c.l.b16 %v20
  %v75 = vunpack.c.h.b16 %v20
  %v76 = vunpack.c.l.b16 %v21
  %v77 = vunpack.c.h.b16 %v21
  %v78 = vunpack.c.l.b16 %v22
  %v79 = vunpack.c.h.b16 %v22
  %v80 = vunpack.c.l.b16 %v23
  %v81 = vunpack.c.h.b16 %v23
  %v82 = vunpack.c.l.b16 %v24
  %v83 = vunpack.c.h.b16 %v24
  %v84 = vunpack.c.l.b16 %v25
  %v85 = vunpack.c.h.b16 %v25
  %v86 = vunpack.c.l.b16 %v26
  %v87 = vunpack.c.h.b16 %v26
  %v88 = vunpack.c.l.b16 %v27
  %v89 = vunpack.c.h.b16 %v27
  %v90 = vunpack.c.l.b16 %v28
  %v91 = vunpack.c.h.b16 %v28
  %v92 = vunpack.c.l.b16 %v29
  %v93 = vunpack.c.h.b16 %v29
  %v94 = vunpack.c.l.b16 %v30
  %v95 = vunpack.c.h.b16 %v30
  %v96 = vunpack.c.l.b16 %v31
  %v97 = vunpack.c.h.b16 %v31
  %v98 = vunpack.c.l.b16 %v32
  %v99 = vunpack.c.h.b16 %v32
  %v100 = vunpack.c.l.b16 %v33
  %v101 = vunpack.c.h.b16 %v33
  %v102 = vpack.c.b16 %v72, %v70
  %v103 = vpack.c.b16 %v73, %v71
  %v104 = vpack.c.b16 %v76, %v74
  %v105 = vpack.c.b16 %v77, %v75
  %v106 = vpack.c.b16 %v80, %v78
  %v107 = vpack.c.b16 %v81, %v79
  %v108 = vpack.c.b16 %v84, %v82
  %v109 = vpack.c.b16 %v85, %v83
  %v110 = vpack.c.b16 %v88, %v86
  %v111 = vpack.c.b16 %v89, %v87
  %v112 = vpack.c.b16 %v92, %v90
  %v113 = vpack.c.b16 %v93, %v91
  %v114 = vpack.c.b16 %v96, %v94
  %v115 = vpack.c.b16 %v97, %v95
  %v116 = vpack.c.b16 %v100, %v98
  %v117 = vpack.c.b16 %v101, %v99
  %v146 = vunpack.c.l.b16 %v34
  %v147 = vunpack.c.l.b16 %v35
  %v148 = vunpack.c.l.b16 %v36
  %v149 = vunpack.c.l.b16 %v37
  %v150 = vunpack.c.l.b16 %v38
  %v151 = vunpack.c.l.b16 %v39
  %v152 = vunpack.c.l.b16 %v40
  %v153 = vunpack.c.l.b16 %v41
  %v154 = vunpack.c.l.b16 %v42
  %v155 = vunpack.c.l.b16 %v43
  %v156 = vunpack.c.l.b16 %v44
  %v157 = vunpack.c.l.b16 %v45
  %v158 = vunpack.c.l.b16 %v46
  %v159 = vunpack.c.l.b16 %v47
  %v160 = vunpack.c.l.b16 %v48
  %v161 = vunpack.c.l.b16 %v49
  %v162 = vunpack.c.l.b16 %v50
  %v163 = vunpack.c.l.b16 %v51
  %v164 = vunpack.c.l.b16 %v52
  %v165 = vunpack.c.l.b16 %v53
  %v166 = vpack.c.b16 %v147, %v146
  %v167 = vpack.c.b16 %v149, %v148
  %v168 = vpack.c.b16 %v151, %v150
  %v169 = vpack.c.b16 %v153, %v152
  %v170 = vpack.c.b16 %v155, %v154
  %v171 = vpack.c.b16 %v157, %v156
  %v172 = vpack.c.b16 %v159, %v158
  %v173 = vpack.c.b16 %v161, %v160
  %v174 = vpack.c.b16 %v163, %v162
  %v175 = vpack.c.b16 %v165, %v164
  %vm186 = vcmask 261120
  %v188 = vsel %vm186, %v103, 0
  %v191 = vsel %vm186, %v105, 0
  %v194 = vsel %vm186, %v107, 0
  %v197 = vsel %vm186, %v109, 0
  %v200 = vsel %vm186, %v111, 0
  %v203 = vsel %vm186, %v113, 0
  %v206 = vsel %vm186, %v115, 0
  %v209 = vsel %vm186, %v117, 0
  %211 = vmatprep.subr.bf16.mxu0 0
  %212 = vmatpush1.bf16.msra.mxu0 %v173
  %213 = vmatprep.subr.bf16.mxu0 0
  %214 = vmatpush1.bf16.msra.mxu0 %v172
  %215 = vmatprep.subr.bf16.mxu0 0
  %216 = vmatpush1.bf16.msra.mxu0 %v171
  %217 = vmatprep.subr.bf16.mxu0 0
  %218 = vmatpush1.bf16.msra.mxu0 %v170
  %219 = vmatprep.subr.bf16.mxu0 0
  %220 = vmatpush1.bf16.msra.mxu0 %v169
  %221 = vmatprep.subr.bf16.mxu0 0
  %222 = vmatpush1.bf16.msra.mxu0 %v168
  %223 = vmatprep.subr.bf16.mxu0 0
  %224 = vmatpush1.bf16.msra.mxu0 %v167
  %225 = vmatprep.subr.bf16.mxu0 0
  %226 = vmatpush1.bf16.msra.mxu0 %v166
  %227 = vmatprep.subr.bf16.mxu0 0
  %228 = vmatpush2.bf16.msra.mxu0 0
  %229 = vmatprep.subr.bf16.mxu0 0
  %230 = vmatpush2.bf16.msra.mxu0 0
  %231 = vmatprep.subr.bf16.mxu0 0
  %232 = vmatpush2.bf16.msra.mxu0 0
  %233 = vmatprep.subr.bf16.mxu0 0
  %234 = vmatpush2.bf16.msra.mxu0 0
  %235 = vmatprep.subr.bf16.mxu0 0
  %236 = vmatpush2.bf16.msra.mxu0 0
  %237 = vmatprep.subr.bf16.mxu0 0
  %238 = vmatpush2.bf16.msra.mxu0 0
  %239 = vmatprep.subr.bf16.mxu0 0
  %240 = vmatpush2.bf16.msra.mxu0 %v175
  %241 = vmatprep.subr.bf16.mxu0 0
  %242 = vmatpush2.bf16.msra.mxu0 %v174
  %243 = vmatprep.mubr.bf16.mxu0 %v188
  %244 = vmatmul.mubr.bf16.gmra.mxu0 %v102
  %v245 = vpop.f32.mrf.mxu0
  %v246 = vadd.f32 0.0, %v245
  %v247 = vpop.f32.mrf.mxu0
  %v248 = vpop.f32.mrf.mxu0
  %v249 = vadd.f32 0.0, %v248
  %v250 = vpop.f32.mrf.mxu0
  %251 = vmatprep.mubr.bf16.mxu0 %v191
  %252 = vmatmul.mubr.bf16.gmra.mxu0 %v104
  %v253 = vpop.f32.mrf.mxu0
  %v254 = vadd.f32 0.0, %v253
  %v255 = vpop.f32.mrf.mxu0
  %v256 = vpop.f32.mrf.mxu0
  %v257 = vadd.f32 0.0, %v256
  %v258 = vpop.f32.mrf.mxu0
  %259 = vmatprep.mubr.bf16.mxu0 %v194
  %260 = vmatmul.mubr.bf16.gmra.mxu0 %v106
  %v261 = vpop.f32.mrf.mxu0
  %v262 = vadd.f32 0.0, %v261
  %v263 = vpop.f32.mrf.mxu0
  %v264 = vpop.f32.mrf.mxu0
  %v265 = vadd.f32 0.0, %v264
  %v266 = vpop.f32.mrf.mxu0
  %267 = vmatprep.mubr.bf16.mxu0 %v197
  %268 = vmatmul.mubr.bf16.gmra.mxu0 %v108
  %v269 = vpop.f32.mrf.mxu0
  %v270 = vadd.f32 0.0, %v269
  %v271 = vpop.f32.mrf.mxu0
  %v272 = vpop.f32.mrf.mxu0
  %v273 = vadd.f32 0.0, %v272
  %v274 = vpop.f32.mrf.mxu0
  %275 = vmatprep.mubr.bf16.mxu0 %v200
  %276 = vmatmul.mubr.bf16.gmra.mxu0 %v110
  %v277 = vpop.f32.mrf.mxu0
  %v278 = vadd.f32 0.0, %v277
  %v279 = vpop.f32.mrf.mxu0
  %v280 = vpop.f32.mrf.mxu0
  %v281 = vadd.f32 0.0, %v280
  %v282 = vpop.f32.mrf.mxu0
  %283 = vmatprep.mubr.bf16.mxu0 %v203
  %284 = vmatmul.mubr.bf16.gmra.mxu0 %v112
  %v285 = vpop.f32.mrf.mxu0
  %v286 = vadd.f32 0.0, %v285
  %v287 = vpop.f32.mrf.mxu0
  %v288 = vpop.f32.mrf.mxu0
  %v289 = vadd.f32 0.0, %v288
  %v290 = vpop.f32.mrf.mxu0
  %291 = vmatprep.mubr.bf16.mxu0 %v206
  %292 = vmatmul.mubr.bf16.gmra.mxu0 %v114
  %v293 = vpop.f32.mrf.mxu0
  %v294 = vadd.f32 0.0, %v293
  %v295 = vpop.f32.mrf.mxu0
  %v296 = vpop.f32.mrf.mxu0
  %v297 = vadd.f32 0.0, %v296
  %v298 = vpop.f32.mrf.mxu0
  %299 = vmatprep.mubr.bf16.mxu0 %v209
  %300 = vmatmul.mubr.bf16.gmra.mxu0 %v116
  %v301 = vpop.f32.mrf.mxu0
  %v302 = vadd.f32 0.0, %v301
  %v303 = vpop.f32.mrf.mxu0
  %v304 = vpop.f32.mrf.mxu0
  %v305 = vadd.f32 0.0, %v304
  %v306 = vpop.f32.mrf.mxu0
  %307 = vdwg.mxu0
  %v308 = vld [vmem:[%s2] sm:$0x1]
  %v310 = vlaneseq
  %v311 = vshrl.u32 %v310, 7
  %v312 = vsub.s32 0, %v311
  %v313 = vrot.slane %v308, %v312
  %v315 = vmul.f32 %v246, %v313
  %v316 = vmul.f32 %v249, %v313
  %v317 = vmul.f32 %v254, %v313
  %v318 = vmul.f32 %v257, %v313
  %v319 = vmul.f32 %v262, %v313
  %v320 = vmul.f32 %v265, %v313
  %v321 = vmul.f32 %v270, %v313
  %v322 = vmul.f32 %v273, %v313
  %v323 = vmul.f32 %v278, %v313
  %v324 = vmul.f32 %v281, %v313
  %v325 = vmul.f32 %v286, %v313
  %v326 = vmul.f32 %v289, %v313
  %v327 = vmul.f32 %v294, %v313
  %v328 = vmul.f32 %v297, %v313
  %v329 = vmul.f32 %v302, %v313
  %v330 = vmul.f32 %v305, %v313
  %v331 = vld [vmem:[%s3] sm:$0x1]
  %v333 = vlaneseq
  %v334 = vshrl.u32 %v333, 7
  %v335 = vsub.s32 0, %v334
  %v336 = vrot.slane %v331, %v335
  %v338 = vadd.f32 %v315, %v336
  %v339 = vadd.f32 %v316, %v336
  %v340 = vadd.f32 %v317, %v336
  %v341 = vadd.f32 %v318, %v336
  %v342 = vadd.f32 %v319, %v336
  %v343 = vadd.f32 %v320, %v336
  %v344 = vadd.f32 %v321, %v336
  %v345 = vadd.f32 %v322, %v336
  %v346 = vadd.f32 %v323, %v336
  %v347 = vadd.f32 %v324, %v336
  %v348 = vadd.f32 %v325, %v336
  %v349 = vadd.f32 %v326, %v336
  %v350 = vadd.f32 %v327, %v336
  %v351 = vadd.f32 %v328, %v336
  %v352 = vadd.f32 %v329, %v336
  %v353 = vadd.f32 %v330, %v336
  %v354 = vmax.f32 %v338, 0.0
  %v355 = vmax.f32 %v339, 0.0
  %v356 = vmax.f32 %v340, 0.0
  %v357 = vmax.f32 %v341, 0.0
  %v358 = vmax.f32 %v342, 0.0
  %v359 = vmax.f32 %v343, 0.0
  %v360 = vmax.f32 %v344, 0.0
  %v361 = vmax.f32 %v345, 0.0
  %v362 = vmax.f32 %v346, 0.0
  %v363 = vmax.f32 %v347, 0.0
  %v364 = vmax.f32 %v348, 0.0
  %v365 = vmax.f32 %v349, 0.0
  %v366 = vmax.f32 %v350, 0.0
  %v367 = vmax.f32 %v351, 0.0
  %v368 = vmax.f32 %v352, 0.0
  %v369 = vmax.f32 %v353, 0.0
  %v370 = vpack.c.bf16 %v355, %v354
  %v371 = vpack.c.bf16 %v357, %v356
  %v372 = vpack.c.bf16 %v359, %v358
  %v373 = vpack.c.bf16 %v361, %v360
  %v374 = vpack.c.bf16 %v363, %v362
  %v375 = vpack.c.bf16 %v365, %v364
  %v376 = vpack.c.bf16 %v367, %v366
  %v377 = vpack.c.bf16 %v369, %v368
  %v386 = vunpack.c.l.b16 %v370
  %v387 = vunpack.c.h.b16 %v370
  %v388 = vunpack.c.l.b16 %v371
  %v389 = vunpack.c.h.b16 %v371
  %v390 = vunpack.c.l.b16 %v372
  %v391 = vunpack.c.h.b16 %v372
  %v392 = vunpack.c.l.b16 %v373
  %v393 = vunpack.c.h.b16 %v373
  %v394 = vunpack.c.l.b16 %v374
  %v395 = vunpack.c.h.b16 %v374
  %v396 = vunpack.c.l.b16 %v375
  %v397 = vunpack.c.h.b16 %v375
  %v398 = vunpack.c.l.b16 %v376
  %v399 = vunpack.c.h.b16 %v376
  %v400 = vunpack.c.l.b16 %v377
  %v401 = vunpack.c.h.b16 %v377
  %v402 = vpack.c.b16 %v386, %v386
  %v403 = vpack.c.b16 %v387, %v387
  %v404 = vpack.c.b16 %v388, %v388
  %v405 = vpack.c.b16 %v389, %v389
  %v406 = vpack.c.b16 %v390, %v390
  %v407 = vpack.c.b16 %v391, %v391
  %v408 = vpack.c.b16 %v392, %v392
  %v409 = vpack.c.b16 %v393, %v393
  %v410 = vpack.c.b16 %v394, %v394
  %v411 = vpack.c.b16 %v395, %v395
  %v412 = vpack.c.b16 %v396, %v396
  %v413 = vpack.c.b16 %v397, %v397
  %v414 = vpack.c.b16 %v398, %v398
  %v415 = vpack.c.b16 %v399, %v399
  %v416 = vpack.c.b16 %v400, %v400
  %v417 = vpack.c.b16 %v401, %v401
  %vm434 = vcmask 519168
  %435 = vst.msk [vmem:[%s4] sm:$0xf] %vm434, %v402
  %436 = vst.msk [vmem:[%s4 + $0x4] sm:$0xf] %vm434, %v403
  %437 = vst.msk [vmem:[%s4 + $0x8] sm:$0xf] %vm434, %v404
  %438 = vst.msk [vmem:[%s4 + $0xc] sm:$0xf] %vm434, %v405
  %439 = vst.msk [vmem:[%s4 + $0x10] sm:$0xf] %vm434, %v406
  %440 = vst.msk [vmem:[%s4 + $0x14] sm:$0xf] %vm434, %v407
  %441 = vst.msk [vmem:[%s4 + $0x18] sm:$0xf] %vm434, %v408
  %442 = vst.msk [vmem:[%s4 + $0x1c] sm:$0xf] %vm434, %v409
  %443 = vst.msk [vmem:[%s4 + $0x20] sm:$0xf] %vm434, %v410
  %444 = vst.msk [vmem:[%s4 + $0x24] sm:$0xf] %vm434, %v411
  %445 = vst.msk [vmem:[%s4 + $0x28] sm:$0xf] %vm434, %v412
  %446 = vst.msk [vmem:[%s4 + $0x2c] sm:$0xf] %vm434, %v413
  %447 = vst.msk [vmem:[%s4 + $0x30] sm:$0xf] %vm434, %v414
  %448 = vst.msk [vmem:[%s4 + $0x34] sm:$0xf] %vm434, %v415
  %449 = vst.msk [vmem:[%s4 + $0x38] sm:$0xf] %vm434, %v416
  %450 = vst.msk [vmem:[%s4 + $0x3c] sm:$0xf] %vm434, %v417
  // Predicated region
  $region18: #{run.6} parent=0 // pred_check
    _
  $region19: #{run.6} parent=0 // pred_check_branch
    %452 = sbr.rel (0) target = $region21
  $region20: #{run.6} parent=0 // pred_region
    _
  $region21: #{run.6} parent=0 // pred_fallthru
    _
  // Predicated region
  $region22: #{run.6} parent=0 // pred_check
    _
  $region23: #{run.6} parent=0 // pred_check_branch
    %454 = sbr.rel (0) target = $region25
  $region24: #{run.6} parent=0 // pred_region
    _
  $region25: #{run.6} parent=0 // pred_fallthru
    _

// kernel: run.8
$region0: #{run.8}
  #allocation0 [shape = 'u32[]', space=smem, size = 0x4, offset = 0x4, fixed_abs, tag = 'smem constant byte address 0x4 - core index']
  #allocation1 [shape = 'u32[144,128]{1,0:T(1,128)}', space=vmem, size = 0x12000, scoped, tag = 'internal scratch']
  %s0 = inlined_call_operand.vmem [shape: bf16[2,6,6,64], index: 0, kind: input, shape index: {}]
  %s1 = inlined_call_operand.vmem [shape: bf16[9,64,64], index: 1, kind: input, shape index: {}]
  %s2 = inlined_call_operand.vmem [shape: f32[1,64], index: 2, kind: input, shape index: {}]
  %s3 = inlined_call_operand.vmem [shape: f32[1,64], index: 3, kind: input, shape index: {}]
  %s4 = inlined_call_operand.vmem [shape: bf16[2,16,64], index: 4, kind: output, shape index: {}]
  %s5 = sld [smem:[#allocation0]]
  $region49: #{run.8} parent=0
    _
  %s7 = ssub.s32 1, %s5
  %s8 = scalar_select 0, %s7, %s5
  loop: start=0, step=1, limit=4
  $region2: #{run.8} parent=0 // loop_pre_header
    _
  $region3: #{run.8} parent=0 // loop_header
    %s10 = sphi 0, %s14
    %p11 = scmp.ge.s32.totalorder %s10, 4
    %s20 = sphi 0, %s22
    %s23 = sphi 0, %s20
    %s24 = sphi 0, %s23
    %s40 = sphi 0, %s24
    %s44 = sphi 0, %s44
    %s46 = sphi 0, %s44
    %s47 = sphi 0, %s46
    %s61 = sphi 0, %s47
    %s65 = sphi 0, %s65
    %s67 = sphi 0, %s65
    %s68 = sphi 0, %s67
    %s82 = sphi 0, %s68
    %s86 = sphi 0, %s86
    %s88 = sphi 0, %s86
    %s89 = sphi 0, %s88
    %s103 = sphi 0, %s89
    %s109 = sphi 0, %s111
    %s112 = sphi 0, %s109
    %s113 = sphi 0, %s112
    %s129 = sphi 0, %s113
  $region4: #{run.8} parent=0 // loop_header_branch
    %13 = sbr.rel (%p11) target = $region8
  $region5: #{run.8} parent=0 // loop_body
    %s15 = ssub.s32 %s10, 1
    %s16 = ssub.s32 %s10, 2
    %s17 = sadd.s32 %s10, 1
    %s18 = ssub.s32 %s10, %s17
    %p19 = scmp.eq.s32.totalorder %s18, 0
    %s21 = sadd.s32 %s20, 1
    %s22 = scalar_select %p19, %s20, %s21
    %p25 = pneg %p19
    %p26 = scmp.eq.s32.totalorder %s10, 1
    %p27 = por %p25, %p26
    %p28 = scmp.ne.s32.totalorder %s20, %s23
    %p29 = scmp.eq.s32.totalorder %s10, 0
    %p30 = por %p28, %p29
    %p31 = scmp.ne.s32.totalorder %s20, %s23
    %p32 = scmp.eq.s32.totalorder %s15, 1
    %p33 = por %p31, %p32
    %p34 = scmp.ne.s32.totalorder %s23, %s24
    %p35 = scmp.eq.s32.totalorder %s15, 0
    %p36 = por %p34, %p35
    %p37 = scmp.ne.s32.totalorder %s23, %s24
    %p38 = scmp.eq.s32.totalorder %s16, 1
    %p39 = por %p37, %p38
    %p41 = scmp.ne.s32.totalorder %s24, %s40
    %p42 = scmp.eq.s32.totalorder %s16, 0
    %p43 = por %p41, %p42
    %s45 = sadd.s32 %s44, 1
    %p48 = scmp.eq.s32.totalorder %s10, 1
    %p49 = scmp.ne.s32.totalorder %s44, %s46
    %p50 = scmp.eq.s32.totalorder %s10, 0
    %p51 = por %p49, %p50
    %p52 = scmp.ne.s32.totalorder %s44, %s46
    %p53 = scmp.eq.s32.totalorder %s15, 1
    %p54 = por %p52, %p53
    %p55 = scmp.ne.s32.totalorder %s46, %s47
    %p56 = scmp.eq.s32.totalorder %s15, 0
    %p57 = por %p55, %p56
    %p58 = scmp.ne.s32.totalorder %s46, %s47
    %p59 = scmp.eq.s32.totalorder %s16, 1
    %p60 = por %p58, %p59
    %p62 = scmp.ne.s32.totalorder %s47, %s61
    %p63 = scmp.eq.s32.totalorder %s16, 0
    %p64 = por %p62, %p63
    %s66 = sadd.s32 %s65, 1
    %p69 = scmp.eq.s32.totalorder %s10, 1
    %p70 = scmp.ne.s32.totalorder %s65, %s67
    %p71 = scmp.eq.s32.totalorder %s10, 0
    %p72 = por %p70, %p71
    %p73 = scmp.ne.s32.totalorder %s65, %s67
    %p74 = scmp.eq.s32.totalorder %s15, 1
    %p75 = por %p73, %p74
    %p76 = scmp.ne.s32.totalorder %s67, %s68
    %p77 = scmp.eq.s32.totalorder %s15, 0
    %p78 = por %p76, %p77
    %p79 = scmp.ne.s32.totalorder %s67, %s68
    %p80 = scmp.eq.s32.totalorder %s16, 1
    %p81 = por %p79, %p80
    %p83 = scmp.ne.s32.totalorder %s68, %s82
    %p84 = scmp.eq.s32.totalorder %s16, 0
    %p85 = por %p83, %p84
    %s87 = sadd.s32 %s86, 1
    %p90 = scmp.eq.s32.totalorder %s10, 1
    %p91 = scmp.ne.s32.totalorder %s86, %s88
    %p92 = scmp.eq.s32.totalorder %s10, 0
    %p93 = por %p91, %p92
    %p94 = scmp.ne.s32.totalorder %s86, %s88
    %p95 = scmp.eq.s32.totalorder %s15, 1
    %p96 = por %p94, %p95
    %p97 = scmp.ne.s32.totalorder %s88, %s89
    %p98 = scmp.eq.s32.totalorder %s15, 0
    %p99 = por %p97, %p98
    %p100 = scmp.ne.s32.totalorder %s88, %s89
    %p101 = scmp.eq.s32.totalorder %s16, 1
    %p102 = por %p100, %p101
    %p104 = scmp.ne.s32.totalorder %s89, %s103
    %p105 = scmp.eq.s32.totalorder %s16, 0
    %p106 = por %p104, %p105
    %s107 = ssub.s32 %s10, %s17
    %p108 = scmp.eq.s32.totalorder %s107, 0
    %s110 = sadd.s32 %s109, 1
    %s111 = scalar_select %p108, %s109, %s110
    %p114 = pneg %p108
    %p115 = scmp.eq.s32.totalorder %s10, 1
    %p116 = por %p114, %p115
    %p117 = scmp.ne.s32.totalorder %s109, %s112
    %p118 = scmp.eq.s32.totalorder %s10, 0
    %p119 = por %p117, %p118
    %p120 = scmp.ne.s32.totalorder %s109, %s112
    %p121 = scmp.eq.s32.totalorder %s15, 1
    %p122 = por %p120, %p121
    %p123 = scmp.ne.s32.totalorder %s112, %s113
    %p124 = scmp.eq.s32.totalorder %s15, 0
    %p125 = por %p123, %p124
    %p126 = scmp.ne.s32.totalorder %s112, %s113
    %p127 = scmp.eq.s32.totalorder %s16, 1
    %p128 = por %p126, %p127
    %p130 = scmp.ne.s32.totalorder %s113, %s129
    %p131 = scmp.eq.s32.totalorder %s16, 0
    %p132 = por %p130, %p131
    %p133 = scmp.le.s32.totalorder 1, %s10
    %p134 = scmp.lt.s32.totalorder %s10, 3
    %p135 = pnand %p133, %p134
    %p136 = pneg %p135
    // Predicated region
    $region9: #{run.8} parent=5 // pred_check
      _
    $region10: #{run.8} parent=5 // pred_check_branch
      %138 = sbr.rel (%p135) target = $region12
    $region11: #{run.8} parent=5 // pred_region
      %s139 = ssub.s32 %s10, 1
      // Predicated region
      $region13: #{run.8} parent=11 // pred_check
        %p140 = pneg %p57
      $region14: #{run.8} parent=11 // pred_check_branch
        %142 = sbr.rel (%p140) target = $region16
      $region15: #{run.8} parent=11 // pred_region
        _
      $region16: #{run.8} parent=11 // pred_fallthru
        _
      // Predicated region
      $region17: #{run.8} parent=11 // pred_check
        %p143 = pneg %p78
      $region18: #{run.8} parent=11 // pred_check_branch
        %145 = sbr.rel (%p143) target = $region20
      $region19: #{run.8} parent=11 // pred_region
        _
      $region20: #{run.8} parent=11 // pred_fallthru
        _
      // Predicated region
      $region21: #{run.8} parent=11 // pred_check
        %p146 = pneg %p99
      $region22: #{run.8} parent=11 // pred_check_branch
        %148 = sbr.rel (%p146) target = $region24
      $region23: #{run.8} parent=11 // pred_region
        _
      $region24: #{run.8} parent=11 // pred_fallthru
        _
    $region12: #{run.8} parent=5 // pred_fallthru
      _
    %p149 = scmp.lt.s32.totalorder %s10, 2
    // Predicated region
    $region25: #{run.8} parent=5 // pred_check
      %p150 = pneg %p149
    $region26: #{run.8} parent=5 // pred_check_branch
      %152 = sbr.rel (%p150) target = $region28
    $region27: #{run.8} parent=5 // pred_region
      // Predicated region
      $region29: #{run.8} parent=27 // pred_check
        %p153 = pneg %p30
      $region30: #{run.8} parent=27 // pred_check_branch
        %155 = sbr.rel (%p153) target = $region32
      $region31: #{run.8} parent=27 // pred_region
        %p156 = scmp.lt.s32.totalorder %s10, 1
        %s157 = scalar_select %p156, %s10, 1
        %s158 = smul.addr %s157, 6
        %s159 = smul.addr %s158, 4
        %s160 = scalar_lea.vmem %s0, %s159
      $region32: #{run.8} parent=27 // pred_fallthru
        _
    $region28: #{run.8} parent=5 // pred_fallthru
      _
    %p161 = scmp.le.s32.totalorder 1, %s10
    %p162 = scmp.lt.s32.totalorder %s10, 3
    %p163 = pnand %p161, %p162
    %p164 = pneg %p163
    // Predicated region
    $region33: #{run.8} parent=5 // pred_check
      _
    $region34: #{run.8} parent=5 // pred_check_branch
      %166 = sbr.rel (%p163) target = $region36
    $region35: #{run.8} parent=5 // pred_region
      %s167 = ssub.s32 %s10, 1
      %p168 = scmp.lt.s32.totalorder %s15, 1
      %s169 = scalar_select %p168, %s15, 1
      %s170 = smul.addr %s169, 6
      %s171 = smul.addr %s170, 4
      %s172 = scalar_lea.vmem %s0, %s171
      %p173 = pneg %p36
      %p174 = pneg %p33
      %p175 = pneg %p57
      %p176 = pneg %p54
      %p177 = pneg %p78
      %p178 = pneg %p75
      %p179 = pneg %p99
      %p180 = pneg %p96
      %p181 = pneg %p125
      %p182 = pneg %p122
      %p183 = scmp.lt.s32.totalorder %s15, 1
      %s184 = scalar_select %p183, %s15, 1
      %s185 = smul.addr %s184, 2
      %s186 = smul.addr %s185, 4
      %s187 = scalar_lea.vmem %s4, %s186
      %p188 = scmp.lt.s32.totalorder %s15, 1
      %s189 = scalar_select %p188, %s15, 1
      %s190 = smul.addr %s189, 6
      %s191 = smul.addr %s190, 4
      %s192 = scalar_lea.vmem %s0, %s191
      %p193 = scmp.lt.s32.totalorder %s15, 1
      %s194 = scalar_select %p193, %s15, 1
      %s195 = smul.addr %s194, 2
      %s196 = smul.addr %s195, 4
      %s197 = scalar_lea.vmem %s4, %s196
      %v199 = vld [vmem:[%s192] sm:$0x3]
      %v200 = vld [vmem:[%s192 + $0x4] sm:$0x3]
      %v201 = vld [vmem:[%s192 + $0x8] sm:$0x3]
      %v202 = vld [vmem:[%s192 + $0xc] sm:$0x3]
      %v203 = vld [vmem:[%s1] sm:$0xf]
      %v204 = vld [vmem:[%s1 + $0x4] sm:$0xf]
      %v205 = vld [vmem:[%s1 + $0x8] sm:$0xf]
      %v206 = vld [vmem:[%s1 + $0xc] sm:$0xf]
      %v207 = vld [vmem:[%s1 + $0x10] sm:$0xf]
      %v208 = vld [vmem:[%s1 + $0x14] sm:$0xf]
      %v209 = vld [vmem:[%s1 + $0x18] sm:$0xf]
      %v210 = vld [vmem:[%s1 + $0x1c] sm:$0xf]
      %v211 = vld [vmem:[%s192] sm:$0x7]
      %v212 = vld [vmem:[%s192 + $0x4] sm:$0x7]
      %v213 = vld [vmem:[%s192 + $0x8] sm:$0x7]
      %v214 = vld [vmem:[%s192 + $0xc] sm:$0x7]
      %v220 = vunpack.c.l.s4 1983009808
      %v221 = vunpack.c.0.s8 %v220
      %v222 = vlaneseq
      %v223 = vshrl.u32 %v222, 7
      %v224 = vsub.s32 %v221, %v223
      %v225 = vrot.slane %v211, %v224
      %v226 = vcombine.high %v225, %v225
      %v228 = vunpack.c.l.s4 1983009808
      %v229 = vunpack.c.0.s8 %v228
      %v230 = vlaneseq
      %v231 = vshrl.u32 %v230, 7
      %v232 = vsub.s32 %v229, %v231
      %v233 = vrot.slane %v212, %v232
      %v234 = vcombine.high %v233, %v233
      %v236 = vunpack.c.l.s4 1983009808
      %v237 = vunpack.c.0.s8 %v236
      %v238 = vlaneseq
      %v239 = vshrl.u32 %v238, 7
      %v240 = vsub.s32 %v237, %v239
      %v241 = vrot.slane %v213, %v240
      %v242 = vcombine.high %v241, %v241
      %v244 = vunpack.c.l.s4 1983009808
      %v245 = vunpack.c.0.s8 %v244
      %v246 = vlaneseq
      %v247 = vshrl.u32 %v246, 7
      %v248 = vsub.s32 %v245, %v247
      %v249 = vrot.slane %v214, %v248
      %v250 = vcombine.high %v249, %v249
      %vm251 = vsmask.f32 1280
      %vm252 = vsmask.f32 3336
      %vm253 = vmor %vm251, %vm252
      %vm254 = vsmask.f32 5392
      %vm255 = vmor %vm253, %vm254
      %vm256 = vsmask.f32 7448
      %vm257 = vmor %vm255, %vm256
      %v259 = vshrl.u32 %v225, 16
      %v261 = vrot.slane %v259, 6
      %v262 = vshll.u32 %v225, 16
      %v264 = vrot.slane %v262, 7
      %v265 = vor.u32 %v261, %v264
      %v266 = vrot.slane %v265, 2
      %v268 = vshll.u32 %v226, 16
      %v270 = vrot.slane %v268, 7
      %v271 = vsel %vm257, %v266, %v270
      %v273 = vshrl.u32 %v233, 16
      %v275 = vrot.slane %v273, 6
      %v276 = vshll.u32 %v233, 16
      %v278 = vrot.slane %v276, 7
      %v279 = vor.u32 %v275, %v278
      %v280 = vrot.slane %v279, 2
      %v282 = vshll.u32 %v234, 16
      %v284 = vrot.slane %v282, 7
      %v285 = vsel %vm257, %v280, %v284
      %v287 = vshrl.u32 %v241, 16
      %v289 = vrot.slane %v287, 6
      %v290 = vshll.u32 %v241, 16
      %v292 = vrot.slane %v290, 7
      %v293 = vor.u32 %v289, %v292
      %v294 = vrot.slane %v293, 2
      %v296 = vshll.u32 %v242, 16
      %v298 = vrot.slane %v296, 7
      %v299 = vsel %vm257, %v294, %v298
      %v301 = vshrl.u32 %v249, 16
      %v303 = vrot.slane %v301, 6
      %v304 = vshll.u32 %v249, 16
      %v306 = vrot.slane %v304, 7
      %v307 = vor.u32 %v303, %v306
      %v308 = vrot.slane %v307, 2
      %v310 = vshll.u32 %v250, 16
      %v312 = vrot.slane %v310, 7
      %v313 = vsel %vm257, %v308, %v312
      %s314 = scalar_lea.vmem %s1, 32
      %v315 = vld [vmem:[%s314] sm:$0xf]
      %v316 = vld [vmem:[%s314 + $0x4] sm:$0xf]
      %v317 = vld [vmem:[%s314 + $0x8] sm:$0xf]
      %v318 = vld [vmem:[%s314 + $0xc] sm:$0xf]
      %v319 = vld [vmem:[%s314 + $0x10] sm:$0xf]
      %v320 = vld [vmem:[%s314 + $0x14] sm:$0xf]
      %v321 = vld [vmem:[%s314 + $0x18] sm:$0xf]
      %v322 = vld [vmem:[%s314 + $0x1c] sm:$0xf]
      %v323 = vcombine.low %v271, %v285
      %v324 = vcombine.low %v299, %v313
      %v326 = vunpack.c.l.s4 1983009808
      %v327 = vunpack.c.0.s8 %v326
      %v328 = vlaneseq
      %v329 = vshrl.u32 %v328, 7
      %v330 = vsub.s32 %v327, %v329
      %v331 = vrot.slane %v323, %v330
      %v333 = vunpack.c.l.s4 1983009808
      %v334 = vunpack.c.0.s8 %v333
      %v335 = vlaneseq
      %v336 = vshrl.u32 %v335, 7
      %v337 = vsub.s32 %v334, %v336
      %v338 = vrot.slane %v324, %v337
      %v339 = vcombine.low %v331, %v338
      %v348 = vunpack.c.l.b16 %v315
      %v349 = vunpack.c.l.b16 %v316
      %v350 = vunpack.c.l.b16 %v317
      %v351 = vunpack.c.l.b16 %v318
      %v352 = vunpack.c.l.b16 %v319
      %v353 = vunpack.c.l.b16 %v320
      %v354 = vunpack.c.l.b16 %v321
      %v355 = vunpack.c.l.b16 %v322
      %v356 = vpack.c.b16 %v349, %v348
      %v357 = vpack.c.b16 %v351, %v350
      %v358 = vpack.c.b16 %v353, %v352
      %v359 = vpack.c.b16 %v355, %v354
      %vm364 = vcmask 523264
      %v366 = vsel %vm364, %v339, 0
      %368 = vmatprep.subr.bf16.mxu0 0
      %369 = vmatpush1.bf16.msra.mxu0 0
      %370 = vmatprep.subr.bf16.mxu0 0
      %371 = vmatpush1.bf16.msra.mxu0 0
      %372 = vmatprep.subr.bf16.mxu0 0
      %373 = vmatpush1.bf16.msra.mxu0 0
      %374 = vmatprep.subr.bf16.mxu0 0
      %375 = vmatpush1.bf16.msra.mxu0 0
      %376 = vmatprep.subr.bf16.mxu0 0
      %377 = vmatpush1.bf16.msra.mxu0 %v359
      %378 = vmatprep.subr.bf16.mxu0 0
      %379 = vmatpush1.bf16.msra.mxu0 %v358
      %380 = vmatprep.subr.bf16.mxu0 0
      %381 = vmatpush1.bf16.msra.mxu0 %v357
      %382 = vmatprep.subr.bf16.mxu0 0
      %383 = vmatpush1.bf16.msra.mxu0 %v356
      %384 = vmatprep.subr.bf16.mxu0 0
      %385 = vmatpush2.bf16.msra.mxu0 0
      %386 = vmatprep.subr.bf16.mxu0 0
      %387 = vmatpush2.bf16.msra.mxu0 0
      %388 = vmatprep.subr.bf16.mxu0 0
      %389 = vmatpush2.bf16.msra.mxu0 0
      %390 = vmatprep.subr.bf16.mxu0 0
      %391 = vmatpush2.bf16.msra.mxu0 0
      %392 = vmatprep.subr.bf16.mxu0 0
      %393 = vmatpush2.bf16.msra.mxu0 0
      %394 = vmatprep.subr.bf16.mxu0 0
      %395 = vmatpush2.bf16.msra.mxu0 0
      %396 = vmatprep.subr.bf16.mxu0 0
      %397 = vmatpush2.bf16.msra.mxu0 0
      %398 = vmatprep.subr.bf16.mxu0 0
      %399 = vmatpush2.bf16.msra.mxu0 0
      %400 = vmatprep.mubr.bf16.mxu0 0
      %401 = vmatmul.mubr.bf16.gmra.mxu0 %v366
      %v402 = vpop.f32.mrf.mxu0
      %v403 = vadd.f32 0.0, %v402
      %v404 = vpop.f32.mrf.mxu0
      %v405 = vpop.f32.mrf.mxu0
      %v406 = vadd.f32 0.0, %v405
      %v407 = vpop.f32.mrf.mxu0
      %408 = vdwg.mxu0
      %v413 = vcombine.low %v199, %v200
      %v414 = vcombine.low %v201, %v202
      %v416 = vunpack.c.l.s4 1983009808
      %v417 = vunpack.c.0.s8 %v416
      %v418 = vlaneseq
      %v419 = vshrl.u32 %v418, 7
      %v420 = vsub.s32 %v417, %v419
      %v421 = vrot.slane %v413, %v420
      %v423 = vunpack.c.l.s4 1983009808
      %v424 = vunpack.c.0.s8 %v423
      %v425 = vlaneseq
      %v426 = vshrl.u32 %v425, 7
      %v427 = vsub.s32 %v424, %v426
      %v428 = vrot.slane %v414, %v427
      %v429 = vcombine.low %v421, %v428
      %v438 = vunpack.c.l.b16 %v203
      %v439 = vunpack.c.l.b16 %v204
      %v440 = vunpack.c.l.b16 %v205
      %v441 = vunpack.c.l.b16 %v206
      %v442 = vunpack.c.l.b16 %v207
      %v443 = vunpack.c.l.b16 %v208
      %v444 = vunpack.c.l.b16 %v209
      %v445 = vunpack.c.l.b16 %v210
      %v446 = vpack.c.b16 %v439, %v438
      %v447 = vpack.c.b16 %v441, %v440
      %v448 = vpack.c.b16 %v443, %v442
      %v449 = vpack.c.b16 %v445, %v444
      %v455 = vsel %vm364, %v429, 0
      %457 = vmatprep.subr.bf16.mxu0 0
      %458 = vmatpush1.bf16.msra.mxu0 0
      %459 = vmatprep.subr.bf16.mxu0 0
      %460 = vmatpush1.bf16.msra.mxu0 0
      %461 = vmatprep.subr.bf16.mxu0 0
      %462 = vmatpush1.bf16.msra.mxu0 0
      %463 = vmatprep.subr.bf16.mxu0 0
      %464 = vmatpush1.bf16.msra.mxu0 0
      %465 = vmatprep.subr.bf16.mxu0 0
      %466 = vmatpush1.bf16.msra.mxu0 %v449
      %467 = vmatprep.subr.bf16.mxu0 0
      %468 = vmatpush1.bf16.msra.mxu0 %v448
      %469 = vmatprep.subr.bf16.mxu0 0
      %470 = vmatpush1.bf16.msra.mxu0 %v447
      %471 = vmatprep.subr.bf16.mxu0 0
      %472 = vmatpush1.bf16.msra.mxu0 %v446
      %473 = vmatprep.subr.bf16.mxu0 0
      %474 = vmatpush2.bf16.msra.mxu0 0
      %475 = vmatprep.subr.bf16.mxu0 0
      %476 = vmatpush2.bf16.msra.mxu0 0
      %477 = vmatprep.subr.bf16.mxu0 0
      %478 = vmatpush2.bf16.msra.mxu0 0
      %479 = vmatprep.subr.bf16.mxu0 0
      %480 = vmatpush2.bf16.msra.mxu0 0
      %481 = vmatprep.subr.bf16.mxu0 0
      %482 = vmatpush2.bf16.msra.mxu0 0
      %483 = vmatprep.subr.bf16.mxu0 0
      %484 = vmatpush2.bf16.msra.mxu0 0
      %485 = vmatprep.subr.bf16.mxu0 0
      %486 = vmatpush2.bf16.msra.mxu0 0
      %487 = vmatprep.subr.bf16.mxu0 0
      %488 = vmatpush2.bf16.msra.mxu0 0
      %489 = vmatprep.mubr.bf16.mxu0 0
      %490 = vmatmul.mubr.bf16.gmra.mxu0 %v455
      %v491 = vpop.f32.mrf.mxu0
      %v492 = vadd.f32 %v403, %v491
      %v493 = vpop.f32.mrf.mxu0
      %v494 = vpop.f32.mrf.mxu0
      %v495 = vadd.f32 %v406, %v494
      %v496 = vpop.f32.mrf.mxu0
      %497 = vdwg.mxu0
      %v498 = vld [vmem:[%s192] sm:$0x6]
      %v499 = vld [vmem:[%s192 + $0x4] sm:$0x6]
      %v500 = vld [vmem:[%s192 + $0x8] sm:$0x6]
      %v501 = vld [vmem:[%s192 + $0xc] sm:$0x6]
      %v507 = vunpack.c.l.s4 1983009808
      %v508 = vunpack.c.0.s8 %v507
      %v509 = vlaneseq
      %v510 = vshrl.u32 %v509, 7
      %v511 = vsub.s32 %v508, %v510
      %v512 = vrot.slane %v498, %v511
      %v513 = vcombine.high %v512, %v512
      %v515 = vunpack.c.l.s4 1983009808
      %v516 = vunpack.c.0.s8 %v515
      %v517 = vlaneseq
      %v518 = vshrl.u32 %v517, 7
      %v519 = vsub.s32 %v516, %v518
      %v520 = vrot.slane %v499, %v519
      %v521 = vcombine.high %v520, %v520
      %v523 = vunpack.c.l.s4 1983009808
      %v524 = vunpack.c.0.s8 %v523
      %v525 = vlaneseq
      %v526 = vshrl.u32 %v525, 7
      %v527 = vsub.s32 %v524, %v526
      %v528 = vrot.slane %v500, %v527
      %v529 = vcombine.high %v528, %v528
      %v531 = vunpack.c.l.s4 1983009808
      %v532 = vunpack.c.0.s8 %v531
      %v533 = vlaneseq
      %v534 = vshrl.u32 %v533, 7
      %v535 = vsub.s32 %v532, %v534
      %v536 = vrot.slane %v501, %v535
      %v537 = vcombine.high %v536, %v536
      %vm538 = vcmask 1040384
      %vm539 = vcmask 1042434
      %vm540 = vmor %vm538, %vm539
      %vm541 = vcmask 1044484
      %vm542 = vmor %vm540, %vm541
      %vm543 = vcmask 1046534
      %vm544 = vmor %vm542, %vm543
      %v545 = vrot.slane %v512, 7
      %v546 = vrot.slane %v545, 2
      %v547 = vrot.slane %v513, 7
      %v548 = vsel %vm544, %v546, %v547
      %v549 = vrot.slane %v520, 7
      %v550 = vrot.slane %v549, 2
      %v551 = vrot.slane %v521, 7
      %v552 = vsel %vm544, %v550, %v551
      %v553 = vrot.slane %v528, 7
      %v554 = vrot.slane %v553, 2
      %v555 = vrot.slane %v529, 7
      %v556 = vsel %vm544, %v554, %v555
      %v557 = vrot.slane %v536, 7
      %v558 = vrot.slane %v557, 2
      %v559 = vrot.slane %v537, 7
      %v560 = vsel %vm544, %v558, %v559
      %s561 = scalar_lea.vmem %s1, 64
      %v562 = vld [vmem:[%s561] sm:$0xf]
      %v563 = vld [vmem:[%s561 + $0x4] sm:$0xf]
      %v564 = vld [vmem:[%s561 + $0x8] sm:$0xf]
      %v565 = vld [vmem:[%s561 + $0xc] sm:$0xf]
      %v566 = vld [vmem:[%s561 + $0x10] sm:$0xf]
      %v567 = vld [vmem:[%s561 + $0x14] sm:$0xf]
      %v568 = vld [vmem:[%s561 + $0x18] sm:$0xf]
      %v569 = vld [vmem:[%s561 + $0x1c] sm:$0xf]
      %v570 = vcombine.low %v548, %v552
      %v571 = vcombine.low %v556, %v560
      %v573 = vunpack.c.l.s4 1983009808
      %v574 = vunpack.c.0.s8 %v573
      %v575 = vlaneseq
      %v576 = vshrl.u32 %v575, 7
      %v577 = vsub.s32 %v574, %v576
      %v578 = vrot.slane %v570, %v577
      %v580 = vunpack.c.l.s4 1983009808
      %v581 = vunpack.c.0.s8 %v580
      %v582 = vlaneseq
      %v583 = vshrl.u32 %v582, 7
      %v584 = vsub.s32 %v581, %v583
      %v585 = vrot.slane %v571, %v584
      %v586 = vcombine.low %v578, %v585
      %v595 = vunpack.c.l.b16 %v562
      %v596 = vunpack.c.l.b16 %v563
      %v597 = vunpack.c.l.b16 %v564
      %v598 = vunpack.c.l.b16 %v565
      %v599 = vunpack.c.l.b16 %v566
      %v600 = vunpack.c.l.b16 %v567
      %v601 = vunpack.c.l.b16 %v568
      %v602 = vunpack.c.l.b16 %v569
      %v603 = vpack.c.b16 %v596, %v595
      %v604 = vpack.c.b16 %v598, %v597
      %v605 = vpack.c.b16 %v600, %v599
      %v606 = vpack.c.b16 %v602, %v601
      %v612 = vsel %vm364, %v586, 0
      %614 = vmatprep.subr.bf16.mxu0 0
      %615 = vmatpush1.bf16.msra.mxu0 0
      %616 = vmatprep.subr.bf16.mxu0 0
      %617 = vmatpush1.bf16.msra.mxu0 0
      %618 = vmatprep.subr.bf16.mxu0 0
      %619 = vmatpush1.bf16.msra.mxu0 0
      %620 = vmatprep.subr.bf16.mxu0 0
      %621 = vmatpush1.bf16.msra.mxu0 0
      %622 = vmatprep.subr.bf16.mxu0 0
      %623 = vmatpush1.bf16.msra.mxu0 %v606
      %624 = vmatprep.subr.bf16.mxu0 0
      %625 = vmatpush1.bf16.msra.mxu0 %v605
      %626 = vmatprep.subr.bf16.mxu0 0
      %627 = vmatpush1.bf16.msra.mxu0 %v604
      %628 = vmatprep.subr.bf16.mxu0 0
      %629 = vmatpush1.bf16.msra.mxu0 %v603
      %630 = vmatprep.subr.bf16.mxu0 0
      %631 = vmatpush2.bf16.msra.mxu0 0
      %632 = vmatprep.subr.bf16.mxu0 0
      %633 = vmatpush2.bf16.msra.mxu0 0
      %634 = vmatprep.subr.bf16.mxu0 0
      %635 = vmatpush2.bf16.msra.mxu0 0
      %636 = vmatprep.subr.bf16.mxu0 0
      %637 = vmatpush2.bf16.msra.mxu0 0
      %638 = vmatprep.subr.bf16.mxu0 0
      %639 = vmatpush2.bf16.msra.mxu0 0
      %640 = vmatprep.subr.bf16.mxu0 0
      %641 = vmatpush2.bf16.msra.mxu0 0
      %642 = vmatprep.subr.bf16.mxu0 0
      %643 = vmatpush2.bf16.msra.mxu0 0
      %644 = vmatprep.subr.bf16.mxu0 0
      %645 = vmatpush2.bf16.msra.mxu0 0
      %646 = vmatprep.mubr.bf16.mxu0 0
      %647 = vmatmul.mubr.bf16.gmra.mxu0 %v612
      %v648 = vpop.f32.mrf.mxu0
      %v649 = vadd.f32 0.0, %v648
      %v650 = vpop.f32.mrf.mxu0
      %v651 = vpop.f32.mrf.mxu0
      %v652 = vadd.f32 0.0, %v651
      %v653 = vpop.f32.mrf.mxu0
      %654 = vdwg.mxu0
      %v655 = vadd.f32 %v492, %v649
      %v656 = vadd.f32 %v495, %v652
      %s657 = scalar_lea.vmem %s192, 4
      %v658 = vld [vmem:[%s657] sm:$0x3]
      %v659 = vld [vmem:[%s657 + $0x4] sm:$0x3]
      %v660 = vld [vmem:[%s657 + $0x8] sm:$0x3]
      %v661 = vld [vmem:[%s657 + $0xc] sm:$0x3]
      %s662 = scalar_lea.vmem %s1, 96
      %v663 = vld [vmem:[%s662] sm:$0xf]
      %v664 = vld [vmem:[%s662 + $0x4] sm:$0xf]
      %v665 = vld [vmem:[%s662 + $0x8] sm:$0xf]
      %v666 = vld [vmem:[%s662 + $0xc] sm:$0xf]
      %v667 = vld [vmem:[%s662 + $0x10] sm:$0xf]
      %v668 = vld [vmem:[%s662 + $0x14] sm:$0xf]
      %v669 = vld [vmem:[%s662 + $0x18] sm:$0xf]
      %v670 = vld [vmem:[%s662 + $0x1c] sm:$0xf]
      %v675 = vcombine.low %v658, %v659
      %v676 = vcombine.low %v660, %v661
      %v678 = vunpack.c.l.s4 1983009808
      %v679 = vunpack.c.0.s8 %v678
      %v680 = vlaneseq
      %v681 = vshrl.u32 %v680, 7
      %v682 = vsub.s32 %v679, %v681
      %v683 = vrot.slane %v675, %v682
      %v685 = vunpack.c.l.s4 1983009808
      %v686 = vunpack.c.0.s8 %v685
      %v687 = vlaneseq
      %v688 = vshrl.u32 %v687, 7
      %v689 = vsub.s32 %v686, %v688
      %v690 = vrot.slane %v676, %v689
      %v691 = vcombine.low %v683, %v690
      %v700 = vunpack.c.l.b16 %v663
      %v701 = vunpack.c.l.b16 %v664
      %v702 = vunpack.c.l.b16 %v665
      %v703 = vunpack.c.l.b16 %v666
      %v704 = vunpack.c.l.b16 %v667
      %v705 = vunpack.c.l.b16 %v668
      %v706 = vunpack.c.l.b16 %v669
      %v707 = vunpack.c.l.b16 %v670
      %v708 = vpack.c.b16 %v701, %v700
      %v709 = vpack.c.b16 %v703, %v702
      %v710 = vpack.c.b16 %v705, %v704
      %v711 = vpack.c.b16 %v707, %v706
      %v717 = vsel %vm364, %v691, 0
      %719 = vmatprep.subr.bf16.mxu0 0
      %720 = vmatpush1.bf16.msra.mxu0 0
      %721 = vmatprep.subr.bf16.mxu0 0
      %722 = vmatpush1.bf16.msra.mxu0 0
      %723 = vmatprep.subr.bf16.mxu0 0
      %724 = vmatpush1.bf16.msra.mxu0 0
      %725 = vmatprep.subr.bf16.mxu0 0
      %726 = vmatpush1.bf16.msra.mxu0 0
      %727 = vmatprep.subr.bf16.mxu0 0
      %728 = vmatpush1.bf16.msra.mxu0 %v711
      %729 = vmatprep.subr.bf16.mxu0 0
      %730 = vmatpush1.bf16.msra.mxu0 %v710
      %731 = vmatprep.subr.bf16.mxu0 0
      %732 = vmatpush1.bf16.msra.mxu0 %v709
      %733 = vmatprep.subr.bf16.mxu0 0
      %734 = vmatpush1.bf16.msra.mxu0 %v708
      %735 = vmatprep.subr.bf16.mxu0 0
      %736 = vmatpush2.bf16.msra.mxu0 0
      %737 = vmatprep.subr.bf16.mxu0 0
      %738 = vmatpush2.bf16.msra.mxu0 0
      %739 = vmatprep.subr.bf16.mxu0 0
      %740 = vmatpush2.bf16.msra.mxu0 0
      %741 = vmatprep.subr.bf16.mxu0 0
      %742 = vmatpush2.bf16.msra.mxu0 0
      %743 = vmatprep.subr.bf16.mxu0 0
      %744 = vmatpush2.bf16.msra.mxu0 0
      %745 = vmatprep.subr.bf16.mxu0 0
      %746 = vmatpush2.bf16.msra.mxu0 0
      %747 = vmatprep.subr.bf16.mxu0 0
      %748 = vmatpush2.bf16.msra.mxu0 0
      %749 = vmatprep.subr.bf16.mxu0 0
      %750 = vmatpush2.bf16.msra.mxu0 0
      %751 = vmatprep.mubr.bf16.mxu0 0
      %752 = vmatmul.mubr.bf16.gmra.mxu0 %v717
      %v753 = vpop.f32.mrf.mxu0
      %v754 = vadd.f32 0.0, %v753
      %v755 = vpop.f32.mrf.mxu0
      %v756 = vpop.f32.mrf.mxu0
      %v757 = vadd.f32 0.0, %v756
      %v758 = vpop.f32.mrf.mxu0
      %759 = vdwg.mxu0
      %v760 = vadd.f32 %v655, %v754
      %v761 = vadd.f32 %v656, %v757
      %v762 = vld [vmem:[%s657] sm:$0x7]
      %v763 = vld [vmem:[%s657 + $0x4] sm:$0x7]
      %v764 = vld [vmem:[%s657 + $0x8] sm:$0x7]
      %v765 = vld [vmem:[%s657 + $0xc] sm:$0x7]
      %v771 = vunpack.c.l.s4 1983009808
      %v772 = vunpack.c.0.s8 %v771
      %v773 = vlaneseq
      %v774 = vshrl.u32 %v773, 7
      %v775 = vsub.s32 %v772, %v774
      %v776 = vrot.slane %v762, %v775
      %v777 = vcombine.high %v776, %v776
      %v779 = vunpack.c.l.s4 1983009808
      %v780 = vunpack.c.0.s8 %v779
      %v781 = vlaneseq
      %v782 = vshrl.u32 %v781, 7
      %v783 = vsub.s32 %v780, %v782
      %v784 = vrot.slane %v763, %v783
      %v785 = vcombine.high %v784, %v784
      %v787 = vunpack.c.l.s4 1983009808
      %v788 = vunpack.c.0.s8 %v787
      %v789 = vlaneseq
      %v790 = vshrl.u32 %v789, 7
      %v791 = vsub.s32 %v788, %v790
      %v792 = vrot.slane %v764, %v791
      %v793 = vcombine.high %v792, %v792
      %v795 = vunpack.c.l.s4 1983009808
      %v796 = vunpack.c.0.s8 %v795
      %v797 = vlaneseq
      %v798 = vshrl.u32 %v797, 7
      %v799 = vsub.s32 %v796, %v798
      %v800 = vrot.slane %v765, %v799
      %v801 = vcombine.high %v800, %v800
      %v803 = vshrl.u32 %v776, 16
      %v805 = vrot.slane %v803, 6
      %v806 = vshll.u32 %v776, 16
      %v808 = vrot.slane %v806, 7
      %v809 = vor.u32 %v805, %v808
      %v810 = vrot.slane %v809, 2
      %v812 = vshll.u32 %v777, 16
      %v814 = vrot.slane %v812, 7
      %v815 = vsel %vm257, %v810, %v814
      %v817 = vshrl.u32 %v784, 16
      %v819 = vrot.slane %v817, 6
      %v820 = vshll.u32 %v784, 16
      %v822 = vrot.slane %v820, 7
      %v823 = vor.u32 %v819, %v822
      %v824 = vrot.slane %v823, 2
      %v826 = vshll.u32 %v785, 16
      %v828 = vrot.slane %v826, 7
      %v829 = vsel %vm257, %v824, %v828
      %v831 = vshrl.u32 %v792, 16
      %v833 = vrot.slane %v831, 6
      %v834 = vshll.u32 %v792, 16
      %v836 = vrot.slane %v834, 7
      %v837 = vor.u32 %v833, %v836
      %v838 = vrot.slane %v837, 2
      %v840 = vshll.u32 %v793, 16
      %v842 = vrot.slane %v840, 7
      %v843 = vsel %vm257, %v838, %v842
      %v845 = vshrl.u32 %v800, 16
      %v847 = vrot.slane %v845, 6
      %v848 = vshll.u32 %v800, 16
      %v850 = vrot.slane %v848, 7
      %v851 = vor.u32 %v847, %v850
      %v852 = vrot.slane %v851, 2
      %v854 = vshll.u32 %v801, 16
      %v856 = vrot.slane %v854, 7
      %v857 = vsel %vm257, %v852, %v856
      %s858 = scalar_lea.vmem %s1, 128
      %v859 = vld [vmem:[%s858] sm:$0xf]
      %v860 = vld [vmem:[%s858 + $0x4] sm:$0xf]
      %v861 = vld [vmem:[%s858 + $0x8] sm:$0xf]
      %v862 = vld [vmem:[%s858 + $0xc] sm:$0xf]
      %v863 = vld [vmem:[%s858 + $0x10] sm:$0xf]
      %v864 = vld [vmem:[%s858 + $0x14] sm:$0xf]
      %v865 = vld [vmem:[%s858 + $0x18] sm:$0xf]
      %v866 = vld [vmem:[%s858 + $0x1c] sm:$0xf]
      %v867 = vcombine.low %v815, %v829
      %v868 = vcombine.low %v843, %v857
      %v870 = vunpack.c.l.s4 1983009808
      %v871 = vunpack.c.0.s8 %v870
      %v872 = vlaneseq
      %v873 = vshrl.u32 %v872, 7
      %v874 = vsub.s32 %v871, %v873
      %v875 = vrot.slane %v867, %v874
      %v877 = vunpack.c.l.s4 1983009808
      %v878 = vunpack.c.0.s8 %v877
      %v879 = vlaneseq
      %v880 = vshrl.u32 %v879, 7
      %v881 = vsub.s32 %v878, %v880
      %v882 = vrot.slane %v868, %v881
      %v883 = vcombine.low %v875, %v882
      %v892 = vunpack.c.l.b16 %v859
      %v893 = vunpack.c.l.b16 %v860
      %v894 = vunpack.c.l.b16 %v861
      %v895 = vunpack.c.l.b16 %v862
      %v896 = vunpack.c.l.b16 %v863
      %v897 = vunpack.c.l.b16 %v864
      %v898 = vunpack.c.l.b16 %v865
      %v899 = vunpack.c.l.b16 %v866
      %v900 = vpack.c.b16 %v893, %v892
      %v901 = vpack.c.b16 %v895, %v894
      %v902 = vpack.c.b16 %v897, %v896
      %v903 = vpack.c.b16 %v899, %v898
      %v909 = vsel %vm364, %v883, 0
      %911 = vmatprep.subr.bf16.mxu0 0
      %912 = vmatpush1.bf16.msra.mxu0 0
      %913 = vmatprep.subr.bf16.mxu0 0
      %914 = vmatpush1.bf16.msra.mxu0 0
      %915 = vmatprep.subr.bf16.mxu0 0
      %916 = vmatpush1.bf16.msra.mxu0 0
      %917 = vmatprep.subr.bf16.mxu0 0
      %918 = vmatpush1.bf16.msra.mxu0 0
      %919 = vmatprep.subr.bf16.mxu0 0
      %920 = vmatpush1.bf16.msra.mxu0 %v903
      %921 = vmatprep.subr.bf16.mxu0 0
      %922 = vmatpush1.bf16.msra.mxu0 %v902
      %923 = vmatprep.subr.bf16.mxu0 0
      %924 = vmatpush1.bf16.msra.mxu0 %v901
      %925 = vmatprep.subr.bf16.mxu0 0
      %926 = vmatpush1.bf16.msra.mxu0 %v900
      %927 = vmatprep.subr.bf16.mxu0 0
      %928 = vmatpush2.bf16.msra.mxu0 0
      %929 = vmatprep.subr.bf16.mxu0 0
      %930 = vmatpush2.bf16.msra.mxu0 0
      %931 = vmatprep.subr.bf16.mxu0 0
      %932 = vmatpush2.bf16.msra.mxu0 0
      %933 = vmatprep.subr.bf16.mxu0 0
      %934 = vmatpush2.bf16.msra.mxu0 0
      %935 = vmatprep.subr.bf16.mxu0 0
      %936 = vmatpush2.bf16.msra.mxu0 0
      %937 = vmatprep.subr.bf16.mxu0 0
      %938 = vmatpush2.bf16.msra.mxu0 0
      %939 = vmatprep.subr.bf16.mxu0 0
      %940 = vmatpush2.bf16.msra.mxu0 0
      %941 = vmatprep.subr.bf16.mxu0 0
      %942 = vmatpush2.bf16.msra.mxu0 0
      %943 = vmatprep.mubr.bf16.mxu0 0
      %944 = vmatmul.mubr.bf16.gmra.mxu0 %v909
      %v945 = vpop.f32.mrf.mxu0
      %v946 = vadd.f32 0.0, %v945
      %v947 = vpop.f32.mrf.mxu0
      %v948 = vpop.f32.mrf.mxu0
      %v949 = vadd.f32 0.0, %v948
      %v950 = vpop.f32.mrf.mxu0
      %951 = vdwg.mxu0
      %v952 = vadd.f32 %v760, %v946
      %v953 = vadd.f32 %v761, %v949
      %v954 = vld [vmem:[%s657] sm:$0x6]
      %v955 = vld [vmem:[%s657 + $0x4] sm:$0x6]
      %v956 = vld [vmem:[%s657 + $0x8] sm:$0x6]
      %v957 = vld [vmem:[%s657 + $0xc] sm:$0x6]
      %v963 = vunpack.c.l.s4 1983009808
      %v964 = vunpack.c.0.s8 %v963
      %v965 = vlaneseq
      %v966 = vshrl.u32 %v965, 7
      %v967 = vsub.s32 %v964, %v966
      %v968 = vrot.slane %v954, %v967
      %v969 = vcombine.high %v968, %v968
      %v971 = vunpack.c.l.s4 1983009808
      %v972 = vunpack.c.0.s8 %v971
      %v973 = vlaneseq
      %v974 = vshrl.u32 %v973, 7
      %v975 = vsub.s32 %v972, %v974
      %v976 = vrot.slane %v955, %v975
      %v977 = vcombine.high %v976, %v976
      %v979 = vunpack.c.l.s4 1983009808
      %v980 = vunpack.c.0.s8 %v979
      %v981 = vlaneseq
      %v982 = vshrl.u32 %v981, 7
      %v983 = vsub.s32 %v980, %v982
      %v984 = vrot.slane %v956, %v983
      %v985 = vcombine.high %v984, %v984
      %v987 = vunpack.c.l.s4 1983009808
      %v988 = vunpack.c.0.s8 %v987
      %v989 = vlaneseq
      %v990 = vshrl.u32 %v989, 7
      %v991 = vsub.s32 %v988, %v990
      %v992 = vrot.slane %v957, %v991
      %v993 = vcombine.high %v992, %v992
      %v994 = vrot.slane %v968, 7
      %v995 = vrot.slane %v994, 2
      %v996 = vrot.slane %v969, 7
      %v997 = vsel %vm544, %v995, %v996
      %v998 = vrot.slane %v976, 7
      %v999 = vrot.slane %v998, 2
      %v1000 = vrot.slane %v977, 7
      %v1001 = vsel %vm544, %v999, %v1000
      %v1002 = vrot.slane %v984, 7
      %v1003 = vrot.slane %v1002, 2
      %v1004 = vrot.slane %v985, 7
      %v1005 = vsel %vm544, %v1003, %v1004
      %v1006 = vrot.slane %v992, 7
      %v1007 = vrot.slane %v1006, 2
      %v1008 = vrot.slane %v993, 7
      %v1009 = vsel %vm544, %v1007, %v1008
      %s1010 = scalar_lea.vmem %s1, 160
      %v1011 = vld [vmem:[%s1010] sm:$0xf]
      %v1012 = vld [vmem:[%s1010 + $0x4] sm:$0xf]
      %v1013 = vld [vmem:[%s1010 + $0x8] sm:$0xf]
      %v1014 = vld [vmem:[%s1010 + $0xc] sm:$0xf]
      %v1015 = vld [vmem:[%s1010 + $0x10] sm:$0xf]
      %v1016 = vld [vmem:[%s1010 + $0x14] sm:$0xf]
      %v1017 = vld [vmem:[%s1010 + $0x18] sm:$0xf]
      %v1018 = vld [vmem:[%s1010 + $0x1c] sm:$0xf]
      %v1019 = vcombine.low %v997, %v1001
      %v1020 = vcombine.low %v1005, %v1009
      %v1022 = vunpack.c.l.s4 1983009808
      %v1023 = vunpack.c.0.s8 %v1022
      %v1024 = vlaneseq
      %v1025 = vshrl.u32 %v1024, 7
      %v1026 = vsub.s32 %v1023, %v1025
      %v1027 = vrot.slane %v1019, %v1026
      %v1029 = vunpack.c.l.s4 1983009808
      %v1030 = vunpack.c.0.s8 %v1029
      %v1031 = vlaneseq
      %v1032 = vshrl.u32 %v1031, 7
      %v1033 = vsub.s32 %v1030, %v1032
      %v1034 = vrot.slane %v1020, %v1033
      %v1035 = vcombine.low %v1027, %v1034
      %v1044 = vunpack.c.l.b16 %v1011
      %v1045 = vunpack.c.l.b16 %v1012
      %v1046 = vunpack.c.l.b16 %v1013
      %v1047 = vunpack.c.l.b16 %v1014
      %v1048 = vunpack.c.l.b16 %v1015
      %v1049 = vunpack.c.l.b16 %v1016
      %v1050 = vunpack.c.l.b16 %v1017
      %v1051 = vunpack.c.l.b16 %v1018
      %v1052 = vpack.c.b16 %v1045, %v1044
      %v1053 = vpack.c.b16 %v1047, %v1046
      %v1054 = vpack.c.b16 %v1049, %v1048
      %v1055 = vpack.c.b16 %v1051, %v1050
      %v1061 = vsel %vm364, %v1035, 0
      %1063 = vmatprep.subr.bf16.mxu0 0
      %1064 = vmatpush1.bf16.msra.mxu0 0
      %1065 = vmatprep.subr.bf16.mxu0 0
      %1066 = vmatpush1.bf16.msra.mxu0 0
      %1067 = vmatprep.subr.bf16.mxu0 0
      %1068 = vmatpush1.bf16.msra.mxu0 0
      %1069 = vmatprep.subr.bf16.mxu0 0
      %1070 = vmatpush1.bf16.msra.mxu0 0
      %1071 = vmatprep.subr.bf16.mxu0 0
      %1072 = vmatpush1.bf16.msra.mxu0 %v1055
      %1073 = vmatprep.subr.bf16.mxu0 0
      %1074 = vmatpush1.bf16.msra.mxu0 %v1054
      %1075 = vmatprep.subr.bf16.mxu0 0
      %1076 = vmatpush1.bf16.msra.mxu0 %v1053
      %1077 = vmatprep.subr.bf16.mxu0 0
      %1078 = vmatpush1.bf16.msra.mxu0 %v1052
      %1079 = vmatprep.subr.bf16.mxu0 0
      %1080 = vmatpush2.bf16.msra.mxu0 0
      %1081 = vmatprep.subr.bf16.mxu0 0
      %1082 = vmatpush2.bf16.msra.mxu0 0
      %1083 = vmatprep.subr.bf16.mxu0 0
      %1084 = vmatpush2.bf16.msra.mxu0 0
      %1085 = vmatprep.subr.bf16.mxu0 0
      %1086 = vmatpush2.bf16.msra.mxu0 0
      %1087 = vmatprep.subr.bf16.mxu0 0
      %1088 = vmatpush2.bf16.msra.mxu0 0
      %1089 = vmatprep.subr.bf16.mxu0 0
      %1090 = vmatpush2.bf16.msra.mxu0 0
      %1091 = vmatprep.subr.bf16.mxu0 0
      %1092 = vmatpush2.bf16.msra.mxu0 0
      %1093 = vmatprep.subr.bf16.mxu0 0
      %1094 = vmatpush2.bf16.msra.mxu0 0
      %1095 = vmatprep.mubr.bf16.mxu0 0
      %1096 = vmatmul.mubr.bf16.gmra.mxu0 %v1061
      %v1097 = vpop.f32.mrf.mxu0
      %v1098 = vadd.f32 0.0, %v1097
      %v1099 = vpop.f32.mrf.mxu0
      %v1100 = vpop.f32.mrf.mxu0
      %v1101 = vadd.f32 0.0, %v1100
      %v1102 = vpop.f32.mrf.mxu0
      %1103 = vdwg.mxu0
      %v1104 = vadd.f32 %v952, %v1098
      %v1105 = vadd.f32 %v953, %v1101
      %s1106 = scalar_lea.vmem %s192, 8
      %v1107 = vld [vmem:[%s1106] sm:$0x3]
      %v1108 = vld [vmem:[%s1106 + $0x4] sm:$0x3]
      %v1109 = vld [vmem:[%s1106 + $0x8] sm:$0x3]
      %v1110 = vld [vmem:[%s1106 + $0xc] sm:$0x3]
      %s1111 = scalar_lea.vmem %s1, 192
      %v1112 = vld [vmem:[%s1111] sm:$0xf]
      %v1113 = vld [vmem:[%s1111 + $0x4] sm:$0xf]
      %v1114 = vld [vmem:[%s1111 + $0x8] sm:$0xf]
      %v1115 = vld [vmem:[%s1111 + $0xc] sm:$0xf]
      %v1116 = vld [vmem:[%s1111 + $0x10] sm:$0xf]
      %v1117 = vld [vmem:[%s1111 + $0x14] sm:$0xf]
      %v1118 = vld [vmem:[%s1111 + $0x18] sm:$0xf]
      %v1119 = vld [vmem:[%s1111 + $0x1c] sm:$0xf]
      %v1124 = vcombine.low %v1107, %v1108
      %v1125 = vcombine.low %v1109, %v1110
      %v1127 = vunpack.c.l.s4 1983009808
      %v1128 = vunpack.c.0.s8 %v1127
      %v1129 = vlaneseq
      %v1130 = vshrl.u32 %v1129, 7
      %v1131 = vsub.s32 %v1128, %v1130
      %v1132 = vrot.slane %v1124, %v1131
      %v1134 = vunpack.c.l.s4 1983009808
      %v1135 = vunpack.c.0.s8 %v1134
      %v1136 = vlaneseq
      %v1137 = vshrl.u32 %v1136, 7
      %v1138 = vsub.s32 %v1135, %v1137
      %v1139 = vrot.slane %v1125, %v1138
      %v1140 = vcombine.low %v1132, %v1139
      %v1149 = vunpack.c.l.b16 %v1112
      %v1150 = vunpack.c.l.b16 %v1113
      %v1151 = vunpack.c.l.b16 %v1114
      %v1152 = vunpack.c.l.b16 %v1115
      %v1153 = vunpack.c.l.b16 %v1116
      %v1154 = vunpack.c.l.b16 %v1117
      %v1155 = vunpack.c.l.b16 %v1118
      %v1156 = vunpack.c.l.b16 %v1119
      %v1157 = vpack.c.b16 %v1150, %v1149
      %v1158 = vpack.c.b16 %v1152, %v1151
      %v1159 = vpack.c.b16 %v1154, %v1153
      %v1160 = vpack.c.b16 %v1156, %v1155
      %v1166 = vsel %vm364, %v1140, 0
      %1168 = vmatprep.subr.bf16.mxu0 0
      %1169 = vmatpush1.bf16.msra.mxu0 0
      %1170 = vmatprep.subr.bf16.mxu0 0
      %1171 = vmatpush1.bf16.msra.mxu0 0
      %1172 = vmatprep.subr.bf16.mxu0 0
      %1173 = vmatpush1.bf16.msra.mxu0 0
      %1174 = vmatprep.subr.bf16.mxu0 0
      %1175 = vmatpush1.bf16.msra.mxu0 0
      %1176 = vmatprep.subr.bf16.mxu0 0
      %1177 = vmatpush1.bf16.msra.mxu0 %v1160
      %1178 = vmatprep.subr.bf16.mxu0 0
      %1179 = vmatpush1.bf16.msra.mxu0 %v1159
      %1180 = vmatprep.subr.bf16.mxu0 0
      %1181 = vmatpush1.bf16.msra.mxu0 %v1158
      %1182 = vmatprep.subr.bf16.mxu0 0
      %1183 = vmatpush1.bf16.msra.mxu0 %v1157
      %1184 = vmatprep.subr.bf16.mxu0 0
      %1185 = vmatpush2.bf16.msra.mxu0 0
      %1186 = vmatprep.subr.bf16.mxu0 0
      %1187 = vmatpush2.bf16.msra.mxu0 0
      %1188 = vmatprep.subr.bf16.mxu0 0
      %1189 = vmatpush2.bf16.msra.mxu0 0
      %1190 = vmatprep.subr.bf16.mxu0 0
      %1191 = vmatpush2.bf16.msra.mxu0 0
      %1192 = vmatprep.subr.bf16.mxu0 0
      %1193 = vmatpush2.bf16.msra.mxu0 0
      %1194 = vmatprep.subr.bf16.mxu0 0
      %1195 = vmatpush2.bf16.msra.mxu0 0
      %1196 = vmatprep.subr.bf16.mxu0 0
      %1197 = vmatpush2.bf16.msra.mxu0 0
      %1198 = vmatprep.subr.bf16.mxu0 0
      %1199 = vmatpush2.bf16.msra.mxu0 0
      %1200 = vmatprep.mubr.bf16.mxu0 0
      %1201 = vmatmul.mubr.bf16.gmra.mxu0 %v1166
      %v1202 = vpop.f32.mrf.mxu0
      %v1203 = vadd.f32 0.0, %v1202
      %v1204 = vpop.f32.mrf.mxu0
      %v1205 = vpop.f32.mrf.mxu0
      %v1206 = vadd.f32 0.0, %v1205
      %v1207 = vpop.f32.mrf.mxu0
      %1208 = vdwg.mxu0
      %v1209 = vadd.f32 %v1104, %v1203
      %v1210 = vadd.f32 %v1105, %v1206
      %v1211 = vld [vmem:[%s1106] sm:$0x7]
      %v1212 = vld [vmem:[%s1106 + $0x4] sm:$0x7]
      %v1213 = vld [vmem:[%s1106 + $0x8] sm:$0x7]
      %v1214 = vld [vmem:[%s1106 + $0xc] sm:$0x7]
      %v1220 = vunpack.c.l.s4 1983009808
      %v1221 = vunpack.c.0.s8 %v1220
      %v1222 = vlaneseq
      %v1223 = vshrl.u32 %v1222, 7
      %v1224 = vsub.s32 %v1221, %v1223
      %v1225 = vrot.slane %v1211, %v1224
      %v1226 = vcombine.high %v1225, %v1225
      %v1228 = vunpack.c.l.s4 1983009808
      %v1229 = vunpack.c.0.s8 %v1228
      %v1230 = vlaneseq
      %v1231 = vshrl.u32 %v1230, 7
      %v1232 = vsub.s32 %v1229, %v1231
      %v1233 = vrot.slane %v1212, %v1232
      %v1234 = vcombine.high %v1233, %v1233
      %v1236 = vunpack.c.l.s4 1983009808
      %v1237 = vunpack.c.0.s8 %v1236
      %v1238 = vlaneseq
      %v1239 = vshrl.u32 %v1238, 7
      %v1240 = vsub.s32 %v1237, %v1239
      %v1241 = vrot.slane %v1213, %v1240
      %v1242 = vcombine.high %v1241, %v1241
      %v1244 = vunpack.c.l.s4 1983009808
      %v1245 = vunpack.c.0.s8 %v1244
      %v1246 = vlaneseq
      %v1247 = vshrl.u32 %v1246, 7
      %v1248 = vsub.s32 %v1245, %v1247
      %v1249 = vrot.slane %v1214, %v1248
      %v1250 = vcombine.high %v1249, %v1249
      %v1252 = vshrl.u32 %v1225, 16
      %v1254 = vrot.slane %v1252, 6
      %v1255 = vshll.u32 %v1225, 16
      %v1257 = vrot.slane %v1255, 7
      %v1258 = vor.u32 %v1254, %v1257
      %v1259 = vrot.slane %v1258, 2
      %v1261 = vshll.u32 %v1226, 16
      %v1263 = vrot.slane %v1261, 7
      %v1264 = vsel %vm257, %v1259, %v1263
      %v1266 = vshrl.u32 %v1233, 16
      %v1268 = vrot.slane %v1266, 6
      %v1269 = vshll.u32 %v1233, 16
      %v1271 = vrot.slane %v1269, 7
      %v1272 = vor.u32 %v1268, %v1271
      %v1273 = vrot.slane %v1272, 2
      %v1275 = vshll.u32 %v1234, 16
      %v1277 = vrot.slane %v1275, 7
      %v1278 = vsel %vm257, %v1273, %v1277
      %v1280 = vshrl.u32 %v1241, 16
      %v1282 = vrot.slane %v1280, 6
      %v1283 = vshll.u32 %v1241, 16
      %v1285 = vrot.slane %v1283, 7
      %v1286 = vor.u32 %v1282, %v1285
      %v1287 = vrot.slane %v1286, 2
      %v1289 = vshll.u32 %v1242, 16
      %v1291 = vrot.slane %v1289, 7
      %v1292 = vsel %vm257, %v1287, %v1291
      %v1294 = vshrl.u32 %v1249, 16
      %v1296 = vrot.slane %v1294, 6
      %v1297 = vshll.u32 %v1249, 16
      %v1299 = vrot.slane %v1297, 7
      %v1300 = vor.u32 %v1296, %v1299
      %v1301 = vrot.slane %v1300, 2
      %v1303 = vshll.u32 %v1250, 16
      %v1305 = vrot.slane %v1303, 7
      %v1306 = vsel %vm257, %v1301, %v1305
      %s1307 = scalar_lea.vmem %s1, 224
      %v1308 = vld [vmem:[%s1307] sm:$0xf]
      %v1309 = vld [vmem:[%s1307 + $0x4] sm:$0xf]
      %v1310 = vld [vmem:[%s1307 + $0x8] sm:$0xf]
      %v1311 = vld [vmem:[%s1307 + $0xc] sm:$0xf]
      %v1312 = vld [vmem:[%s1307 + $0x10] sm:$0xf]
      %v1313 = vld [vmem:[%s1307 + $0x14] sm:$0xf]
      %v1314 = vld [vmem:[%s1307 + $0x18] sm:$0xf]
      %v1315 = vld [vmem:[%s1307 + $0x1c] sm:$0xf]
      %v1316 = vcombine.low %v1264, %v1278
      %v1317 = vcombine.low %v1292, %v1306
      %v1319 = vunpack.c.l.s4 1983009808
      %v1320 = vunpack.c.0.s8 %v1319
      %v1321 = vlaneseq
      %v1322 = vshrl.u32 %v1321, 7
      %v1323 = vsub.s32 %v1320, %v1322
      %v1324 = vrot.slane %v1316, %v1323
      %v1326 = vunpack.c.l.s4 1983009808
      %v1327 = vunpack.c.0.s8 %v1326
      %v1328 = vlaneseq
      %v1329 = vshrl.u32 %v1328, 7
      %v1330 = vsub.s32 %v1327, %v1329
      %v1331 = vrot.slane %v1317, %v1330
      %v1332 = vcombine.low %v1324, %v1331
      %v1341 = vunpack.c.l.b16 %v1308
      %v1342 = vunpack.c.l.b16 %v1309
      %v1343 = vunpack.c.l.b16 %v1310
      %v1344 = vunpack.c.l.b16 %v1311
      %v1345 = vunpack.c.l.b16 %v1312
      %v1346 = vunpack.c.l.b16 %v1313
      %v1347 = vunpack.c.l.b16 %v1314
      %v1348 = vunpack.c.l.b16 %v1315
      %v1349 = vpack.c.b16 %v1342, %v1341
      %v1350 = vpack.c.b16 %v1344, %v1343
      %v1351 = vpack.c.b16 %v1346, %v1345
      %v1352 = vpack.c.b16 %v1348, %v1347
      %v1358 = vsel %vm364, %v1332, 0
      %1360 = vmatprep.subr.bf16.mxu0 0
      %1361 = vmatpush1.bf16.msra.mxu0 0
      %1362 = vmatprep.subr.bf16.mxu0 0
      %1363 = vmatpush1.bf16.msra.mxu0 0
      %1364 = vmatprep.subr.bf16.mxu0 0
      %1365 = vmatpush1.bf16.msra.mxu0 0
      %1366 = vmatprep.subr.bf16.mxu0 0
      %1367 = vmatpush1.bf16.msra.mxu0 0
      %1368 = vmatprep.subr.bf16.mxu0 0
      %1369 = vmatpush1.bf16.msra.mxu0 %v1352
      %1370 = vmatprep.subr.bf16.mxu0 0
      %1371 = vmatpush1.bf16.msra.mxu0 %v1351
      %1372 = vmatprep.subr.bf16.mxu0 0
      %1373 = vmatpush1.bf16.msra.mxu0 %v1350
      %1374 = vmatprep.subr.bf16.mxu0 0
      %1375 = vmatpush1.bf16.msra.mxu0 %v1349
      %1376 = vmatprep.subr.bf16.mxu0 0
      %1377 = vmatpush2.bf16.msra.mxu0 0
      %1378 = vmatprep.subr.bf16.mxu0 0
      %1379 = vmatpush2.bf16.msra.mxu0 0
      %1380 = vmatprep.subr.bf16.mxu0 0
      %1381 = vmatpush2.bf16.msra.mxu0 0
      %1382 = vmatprep.subr.bf16.mxu0 0
      %1383 = vmatpush2.bf16.msra.mxu0 0
      %1384 = vmatprep.subr.bf16.mxu0 0
      %1385 = vmatpush2.bf16.msra.mxu0 0
      %1386 = vmatprep.subr.bf16.mxu0 0
      %1387 = vmatpush2.bf16.msra.mxu0 0
      %1388 = vmatprep.subr.bf16.mxu0 0
      %1389 = vmatpush2.bf16.msra.mxu0 0
      %1390 = vmatprep.subr.bf16.mxu0 0
      %1391 = vmatpush2.bf16.msra.mxu0 0
      %1392 = vmatprep.mubr.bf16.mxu0 0
      %1393 = vmatmul.mubr.bf16.gmra.mxu0 %v1358
      %v1394 = vpop.f32.mrf.mxu0
      %v1395 = vadd.f32 0.0, %v1394
      %v1396 = vpop.f32.mrf.mxu0
      %v1397 = vpop.f32.mrf.mxu0
      %v1398 = vadd.f32 0.0, %v1397
      %v1399 = vpop.f32.mrf.mxu0
      %1400 = vdwg.mxu0
      %v1401 = vadd.f32 %v1209, %v1395
      %v1402 = vadd.f32 %v1210, %v1398
      %v1403 = vld [vmem:[%s1106] sm:$0x6]
      %v1404 = vld [vmem:[%s1106 + $0x4] sm:$0x6]
      %v1405 = vld [vmem:[%s1106 + $0x8] sm:$0x6]
      %v1406 = vld [vmem:[%s1106 + $0xc] sm:$0x6]
      %v1412 = vunpack.c.l.s4 1983009808
      %v1413 = vunpack.c.0.s8 %v1412
      %v1414 = vlaneseq
      %v1415 = vshrl.u32 %v1414, 7
      %v1416 = vsub.s32 %v1413, %v1415
      %v1417 = vrot.slane %v1403, %v1416
      %v1418 = vcombine.high %v1417, %v1417
      %v1420 = vunpack.c.l.s4 1983009808
      %v1421 = vunpack.c.0.s8 %v1420
      %v1422 = vlaneseq
      %v1423 = vshrl.u32 %v1422, 7
      %v1424 = vsub.s32 %v1421, %v1423
      %v1425 = vrot.slane %v1404, %v1424
      %v1426 = vcombine.high %v1425, %v1425
      %v1428 = vunpack.c.l.s4 1983009808
      %v1429 = vunpack.c.0.s8 %v1428
      %v1430 = vlaneseq
      %v1431 = vshrl.u32 %v1430, 7
      %v1432 = vsub.s32 %v1429, %v1431
      %v1433 = vrot.slane %v1405, %v1432
      %v1434 = vcombine.high %v1433, %v1433
      %v1436 = vunpack.c.l.s4 1983009808
      %v1437 = vunpack.c.0.s8 %v1436
      %v1438 = vlaneseq
      %v1439 = vshrl.u32 %v1438, 7
      %v1440 = vsub.s32 %v1437, %v1439
      %v1441 = vrot.slane %v1406, %v1440
      %v1442 = vcombine.high %v1441, %v1441
      %v1443 = vrot.slane %v1417, 7
      %v1444 = vrot.slane %v1443, 2
      %v1445 = vrot.slane %v1418, 7
      %v1446 = vsel %vm544, %v1444, %v1445
      %v1447 = vrot.slane %v1425, 7
      %v1448 = vrot.slane %v1447, 2
      %v1449 = vrot.slane %v1426, 7
      %v1450 = vsel %vm544, %v1448, %v1449
      %v1451 = vrot.slane %v1433, 7
      %v1452 = vrot.slane %v1451, 2
      %v1453 = vrot.slane %v1434, 7
      %v1454 = vsel %vm544, %v1452, %v1453
      %v1455 = vrot.slane %v1441, 7
      %v1456 = vrot.slane %v1455, 2
      %v1457 = vrot.slane %v1442, 7
      %v1458 = vsel %vm544, %v1456, %v1457
      %s1459 = scalar_lea.vmem %s1, 256
      %v1460 = vld [vmem:[%s1459] sm:$0xf]
      %v1461 = vld [vmem:[%s1459 + $0x4] sm:$0xf]
      %v1462 = vld [vmem:[%s1459 + $0x8] sm:$0xf]
      %v1463 = vld [vmem:[%s1459 + $0xc] sm:$0xf]
      %v1464 = vld [vmem:[%s1459 + $0x10] sm:$0xf]
      %v1465 = vld [vmem:[%s1459 + $0x14] sm:$0xf]
      %v1466 = vld [vmem:[%s1459 + $0x18] sm:$0xf]
      %v1467 = vld [vmem:[%s1459 + $0x1c] sm:$0xf]
      %v1468 = vcombine.low %v1446, %v1450
      %v1469 = vcombine.low %v1454, %v1458
      %v1471 = vunpack.c.l.s4 1983009808
      %v1472 = vunpack.c.0.s8 %v1471
      %v1473 = vlaneseq
      %v1474 = vshrl.u32 %v1473, 7
      %v1475 = vsub.s32 %v1472, %v1474
      %v1476 = vrot.slane %v1468, %v1475
      %v1478 = vunpack.c.l.s4 1983009808
      %v1479 = vunpack.c.0.s8 %v1478
      %v1480 = vlaneseq
      %v1481 = vshrl.u32 %v1480, 7
      %v1482 = vsub.s32 %v1479, %v1481
      %v1483 = vrot.slane %v1469, %v1482
      %v1484 = vcombine.low %v1476, %v1483
      %v1493 = vunpack.c.l.b16 %v1460
      %v1494 = vunpack.c.l.b16 %v1461
      %v1495 = vunpack.c.l.b16 %v1462
      %v1496 = vunpack.c.l.b16 %v1463
      %v1497 = vunpack.c.l.b16 %v1464
      %v1498 = vunpack.c.l.b16 %v1465
      %v1499 = vunpack.c.l.b16 %v1466
      %v1500 = vunpack.c.l.b16 %v1467
      %v1501 = vpack.c.b16 %v1494, %v1493
      %v1502 = vpack.c.b16 %v1496, %v1495
      %v1503 = vpack.c.b16 %v1498, %v1497
      %v1504 = vpack.c.b16 %v1500, %v1499
      %v1510 = vsel %vm364, %v1484, 0
      %1512 = vmatprep.subr.bf16.mxu0 0
      %1513 = vmatpush1.bf16.msra.mxu0 0
      %1514 = vmatprep.subr.bf16.mxu0 0
      %1515 = vmatpush1.bf16.msra.mxu0 0
      %1516 = vmatprep.subr.bf16.mxu0 0
      %1517 = vmatpush1.bf16.msra.mxu0 0
      %1518 = vmatprep.subr.bf16.mxu0 0
      %1519 = vmatpush1.bf16.msra.mxu0 0
      %1520 = vmatprep.subr.bf16.mxu0 0
      %1521 = vmatpush1.bf16.msra.mxu0 %v1504
      %1522 = vmatprep.subr.bf16.mxu0 0
      %1523 = vmatpush1.bf16.msra.mxu0 %v1503
      %1524 = vmatprep.subr.bf16.mxu0 0
      %1525 = vmatpush1.bf16.msra.mxu0 %v1502
      %1526 = vmatprep.subr.bf16.mxu0 0
      %1527 = vmatpush1.bf16.msra.mxu0 %v1501
      %1528 = vmatprep.subr.bf16.mxu0 0
      %1529 = vmatpush2.bf16.msra.mxu0 0
      %1530 = vmatprep.subr.bf16.mxu0 0
      %1531 = vmatpush2.bf16.msra.mxu0 0
      %1532 = vmatprep.subr.bf16.mxu0 0
      %1533 = vmatpush2.bf16.msra.mxu0 0
      %1534 = vmatprep.subr.bf16.mxu0 0
      %1535 = vmatpush2.bf16.msra.mxu0 0
      %1536 = vmatprep.subr.bf16.mxu0 0
      %1537 = vmatpush2.bf16.msra.mxu0 0
      %1538 = vmatprep.subr.bf16.mxu0 0
      %1539 = vmatpush2.bf16.msra.mxu0 0
      %1540 = vmatprep.subr.bf16.mxu0 0
      %1541 = vmatpush2.bf16.msra.mxu0 0
      %1542 = vmatprep.subr.bf16.mxu0 0
      %1543 = vmatpush2.bf16.msra.mxu0 0
      %1544 = vmatprep.mubr.bf16.mxu0 0
      %1545 = vmatmul.mubr.bf16.gmra.mxu0 %v1510
      %v1546 = vpop.f32.mrf.mxu0
      %v1547 = vadd.f32 0.0, %v1546
      %v1548 = vpop.f32.mrf.mxu0
      %v1549 = vpop.f32.mrf.mxu0
      %v1550 = vadd.f32 0.0, %v1549
      %v1551 = vpop.f32.mrf.mxu0
      %1552 = vdwg.mxu0
      %v1553 = vadd.f32 %v1401, %v1547
      %v1554 = vadd.f32 %v1402, %v1550
      %v1555 = vld [vmem:[%s2] sm:$0x1]
      %v1557 = vlaneseq
      %v1558 = vshrl.u32 %v1557, 7
      %v1559 = vsub.s32 0, %v1558
      %v1560 = vrot.slane %v1555, %v1559
      %v1562 = vmul.f32 %v1553, %v1560
      %v1563 = vmul.f32 %v1554, %v1560
      %v1564 = vld [vmem:[%s3] sm:$0x1]
      %v1566 = vlaneseq
      %v1567 = vshrl.u32 %v1566, 7
      %v1568 = vsub.s32 0, %v1567
      %v1569 = vrot.slane %v1564, %v1568
      %v1571 = vadd.f32 %v1562, %v1569
      %v1572 = vadd.f32 %v1563, %v1569
      %v1573 = vmax.f32 %v1571, 0.0
      %v1574 = vmax.f32 %v1572, 0.0
      %v1575 = vpack.c.bf16 %v1574, %v1573
      %v1577 = vunpack.c.l.b16 %v1575
      %v1578 = vunpack.c.h.b16 %v1575
      %v1579 = vpack.c.b16 %v1577, %v1577
      %v1580 = vpack.c.b16 %v1578, %v1578
      %vm1583 = vcmask 519168
      %1584 = vst.msk [vmem:[%s197] sm:$0xf] %vm1583, %v1579
      %1585 = vst.msk [vmem:[%s197 + $0x4] sm:$0xf] %vm1583, %v1580
      %p1586 = scmp.lt.s32.totalorder %s15, 1
      %s1587 = scalar_select %p1586, %s15, 1
      %s1588 = smul.addr %s1587, 2
      %s1589 = smul.addr %s1588, 4
      %s1590 = scalar_lea.vmem %s4, %s1589
      // Predicated region
      $region37: #{run.8} parent=35 // pred_check
        %p1591 = pneg %p122
      $region38: #{run.8} parent=35 // pred_check_branch
        %1593 = sbr.rel (%p1591) target = $region40
      $region39: #{run.8} parent=35 // pred_region
        _
      $region40: #{run.8} parent=35 // pred_fallthru
        _
    $region36: #{run.8} parent=5 // pred_fallthru
      _
    %p1594 = scmp.le.s32.totalorder 2, %s10
    // Predicated region
    $region41: #{run.8} parent=5 // pred_check
      %p1595 = pneg %p1594
    $region42: #{run.8} parent=5 // pred_check_branch
      %1597 = sbr.rel (%p1595) target = $region44
    $region43: #{run.8} parent=5 // pred_region
      %s1598 = ssub.s32 %s10, 2
      // Predicated region
      $region45: #{run.8} parent=43 // pred_check
        %p1599 = pneg %p128
      $region46: #{run.8} parent=43 // pred_check_branch
        %1601 = sbr.rel (%p1599) target = $region48
      $region47: #{run.8} parent=43 // pred_region
        %p1602 = scmp.lt.s32.totalorder %s16, 1
        %s1603 = scalar_select %p1602, %s16, 1
        %s1604 = smul.addr %s1603, 2
        %s1605 = smul.addr %s1604, 4
        %s1606 = scalar_lea.vmem %s4, %s1605
      $region48: #{run.8} parent=43 // pred_fallthru
        _
    $region44: #{run.8} parent=5 // pred_fallthru
      _
  $region6: #{run.8} parent=0 // loop_footer
    %s14 = sadd.s32 1, %s10
  $region7: #{run.8} parent=0 // loop_footer_branch
    %9 = sbr.rel target = $region3
  $region8: #{run.8} parent=0 // loop_exit
    _

// kernel: run.9
$region0: #{run.9}
  #allocation0 [shape = 'u32[]', space=smem, size = 0x4, offset = 0x4, fixed_abs, tag = 'smem constant byte address 0x4 - core index']
  #allocation1 [shape = 'u32[144,128]{1,0:T(1,128)}', space=vmem, size = 0x12000, scoped, tag = 'internal scratch']
  %s0 = inlined_call_operand.vmem [shape: bf16[2,6,6,64], index: 0, kind: input, shape index: {}]
  %s1 = inlined_call_operand.vmem [shape: bf16[9,64,64], index: 1, kind: input, shape index: {}]
  %s2 = inlined_call_operand.vmem [shape: f32[1,64], index: 2, kind: input, shape index: {}]
  %s3 = inlined_call_operand.vmem [shape: f32[1,64], index: 3, kind: input, shape index: {}]
  %s4 = inlined_call_operand.vmem [shape: bf16[2,16,64], index: 4, kind: input, shape index: {}]
  %s5 = inlined_call_operand.vmem [shape: bf16[2,16,64], index: 5, kind: output, shape index: {}]
  %s6 = sld [smem:[#allocation0]]
  $region53: #{run.9} parent=0
    _
  %s8 = ssub.s32 1, %s6
  %s9 = scalar_select 0, %s8, %s6
  loop: start=0, step=1, limit=4
  $region2: #{run.9} parent=0 // loop_pre_header
    _
  $region3: #{run.9} parent=0 // loop_header
    %s11 = sphi 0, %s15
    %p12 = scmp.ge.s32.totalorder %s11, 4
    %s21 = sphi 0, %s23
    %s24 = sphi 0, %s21
    %s25 = sphi 0, %s24
    %s41 = sphi 0, %s25
    %s45 = sphi 0, %s45
    %s47 = sphi 0, %s45
    %s48 = sphi 0, %s47
    %s62 = sphi 0, %s48
    %s66 = sphi 0, %s66
    %s68 = sphi 0, %s66
    %s69 = sphi 0, %s68
    %s83 = sphi 0, %s69
    %s87 = sphi 0, %s87
    %s89 = sphi 0, %s87
    %s90 = sphi 0, %s89
    %s104 = sphi 0, %s90
    %s110 = sphi 0, %s112
    %s113 = sphi 0, %s110
    %s114 = sphi 0, %s113
    %s130 = sphi 0, %s114
    %s136 = sphi 0, %s138
    %s139 = sphi 0, %s136
    %s140 = sphi 0, %s139
    %s156 = sphi 0, %s140
  $region4: #{run.9} parent=0 // loop_header_branch
    %14 = sbr.rel (%p12) target = $region8
  $region5: #{run.9} parent=0 // loop_body
    %s16 = ssub.s32 %s11, 1
    %s17 = ssub.s32 %s11, 2
    %s18 = sadd.s32 %s11, 1
    %s19 = ssub.s32 %s11, %s18
    %p20 = scmp.eq.s32.totalorder %s19, 0
    %s22 = sadd.s32 %s21, 1
    %s23 = scalar_select %p20, %s21, %s22
    %p26 = pneg %p20
    %p27 = scmp.eq.s32.totalorder %s11, 1
    %p28 = por %p26, %p27
    %p29 = scmp.ne.s32.totalorder %s21, %s24
    %p30 = scmp.eq.s32.totalorder %s11, 0
    %p31 = por %p29, %p30
    %p32 = scmp.ne.s32.totalorder %s21, %s24
    %p33 = scmp.eq.s32.totalorder %s16, 1
    %p34 = por %p32, %p33
    %p35 = scmp.ne.s32.totalorder %s24, %s25
    %p36 = scmp.eq.s32.totalorder %s16, 0
    %p37 = por %p35, %p36
    %p38 = scmp.ne.s32.totalorder %s24, %s25
    %p39 = scmp.eq.s32.totalorder %s17, 1
    %p40 = por %p38, %p39
    %p42 = scmp.ne.s32.totalorder %s25, %s41
    %p43 = scmp.eq.s32.totalorder %s17, 0
    %p44 = por %p42, %p43
    %s46 = sadd.s32 %s45, 1
    %p49 = scmp.eq.s32.totalorder %s11, 1
    %p50 = scmp.ne.s32.totalorder %s45, %s47
    %p51 = scmp.eq.s32.totalorder %s11, 0
    %p52 = por %p50, %p51
    %p53 = scmp.ne.s32.totalorder %s45, %s47
    %p54 = scmp.eq.s32.totalorder %s16, 1
    %p55 = por %p53, %p54
    %p56 = scmp.ne.s32.totalorder %s47, %s48
    %p57 = scmp.eq.s32.totalorder %s16, 0
    %p58 = por %p56, %p57
    %p59 = scmp.ne.s32.totalorder %s47, %s48
    %p60 = scmp.eq.s32.totalorder %s17, 1
    %p61 = por %p59, %p60
    %p63 = scmp.ne.s32.totalorder %s48, %s62
    %p64 = scmp.eq.s32.totalorder %s17, 0
    %p65 = por %p63, %p64
    %s67 = sadd.s32 %s66, 1
    %p70 = scmp.eq.s32.totalorder %s11, 1
    %p71 = scmp.ne.s32.totalorder %s66, %s68
    %p72 = scmp.eq.s32.totalorder %s11, 0
    %p73 = por %p71, %p72
    %p74 = scmp.ne.s32.totalorder %s66, %s68
    %p75 = scmp.eq.s32.totalorder %s16, 1
    %p76 = por %p74, %p75
    %p77 = scmp.ne.s32.totalorder %s68, %s69
    %p78 = scmp.eq.s32.totalorder %s16, 0
    %p79 = por %p77, %p78
    %p80 = scmp.ne.s32.totalorder %s68, %s69
    %p81 = scmp.eq.s32.totalorder %s17, 1
    %p82 = por %p80, %p81
    %p84 = scmp.ne.s32.totalorder %s69, %s83
    %p85 = scmp.eq.s32.totalorder %s17, 0
    %p86 = por %p84, %p85
    %s88 = sadd.s32 %s87, 1
    %p91 = scmp.eq.s32.totalorder %s11, 1
    %p92 = scmp.ne.s32.totalorder %s87, %s89
    %p93 = scmp.eq.s32.totalorder %s11, 0
    %p94 = por %p92, %p93
    %p95 = scmp.ne.s32.totalorder %s87, %s89
    %p96 = scmp.eq.s32.totalorder %s16, 1
    %p97 = por %p95, %p96
    %p98 = scmp.ne.s32.totalorder %s89, %s90
    %p99 = scmp.eq.s32.totalorder %s16, 0
    %p100 = por %p98, %p99
    %p101 = scmp.ne.s32.totalorder %s89, %s90
    %p102 = scmp.eq.s32.totalorder %s17, 1
    %p103 = por %p101, %p102
    %p105 = scmp.ne.s32.totalorder %s90, %s104
    %p106 = scmp.eq.s32.totalorder %s17, 0
    %p107 = por %p105, %p106
    %s108 = ssub.s32 %s11, %s18
    %p109 = scmp.eq.s32.totalorder %s108, 0
    %s111 = sadd.s32 %s110, 1
    %s112 = scalar_select %p109, %s110, %s111
    %p115 = pneg %p109
    %p116 = scmp.eq.s32.totalorder %s11, 1
    %p117 = por %p115, %p116
    %p118 = scmp.ne.s32.totalorder %s110, %s113
    %p119 = scmp.eq.s32.totalorder %s11, 0
    %p120 = por %p118, %p119
    %p121 = scmp.ne.s32.totalorder %s110, %s113
    %p122 = scmp.eq.s32.totalorder %s16, 1
    %p123 = por %p121, %p122
    %p124 = scmp.ne.s32.totalorder %s113, %s114
    %p125 = scmp.eq.s32.totalorder %s16, 0
    %p126 = por %p124, %p125
    %p127 = scmp.ne.s32.totalorder %s113, %s114
    %p128 = scmp.eq.s32.totalorder %s17, 1
    %p129 = por %p127, %p128
    %p131 = scmp.ne.s32.totalorder %s114, %s130
    %p132 = scmp.eq.s32.totalorder %s17, 0
    %p133 = por %p131, %p132
    %s134 = ssub.s32 %s11, %s18
    %p135 = scmp.eq.s32.totalorder %s134, 0
    %s137 = sadd.s32 %s136, 1
    %s138 = scalar_select %p135, %s136, %s137
    %p141 = pneg %p135
    %p142 = scmp.eq.s32.totalorder %s11, 1
    %p143 = por %p141, %p142
    %p144 = scmp.ne.s32.totalorder %s136, %s139
    %p145 = scmp.eq.s32.totalorder %s11, 0
    %p146 = por %p144, %p145
    %p147 = scmp.ne.s32.totalorder %s136, %s139
    %p148 = scmp.eq.s32.totalorder %s16, 1
    %p149 = por %p147, %p148
    %p150 = scmp.ne.s32.totalorder %s139, %s140
    %p151 = scmp.eq.s32.totalorder %s16, 0
    %p152 = por %p150, %p151
    %p153 = scmp.ne.s32.totalorder %s139, %s140
    %p154 = scmp.eq.s32.totalorder %s17, 1
    %p155 = por %p153, %p154
    %p157 = scmp.ne.s32.totalorder %s140, %s156
    %p158 = scmp.eq.s32.totalorder %s17, 0
    %p159 = por %p157, %p158
    %p160 = scmp.le.s32.totalorder 1, %s11
    %p161 = scmp.lt.s32.totalorder %s11, 3
    %p162 = pnand %p160, %p161
    %p163 = pneg %p162
    // Predicated region
    $region9: #{run.9} parent=5 // pred_check
      _
    $region10: #{run.9} parent=5 // pred_check_branch
      %165 = sbr.rel (%p162) target = $region12
    $region11: #{run.9} parent=5 // pred_region
      %s166 = ssub.s32 %s11, 1
      // Predicated region
      $region13: #{run.9} parent=11 // pred_check
        %p167 = pneg %p58
      $region14: #{run.9} parent=11 // pred_check_branch
        %169 = sbr.rel (%p167) target = $region16
      $region15: #{run.9} parent=11 // pred_region
        _
      $region16: #{run.9} parent=11 // pred_fallthru
        _
      // Predicated region
      $region17: #{run.9} parent=11 // pred_check
        %p170 = pneg %p79
      $region18: #{run.9} parent=11 // pred_check_branch
        %172 = sbr.rel (%p170) target = $region20
      $region19: #{run.9} parent=11 // pred_region
        _
      $region20: #{run.9} parent=11 // pred_fallthru
        _
      // Predicated region
      $region21: #{run.9} parent=11 // pred_check
        %p173 = pneg %p100
      $region22: #{run.9} parent=11 // pred_check_branch
        %175 = sbr.rel (%p173) target = $region24
      $region23: #{run.9} parent=11 // pred_region
        _
      $region24: #{run.9} parent=11 // pred_fallthru
        _
    $region12: #{run.9} parent=5 // pred_fallthru
      _
    %p176 = scmp.lt.s32.totalorder %s11, 2
    // Predicated region
    $region25: #{run.9} parent=5 // pred_check
      %p177 = pneg %p176
    $region26: #{run.9} parent=5 // pred_check_branch
      %179 = sbr.rel (%p177) target = $region28
    $region27: #{run.9} parent=5 // pred_region
      // Predicated region
      $region29: #{run.9} parent=27 // pred_check
        %p180 = pneg %p31
      $region30: #{run.9} parent=27 // pred_check_branch
        %182 = sbr.rel (%p180) target = $region32
      $region31: #{run.9} parent=27 // pred_region
        %p183 = scmp.lt.s32.totalorder %s11, 1
        %s184 = scalar_select %p183, %s11, 1
        %s185 = smul.addr %s184, 6
        %s186 = smul.addr %s185, 4
        %s187 = scalar_lea.vmem %s0, %s186
      $region32: #{run.9} parent=27 // pred_fallthru
        _
      // Predicated region
      $region33: #{run.9} parent=27 // pred_check
        %p188 = pneg %p120
      $region34: #{run.9} parent=27 // pred_check_branch
        %190 = sbr.rel (%p188) target = $region36
      $region35: #{run.9} parent=27 // pred_region
        %p191 = scmp.lt.s32.totalorder %s11, 1
        %s192 = scalar_select %p191, %s11, 1
        %s193 = smul.addr %s192, 2
        %s194 = smul.addr %s193, 4
        %s195 = scalar_lea.vmem %s4, %s194
      $region36: #{run.9} parent=27 // pred_fallthru
        _
    $region28: #{run.9} parent=5 // pred_fallthru
      _
    %p196 = scmp.le.s32.totalorder 1, %s11
    %p197 = scmp.lt.s32.totalorder %s11, 3
    %p198 = pnand %p196, %p197
    %p199 = pneg %p198
    // Predicated region
    $region37: #{run.9} parent=5 // pred_check
      _
    $region38: #{run.9} parent=5 // pred_check_branch
      %201 = sbr.rel (%p198) target = $region40
    $region39: #{run.9} parent=5 // pred_region
      %s202 = ssub.s32 %s11, 1
      %p203 = scmp.lt.s32.totalorder %s16, 1
      %s204 = scalar_select %p203, %s16, 1
      %s205 = smul.addr %s204, 6
      %s206 = smul.addr %s205, 4
      %s207 = scalar_lea.vmem %s0, %s206
      %p208 = pneg %p37
      %p209 = pneg %p34
      %p210 = pneg %p58
      %p211 = pneg %p55
      %p212 = pneg %p79
      %p213 = pneg %p76
      %p214 = pneg %p100
      %p215 = pneg %p97
      %p216 = scmp.lt.s32.totalorder %s16, 1
      %s217 = scalar_select %p216, %s16, 1
      %s218 = smul.addr %s217, 2
      %s219 = smul.addr %s218, 4
      %s220 = scalar_lea.vmem %s4, %s219
      %p221 = pneg %p126
      %p222 = pneg %p123
      %p223 = pneg %p152
      %p224 = pneg %p149
      %p225 = scmp.lt.s32.totalorder %s16, 1
      %s226 = scalar_select %p225, %s16, 1
      %s227 = smul.addr %s226, 2
      %s228 = smul.addr %s227, 4
      %s229 = scalar_lea.vmem %s5, %s228
      %p230 = scmp.lt.s32.totalorder %s16, 1
      %s231 = scalar_select %p230, %s16, 1
      %s232 = smul.addr %s231, 6
      %s233 = smul.addr %s232, 4
      %s234 = scalar_lea.vmem %s0, %s233
      %p235 = scmp.lt.s32.totalorder %s16, 1
      %s236 = scalar_select %p235, %s16, 1
      %s237 = smul.addr %s236, 2
      %s238 = smul.addr %s237, 4
      %s239 = scalar_lea.vmem %s4, %s238
      %p240 = scmp.lt.s32.totalorder %s16, 1
      %s241 = scalar_select %p240, %s16, 1
      %s242 = smul.addr %s241, 2
      %s243 = smul.addr %s242, 4
      %s244 = scalar_lea.vmem %s5, %s243
      %v246 = vld [vmem:[%s234] sm:$0x3]
      %v247 = vld [vmem:[%s234 + $0x4] sm:$0x3]
      %v248 = vld [vmem:[%s234 + $0x8] sm:$0x3]
      %v249 = vld [vmem:[%s234 + $0xc] sm:$0x3]
      %v250 = vld [vmem:[%s1] sm:$0xf]
      %v251 = vld [vmem:[%s1 + $0x4] sm:$0xf]
      %v252 = vld [vmem:[%s1 + $0x8] sm:$0xf]
      %v253 = vld [vmem:[%s1 + $0xc] sm:$0xf]
      %v254 = vld [vmem:[%s1 + $0x10] sm:$0xf]
      %v255 = vld [vmem:[%s1 + $0x14] sm:$0xf]
      %v256 = vld [vmem:[%s1 + $0x18] sm:$0xf]
      %v257 = vld [vmem:[%s1 + $0x1c] sm:$0xf]
      %v258 = vld [vmem:[%s234] sm:$0x7]
      %v259 = vld [vmem:[%s234 + $0x4] sm:$0x7]
      %v260 = vld [vmem:[%s234 + $0x8] sm:$0x7]
      %v261 = vld [vmem:[%s234 + $0xc] sm:$0x7]
      %v267 = vunpack.c.l.s4 1983009808
      %v268 = vunpack.c.0.s8 %v267
      %v269 = vlaneseq
      %v270 = vshrl.u32 %v269, 7
      %v271 = vsub.s32 %v268, %v270
      %v272 = vrot.slane %v258, %v271
      %v273 = vcombine.high %v272, %v272
      %v275 = vunpack.c.l.s4 1983009808
      %v276 = vunpack.c.0.s8 %v275
      %v277 = vlaneseq
      %v278 = vshrl.u32 %v277, 7
      %v279 = vsub.s32 %v276, %v278
      %v280 = vrot.slane %v259, %v279
      %v281 = vcombine.high %v280, %v280
      %v283 = vunpack.c.l.s4 1983009808
      %v284 = vunpack.c.0.s8 %v283
      %v285 = vlaneseq
      %v286 = vshrl.u32 %v285, 7
      %v287 = vsub.s32 %v284, %v286
      %v288 = vrot.slane %v260, %v287
      %v289 = vcombine.high %v288, %v288
      %v291 = vunpack.c.l.s4 1983009808
      %v292 = vunpack.c.0.s8 %v291
      %v293 = vlaneseq
      %v294 = vshrl.u32 %v293, 7
      %v295 = vsub.s32 %v292, %v294
      %v296 = vrot.slane %v261, %v295
      %v297 = vcombine.high %v296, %v296
      %vm298 = vsmask.f32 1280
      %vm299 = vsmask.f32 3336
      %vm300 = vmor %vm298, %vm299
      %vm301 = vsmask.f32 5392
      %vm302 = vmor %vm300, %vm301
      %vm303 = vsmask.f32 7448
      %vm304 = vmor %vm302, %vm303
      %v306 = vshrl.u32 %v272, 16
      %v308 = vrot.slane %v306, 6
      %v309 = vshll.u32 %v272, 16
      %v311 = vrot.slane %v309, 7
      %v312 = vor.u32 %v308, %v311
      %v313 = vrot.slane %v312, 2
      %v315 = vshll.u32 %v273, 16
      %v317 = vrot.slane %v315, 7
      %v318 = vsel %vm304, %v313, %v317
      %v320 = vshrl.u32 %v280, 16
      %v322 = vrot.slane %v320, 6
      %v323 = vshll.u32 %v280, 16
      %v325 = vrot.slane %v323, 7
      %v326 = vor.u32 %v322, %v325
      %v327 = vrot.slane %v326, 2
      %v329 = vshll.u32 %v281, 16
      %v331 = vrot.slane %v329, 7
      %v332 = vsel %vm304, %v327, %v331
      %v334 = vshrl.u32 %v288, 16
      %v336 = vrot.slane %v334, 6
      %v337 = vshll.u32 %v288, 16
      %v339 = vrot.slane %v337, 7
      %v340 = vor.u32 %v336, %v339
      %v341 = vrot.slane %v340, 2
      %v343 = vshll.u32 %v289, 16
      %v345 = vrot.slane %v343, 7
      %v346 = vsel %vm304, %v341, %v345
      %v348 = vshrl.u32 %v296, 16
      %v350 = vrot.slane %v348, 6
      %v351 = vshll.u32 %v296, 16
      %v353 = vrot.slane %v351, 7
      %v354 = vor.u32 %v350, %v353
      %v355 = vrot.slane %v354, 2
      %v357 = vshll.u32 %v297, 16
      %v359 = vrot.slane %v357, 7
      %v360 = vsel %vm304, %v355, %v359
      %s361 = scalar_lea.vmem %s1, 32
      %v362 = vld [vmem:[%s361] sm:$0xf]
      %v363 = vld [vmem:[%s361 + $0x4] sm:$0xf]
      %v364 = vld [vmem:[%s361 + $0x8] sm:$0xf]
      %v365 = vld [vmem:[%s361 + $0xc] sm:$0xf]
      %v366 = vld [vmem:[%s361 + $0x10] sm:$0xf]
      %v367 = vld [vmem:[%s361 + $0x14] sm:$0xf]
      %v368 = vld [vmem:[%s361 + $0x18] sm:$0xf]
      %v369 = vld [vmem:[%s361 + $0x1c] sm:$0xf]
      %v370 = vcombine.low %v318, %v332
      %v371 = vcombine.low %v346, %v360
      %v373 = vunpack.c.l.s4 1983009808
      %v374 = vunpack.c.0.s8 %v373
      %v375 = vlaneseq
      %v376 = vshrl.u32 %v375, 7
      %v377 = vsub.s32 %v374, %v376
      %v378 = vrot.slane %v370, %v377
      %v380 = vunpack.c.l.s4 1983009808
      %v381 = vunpack.c.0.s8 %v380
      %v382 = vlaneseq
      %v383 = vshrl.u32 %v382, 7
      %v384 = vsub.s32 %v381, %v383
      %v385 = vrot.slane %v371, %v384
      %v386 = vcombine.low %v378, %v385
      %v395 = vunpack.c.l.b16 %v362
      %v396 = vunpack.c.l.b16 %v363
      %v397 = vunpack.c.l.b16 %v364
      %v398 = vunpack.c.l.b16 %v365
      %v399 = vunpack.c.l.b16 %v366
      %v400 = vunpack.c.l.b16 %v367
      %v401 = vunpack.c.l.b16 %v368
      %v402 = vunpack.c.l.b16 %v369
      %v403 = vpack.c.b16 %v396, %v395
      %v404 = vpack.c.b16 %v398, %v397
      %v405 = vpack.c.b16 %v400, %v399
      %v406 = vpack.c.b16 %v402, %v401
      %vm411 = vcmask 523264
      %v413 = vsel %vm411, %v386, 0
      %415 = vmatprep.subr.bf16.mxu0 0
      %416 = vmatpush1.bf16.msra.mxu0 0
      %417 = vmatprep.subr.bf16.mxu0 0
      %418 = vmatpush1.bf16.msra.mxu0 0
      %419 = vmatprep.subr.bf16.mxu0 0
      %420 = vmatpush1.bf16.msra.mxu0 0
      %421 = vmatprep.subr.bf16.mxu0 0
      %422 = vmatpush1.bf16.msra.mxu0 0
      %423 = vmatprep.subr.bf16.mxu0 0
      %424 = vmatpush1.bf16.msra.mxu0 %v406
      %425 = vmatprep.subr.bf16.mxu0 0
      %426 = vmatpush1.bf16.msra.mxu0 %v405
      %427 = vmatprep.subr.bf16.mxu0 0
      %428 = vmatpush1.bf16.msra.mxu0 %v404
      %429 = vmatprep.subr.bf16.mxu0 0
      %430 = vmatpush1.bf16.msra.mxu0 %v403
      %431 = vmatprep.subr.bf16.mxu0 0
      %432 = vmatpush2.bf16.msra.mxu0 0
      %433 = vmatprep.subr.bf16.mxu0 0
      %434 = vmatpush2.bf16.msra.mxu0 0
      %435 = vmatprep.subr.bf16.mxu0 0
      %436 = vmatpush2.bf16.msra.mxu0 0
      %437 = vmatprep.subr.bf16.mxu0 0
      %438 = vmatpush2.bf16.msra.mxu0 0
      %439 = vmatprep.subr.bf16.mxu0 0
      %440 = vmatpush2.bf16.msra.mxu0 0
      %441 = vmatprep.subr.bf16.mxu0 0
      %442 = vmatpush2.bf16.msra.mxu0 0
      %443 = vmatprep.subr.bf16.mxu0 0
      %444 = vmatpush2.bf16.msra.mxu0 0
      %445 = vmatprep.subr.bf16.mxu0 0
      %446 = vmatpush2.bf16.msra.mxu0 0
      %447 = vmatprep.mubr.bf16.mxu0 0
      %448 = vmatmul.mubr.bf16.gmra.mxu0 %v413
      %v449 = vpop.f32.mrf.mxu0
      %v450 = vadd.f32 0.0, %v449
      %v451 = vpop.f32.mrf.mxu0
      %v452 = vpop.f32.mrf.mxu0
      %v453 = vadd.f32 0.0, %v452
      %v454 = vpop.f32.mrf.mxu0
      %455 = vdwg.mxu0
      %v460 = vcombine.low %v246, %v247
      %v461 = vcombine.low %v248, %v249
      %v463 = vunpack.c.l.s4 1983009808
      %v464 = vunpack.c.0.s8 %v463
      %v465 = vlaneseq
      %v466 = vshrl.u32 %v465, 7
      %v467 = vsub.s32 %v464, %v466
      %v468 = vrot.slane %v460, %v467
      %v470 = vunpack.c.l.s4 1983009808
      %v471 = vunpack.c.0.s8 %v470
      %v472 = vlaneseq
      %v473 = vshrl.u32 %v472, 7
      %v474 = vsub.s32 %v471, %v473
      %v475 = vrot.slane %v461, %v474
      %v476 = vcombine.low %v468, %v475
      %v485 = vunpack.c.l.b16 %v250
      %v486 = vunpack.c.l.b16 %v251
      %v487 = vunpack.c.l.b16 %v252
      %v488 = vunpack.c.l.b16 %v253
      %v489 = vunpack.c.l.b16 %v254
      %v490 = vunpack.c.l.b16 %v255
      %v491 = vunpack.c.l.b16 %v256
      %v492 = vunpack.c.l.b16 %v257
      %v493 = vpack.c.b16 %v486, %v485
      %v494 = vpack.c.b16 %v488, %v487
      %v495 = vpack.c.b16 %v490, %v489
      %v496 = vpack.c.b16 %v492, %v491
      %v502 = vsel %vm411, %v476, 0
      %504 = vmatprep.subr.bf16.mxu0 0
      %505 = vmatpush1.bf16.msra.mxu0 0
      %506 = vmatprep.subr.bf16.mxu0 0
      %507 = vmatpush1.bf16.msra.mxu0 0
      %508 = vmatprep.subr.bf16.mxu0 0
      %509 = vmatpush1.bf16.msra.mxu0 0
      %510 = vmatprep.subr.bf16.mxu0 0
      %511 = vmatpush1.bf16.msra.mxu0 0
      %512 = vmatprep.subr.bf16.mxu0 0
      %513 = vmatpush1.bf16.msra.mxu0 %v496
      %514 = vmatprep.subr.bf16.mxu0 0
      %515 = vmatpush1.bf16.msra.mxu0 %v495
      %516 = vmatprep.subr.bf16.mxu0 0
      %517 = vmatpush1.bf16.msra.mxu0 %v494
      %518 = vmatprep.subr.bf16.mxu0 0
      %519 = vmatpush1.bf16.msra.mxu0 %v493
      %520 = vmatprep.subr.bf16.mxu0 0
      %521 = vmatpush2.bf16.msra.mxu0 0
      %522 = vmatprep.subr.bf16.mxu0 0
      %523 = vmatpush2.bf16.msra.mxu0 0
      %524 = vmatprep.subr.bf16.mxu0 0
      %525 = vmatpush2.bf16.msra.mxu0 0
      %526 = vmatprep.subr.bf16.mxu0 0
      %527 = vmatpush2.bf16.msra.mxu0 0
      %528 = vmatprep.subr.bf16.mxu0 0
      %529 = vmatpush2.bf16.msra.mxu0 0
      %530 = vmatprep.subr.bf16.mxu0 0
      %531 = vmatpush2.bf16.msra.mxu0 0
      %532 = vmatprep.subr.bf16.mxu0 0
      %533 = vmatpush2.bf16.msra.mxu0 0
      %534 = vmatprep.subr.bf16.mxu0 0
      %535 = vmatpush2.bf16.msra.mxu0 0
      %536 = vmatprep.mubr.bf16.mxu0 0
      %537 = vmatmul.mubr.bf16.gmra.mxu0 %v502
      %v538 = vpop.f32.mrf.mxu0
      %v539 = vadd.f32 %v450, %v538
      %v540 = vpop.f32.mrf.mxu0
      %v541 = vpop.f32.mrf.mxu0
      %v542 = vadd.f32 %v453, %v541
      %v543 = vpop.f32.mrf.mxu0
      %544 = vdwg.mxu0
      %v545 = vld [vmem:[%s234] sm:$0x6]
      %v546 = vld [vmem:[%s234 + $0x4] sm:$0x6]
      %v547 = vld [vmem:[%s234 + $0x8] sm:$0x6]
      %v548 = vld [vmem:[%s234 + $0xc] sm:$0x6]
      %v554 = vunpack.c.l.s4 1983009808
      %v555 = vunpack.c.0.s8 %v554
      %v556 = vlaneseq
      %v557 = vshrl.u32 %v556, 7
      %v558 = vsub.s32 %v555, %v557
      %v559 = vrot.slane %v545, %v558
      %v560 = vcombine.high %v559, %v559
      %v562 = vunpack.c.l.s4 1983009808
      %v563 = vunpack.c.0.s8 %v562
      %v564 = vlaneseq
      %v565 = vshrl.u32 %v564, 7
      %v566 = vsub.s32 %v563, %v565
      %v567 = vrot.slane %v546, %v566
      %v568 = vcombine.high %v567, %v567
      %v570 = vunpack.c.l.s4 1983009808
      %v571 = vunpack.c.0.s8 %v570
      %v572 = vlaneseq
      %v573 = vshrl.u32 %v572, 7
      %v574 = vsub.s32 %v571, %v573
      %v575 = vrot.slane %v547, %v574
      %v576 = vcombine.high %v575, %v575
      %v578 = vunpack.c.l.s4 1983009808
      %v579 = vunpack.c.0.s8 %v578
      %v580 = vlaneseq
      %v581 = vshrl.u32 %v580, 7
      %v582 = vsub.s32 %v579, %v581
      %v583 = vrot.slane %v548, %v582
      %v584 = vcombine.high %v583, %v583
      %vm585 = vcmask 1040384
      %vm586 = vcmask 1042434
      %vm587 = vmor %vm585, %vm586
      %vm588 = vcmask 1044484
      %vm589 = vmor %vm587, %vm588
      %vm590 = vcmask 1046534
      %vm591 = vmor %vm589, %vm590
      %v592 = vrot.slane %v559, 7
      %v593 = vrot.slane %v592, 2
      %v594 = vrot.slane %v560, 7
      %v595 = vsel %vm591, %v593, %v594
      %v596 = vrot.slane %v567, 7
      %v597 = vrot.slane %v596, 2
      %v598 = vrot.slane %v568, 7
      %v599 = vsel %vm591, %v597, %v598
      %v600 = vrot.slane %v575, 7
      %v601 = vrot.slane %v600, 2
      %v602 = vrot.slane %v576, 7
      %v603 = vsel %vm591, %v601, %v602
      %v604 = vrot.slane %v583, 7
      %v605 = vrot.slane %v604, 2
      %v606 = vrot.slane %v584, 7
      %v607 = vsel %vm591, %v605, %v606
      %s608 = scalar_lea.vmem %s1, 64
      %v609 = vld [vmem:[%s608] sm:$0xf]
      %v610 = vld [vmem:[%s608 + $0x4] sm:$0xf]
      %v611 = vld [vmem:[%s608 + $0x8] sm:$0xf]
      %v612 = vld [vmem:[%s608 + $0xc] sm:$0xf]
      %v613 = vld [vmem:[%s608 + $0x10] sm:$0xf]
      %v614 = vld [vmem:[%s608 + $0x14] sm:$0xf]
      %v615 = vld [vmem:[%s608 + $0x18] sm:$0xf]
      %v616 = vld [vmem:[%s608 + $0x1c] sm:$0xf]
      %v617 = vcombine.low %v595, %v599
      %v618 = vcombine.low %v603, %v607
      %v620 = vunpack.c.l.s4 1983009808
      %v621 = vunpack.c.0.s8 %v620
      %v622 = vlaneseq
      %v623 = vshrl.u32 %v622, 7
      %v624 = vsub.s32 %v621, %v623
      %v625 = vrot.slane %v617, %v624
      %v627 = vunpack.c.l.s4 1983009808
      %v628 = vunpack.c.0.s8 %v627
      %v629 = vlaneseq
      %v630 = vshrl.u32 %v629, 7
      %v631 = vsub.s32 %v628, %v630
      %v632 = vrot.slane %v618, %v631
      %v633 = vcombine.low %v625, %v632
      %v642 = vunpack.c.l.b16 %v609
      %v643 = vunpack.c.l.b16 %v610
      %v644 = vunpack.c.l.b16 %v611
      %v645 = vunpack.c.l.b16 %v612
      %v646 = vunpack.c.l.b16 %v613
      %v647 = vunpack.c.l.b16 %v614
      %v648 = vunpack.c.l.b16 %v615
      %v649 = vunpack.c.l.b16 %v616
      %v650 = vpack.c.b16 %v643, %v642
      %v651 = vpack.c.b16 %v645, %v644
      %v652 = vpack.c.b16 %v647, %v646
      %v653 = vpack.c.b16 %v649, %v648
      %v659 = vsel %vm411, %v633, 0
      %661 = vmatprep.subr.bf16.mxu0 0
      %662 = vmatpush1.bf16.msra.mxu0 0
      %663 = vmatprep.subr.bf16.mxu0 0
      %664 = vmatpush1.bf16.msra.mxu0 0
      %665 = vmatprep.subr.bf16.mxu0 0
      %666 = vmatpush1.bf16.msra.mxu0 0
      %667 = vmatprep.subr.bf16.mxu0 0
      %668 = vmatpush1.bf16.msra.mxu0 0
      %669 = vmatprep.subr.bf16.mxu0 0
      %670 = vmatpush1.bf16.msra.mxu0 %v653
      %671 = vmatprep.subr.bf16.mxu0 0
      %672 = vmatpush1.bf16.msra.mxu0 %v652
      %673 = vmatprep.subr.bf16.mxu0 0
      %674 = vmatpush1.bf16.msra.mxu0 %v651
      %675 = vmatprep.subr.bf16.mxu0 0
      %676 = vmatpush1.bf16.msra.mxu0 %v650
      %677 = vmatprep.subr.bf16.mxu0 0
      %678 = vmatpush2.bf16.msra.mxu0 0
      %679 = vmatprep.subr.bf16.mxu0 0
      %680 = vmatpush2.bf16.msra.mxu0 0
      %681 = vmatprep.subr.bf16.mxu0 0
      %682 = vmatpush2.bf16.msra.mxu0 0
      %683 = vmatprep.subr.bf16.mxu0 0
      %684 = vmatpush2.bf16.msra.mxu0 0
      %685 = vmatprep.subr.bf16.mxu0 0
      %686 = vmatpush2.bf16.msra.mxu0 0
      %687 = vmatprep.subr.bf16.mxu0 0
      %688 = vmatpush2.bf16.msra.mxu0 0
      %689 = vmatprep.subr.bf16.mxu0 0
      %690 = vmatpush2.bf16.msra.mxu0 0
      %691 = vmatprep.subr.bf16.mxu0 0
      %692 = vmatpush2.bf16.msra.mxu0 0
      %693 = vmatprep.mubr.bf16.mxu0 0
      %694 = vmatmul.mubr.bf16.gmra.mxu0 %v659
      %v695 = vpop.f32.mrf.mxu0
      %v696 = vadd.f32 0.0, %v695
      %v697 = vpop.f32.mrf.mxu0
      %v698 = vpop.f32.mrf.mxu0
      %v699 = vadd.f32 0.0, %v698
      %v700 = vpop.f32.mrf.mxu0
      %701 = vdwg.mxu0
      %v702 = vadd.f32 %v539, %v696
      %v703 = vadd.f32 %v542, %v699
      %s704 = scalar_lea.vmem %s234, 4
      %v705 = vld [vmem:[%s704] sm:$0x3]
      %v706 = vld [vmem:[%s704 + $0x4] sm:$0x3]
      %v707 = vld [vmem:[%s704 + $0x8] sm:$0x3]
      %v708 = vld [vmem:[%s704 + $0xc] sm:$0x3]
      %s709 = scalar_lea.vmem %s1, 96
      %v710 = vld [vmem:[%s709] sm:$0xf]
      %v711 = vld [vmem:[%s709 + $0x4] sm:$0xf]
      %v712 = vld [vmem:[%s709 + $0x8] sm:$0xf]
      %v713 = vld [vmem:[%s709 + $0xc] sm:$0xf]
      %v714 = vld [vmem:[%s709 + $0x10] sm:$0xf]
      %v715 = vld [vmem:[%s709 + $0x14] sm:$0xf]
      %v716 = vld [vmem:[%s709 + $0x18] sm:$0xf]
      %v717 = vld [vmem:[%s709 + $0x1c] sm:$0xf]
      %v722 = vcombine.low %v705, %v706
      %v723 = vcombine.low %v707, %v708
      %v725 = vunpack.c.l.s4 1983009808
      %v726 = vunpack.c.0.s8 %v725
      %v727 = vlaneseq
      %v728 = vshrl.u32 %v727, 7
      %v729 = vsub.s32 %v726, %v728
      %v730 = vrot.slane %v722, %v729
      %v732 = vunpack.c.l.s4 1983009808
      %v733 = vunpack.c.0.s8 %v732
      %v734 = vlaneseq
      %v735 = vshrl.u32 %v734, 7
      %v736 = vsub.s32 %v733, %v735
      %v737 = vrot.slane %v723, %v736
      %v738 = vcombine.low %v730, %v737
      %v747 = vunpack.c.l.b16 %v710
      %v748 = vunpack.c.l.b16 %v711
      %v749 = vunpack.c.l.b16 %v712
      %v750 = vunpack.c.l.b16 %v713
      %v751 = vunpack.c.l.b16 %v714
      %v752 = vunpack.c.l.b16 %v715
      %v753 = vunpack.c.l.b16 %v716
      %v754 = vunpack.c.l.b16 %v717
      %v755 = vpack.c.b16 %v748, %v747
      %v756 = vpack.c.b16 %v750, %v749
      %v757 = vpack.c.b16 %v752, %v751
      %v758 = vpack.c.b16 %v754, %v753
      %v764 = vsel %vm411, %v738, 0
      %766 = vmatprep.subr.bf16.mxu0 0
      %767 = vmatpush1.bf16.msra.mxu0 0
      %768 = vmatprep.subr.bf16.mxu0 0
      %769 = vmatpush1.bf16.msra.mxu0 0
      %770 = vmatprep.subr.bf16.mxu0 0
      %771 = vmatpush1.bf16.msra.mxu0 0
      %772 = vmatprep.subr.bf16.mxu0 0
      %773 = vmatpush1.bf16.msra.mxu0 0
      %774 = vmatprep.subr.bf16.mxu0 0
      %775 = vmatpush1.bf16.msra.mxu0 %v758
      %776 = vmatprep.subr.bf16.mxu0 0
      %777 = vmatpush1.bf16.msra.mxu0 %v757
      %778 = vmatprep.subr.bf16.mxu0 0
      %779 = vmatpush1.bf16.msra.mxu0 %v756
      %780 = vmatprep.subr.bf16.mxu0 0
      %781 = vmatpush1.bf16.msra.mxu0 %v755
      %782 = vmatprep.subr.bf16.mxu0 0
      %783 = vmatpush2.bf16.msra.mxu0 0
      %784 = vmatprep.subr.bf16.mxu0 0
      %785 = vmatpush2.bf16.msra.mxu0 0
      %786 = vmatprep.subr.bf16.mxu0 0
      %787 = vmatpush2.bf16.msra.mxu0 0
      %788 = vmatprep.subr.bf16.mxu0 0
      %789 = vmatpush2.bf16.msra.mxu0 0
      %790 = vmatprep.subr.bf16.mxu0 0
      %791 = vmatpush2.bf16.msra.mxu0 0
      %792 = vmatprep.subr.bf16.mxu0 0
      %793 = vmatpush2.bf16.msra.mxu0 0
      %794 = vmatprep.subr.bf16.mxu0 0
      %795 = vmatpush2.bf16.msra.mxu0 0
      %796 = vmatprep.subr.bf16.mxu0 0
      %797 = vmatpush2.bf16.msra.mxu0 0
      %798 = vmatprep.mubr.bf16.mxu0 0
      %799 = vmatmul.mubr.bf16.gmra.mxu0 %v764
      %v800 = vpop.f32.mrf.mxu0
      %v801 = vadd.f32 0.0, %v800
      %v802 = vpop.f32.mrf.mxu0
      %v803 = vpop.f32.mrf.mxu0
      %v804 = vadd.f32 0.0, %v803
      %v805 = vpop.f32.mrf.mxu0
      %806 = vdwg.mxu0
      %v807 = vadd.f32 %v702, %v801
      %v808 = vadd.f32 %v703, %v804
      %v809 = vld [vmem:[%s704] sm:$0x7]
      %v810 = vld [vmem:[%s704 + $0x4] sm:$0x7]
      %v811 = vld [vmem:[%s704 + $0x8] sm:$0x7]
      %v812 = vld [vmem:[%s704 + $0xc] sm:$0x7]
      %v818 = vunpack.c.l.s4 1983009808
      %v819 = vunpack.c.0.s8 %v818
      %v820 = vlaneseq
      %v821 = vshrl.u32 %v820, 7
      %v822 = vsub.s32 %v819, %v821
      %v823 = vrot.slane %v809, %v822
      %v824 = vcombine.high %v823, %v823
      %v826 = vunpack.c.l.s4 1983009808
      %v827 = vunpack.c.0.s8 %v826
      %v828 = vlaneseq
      %v829 = vshrl.u32 %v828, 7
      %v830 = vsub.s32 %v827, %v829
      %v831 = vrot.slane %v810, %v830
      %v832 = vcombine.high %v831, %v831
      %v834 = vunpack.c.l.s4 1983009808
      %v835 = vunpack.c.0.s8 %v834
      %v836 = vlaneseq
      %v837 = vshrl.u32 %v836, 7
      %v838 = vsub.s32 %v835, %v837
      %v839 = vrot.slane %v811, %v838
      %v840 = vcombine.high %v839, %v839
      %v842 = vunpack.c.l.s4 1983009808
      %v843 = vunpack.c.0.s8 %v842
      %v844 = vlaneseq
      %v845 = vshrl.u32 %v844, 7
      %v846 = vsub.s32 %v843, %v845
      %v847 = vrot.slane %v812, %v846
      %v848 = vcombine.high %v847, %v847
      %v850 = vshrl.u32 %v823, 16
      %v852 = vrot.slane %v850, 6
      %v853 = vshll.u32 %v823, 16
      %v855 = vrot.slane %v853, 7
      %v856 = vor.u32 %v852, %v855
      %v857 = vrot.slane %v856, 2
      %v859 = vshll.u32 %v824, 16
      %v861 = vrot.slane %v859, 7
      %v862 = vsel %vm304, %v857, %v861
      %v864 = vshrl.u32 %v831, 16
      %v866 = vrot.slane %v864, 6
      %v867 = vshll.u32 %v831, 16
      %v869 = vrot.slane %v867, 7
      %v870 = vor.u32 %v866, %v869
      %v871 = vrot.slane %v870, 2
      %v873 = vshll.u32 %v832, 16
      %v875 = vrot.slane %v873, 7
      %v876 = vsel %vm304, %v871, %v875
      %v878 = vshrl.u32 %v839, 16
      %v880 = vrot.slane %v878, 6
      %v881 = vshll.u32 %v839, 16
      %v883 = vrot.slane %v881, 7
      %v884 = vor.u32 %v880, %v883
      %v885 = vrot.slane %v884, 2
      %v887 = vshll.u32 %v840, 16
      %v889 = vrot.slane %v887, 7
      %v890 = vsel %vm304, %v885, %v889
      %v892 = vshrl.u32 %v847, 16
      %v894 = vrot.slane %v892, 6
      %v895 = vshll.u32 %v847, 16
      %v897 = vrot.slane %v895, 7
      %v898 = vor.u32 %v894, %v897
      %v899 = vrot.slane %v898, 2
      %v901 = vshll.u32 %v848, 16
      %v903 = vrot.slane %v901, 7
      %v904 = vsel %vm304, %v899, %v903
      %s905 = scalar_lea.vmem %s1, 128
      %v906 = vld [vmem:[%s905] sm:$0xf]
      %v907 = vld [vmem:[%s905 + $0x4] sm:$0xf]
      %v908 = vld [vmem:[%s905 + $0x8] sm:$0xf]
      %v909 = vld [vmem:[%s905 + $0xc] sm:$0xf]
      %v910 = vld [vmem:[%s905 + $0x10] sm:$0xf]
      %v911 = vld [vmem:[%s905 + $0x14] sm:$0xf]
      %v912 = vld [vmem:[%s905 + $0x18] sm:$0xf]
      %v913 = vld [vmem:[%s905 + $0x1c] sm:$0xf]
      %v914 = vcombine.low %v862, %v876
      %v915 = vcombine.low %v890, %v904
      %v917 = vunpack.c.l.s4 1983009808
      %v918 = vunpack.c.0.s8 %v917
      %v919 = vlaneseq
      %v920 = vshrl.u32 %v919, 7
      %v921 = vsub.s32 %v918, %v920
      %v922 = vrot.slane %v914, %v921
      %v924 = vunpack.c.l.s4 1983009808
      %v925 = vunpack.c.0.s8 %v924
      %v926 = vlaneseq
      %v927 = vshrl.u32 %v926, 7
      %v928 = vsub.s32 %v925, %v927
      %v929 = vrot.slane %v915, %v928
      %v930 = vcombine.low %v922, %v929
      %v939 = vunpack.c.l.b16 %v906
      %v940 = vunpack.c.l.b16 %v907
      %v941 = vunpack.c.l.b16 %v908
      %v942 = vunpack.c.l.b16 %v909
      %v943 = vunpack.c.l.b16 %v910
      %v944 = vunpack.c.l.b16 %v911
      %v945 = vunpack.c.l.b16 %v912
      %v946 = vunpack.c.l.b16 %v913
      %v947 = vpack.c.b16 %v940, %v939
      %v948 = vpack.c.b16 %v942, %v941
      %v949 = vpack.c.b16 %v944, %v943
      %v950 = vpack.c.b16 %v946, %v945
      %v956 = vsel %vm411, %v930, 0
      %958 = vmatprep.subr.bf16.mxu0 0
      %959 = vmatpush1.bf16.msra.mxu0 0
      %960 = vmatprep.subr.bf16.mxu0 0
      %961 = vmatpush1.bf16.msra.mxu0 0
      %962 = vmatprep.subr.bf16.mxu0 0
      %963 = vmatpush1.bf16.msra.mxu0 0
      %964 = vmatprep.subr.bf16.mxu0 0
      %965 = vmatpush1.bf16.msra.mxu0 0
      %966 = vmatprep.subr.bf16.mxu0 0
      %967 = vmatpush1.bf16.msra.mxu0 %v950
      %968 = vmatprep.subr.bf16.mxu0 0
      %969 = vmatpush1.bf16.msra.mxu0 %v949
      %970 = vmatprep.subr.bf16.mxu0 0
      %971 = vmatpush1.bf16.msra.mxu0 %v948
      %972 = vmatprep.subr.bf16.mxu0 0
      %973 = vmatpush1.bf16.msra.mxu0 %v947
      %974 = vmatprep.subr.bf16.mxu0 0
      %975 = vmatpush2.bf16.msra.mxu0 0
      %976 = vmatprep.subr.bf16.mxu0 0
      %977 = vmatpush2.bf16.msra.mxu0 0
      %978 = vmatprep.subr.bf16.mxu0 0
      %979 = vmatpush2.bf16.msra.mxu0 0
      %980 = vmatprep.subr.bf16.mxu0 0
      %981 = vmatpush2.bf16.msra.mxu0 0
      %982 = vmatprep.subr.bf16.mxu0 0
      %983 = vmatpush2.bf16.msra.mxu0 0
      %984 = vmatprep.subr.bf16.mxu0 0
      %985 = vmatpush2.bf16.msra.mxu0 0
      %986 = vmatprep.subr.bf16.mxu0 0
      %987 = vmatpush2.bf16.msra.mxu0 0
      %988 = vmatprep.subr.bf16.mxu0 0
      %989 = vmatpush2.bf16.msra.mxu0 0
      %990 = vmatprep.mubr.bf16.mxu0 0
      %991 = vmatmul.mubr.bf16.gmra.mxu0 %v956
      %v992 = vpop.f32.mrf.mxu0
      %v993 = vadd.f32 0.0, %v992
      %v994 = vpop.f32.mrf.mxu0
      %v995 = vpop.f32.mrf.mxu0
      %v996 = vadd.f32 0.0, %v995
      %v997 = vpop.f32.mrf.mxu0
      %998 = vdwg.mxu0
      %v999 = vadd.f32 %v807, %v993
      %v1000 = vadd.f32 %v808, %v996
      %v1001 = vld [vmem:[%s704] sm:$0x6]
      %v1002 = vld [vmem:[%s704 + $0x4] sm:$0x6]
      %v1003 = vld [vmem:[%s704 + $0x8] sm:$0x6]
      %v1004 = vld [vmem:[%s704 + $0xc] sm:$0x6]
      %v1010 = vunpack.c.l.s4 1983009808
      %v1011 = vunpack.c.0.s8 %v1010
      %v1012 = vlaneseq
      %v1013 = vshrl.u32 %v1012, 7
      %v1014 = vsub.s32 %v1011, %v1013
      %v1015 = vrot.slane %v1001, %v1014
      %v1016 = vcombine.high %v1015, %v1015
      %v1018 = vunpack.c.l.s4 1983009808
      %v1019 = vunpack.c.0.s8 %v1018
      %v1020 = vlaneseq
      %v1021 = vshrl.u32 %v1020, 7
      %v1022 = vsub.s32 %v1019, %v1021
      %v1023 = vrot.slane %v1002, %v1022
      %v1024 = vcombine.high %v1023, %v1023
      %v1026 = vunpack.c.l.s4 1983009808
      %v1027 = vunpack.c.0.s8 %v1026
      %v1028 = vlaneseq
      %v1029 = vshrl.u32 %v1028, 7
      %v1030 = vsub.s32 %v1027, %v1029
      %v1031 = vrot.slane %v1003, %v1030
      %v1032 = vcombine.high %v1031, %v1031
      %v1034 = vunpack.c.l.s4 1983009808
      %v1035 = vunpack.c.0.s8 %v1034
      %v1036 = vlaneseq
      %v1037 = vshrl.u32 %v1036, 7
      %v1038 = vsub.s32 %v1035, %v1037
      %v1039 = vrot.slane %v1004, %v1038
      %v1040 = vcombine.high %v1039, %v1039
      %v1041 = vrot.slane %v1015, 7
      %v1042 = vrot.slane %v1041, 2
      %v1043 = vrot.slane %v1016, 7
      %v1044 = vsel %vm591, %v1042, %v1043
      %v1045 = vrot.slane %v1023, 7
      %v1046 = vrot.slane %v1045, 2
      %v1047 = vrot.slane %v1024, 7
      %v1048 = vsel %vm591, %v1046, %v1047
      %v1049 = vrot.slane %v1031, 7
      %v1050 = vrot.slane %v1049, 2
      %v1051 = vrot.slane %v1032, 7
      %v1052 = vsel %vm591, %v1050, %v1051
      %v1053 = vrot.slane %v1039, 7
      %v1054 = vrot.slane %v1053, 2
      %v1055 = vrot.slane %v1040, 7
      %v1056 = vsel %vm591, %v1054, %v1055
      %s1057 = scalar_lea.vmem %s1, 160
      %v1058 = vld [vmem:[%s1057] sm:$0xf]
      %v1059 = vld [vmem:[%s1057 + $0x4] sm:$0xf]
      %v1060 = vld [vmem:[%s1057 + $0x8] sm:$0xf]
      %v1061 = vld [vmem:[%s1057 + $0xc] sm:$0xf]
      %v1062 = vld [vmem:[%s1057 + $0x10] sm:$0xf]
      %v1063 = vld [vmem:[%s1057 + $0x14] sm:$0xf]
      %v1064 = vld [vmem:[%s1057 + $0x18] sm:$0xf]
      %v1065 = vld [vmem:[%s1057 + $0x1c] sm:$0xf]
      %v1066 = vcombine.low %v1044, %v1048
      %v1067 = vcombine.low %v1052, %v1056
      %v1069 = vunpack.c.l.s4 1983009808
      %v1070 = vunpack.c.0.s8 %v1069
      %v1071 = vlaneseq
      %v1072 = vshrl.u32 %v1071, 7
      %v1073 = vsub.s32 %v1070, %v1072
      %v1074 = vrot.slane %v1066, %v1073
      %v1076 = vunpack.c.l.s4 1983009808
      %v1077 = vunpack.c.0.s8 %v1076
      %v1078 = vlaneseq
      %v1079 = vshrl.u32 %v1078, 7
      %v1080 = vsub.s32 %v1077, %v1079
      %v1081 = vrot.slane %v1067, %v1080
      %v1082 = vcombine.low %v1074, %v1081
      %v1091 = vunpack.c.l.b16 %v1058
      %v1092 = vunpack.c.l.b16 %v1059
      %v1093 = vunpack.c.l.b16 %v1060
      %v1094 = vunpack.c.l.b16 %v1061
      %v1095 = vunpack.c.l.b16 %v1062
      %v1096 = vunpack.c.l.b16 %v1063
      %v1097 = vunpack.c.l.b16 %v1064
      %v1098 = vunpack.c.l.b16 %v1065
      %v1099 = vpack.c.b16 %v1092, %v1091
      %v1100 = vpack.c.b16 %v1094, %v1093
      %v1101 = vpack.c.b16 %v1096, %v1095
      %v1102 = vpack.c.b16 %v1098, %v1097
      %v1108 = vsel %vm411, %v1082, 0
      %1110 = vmatprep.subr.bf16.mxu0 0
      %1111 = vmatpush1.bf16.msra.mxu0 0
      %1112 = vmatprep.subr.bf16.mxu0 0
      %1113 = vmatpush1.bf16.msra.mxu0 0
      %1114 = vmatprep.subr.bf16.mxu0 0
      %1115 = vmatpush1.bf16.msra.mxu0 0
      %1116 = vmatprep.subr.bf16.mxu0 0
      %1117 = vmatpush1.bf16.msra.mxu0 0
      %1118 = vmatprep.subr.bf16.mxu0 0
      %1119 = vmatpush1.bf16.msra.mxu0 %v1102
      %1120 = vmatprep.subr.bf16.mxu0 0
      %1121 = vmatpush1.bf16.msra.mxu0 %v1101
      %1122 = vmatprep.subr.bf16.mxu0 0
      %1123 = vmatpush1.bf16.msra.mxu0 %v1100
      %1124 = vmatprep.subr.bf16.mxu0 0
      %1125 = vmatpush1.bf16.msra.mxu0 %v1099
      %1126 = vmatprep.subr.bf16.mxu0 0
      %1127 = vmatpush2.bf16.msra.mxu0 0
      %1128 = vmatprep.subr.bf16.mxu0 0
      %1129 = vmatpush2.bf16.msra.mxu0 0
      %1130 = vmatprep.subr.bf16.mxu0 0
      %1131 = vmatpush2.bf16.msra.mxu0 0
      %1132 = vmatprep.subr.bf16.mxu0 0
      %1133 = vmatpush2.bf16.msra.mxu0 0
      %1134 = vmatprep.subr.bf16.mxu0 0
      %1135 = vmatpush2.bf16.msra.mxu0 0
      %1136 = vmatprep.subr.bf16.mxu0 0
      %1137 = vmatpush2.bf16.msra.mxu0 0
      %1138 = vmatprep.subr.bf16.mxu0 0
      %1139 = vmatpush2.bf16.msra.mxu0 0
      %1140 = vmatprep.subr.bf16.mxu0 0
      %1141 = vmatpush2.bf16.msra.mxu0 0
      %1142 = vmatprep.mubr.bf16.mxu0 0
      %1143 = vmatmul.mubr.bf16.gmra.mxu0 %v1108
      %v1144 = vpop.f32.mrf.mxu0
      %v1145 = vadd.f32 0.0, %v1144
      %v1146 = vpop.f32.mrf.mxu0
      %v1147 = vpop.f32.mrf.mxu0
      %v1148 = vadd.f32 0.0, %v1147
      %v1149 = vpop.f32.mrf.mxu0
      %1150 = vdwg.mxu0
      %v1151 = vadd.f32 %v999, %v1145
      %v1152 = vadd.f32 %v1000, %v1148
      %s1153 = scalar_lea.vmem %s234, 8
      %v1154 = vld [vmem:[%s1153] sm:$0x3]
      %v1155 = vld [vmem:[%s1153 + $0x4] sm:$0x3]
      %v1156 = vld [vmem:[%s1153 + $0x8] sm:$0x3]
      %v1157 = vld [vmem:[%s1153 + $0xc] sm:$0x3]
      %s1158 = scalar_lea.vmem %s1, 192
      %v1159 = vld [vmem:[%s1158] sm:$0xf]
      %v1160 = vld [vmem:[%s1158 + $0x4] sm:$0xf]
      %v1161 = vld [vmem:[%s1158 + $0x8] sm:$0xf]
      %v1162 = vld [vmem:[%s1158 + $0xc] sm:$0xf]
      %v1163 = vld [vmem:[%s1158 + $0x10] sm:$0xf]
      %v1164 = vld [vmem:[%s1158 + $0x14] sm:$0xf]
      %v1165 = vld [vmem:[%s1158 + $0x18] sm:$0xf]
      %v1166 = vld [vmem:[%s1158 + $0x1c] sm:$0xf]
      %v1171 = vcombine.low %v1154, %v1155
      %v1172 = vcombine.low %v1156, %v1157
      %v1174 = vunpack.c.l.s4 1983009808
      %v1175 = vunpack.c.0.s8 %v1174
      %v1176 = vlaneseq
      %v1177 = vshrl.u32 %v1176, 7
      %v1178 = vsub.s32 %v1175, %v1177
      %v1179 = vrot.slane %v1171, %v1178
      %v1181 = vunpack.c.l.s4 1983009808
      %v1182 = vunpack.c.0.s8 %v1181
      %v1183 = vlaneseq
      %v1184 = vshrl.u32 %v1183, 7
      %v1185 = vsub.s32 %v1182, %v1184
      %v1186 = vrot.slane %v1172, %v1185
      %v1187 = vcombine.low %v1179, %v1186
      %v1196 = vunpack.c.l.b16 %v1159
      %v1197 = vunpack.c.l.b16 %v1160
      %v1198 = vunpack.c.l.b16 %v1161
      %v1199 = vunpack.c.l.b16 %v1162
      %v1200 = vunpack.c.l.b16 %v1163
      %v1201 = vunpack.c.l.b16 %v1164
      %v1202 = vunpack.c.l.b16 %v1165
      %v1203 = vunpack.c.l.b16 %v1166
      %v1204 = vpack.c.b16 %v1197, %v1196
      %v1205 = vpack.c.b16 %v1199, %v1198
      %v1206 = vpack.c.b16 %v1201, %v1200
      %v1207 = vpack.c.b16 %v1203, %v1202
      %v1213 = vsel %vm411, %v1187, 0
      %1215 = vmatprep.subr.bf16.mxu0 0
      %1216 = vmatpush1.bf16.msra.mxu0 0
      %1217 = vmatprep.subr.bf16.mxu0 0
      %1218 = vmatpush1.bf16.msra.mxu0 0
      %1219 = vmatprep.subr.bf16.mxu0 0
      %1220 = vmatpush1.bf16.msra.mxu0 0
      %1221 = vmatprep.subr.bf16.mxu0 0
      %1222 = vmatpush1.bf16.msra.mxu0 0
      %1223 = vmatprep.subr.bf16.mxu0 0
      %1224 = vmatpush1.bf16.msra.mxu0 %v1207
      %1225 = vmatprep.subr.bf16.mxu0 0
      %1226 = vmatpush1.bf16.msra.mxu0 %v1206
      %1227 = vmatprep.subr.bf16.mxu0 0
      %1228 = vmatpush1.bf16.msra.mxu0 %v1205
      %1229 = vmatprep.subr.bf16.mxu0 0
      %1230 = vmatpush1.bf16.msra.mxu0 %v1204
      %1231 = vmatprep.subr.bf16.mxu0 0
      %1232 = vmatpush2.bf16.msra.mxu0 0
      %1233 = vmatprep.subr.bf16.mxu0 0
      %1234 = vmatpush2.bf16.msra.mxu0 0
      %1235 = vmatprep.subr.bf16.mxu0 0
      %1236 = vmatpush2.bf16.msra.mxu0 0
      %1237 = vmatprep.subr.bf16.mxu0 0
      %1238 = vmatpush2.bf16.msra.mxu0 0
      %1239 = vmatprep.subr.bf16.mxu0 0
      %1240 = vmatpush2.bf16.msra.mxu0 0
      %1241 = vmatprep.subr.bf16.mxu0 0
      %1242 = vmatpush2.bf16.msra.mxu0 0
      %1243 = vmatprep.subr.bf16.mxu0 0
      %1244 = vmatpush2.bf16.msra.mxu0 0
      %1245 = vmatprep.subr.bf16.mxu0 0
      %1246 = vmatpush2.bf16.msra.mxu0 0
      %1247 = vmatprep.mubr.bf16.mxu0 0
      %1248 = vmatmul.mubr.bf16.gmra.mxu0 %v1213
      %v1249 = vpop.f32.mrf.mxu0
      %v1250 = vadd.f32 0.0, %v1249
      %v1251 = vpop.f32.mrf.mxu0
      %v1252 = vpop.f32.mrf.mxu0
      %v1253 = vadd.f32 0.0, %v1252
      %v1254 = vpop.f32.mrf.mxu0
      %1255 = vdwg.mxu0
      %v1256 = vadd.f32 %v1151, %v1250
      %v1257 = vadd.f32 %v1152, %v1253
      %v1258 = vld [vmem:[%s1153] sm:$0x7]
      %v1259 = vld [vmem:[%s1153 + $0x4] sm:$0x7]
      %v1260 = vld [vmem:[%s1153 + $0x8] sm:$0x7]
      %v1261 = vld [vmem:[%s1153 + $0xc] sm:$0x7]
      %v1267 = vunpack.c.l.s4 1983009808
      %v1268 = vunpack.c.0.s8 %v1267
      %v1269 = vlaneseq
      %v1270 = vshrl.u32 %v1269, 7
      %v1271 = vsub.s32 %v1268, %v1270
      %v1272 = vrot.slane %v1258, %v1271
      %v1273 = vcombine.high %v1272, %v1272
      %v1275 = vunpack.c.l.s4 1983009808
      %v1276 = vunpack.c.0.s8 %v1275
      %v1277 = vlaneseq
      %v1278 = vshrl.u32 %v1277, 7
      %v1279 = vsub.s32 %v1276, %v1278
      %v1280 = vrot.slane %v1259, %v1279
      %v1281 = vcombine.high %v1280, %v1280
      %v1283 = vunpack.c.l.s4 1983009808
      %v1284 = vunpack.c.0.s8 %v1283
      %v1285 = vlaneseq
      %v1286 = vshrl.u32 %v1285, 7
      %v1287 = vsub.s32 %v1284, %v1286
      %v1288 = vrot.slane %v1260, %v1287
      %v1289 = vcombine.high %v1288, %v1288
      %v1291 = vunpack.c.l.s4 1983009808
      %v1292 = vunpack.c.0.s8 %v1291
      %v1293 = vlaneseq
      %v1294 = vshrl.u32 %v1293, 7
      %v1295 = vsub.s32 %v1292, %v1294
      %v1296 = vrot.slane %v1261, %v1295
      %v1297 = vcombine.high %v1296, %v1296
      %v1299 = vshrl.u32 %v1272, 16
      %v1301 = vrot.slane %v1299, 6
      %v1302 = vshll.u32 %v1272, 16
      %v1304 = vrot.slane %v1302, 7
      %v1305 = vor.u32 %v1301, %v1304
      %v1306 = vrot.slane %v1305, 2
      %v1308 = vshll.u32 %v1273, 16
      %v1310 = vrot.slane %v1308, 7
      %v1311 = vsel %vm304, %v1306, %v1310
      %v1313 = vshrl.u32 %v1280, 16
      %v1315 = vrot.slane %v1313, 6
      %v1316 = vshll.u32 %v1280, 16
      %v1318 = vrot.slane %v1316, 7
      %v1319 = vor.u32 %v1315, %v1318
      %v1320 = vrot.slane %v1319, 2
      %v1322 = vshll.u32 %v1281, 16
      %v1324 = vrot.slane %v1322, 7
      %v1325 = vsel %vm304, %v1320, %v1324
      %v1327 = vshrl.u32 %v1288, 16
      %v1329 = vrot.slane %v1327, 6
      %v1330 = vshll.u32 %v1288, 16
      %v1332 = vrot.slane %v1330, 7
      %v1333 = vor.u32 %v1329, %v1332
      %v1334 = vrot.slane %v1333, 2
      %v1336 = vshll.u32 %v1289, 16
      %v1338 = vrot.slane %v1336, 7
      %v1339 = vsel %vm304, %v1334, %v1338
      %v1341 = vshrl.u32 %v1296, 16
      %v1343 = vrot.slane %v1341, 6
      %v1344 = vshll.u32 %v1296, 16
      %v1346 = vrot.slane %v1344, 7
      %v1347 = vor.u32 %v1343, %v1346
      %v1348 = vrot.slane %v1347, 2
      %v1350 = vshll.u32 %v1297, 16
      %v1352 = vrot.slane %v1350, 7
      %v1353 = vsel %vm304, %v1348, %v1352
      %s1354 = scalar_lea.vmem %s1, 224
      %v1355 = vld [vmem:[%s1354] sm:$0xf]
      %v1356 = vld [vmem:[%s1354 + $0x4] sm:$0xf]
      %v1357 = vld [vmem:[%s1354 + $0x8] sm:$0xf]
      %v1358 = vld [vmem:[%s1354 + $0xc] sm:$0xf]
      %v1359 = vld [vmem:[%s1354 + $0x10] sm:$0xf]
      %v1360 = vld [vmem:[%s1354 + $0x14] sm:$0xf]
      %v1361 = vld [vmem:[%s1354 + $0x18] sm:$0xf]
      %v1362 = vld [vmem:[%s1354 + $0x1c] sm:$0xf]
      %v1363 = vcombine.low %v1311, %v1325
      %v1364 = vcombine.low %v1339, %v1353
      %v1366 = vunpack.c.l.s4 1983009808
      %v1367 = vunpack.c.0.s8 %v1366
      %v1368 = vlaneseq
      %v1369 = vshrl.u32 %v1368, 7
      %v1370 = vsub.s32 %v1367, %v1369
      %v1371 = vrot.slane %v1363, %v1370
      %v1373 = vunpack.c.l.s4 1983009808
      %v1374 = vunpack.c.0.s8 %v1373
      %v1375 = vlaneseq
      %v1376 = vshrl.u32 %v1375, 7
      %v1377 = vsub.s32 %v1374, %v1376
      %v1378 = vrot.slane %v1364, %v1377
      %v1379 = vcombine.low %v1371, %v1378
      %v1388 = vunpack.c.l.b16 %v1355
      %v1389 = vunpack.c.l.b16 %v1356
      %v1390 = vunpack.c.l.b16 %v1357
      %v1391 = vunpack.c.l.b16 %v1358
      %v1392 = vunpack.c.l.b16 %v1359
      %v1393 = vunpack.c.l.b16 %v1360
      %v1394 = vunpack.c.l.b16 %v1361
      %v1395 = vunpack.c.l.b16 %v1362
      %v1396 = vpack.c.b16 %v1389, %v1388
      %v1397 = vpack.c.b16 %v1391, %v1390
      %v1398 = vpack.c.b16 %v1393, %v1392
      %v1399 = vpack.c.b16 %v1395, %v1394
      %v1405 = vsel %vm411, %v1379, 0
      %1407 = vmatprep.subr.bf16.mxu0 0
      %1408 = vmatpush1.bf16.msra.mxu0 0
      %1409 = vmatprep.subr.bf16.mxu0 0
      %1410 = vmatpush1.bf16.msra.mxu0 0
      %1411 = vmatprep.subr.bf16.mxu0 0
      %1412 = vmatpush1.bf16.msra.mxu0 0
      %1413 = vmatprep.subr.bf16.mxu0 0
      %1414 = vmatpush1.bf16.msra.mxu0 0
      %1415 = vmatprep.subr.bf16.mxu0 0
      %1416 = vmatpush1.bf16.msra.mxu0 %v1399
      %1417 = vmatprep.subr.bf16.mxu0 0
      %1418 = vmatpush1.bf16.msra.mxu0 %v1398
      %1419 = vmatprep.subr.bf16.mxu0 0
      %1420 = vmatpush1.bf16.msra.mxu0 %v1397
      %1421 = vmatprep.subr.bf16.mxu0 0
      %1422 = vmatpush1.bf16.msra.mxu0 %v1396
      %1423 = vmatprep.subr.bf16.mxu0 0
      %1424 = vmatpush2.bf16.msra.mxu0 0
      %1425 = vmatprep.subr.bf16.mxu0 0
      %1426 = vmatpush2.bf16.msra.mxu0 0
      %1427 = vmatprep.subr.bf16.mxu0 0
      %1428 = vmatpush2.bf16.msra.mxu0 0
      %1429 = vmatprep.subr.bf16.mxu0 0
      %1430 = vmatpush2.bf16.msra.mxu0 0
      %1431 = vmatprep.subr.bf16.mxu0 0
      %1432 = vmatpush2.bf16.msra.mxu0 0
      %1433 = vmatprep.subr.bf16.mxu0 0
      %1434 = vmatpush2.bf16.msra.mxu0 0
      %1435 = vmatprep.subr.bf16.mxu0 0
      %1436 = vmatpush2.bf16.msra.mxu0 0
      %1437 = vmatprep.subr.bf16.mxu0 0
      %1438 = vmatpush2.bf16.msra.mxu0 0
      %1439 = vmatprep.mubr.bf16.mxu0 0
      %1440 = vmatmul.mubr.bf16.gmra.mxu0 %v1405
      %v1441 = vpop.f32.mrf.mxu0
      %v1442 = vadd.f32 0.0, %v1441
      %v1443 = vpop.f32.mrf.mxu0
      %v1444 = vpop.f32.mrf.mxu0
      %v1445 = vadd.f32 0.0, %v1444
      %v1446 = vpop.f32.mrf.mxu0
      %1447 = vdwg.mxu0
      %v1448 = vadd.f32 %v1256, %v1442
      %v1449 = vadd.f32 %v1257, %v1445
      %v1450 = vld [vmem:[%s1153] sm:$0x6]
      %v1451 = vld [vmem:[%s1153 + $0x4] sm:$0x6]
      %v1452 = vld [vmem:[%s1153 + $0x8] sm:$0x6]
      %v1453 = vld [vmem:[%s1153 + $0xc] sm:$0x6]
      %v1459 = vunpack.c.l.s4 1983009808
      %v1460 = vunpack.c.0.s8 %v1459
      %v1461 = vlaneseq
      %v1462 = vshrl.u32 %v1461, 7
      %v1463 = vsub.s32 %v1460, %v1462
      %v1464 = vrot.slane %v1450, %v1463
      %v1465 = vcombine.high %v1464, %v1464
      %v1467 = vunpack.c.l.s4 1983009808
      %v1468 = vunpack.c.0.s8 %v1467
      %v1469 = vlaneseq
      %v1470 = vshrl.u32 %v1469, 7
      %v1471 = vsub.s32 %v1468, %v1470
      %v1472 = vrot.slane %v1451, %v1471
      %v1473 = vcombine.high %v1472, %v1472
      %v1475 = vunpack.c.l.s4 1983009808
      %v1476 = vunpack.c.0.s8 %v1475
      %v1477 = vlaneseq
      %v1478 = vshrl.u32 %v1477, 7
      %v1479 = vsub.s32 %v1476, %v1478
      %v1480 = vrot.slane %v1452, %v1479
      %v1481 = vcombine.high %v1480, %v1480
      %v1483 = vunpack.c.l.s4 1983009808
      %v1484 = vunpack.c.0.s8 %v1483
      %v1485 = vlaneseq
      %v1486 = vshrl.u32 %v1485, 7
      %v1487 = vsub.s32 %v1484, %v1486
      %v1488 = vrot.slane %v1453, %v1487
      %v1489 = vcombine.high %v1488, %v1488
      %v1490 = vrot.slane %v1464, 7
      %v1491 = vrot.slane %v1490, 2
      %v1492 = vrot.slane %v1465, 7
      %v1493 = vsel %vm591, %v1491, %v1492
      %v1494 = vrot.slane %v1472, 7
      %v1495 = vrot.slane %v1494, 2
      %v1496 = vrot.slane %v1473, 7
      %v1497 = vsel %vm591, %v1495, %v1496
      %v1498 = vrot.slane %v1480, 7
      %v1499 = vrot.slane %v1498, 2
      %v1500 = vrot.slane %v1481, 7
      %v1501 = vsel %vm591, %v1499, %v1500
      %v1502 = vrot.slane %v1488, 7
      %v1503 = vrot.slane %v1502, 2
      %v1504 = vrot.slane %v1489, 7
      %v1505 = vsel %vm591, %v1503, %v1504
      %s1506 = scalar_lea.vmem %s1, 256
      %v1507 = vld [vmem:[%s1506] sm:$0xf]
      %v1508 = vld [vmem:[%s1506 + $0x4] sm:$0xf]
      %v1509 = vld [vmem:[%s1506 + $0x8] sm:$0xf]
      %v1510 = vld [vmem:[%s1506 + $0xc] sm:$0xf]
      %v1511 = vld [vmem:[%s1506 + $0x10] sm:$0xf]
      %v1512 = vld [vmem:[%s1506 + $0x14] sm:$0xf]
      %v1513 = vld [vmem:[%s1506 + $0x18] sm:$0xf]
      %v1514 = vld [vmem:[%s1506 + $0x1c] sm:$0xf]
      %v1515 = vcombine.low %v1493, %v1497
      %v1516 = vcombine.low %v1501, %v1505
      %v1518 = vunpack.c.l.s4 1983009808
      %v1519 = vunpack.c.0.s8 %v1518
      %v1520 = vlaneseq
      %v1521 = vshrl.u32 %v1520, 7
      %v1522 = vsub.s32 %v1519, %v1521
      %v1523 = vrot.slane %v1515, %v1522
      %v1525 = vunpack.c.l.s4 1983009808
      %v1526 = vunpack.c.0.s8 %v1525
      %v1527 = vlaneseq
      %v1528 = vshrl.u32 %v1527, 7
      %v1529 = vsub.s32 %v1526, %v1528
      %v1530 = vrot.slane %v1516, %v1529
      %v1531 = vcombine.low %v1523, %v1530
      %v1540 = vunpack.c.l.b16 %v1507
      %v1541 = vunpack.c.l.b16 %v1508
      %v1542 = vunpack.c.l.b16 %v1509
      %v1543 = vunpack.c.l.b16 %v1510
      %v1544 = vunpack.c.l.b16 %v1511
      %v1545 = vunpack.c.l.b16 %v1512
      %v1546 = vunpack.c.l.b16 %v1513
      %v1547 = vunpack.c.l.b16 %v1514
      %v1548 = vpack.c.b16 %v1541, %v1540
      %v1549 = vpack.c.b16 %v1543, %v1542
      %v1550 = vpack.c.b16 %v1545, %v1544
      %v1551 = vpack.c.b16 %v1547, %v1546
      %v1557 = vsel %vm411, %v1531, 0
      %1559 = vmatprep.subr.bf16.mxu0 0
      %1560 = vmatpush1.bf16.msra.mxu0 0
      %1561 = vmatprep.subr.bf16.mxu0 0
      %1562 = vmatpush1.bf16.msra.mxu0 0
      %1563 = vmatprep.subr.bf16.mxu0 0
      %1564 = vmatpush1.bf16.msra.mxu0 0
      %1565 = vmatprep.subr.bf16.mxu0 0
      %1566 = vmatpush1.bf16.msra.mxu0 0
      %1567 = vmatprep.subr.bf16.mxu0 0
      %1568 = vmatpush1.bf16.msra.mxu0 %v1551
      %1569 = vmatprep.subr.bf16.mxu0 0
      %1570 = vmatpush1.bf16.msra.mxu0 %v1550
      %1571 = vmatprep.subr.bf16.mxu0 0
      %1572 = vmatpush1.bf16.msra.mxu0 %v1549
      %1573 = vmatprep.subr.bf16.mxu0 0
      %1574 = vmatpush1.bf16.msra.mxu0 %v1548
      %1575 = vmatprep.subr.bf16.mxu0 0
      %1576 = vmatpush2.bf16.msra.mxu0 0
      %1577 = vmatprep.subr.bf16.mxu0 0
      %1578 = vmatpush2.bf16.msra.mxu0 0
      %1579 = vmatprep.subr.bf16.mxu0 0
      %1580 = vmatpush2.bf16.msra.mxu0 0
      %1581 = vmatprep.subr.bf16.mxu0 0
      %1582 = vmatpush2.bf16.msra.mxu0 0
      %1583 = vmatprep.subr.bf16.mxu0 0
      %1584 = vmatpush2.bf16.msra.mxu0 0
      %1585 = vmatprep.subr.bf16.mxu0 0
      %1586 = vmatpush2.bf16.msra.mxu0 0
      %1587 = vmatprep.subr.bf16.mxu0 0
      %1588 = vmatpush2.bf16.msra.mxu0 0
      %1589 = vmatprep.subr.bf16.mxu0 0
      %1590 = vmatpush2.bf16.msra.mxu0 0
      %1591 = vmatprep.mubr.bf16.mxu0 0
      %1592 = vmatmul.mubr.bf16.gmra.mxu0 %v1557
      %v1593 = vpop.f32.mrf.mxu0
      %v1594 = vadd.f32 0.0, %v1593
      %v1595 = vpop.f32.mrf.mxu0
      %v1596 = vpop.f32.mrf.mxu0
      %v1597 = vadd.f32 0.0, %v1596
      %v1598 = vpop.f32.mrf.mxu0
      %1599 = vdwg.mxu0
      %v1600 = vadd.f32 %v1448, %v1594
      %v1601 = vadd.f32 %v1449, %v1597
      %v1602 = vld [vmem:[%s2] sm:$0x1]
      %v1604 = vlaneseq
      %v1605 = vshrl.u32 %v1604, 7
      %v1606 = vsub.s32 0, %v1605
      %v1607 = vrot.slane %v1602, %v1606
      %v1609 = vmul.f32 %v1600, %v1607
      %v1610 = vmul.f32 %v1601, %v1607
      %v1611 = vld [vmem:[%s3] sm:$0x1]
      %v1613 = vlaneseq
      %v1614 = vshrl.u32 %v1613, 7
      %v1615 = vsub.s32 0, %v1614
      %v1616 = vrot.slane %v1611, %v1615
      %v1618 = vadd.f32 %v1609, %v1616
      %v1619 = vadd.f32 %v1610, %v1616
      %v1620 = vld [vmem:[%s239] sm:$0xf]
      %v1621 = vld [vmem:[%s239 + $0x4] sm:$0xf]
      %v1622 = vunpack.c.l.bf16 %v1620
      %v1623 = vunpack.c.l.bf16 %v1621
      %v1624 = vadd.f32 %v1618, %v1622
      %v1625 = vadd.f32 %v1619, %v1623
      %v1626 = vmax.f32 %v1624, 0.0
      %v1627 = vmax.f32 %v1625, 0.0
      %v1628 = vpack.c.bf16 %v1627, %v1626
      %v1630 = vunpack.c.l.b16 %v1628
      %v1631 = vunpack.c.h.b16 %v1628
      %v1632 = vpack.c.b16 %v1630, %v1630
      %v1633 = vpack.c.b16 %v1631, %v1631
      %vm1636 = vcmask 519168
      %1637 = vst.msk [vmem:[%s244] sm:$0xf] %vm1636, %v1632
      %1638 = vst.msk [vmem:[%s244 + $0x4] sm:$0xf] %vm1636, %v1633
      %p1639 = scmp.lt.s32.totalorder %s16, 1
      %s1640 = scalar_select %p1639, %s16, 1
      %s1641 = smul.addr %s1640, 2
      %s1642 = smul.addr %s1641, 4
      %s1643 = scalar_lea.vmem %s5, %s1642
      // Predicated region
      $region41: #{run.9} parent=39 // pred_check
        %p1644 = pneg %p149
      $region42: #{run.9} parent=39 // pred_check_branch
        %1646 = sbr.rel (%p1644) target = $region44
      $region43: #{run.9} parent=39 // pred_region
        _
      $region44: #{run.9} parent=39 // pred_fallthru
        _
    $region40: #{run.9} parent=5 // pred_fallthru
      _
    %p1647 = scmp.le.s32.totalorder 2, %s11
    // Predicated region
    $region45: #{run.9} parent=5 // pred_check
      %p1648 = pneg %p1647
    $region46: #{run.9} parent=5 // pred_check_branch
      %1650 = sbr.rel (%p1648) target = $region48
    $region47: #{run.9} parent=5 // pred_region
      %s1651 = ssub.s32 %s11, 2
      // Predicated region
      $region49: #{run.9} parent=47 // pred_check
        %p1652 = pneg %p155
      $region50: #{run.9} parent=47 // pred_check_branch
        %1654 = sbr.rel (%p1652) target = $region52
      $region51: #{run.9} parent=47 // pred_region
        %p1655 = scmp.lt.s32.totalorder %s17, 1
        %s1656 = scalar_select %p1655, %s17, 1
        %s1657 = smul.addr %s1656, 2
        %s1658 = smul.addr %s1657, 4
        %s1659 = scalar_lea.vmem %s5, %s1658
      $region52: #{run.9} parent=47 // pred_fallthru
        _
    $region48: #{run.9} parent=5 // pred_fallthru
      _
  $region6: #{run.9} parent=0 // loop_footer
    %s15 = sadd.s32 1, %s11
  $region7: #{run.9} parent=0 // loop_footer_branch
    %10 = sbr.rel target = $region3
  $region8: #{run.9} parent=0 // loop_exit
    _

// kernel: run.10
$region0: #{run.10}
  #allocation0 [shape = 'u32[]', space=smem, size = 0x4, offset = 0x4, fixed_abs, tag = 'smem constant byte address 0x4 - core index']
  #allocation1 [shape = 'u32[144,128]{1,0:T(1,128)}', space=vmem, size = 0x12000, scoped, tag = 'internal scratch']
  %s0 = inlined_call_operand.vmem [shape: bf16[8,3,3,64], index: 0, kind: input, shape index: {}]
  %s1 = inlined_call_operand.vmem [shape: bf16[9,64,128], index: 1, kind: input, shape index: {}]
  %s2 = inlined_call_operand.vmem [shape: f32[1,128], index: 2, kind: input, shape index: {}]
  %s3 = inlined_call_operand.vmem [shape: f32[1,128], index: 3, kind: input, shape index: {}]
  %s4 = inlined_call_operand.vmem [shape: bf16[2,4,128], index: 4, kind: output, shape index: {}]
  %s5 = sld [smem:[#allocation0]]
  $region49: #{run.10} parent=0
    _
  %s7 = ssub.s32 1, %s5
  %s8 = scalar_select 0, %s7, %s5
  loop: start=0, step=1, limit=4
  $region2: #{run.10} parent=0 // loop_pre_header
    _
  $region3: #{run.10} parent=0 // loop_header
    %s10 = sphi 0, %s14
    %p11 = scmp.ge.s32.totalorder %s10, 4
    %s20 = sphi 0, %s22
    %s23 = sphi 0, %s20
    %s24 = sphi 0, %s23
    %s40 = sphi 0, %s24
    %s44 = sphi 0, %s44
    %s46 = sphi 0, %s44
    %s47 = sphi 0, %s46
    %s61 = sphi 0, %s47
    %s65 = sphi 0, %s65
    %s67 = sphi 0, %s65
    %s68 = sphi 0, %s67
    %s82 = sphi 0, %s68
    %s86 = sphi 0, %s86
    %s88 = sphi 0, %s86
    %s89 = sphi 0, %s88
    %s103 = sphi 0, %s89
    %s109 = sphi 0, %s111
    %s112 = sphi 0, %s109
    %s113 = sphi 0, %s112
    %s129 = sphi 0, %s113
  $region4: #{run.10} parent=0 // loop_header_branch
    %13 = sbr.rel (%p11) target = $region8
  $region5: #{run.10} parent=0 // loop_body
    %s15 = ssub.s32 %s10, 1
    %s16 = ssub.s32 %s10, 2
    %s17 = sadd.s32 %s10, 1
    %s18 = ssub.s32 %s10, %s17
    %p19 = scmp.eq.s32.totalorder %s18, 0
    %s21 = sadd.s32 %s20, 1
    %s22 = scalar_select %p19, %s20, %s21
    %p25 = pneg %p19
    %p26 = scmp.eq.s32.totalorder %s10, 1
    %p27 = por %p25, %p26
    %p28 = scmp.ne.s32.totalorder %s20, %s23
    %p29 = scmp.eq.s32.totalorder %s10, 0
    %p30 = por %p28, %p29
    %p31 = scmp.ne.s32.totalorder %s20, %s23
    %p32 = scmp.eq.s32.totalorder %s15, 1
    %p33 = por %p31, %p32
    %p34 = scmp.ne.s32.totalorder %s23, %s24
    %p35 = scmp.eq.s32.totalorder %s15, 0
    %p36 = por %p34, %p35
    %p37 = scmp.ne.s32.totalorder %s23, %s24
    %p38 = scmp.eq.s32.totalorder %s16, 1
    %p39 = por %p37, %p38
    %p41 = scmp.ne.s32.totalorder %s24, %s40
    %p42 = scmp.eq.s32.totalorder %s16, 0
    %p43 = por %p41, %p42
    %s45 = sadd.s32 %s44, 1
    %p48 = scmp.eq.s32.totalorder %s10, 1
    %p49 = scmp.ne.s32.totalorder %s44, %s46
    %p50 = scmp.eq.s32.totalorder %s10, 0
    %p51 = por %p49, %p50
    %p52 = scmp.ne.s32.totalorder %s44, %s46
    %p53 = scmp.eq.s32.totalorder %s15, 1
    %p54 = por %p52, %p53
    %p55 = scmp.ne.s32.totalorder %s46, %s47
    %p56 = scmp.eq.s32.totalorder %s15, 0
    %p57 = por %p55, %p56
    %p58 = scmp.ne.s32.totalorder %s46, %s47
    %p59 = scmp.eq.s32.totalorder %s16, 1
    %p60 = por %p58, %p59
    %p62 = scmp.ne.s32.totalorder %s47, %s61
    %p63 = scmp.eq.s32.totalorder %s16, 0
    %p64 = por %p62, %p63
    %s66 = sadd.s32 %s65, 1
    %p69 = scmp.eq.s32.totalorder %s10, 1
    %p70 = scmp.ne.s32.totalorder %s65, %s67
    %p71 = scmp.eq.s32.totalorder %s10, 0
    %p72 = por %p70, %p71
    %p73 = scmp.ne.s32.totalorder %s65, %s67
    %p74 = scmp.eq.s32.totalorder %s15, 1
    %p75 = por %p73, %p74
    %p76 = scmp.ne.s32.totalorder %s67, %s68
    %p77 = scmp.eq.s32.totalorder %s15, 0
    %p78 = por %p76, %p77
    %p79 = scmp.ne.s32.totalorder %s67, %s68
    %p80 = scmp.eq.s32.totalorder %s16, 1
    %p81 = por %p79, %p80
    %p83 = scmp.ne.s32.totalorder %s68, %s82
    %p84 = scmp.eq.s32.totalorder %s16, 0
    %p85 = por %p83, %p84
    %s87 = sadd.s32 %s86, 1
    %p90 = scmp.eq.s32.totalorder %s10, 1
    %p91 = scmp.ne.s32.totalorder %s86, %s88
    %p92 = scmp.eq.s32.totalorder %s10, 0
    %p93 = por %p91, %p92
    %p94 = scmp.ne.s32.totalorder %s86, %s88
    %p95 = scmp.eq.s32.totalorder %s15, 1
    %p96 = por %p94, %p95
    %p97 = scmp.ne.s32.totalorder %s88, %s89
    %p98 = scmp.eq.s32.totalorder %s15, 0
    %p99 = por %p97, %p98
    %p100 = scmp.ne.s32.totalorder %s88, %s89
    %p101 = scmp.eq.s32.totalorder %s16, 1
    %p102 = por %p100, %p101
    %p104 = scmp.ne.s32.totalorder %s89, %s103
    %p105 = scmp.eq.s32.totalorder %s16, 0
    %p106 = por %p104, %p105
    %s107 = ssub.s32 %s10, %s17
    %p108 = scmp.eq.s32.totalorder %s107, 0
    %s110 = sadd.s32 %s109, 1
    %s111 = scalar_select %p108, %s109, %s110
    %p114 = pneg %p108
    %p115 = scmp.eq.s32.totalorder %s10, 1
    %p116 = por %p114, %p115
    %p117 = scmp.ne.s32.totalorder %s109, %s112
    %p118 = scmp.eq.s32.totalorder %s10, 0
    %p119 = por %p117, %p118
    %p120 = scmp.ne.s32.totalorder %s109, %s112
    %p121 = scmp.eq.s32.totalorder %s15, 1
    %p122 = por %p120, %p121
    %p123 = scmp.ne.s32.totalorder %s112, %s113
    %p124 = scmp.eq.s32.totalorder %s15, 0
    %p125 = por %p123, %p124
    %p126 = scmp.ne.s32.totalorder %s112, %s113
    %p127 = scmp.eq.s32.totalorder %s16, 1
    %p128 = por %p126, %p127
    %p130 = scmp.ne.s32.totalorder %s113, %s129
    %p131 = scmp.eq.s32.totalorder %s16, 0
    %p132 = por %p130, %p131
    %p133 = scmp.le.s32.totalorder 1, %s10
    %p134 = scmp.lt.s32.totalorder %s10, 3
    %p135 = pnand %p133, %p134
    %p136 = pneg %p135
    // Predicated region
    $region9: #{run.10} parent=5 // pred_check
      _
    $region10: #{run.10} parent=5 // pred_check_branch
      %138 = sbr.rel (%p135) target = $region12
    $region11: #{run.10} parent=5 // pred_region
      %s139 = ssub.s32 %s10, 1
      // Predicated region
      $region13: #{run.10} parent=11 // pred_check
        %p140 = pneg %p57
      $region14: #{run.10} parent=11 // pred_check_branch
        %142 = sbr.rel (%p140) target = $region16
      $region15: #{run.10} parent=11 // pred_region
        _
      $region16: #{run.10} parent=11 // pred_fallthru
        _
      // Predicated region
      $region17: #{run.10} parent=11 // pred_check
        %p143 = pneg %p78
      $region18: #{run.10} parent=11 // pred_check_branch
        %145 = sbr.rel (%p143) target = $region20
      $region19: #{run.10} parent=11 // pred_region
        _
      $region20: #{run.10} parent=11 // pred_fallthru
        _
      // Predicated region
      $region21: #{run.10} parent=11 // pred_check
        %p146 = pneg %p99
      $region22: #{run.10} parent=11 // pred_check_branch
        %148 = sbr.rel (%p146) target = $region24
      $region23: #{run.10} parent=11 // pred_region
        _
      $region24: #{run.10} parent=11 // pred_fallthru
        _
    $region12: #{run.10} parent=5 // pred_fallthru
      _
    %p149 = scmp.lt.s32.totalorder %s10, 2
    // Predicated region
    $region25: #{run.10} parent=5 // pred_check
      %p150 = pneg %p149
    $region26: #{run.10} parent=5 // pred_check_branch
      %152 = sbr.rel (%p150) target = $region28
    $region27: #{run.10} parent=5 // pred_region
      // Predicated region
      $region29: #{run.10} parent=27 // pred_check
        %p153 = pneg %p30
      $region30: #{run.10} parent=27 // pred_check_branch
        %155 = sbr.rel (%p153) target = $region32
      $region31: #{run.10} parent=27 // pred_region
        %s156 = smul.u32 4, %s10
        %p157 = scmp.lt.s32.totalorder %s156, 7
        %s158 = scalar_select %p157, %s156, 7
        %s159 = smul.addr %s158, 3
        %s160 = smul.addr %s159, 2
        %s161 = scalar_lea.vmem %s0, %s160
        %s162 = smul.u32 4, %s10
      $region32: #{run.10} parent=27 // pred_fallthru
        _
    $region28: #{run.10} parent=5 // pred_fallthru
      _
    %p163 = scmp.le.s32.totalorder 1, %s10
    %p164 = scmp.lt.s32.totalorder %s10, 3
    %p165 = pnand %p163, %p164
    %p166 = pneg %p165
    // Predicated region
    $region33: #{run.10} parent=5 // pred_check
      _
    $region34: #{run.10} parent=5 // pred_check_branch
      %168 = sbr.rel (%p165) target = $region36
    $region35: #{run.10} parent=5 // pred_region
      %s169 = ssub.s32 %s10, 1
      %s170 = smul.u32 4, %s15
      %p171 = scmp.lt.s32.totalorder %s170, 7
      %s172 = scalar_select %p171, %s170, 7
      %s173 = smul.addr %s172, 3
      %s174 = smul.addr %s173, 2
      %s175 = scalar_lea.vmem %s0, %s174
      %p176 = pneg %p36
      %p177 = pneg %p33
      %p178 = pneg %p57
      %p179 = pneg %p54
      %p180 = pneg %p78
      %p181 = pneg %p75
      %p182 = pneg %p99
      %p183 = pneg %p96
      %p184 = pneg %p125
      %p185 = pneg %p122
      %p186 = scmp.lt.s32.totalorder %s15, 1
      %s187 = scalar_select %p186, %s15, 1
      %s188 = smul.addr %s187, 2
      %s189 = scalar_lea.vmem %s4, %s188
      %s190 = smul.u32 4, %s15
      %p191 = scmp.lt.s32.totalorder %s190, 7
      %s192 = scalar_select %p191, %s190, 7
      %s193 = smul.addr %s192, 3
      %s194 = smul.addr %s193, 2
      %s195 = scalar_lea.vmem %s0, %s194
      %s196 = smul.u32 4, %s15
      %p197 = scmp.lt.s32.totalorder %s15, 1
      %s198 = scalar_select %p197, %s15, 1
      %s199 = smul.addr %s198, 2
      %s200 = scalar_lea.vmem %s4, %s199
      %v202 = vld [vmem:[%s195] sm:$0x1]
      %v203 = vld [vmem:[%s195 + $0x2] sm:$0x1]
      %v204 = vld [vmem:[%s1] sm:$0xf]
      %v205 = vld [vmem:[%s1 + $0x4] sm:$0xf]
      %v206 = vld [vmem:[%s1 + $0x8] sm:$0xf]
      %v207 = vld [vmem:[%s1 + $0xc] sm:$0xf]
      %v208 = vld [vmem:[%s1 + $0x10] sm:$0xf]
      %v209 = vld [vmem:[%s1 + $0x14] sm:$0xf]
      %v210 = vld [vmem:[%s1 + $0x18] sm:$0xf]
      %v211 = vld [vmem:[%s1 + $0x1c] sm:$0xf]
      %s212 = scalar_lea.vmem %s195, 6
      %v213 = vld [vmem:[%s212] sm:$0x1]
      %v214 = vld [vmem:[%s212 + $0x2] sm:$0x1]
      %s215 = scalar_lea.vmem %s1, 32
      %v216 = vld [vmem:[%s215] sm:$0xf]
      %v217 = vld [vmem:[%s215 + $0x4] sm:$0xf]
      %v218 = vld [vmem:[%s215 + $0x8] sm:$0xf]
      %v219 = vld [vmem:[%s215 + $0xc] sm:$0xf]
      %v220 = vld [vmem:[%s215 + $0x10] sm:$0xf]
      %v221 = vld [vmem:[%s215 + $0x14] sm:$0xf]
      %v222 = vld [vmem:[%s215 + $0x18] sm:$0xf]
      %v223 = vld [vmem:[%s215 + $0x1c] sm:$0xf]
      %v226 = vcombine.low %v213, %v214
      %v228 = vunpack.c.l.s4 1966171168
      %v229 = vunpack.c.0.s8 %v228
      %v230 = vlaneseq
      %v231 = vshrl.u32 %v230, 7
      %v232 = vsub.s32 %v229, %v231
      %v233 = vrot.slane %v226, %v232
      %v235 = vunpack.c.l.s4 1966171168
      %v236 = vunpack.c.0.s8 %v235
      %v237 = vlaneseq
      %v238 = vshrl.u32 %v237, 7
      %v239 = vsub.s32 %v236, %v238
      %v240 = vrot.slane %v233, %v239
      %v249 = vunpack.c.l.b16 %v216
      %v250 = vunpack.c.l.b16 %v217
      %v251 = vunpack.c.l.b16 %v218
      %v252 = vunpack.c.l.b16 %v219
      %v253 = vunpack.c.l.b16 %v220
      %v254 = vunpack.c.l.b16 %v221
      %v255 = vunpack.c.l.b16 %v222
      %v256 = vunpack.c.l.b16 %v223
      %v257 = vpack.c.b16 %v250, %v249
      %v258 = vpack.c.b16 %v252, %v251
      %v259 = vpack.c.b16 %v254, %v253
      %v260 = vpack.c.b16 %v256, %v255
      %vm265 = vcmask 523264
      %v267 = vsel %vm265, %v240, 0
      %269 = vmatprep.subr.bf16.mxu0 0
      %270 = vmatpush1.bf16.msra.mxu0 0
      %271 = vmatprep.subr.bf16.mxu0 0
      %272 = vmatpush1.bf16.msra.mxu0 0
      %273 = vmatprep.subr.bf16.mxu0 0
      %274 = vmatpush1.bf16.msra.mxu0 0
      %275 = vmatprep.subr.bf16.mxu0 0
      %276 = vmatpush1.bf16.msra.mxu0 0
      %277 = vmatprep.subr.bf16.mxu0 0
      %278 = vmatpush1.bf16.msra.mxu0 %v260
      %279 = vmatprep.subr.bf16.mxu0 0
      %280 = vmatpush1.bf16.msra.mxu0 %v259
      %281 = vmatprep.subr.bf16.mxu0 0
      %282 = vmatpush1.bf16.msra.mxu0 %v258
      %283 = vmatprep.subr.bf16.mxu0 0
      %284 = vmatpush1.bf16.msra.mxu0 %v257
      %285 = vmatprep.subr.bf16.mxu0 0
      %286 = vmatpush2.bf16.msra.mxu0 0
      %287 = vmatprep.subr.bf16.mxu0 0
      %288 = vmatpush2.bf16.msra.mxu0 0
      %289 = vmatprep.subr.bf16.mxu0 0
      %290 = vmatpush2.bf16.msra.mxu0 0
      %291 = vmatprep.subr.bf16.mxu0 0
      %292 = vmatpush2.bf16.msra.mxu0 0
      %293 = vmatprep.subr.bf16.mxu0 0
      %294 = vmatpush2.bf16.msra.mxu0 0
      %295 = vmatprep.subr.bf16.mxu0 0
      %296 = vmatpush2.bf16.msra.mxu0 0
      %297 = vmatprep.subr.bf16.mxu0 0
      %298 = vmatpush2.bf16.msra.mxu0 0
      %299 = vmatprep.subr.bf16.mxu0 0
      %300 = vmatpush2.bf16.msra.mxu0 0
      %301 = vmatprep.mubr.bf16.mxu0 0
      %302 = vmatmul.mubr.bf16.gmra.mxu0 %v267
      %v303 = vpop.f32.mrf.mxu0
      %v304 = vadd.f32 0.0, %v303
      %v305 = vpop.f32.mrf.mxu0
      %v306 = vpop.f32.mrf.mxu0
      %v307 = vpop.f32.mrf.mxu0
      %308 = vdwg.mxu0
      %v311 = vcombine.low %v202, %v203
      %v313 = vunpack.c.l.s4 1966171168
      %v314 = vunpack.c.0.s8 %v313
      %v315 = vlaneseq
      %v316 = vshrl.u32 %v315, 7
      %v317 = vsub.s32 %v314, %v316
      %v318 = vrot.slane %v311, %v317
      %v320 = vunpack.c.l.s4 1966171168
      %v321 = vunpack.c.0.s8 %v320
      %v322 = vlaneseq
      %v323 = vshrl.u32 %v322, 7
      %v324 = vsub.s32 %v321, %v323
      %v325 = vrot.slane %v318, %v324
      %v334 = vunpack.c.l.b16 %v204
      %v335 = vunpack.c.l.b16 %v205
      %v336 = vunpack.c.l.b16 %v206
      %v337 = vunpack.c.l.b16 %v207
      %v338 = vunpack.c.l.b16 %v208
      %v339 = vunpack.c.l.b16 %v209
      %v340 = vunpack.c.l.b16 %v210
      %v341 = vunpack.c.l.b16 %v211
      %v342 = vpack.c.b16 %v335, %v334
      %v343 = vpack.c.b16 %v337, %v336
      %v344 = vpack.c.b16 %v339, %v338
      %v345 = vpack.c.b16 %v341, %v340
      %v351 = vsel %vm265, %v325, 0
      %353 = vmatprep.subr.bf16.mxu0 0
      %354 = vmatpush1.bf16.msra.mxu0 0
      %355 = vmatprep.subr.bf16.mxu0 0
      %356 = vmatpush1.bf16.msra.mxu0 0
      %357 = vmatprep.subr.bf16.mxu0 0
      %358 = vmatpush1.bf16.msra.mxu0 0
      %359 = vmatprep.subr.bf16.mxu0 0
      %360 = vmatpush1.bf16.msra.mxu0 0
      %361 = vmatprep.subr.bf16.mxu0 0
      %362 = vmatpush1.bf16.msra.mxu0 %v345
      %363 = vmatprep.subr.bf16.mxu0 0
      %364 = vmatpush1.bf16.msra.mxu0 %v344
      %365 = vmatprep.subr.bf16.mxu0 0
      %366 = vmatpush1.bf16.msra.mxu0 %v343
      %367 = vmatprep.subr.bf16.mxu0 0
      %368 = vmatpush1.bf16.msra.mxu0 %v342
      %369 = vmatprep.subr.bf16.mxu0 0
      %370 = vmatpush2.bf16.msra.mxu0 0
      %371 = vmatprep.subr.bf16.mxu0 0
      %372 = vmatpush2.bf16.msra.mxu0 0
      %373 = vmatprep.subr.bf16.mxu0 0
      %374 = vmatpush2.bf16.msra.mxu0 0
      %375 = vmatprep.subr.bf16.mxu0 0
      %376 = vmatpush2.bf16.msra.mxu0 0
      %377 = vmatprep.subr.bf16.mxu0 0
      %378 = vmatpush2.bf16.msra.mxu0 0
      %379 = vmatprep.subr.bf16.mxu0 0
      %380 = vmatpush2.bf16.msra.mxu0 0
      %381 = vmatprep.subr.bf16.mxu0 0
      %382 = vmatpush2.bf16.msra.mxu0 0
      %383 = vmatprep.subr.bf16.mxu0 0
      %384 = vmatpush2.bf16.msra.mxu0 0
      %385 = vmatprep.mubr.bf16.mxu0 0
      %386 = vmatmul.mubr.bf16.gmra.mxu0 %v351
      %v387 = vpop.f32.mrf.mxu0
      %v388 = vadd.f32 %v304, %v387
      %v389 = vpop.f32.mrf.mxu0
      %v390 = vpop.f32.mrf.mxu0
      %v391 = vpop.f32.mrf.mxu0
      %392 = vdwg.mxu0
      %v393 = vld [vmem:[%s195] sm:$0x3]
      %v394 = vld [vmem:[%s195 + $0x2] sm:$0x3]
      %v398 = vunpack.c.l.s4 1966171168
      %v399 = vunpack.c.0.s8 %v398
      %v400 = vlaneseq
      %v401 = vshrl.u32 %v400, 7
      %v402 = vsub.s32 %v399, %v401
      %v403 = vrot.slane %v393, %v402
      %v404 = vcombine.high %v403, %v403
      %v406 = vunpack.c.l.s4 1966171168
      %v407 = vunpack.c.0.s8 %v406
      %v408 = vlaneseq
      %v409 = vshrl.u32 %v408, 7
      %v410 = vsub.s32 %v407, %v409
      %v411 = vrot.slane %v394, %v410
      %v412 = vcombine.high %v411, %v411
      %vm413 = vsmask.f32 256
      %vm414 = vsmask.f32 1284
      %vm415 = vmor %vm413, %vm414
      %vm416 = vsmask.f32 2312
      %vm417 = vmor %vm415, %vm416
      %vm418 = vsmask.f32 3340
      %vm419 = vmor %vm417, %vm418
      %vm420 = vsmask.f32 4368
      %vm421 = vmor %vm419, %vm420
      %vm422 = vsmask.f32 5396
      %vm423 = vmor %vm421, %vm422
      %vm424 = vsmask.f32 6424
      %vm425 = vmor %vm423, %vm424
      %vm426 = vsmask.f32 7452
      %vm427 = vmor %vm425, %vm426
      %v429 = vshrl.u32 %v403, 16
      %v431 = vrot.slane %v429, 7
      %v432 = vrot.slane %v431, 1
      %v434 = vshll.u32 %v404, 16
      %v436 = vsel %vm427, %v432, %v434
      %v438 = vshrl.u32 %v411, 16
      %v440 = vrot.slane %v438, 7
      %v441 = vrot.slane %v440, 1
      %v443 = vshll.u32 %v412, 16
      %v445 = vsel %vm427, %v441, %v443
      %s446 = scalar_lea.vmem %s1, 64
      %v447 = vld [vmem:[%s446] sm:$0xf]
      %v448 = vld [vmem:[%s446 + $0x4] sm:$0xf]
      %v449 = vld [vmem:[%s446 + $0x8] sm:$0xf]
      %v450 = vld [vmem:[%s446 + $0xc] sm:$0xf]
      %v451 = vld [vmem:[%s446 + $0x10] sm:$0xf]
      %v452 = vld [vmem:[%s446 + $0x14] sm:$0xf]
      %v453 = vld [vmem:[%s446 + $0x18] sm:$0xf]
      %v454 = vld [vmem:[%s446 + $0x1c] sm:$0xf]
      %v455 = vcombine.low %v436, %v445
      %v457 = vunpack.c.l.s4 1966171168
      %v458 = vunpack.c.0.s8 %v457
      %v459 = vlaneseq
      %v460 = vshrl.u32 %v459, 7
      %v461 = vsub.s32 %v458, %v460
      %v462 = vrot.slane %v455, %v461
      %v464 = vunpack.c.l.s4 1966171168
      %v465 = vunpack.c.0.s8 %v464
      %v466 = vlaneseq
      %v467 = vshrl.u32 %v466, 7
      %v468 = vsub.s32 %v465, %v467
      %v469 = vrot.slane %v462, %v468
      %v478 = vunpack.c.l.b16 %v447
      %v479 = vunpack.c.l.b16 %v448
      %v480 = vunpack.c.l.b16 %v449
      %v481 = vunpack.c.l.b16 %v450
      %v482 = vunpack.c.l.b16 %v451
      %v483 = vunpack.c.l.b16 %v452
      %v484 = vunpack.c.l.b16 %v453
      %v485 = vunpack.c.l.b16 %v454
      %v486 = vpack.c.b16 %v479, %v478
      %v487 = vpack.c.b16 %v481, %v480
      %v488 = vpack.c.b16 %v483, %v482
      %v489 = vpack.c.b16 %v485, %v484
      %v495 = vsel %vm265, %v469, 0
      %497 = vmatprep.subr.bf16.mxu0 0
      %498 = vmatpush1.bf16.msra.mxu0 0
      %499 = vmatprep.subr.bf16.mxu0 0
      %500 = vmatpush1.bf16.msra.mxu0 0
      %501 = vmatprep.subr.bf16.mxu0 0
      %502 = vmatpush1.bf16.msra.mxu0 0
      %503 = vmatprep.subr.bf16.mxu0 0
      %504 = vmatpush1.bf16.msra.mxu0 0
      %505 = vmatprep.subr.bf16.mxu0 0
      %506 = vmatpush1.bf16.msra.mxu0 %v489
      %507 = vmatprep.subr.bf16.mxu0 0
      %508 = vmatpush1.bf16.msra.mxu0 %v488
      %509 = vmatprep.subr.bf16.mxu0 0
      %510 = vmatpush1.bf16.msra.mxu0 %v487
      %511 = vmatprep.subr.bf16.mxu0 0
      %512 = vmatpush1.bf16.msra.mxu0 %v486
      %513 = vmatprep.subr.bf16.mxu0 0
      %514 = vmatpush2.bf16.msra.mxu0 0
      %515 = vmatprep.subr.bf16.mxu0 0
      %516 = vmatpush2.bf16.msra.mxu0 0
      %517 = vmatprep.subr.bf16.mxu0 0
      %518 = vmatpush2.bf16.msra.mxu0 0
      %519 = vmatprep.subr.bf16.mxu0 0
      %520 = vmatpush2.bf16.msra.mxu0 0
      %521 = vmatprep.subr.bf16.mxu0 0
      %522 = vmatpush2.bf16.msra.mxu0 0
      %523 = vmatprep.subr.bf16.mxu0 0
      %524 = vmatpush2.bf16.msra.mxu0 0
      %525 = vmatprep.subr.bf16.mxu0 0
      %526 = vmatpush2.bf16.msra.mxu0 0
      %527 = vmatprep.subr.bf16.mxu0 0
      %528 = vmatpush2.bf16.msra.mxu0 0
      %529 = vmatprep.mubr.bf16.mxu0 0
      %530 = vmatmul.mubr.bf16.gmra.mxu0 %v495
      %v531 = vpop.f32.mrf.mxu0
      %v532 = vadd.f32 0.0, %v531
      %v533 = vpop.f32.mrf.mxu0
      %v534 = vpop.f32.mrf.mxu0
      %v535 = vpop.f32.mrf.mxu0
      %536 = vdwg.mxu0
      %v537 = vadd.f32 %v388, %v532
      %s538 = scalar_lea.vmem %s195, 12
      %v539 = vld [vmem:[%s538] sm:$0x1]
      %v540 = vld [vmem:[%s538 + $0x2] sm:$0x1]
      %s541 = scalar_lea.vmem %s1, 96
      %v542 = vld [vmem:[%s541] sm:$0xf]
      %v543 = vld [vmem:[%s541 + $0x4] sm:$0xf]
      %v544 = vld [vmem:[%s541 + $0x8] sm:$0xf]
      %v545 = vld [vmem:[%s541 + $0xc] sm:$0xf]
      %v546 = vld [vmem:[%s541 + $0x10] sm:$0xf]
      %v547 = vld [vmem:[%s541 + $0x14] sm:$0xf]
      %v548 = vld [vmem:[%s541 + $0x18] sm:$0xf]
      %v549 = vld [vmem:[%s541 + $0x1c] sm:$0xf]
      %v552 = vcombine.low %v539, %v540
      %v554 = vunpack.c.l.s4 1966171168
      %v555 = vunpack.c.0.s8 %v554
      %v556 = vlaneseq
      %v557 = vshrl.u32 %v556, 7
      %v558 = vsub.s32 %v555, %v557
      %v559 = vrot.slane %v552, %v558
      %v561 = vunpack.c.l.s4 1966171168
      %v562 = vunpack.c.0.s8 %v561
      %v563 = vlaneseq
      %v564 = vshrl.u32 %v563, 7
      %v565 = vsub.s32 %v562, %v564
      %v566 = vrot.slane %v559, %v565
      %v575 = vunpack.c.l.b16 %v542
      %v576 = vunpack.c.l.b16 %v543
      %v577 = vunpack.c.l.b16 %v544
      %v578 = vunpack.c.l.b16 %v545
      %v579 = vunpack.c.l.b16 %v546
      %v580 = vunpack.c.l.b16 %v547
      %v581 = vunpack.c.l.b16 %v548
      %v582 = vunpack.c.l.b16 %v549
      %v583 = vpack.c.b16 %v576, %v575
      %v584 = vpack.c.b16 %v578, %v577
      %v585 = vpack.c.b16 %v580, %v579
      %v586 = vpack.c.b16 %v582, %v581
      %v592 = vsel %vm265, %v566, 0
      %594 = vmatprep.subr.bf16.mxu0 0
      %595 = vmatpush1.bf16.msra.mxu0 0
      %596 = vmatprep.subr.bf16.mxu0 0
      %597 = vmatpush1.bf16.msra.mxu0 0
      %598 = vmatprep.subr.bf16.mxu0 0
      %599 = vmatpush1.bf16.msra.mxu0 0
      %600 = vmatprep.subr.bf16.mxu0 0
      %601 = vmatpush1.bf16.msra.mxu0 0
      %602 = vmatprep.subr.bf16.mxu0 0
      %603 = vmatpush1.bf16.msra.mxu0 %v586
      %604 = vmatprep.subr.bf16.mxu0 0
      %605 = vmatpush1.bf16.msra.mxu0 %v585
      %606 = vmatprep.subr.bf16.mxu0 0
      %607 = vmatpush1.bf16.msra.mxu0 %v584
      %608 = vmatprep.subr.bf16.mxu0 0
      %609 = vmatpush1.bf16.msra.mxu0 %v583
      %610 = vmatprep.subr.bf16.mxu0 0
      %611 = vmatpush2.bf16.msra.mxu0 0
      %612 = vmatprep.subr.bf16.mxu0 0
      %613 = vmatpush2.bf16.msra.mxu0 0
      %614 = vmatprep.subr.bf16.mxu0 0
      %615 = vmatpush2.bf16.msra.mxu0 0
      %616 = vmatprep.subr.bf16.mxu0 0
      %617 = vmatpush2.bf16.msra.mxu0 0
      %618 = vmatprep.subr.bf16.mxu0 0
      %619 = vmatpush2.bf16.msra.mxu0 0
      %620 = vmatprep.subr.bf16.mxu0 0
      %621 = vmatpush2.bf16.msra.mxu0 0
      %622 = vmatprep.subr.bf16.mxu0 0
      %623 = vmatpush2.bf16.msra.mxu0 0
      %624 = vmatprep.subr.bf16.mxu0 0
      %625 = vmatpush2.bf16.msra.mxu0 0
      %626 = vmatprep.mubr.bf16.mxu0 0
      %627 = vmatmul.mubr.bf16.gmra.mxu0 %v592
      %v628 = vpop.f32.mrf.mxu0
      %v629 = vadd.f32 0.0, %v628
      %v630 = vpop.f32.mrf.mxu0
      %v631 = vpop.f32.mrf.mxu0
      %v632 = vpop.f32.mrf.mxu0
      %633 = vdwg.mxu0
      %v634 = vadd.f32 %v537, %v629
      %s635 = scalar_lea.vmem %s195, 18
      %v636 = vld [vmem:[%s635] sm:$0x1]
      %v637 = vld [vmem:[%s635 + $0x2] sm:$0x1]
      %s638 = scalar_lea.vmem %s1, 128
      %v639 = vld [vmem:[%s638] sm:$0xf]
      %v640 = vld [vmem:[%s638 + $0x4] sm:$0xf]
      %v641 = vld [vmem:[%s638 + $0x8] sm:$0xf]
      %v642 = vld [vmem:[%s638 + $0xc] sm:$0xf]
      %v643 = vld [vmem:[%s638 + $0x10] sm:$0xf]
      %v644 = vld [vmem:[%s638 + $0x14] sm:$0xf]
      %v645 = vld [vmem:[%s638 + $0x18] sm:$0xf]
      %v646 = vld [vmem:[%s638 + $0x1c] sm:$0xf]
      %v649 = vcombine.low %v636, %v637
      %v651 = vunpack.c.l.s4 1966171168
      %v652 = vunpack.c.0.s8 %v651
      %v653 = vlaneseq
      %v654 = vshrl.u32 %v653, 7
      %v655 = vsub.s32 %v652, %v654
      %v656 = vrot.slane %v649, %v655
      %v658 = vunpack.c.l.s4 1966171168
      %v659 = vunpack.c.0.s8 %v658
      %v660 = vlaneseq
      %v661 = vshrl.u32 %v660, 7
      %v662 = vsub.s32 %v659, %v661
      %v663 = vrot.slane %v656, %v662
      %v672 = vunpack.c.l.b16 %v639
      %v673 = vunpack.c.l.b16 %v640
      %v674 = vunpack.c.l.b16 %v641
      %v675 = vunpack.c.l.b16 %v642
      %v676 = vunpack.c.l.b16 %v643
      %v677 = vunpack.c.l.b16 %v644
      %v678 = vunpack.c.l.b16 %v645
      %v679 = vunpack.c.l.b16 %v646
      %v680 = vpack.c.b16 %v673, %v672
      %v681 = vpack.c.b16 %v675, %v674
      %v682 = vpack.c.b16 %v677, %v676
      %v683 = vpack.c.b16 %v679, %v678
      %v689 = vsel %vm265, %v663, 0
      %691 = vmatprep.subr.bf16.mxu0 0
      %692 = vmatpush1.bf16.msra.mxu0 0
      %693 = vmatprep.subr.bf16.mxu0 0
      %694 = vmatpush1.bf16.msra.mxu0 0
      %695 = vmatprep.subr.bf16.mxu0 0
      %696 = vmatpush1.bf16.msra.mxu0 0
      %697 = vmatprep.subr.bf16.mxu0 0
      %698 = vmatpush1.bf16.msra.mxu0 0
      %699 = vmatprep.subr.bf16.mxu0 0
      %700 = vmatpush1.bf16.msra.mxu0 %v683
      %701 = vmatprep.subr.bf16.mxu0 0
      %702 = vmatpush1.bf16.msra.mxu0 %v682
      %703 = vmatprep.subr.bf16.mxu0 0
      %704 = vmatpush1.bf16.msra.mxu0 %v681
      %705 = vmatprep.subr.bf16.mxu0 0
      %706 = vmatpush1.bf16.msra.mxu0 %v680
      %707 = vmatprep.subr.bf16.mxu0 0
      %708 = vmatpush2.bf16.msra.mxu0 0
      %709 = vmatprep.subr.bf16.mxu0 0
      %710 = vmatpush2.bf16.msra.mxu0 0
      %711 = vmatprep.subr.bf16.mxu0 0
      %712 = vmatpush2.bf16.msra.mxu0 0
      %713 = vmatprep.subr.bf16.mxu0 0
      %714 = vmatpush2.bf16.msra.mxu0 0
      %715 = vmatprep.subr.bf16.mxu0 0
      %716 = vmatpush2.bf16.msra.mxu0 0
      %717 = vmatprep.subr.bf16.mxu0 0
      %718 = vmatpush2.bf16.msra.mxu0 0
      %719 = vmatprep.subr.bf16.mxu0 0
      %720 = vmatpush2.bf16.msra.mxu0 0
      %721 = vmatprep.subr.bf16.mxu0 0
      %722 = vmatpush2.bf16.msra.mxu0 0
      %723 = vmatprep.mubr.bf16.mxu0 0
      %724 = vmatmul.mubr.bf16.gmra.mxu0 %v689
      %v725 = vpop.f32.mrf.mxu0
      %v726 = vadd.f32 0.0, %v725
      %v727 = vpop.f32.mrf.mxu0
      %v728 = vpop.f32.mrf.mxu0
      %v729 = vpop.f32.mrf.mxu0
      %730 = vdwg.mxu0
      %v731 = vadd.f32 %v634, %v726
      %v732 = vld [vmem:[%s538] sm:$0x3]
      %v733 = vld [vmem:[%s538 + $0x2] sm:$0x3]
      %v737 = vunpack.c.l.s4 1966171168
      %v738 = vunpack.c.0.s8 %v737
      %v739 = vlaneseq
      %v740 = vshrl.u32 %v739, 7
      %v741 = vsub.s32 %v738, %v740
      %v742 = vrot.slane %v732, %v741
      %v743 = vcombine.high %v742, %v742
      %v745 = vunpack.c.l.s4 1966171168
      %v746 = vunpack.c.0.s8 %v745
      %v747 = vlaneseq
      %v748 = vshrl.u32 %v747, 7
      %v749 = vsub.s32 %v746, %v748
      %v750 = vrot.slane %v733, %v749
      %v751 = vcombine.high %v750, %v750
      %v753 = vshrl.u32 %v742, 16
      %v755 = vrot.slane %v753, 7
      %v756 = vrot.slane %v755, 1
      %v758 = vshll.u32 %v743, 16
      %v760 = vsel %vm427, %v756, %v758
      %v762 = vshrl.u32 %v750, 16
      %v764 = vrot.slane %v762, 7
      %v765 = vrot.slane %v764, 1
      %v767 = vshll.u32 %v751, 16
      %v769 = vsel %vm427, %v765, %v767
      %s770 = scalar_lea.vmem %s1, 160
      %v771 = vld [vmem:[%s770] sm:$0xf]
      %v772 = vld [vmem:[%s770 + $0x4] sm:$0xf]
      %v773 = vld [vmem:[%s770 + $0x8] sm:$0xf]
      %v774 = vld [vmem:[%s770 + $0xc] sm:$0xf]
      %v775 = vld [vmem:[%s770 + $0x10] sm:$0xf]
      %v776 = vld [vmem:[%s770 + $0x14] sm:$0xf]
      %v777 = vld [vmem:[%s770 + $0x18] sm:$0xf]
      %v778 = vld [vmem:[%s770 + $0x1c] sm:$0xf]
      %v779 = vcombine.low %v760, %v769
      %v781 = vunpack.c.l.s4 1966171168
      %v782 = vunpack.c.0.s8 %v781
      %v783 = vlaneseq
      %v784 = vshrl.u32 %v783, 7
      %v785 = vsub.s32 %v782, %v784
      %v786 = vrot.slane %v779, %v785
      %v788 = vunpack.c.l.s4 1966171168
      %v789 = vunpack.c.0.s8 %v788
      %v790 = vlaneseq
      %v791 = vshrl.u32 %v790, 7
      %v792 = vsub.s32 %v789, %v791
      %v793 = vrot.slane %v786, %v792
      %v802 = vunpack.c.l.b16 %v771
      %v803 = vunpack.c.l.b16 %v772
      %v804 = vunpack.c.l.b16 %v773
      %v805 = vunpack.c.l.b16 %v774
      %v806 = vunpack.c.l.b16 %v775
      %v807 = vunpack.c.l.b16 %v776
      %v808 = vunpack.c.l.b16 %v777
      %v809 = vunpack.c.l.b16 %v778
      %v810 = vpack.c.b16 %v803, %v802
      %v811 = vpack.c.b16 %v805, %v804
      %v812 = vpack.c.b16 %v807, %v806
      %v813 = vpack.c.b16 %v809, %v808
      %v819 = vsel %vm265, %v793, 0
      %821 = vmatprep.subr.bf16.mxu0 0
      %822 = vmatpush1.bf16.msra.mxu0 0
      %823 = vmatprep.subr.bf16.mxu0 0
      %824 = vmatpush1.bf16.msra.mxu0 0
      %825 = vmatprep.subr.bf16.mxu0 0
      %826 = vmatpush1.bf16.msra.mxu0 0
      %827 = vmatprep.subr.bf16.mxu0 0
      %828 = vmatpush1.bf16.msra.mxu0 0
      %829 = vmatprep.subr.bf16.mxu0 0
      %830 = vmatpush1.bf16.msra.mxu0 %v813
      %831 = vmatprep.subr.bf16.mxu0 0
      %832 = vmatpush1.bf16.msra.mxu0 %v812
      %833 = vmatprep.subr.bf16.mxu0 0
      %834 = vmatpush1.bf16.msra.mxu0 %v811
      %835 = vmatprep.subr.bf16.mxu0 0
      %836 = vmatpush1.bf16.msra.mxu0 %v810
      %837 = vmatprep.subr.bf16.mxu0 0
      %838 = vmatpush2.bf16.msra.mxu0 0
      %839 = vmatprep.subr.bf16.mxu0 0
      %840 = vmatpush2.bf16.msra.mxu0 0
      %841 = vmatprep.subr.bf16.mxu0 0
      %842 = vmatpush2.bf16.msra.mxu0 0
      %843 = vmatprep.subr.bf16.mxu0 0
      %844 = vmatpush2.bf16.msra.mxu0 0
      %845 = vmatprep.subr.bf16.mxu0 0
      %846 = vmatpush2.bf16.msra.mxu0 0
      %847 = vmatprep.subr.bf16.mxu0 0
      %848 = vmatpush2.bf16.msra.mxu0 0
      %849 = vmatprep.subr.bf16.mxu0 0
      %850 = vmatpush2.bf16.msra.mxu0 0
      %851 = vmatprep.subr.bf16.mxu0 0
      %852 = vmatpush2.bf16.msra.mxu0 0
      %853 = vmatprep.mubr.bf16.mxu0 0
      %854 = vmatmul.mubr.bf16.gmra.mxu0 %v819
      %v855 = vpop.f32.mrf.mxu0
      %v856 = vadd.f32 0.0, %v855
      %v857 = vpop.f32.mrf.mxu0
      %v858 = vpop.f32.mrf.mxu0
      %v859 = vpop.f32.mrf.mxu0
      %860 = vdwg.mxu0
      %v861 = vadd.f32 %v731, %v856
      %s862 = scalar_lea.vmem %s195, 2
      %v863 = vld [vmem:[%s862] sm:$0x1]
      %v864 = vld [vmem:[%s862 + $0x2] sm:$0x1]
      %s865 = scalar_lea.vmem %s1, 192
      %v866 = vld [vmem:[%s865] sm:$0xf]
      %v867 = vld [vmem:[%s865 + $0x4] sm:$0xf]
      %v868 = vld [vmem:[%s865 + $0x8] sm:$0xf]
      %v869 = vld [vmem:[%s865 + $0xc] sm:$0xf]
      %v870 = vld [vmem:[%s865 + $0x10] sm:$0xf]
      %v871 = vld [vmem:[%s865 + $0x14] sm:$0xf]
      %v872 = vld [vmem:[%s865 + $0x18] sm:$0xf]
      %v873 = vld [vmem:[%s865 + $0x1c] sm:$0xf]
      %v876 = vcombine.low %v863, %v864
      %v878 = vunpack.c.l.s4 1966171168
      %v879 = vunpack.c.0.s8 %v878
      %v880 = vlaneseq
      %v881 = vshrl.u32 %v880, 7
      %v882 = vsub.s32 %v879, %v881
      %v883 = vrot.slane %v876, %v882
      %v885 = vunpack.c.l.s4 1966171168
      %v886 = vunpack.c.0.s8 %v885
      %v887 = vlaneseq
      %v888 = vshrl.u32 %v887, 7
      %v889 = vsub.s32 %v886, %v888
      %v890 = vrot.slane %v883, %v889
      %v899 = vunpack.c.l.b16 %v866
      %v900 = vunpack.c.l.b16 %v867
      %v901 = vunpack.c.l.b16 %v868
      %v902 = vunpack.c.l.b16 %v869
      %v903 = vunpack.c.l.b16 %v870
      %v904 = vunpack.c.l.b16 %v871
      %v905 = vunpack.c.l.b16 %v872
      %v906 = vunpack.c.l.b16 %v873
      %v907 = vpack.c.b16 %v900, %v899
      %v908 = vpack.c.b16 %v902, %v901
      %v909 = vpack.c.b16 %v904, %v903
      %v910 = vpack.c.b16 %v906, %v905
      %v916 = vsel %vm265, %v890, 0
      %918 = vmatprep.subr.bf16.mxu0 0
      %919 = vmatpush1.bf16.msra.mxu0 0
      %920 = vmatprep.subr.bf16.mxu0 0
      %921 = vmatpush1.bf16.msra.mxu0 0
      %922 = vmatprep.subr.bf16.mxu0 0
      %923 = vmatpush1.bf16.msra.mxu0 0
      %924 = vmatprep.subr.bf16.mxu0 0
      %925 = vmatpush1.bf16.msra.mxu0 0
      %926 = vmatprep.subr.bf16.mxu0 0
      %927 = vmatpush1.bf16.msra.mxu0 %v910
      %928 = vmatprep.subr.bf16.mxu0 0
      %929 = vmatpush1.bf16.msra.mxu0 %v909
      %930 = vmatprep.subr.bf16.mxu0 0
      %931 = vmatpush1.bf16.msra.mxu0 %v908
      %932 = vmatprep.subr.bf16.mxu0 0
      %933 = vmatpush1.bf16.msra.mxu0 %v907
      %934 = vmatprep.subr.bf16.mxu0 0
      %935 = vmatpush2.bf16.msra.mxu0 0
      %936 = vmatprep.subr.bf16.mxu0 0
      %937 = vmatpush2.bf16.msra.mxu0 0
      %938 = vmatprep.subr.bf16.mxu0 0
      %939 = vmatpush2.bf16.msra.mxu0 0
      %940 = vmatprep.subr.bf16.mxu0 0
      %941 = vmatpush2.bf16.msra.mxu0 0
      %942 = vmatprep.subr.bf16.mxu0 0
      %943 = vmatpush2.bf16.msra.mxu0 0
      %944 = vmatprep.subr.bf16.mxu0 0
      %945 = vmatpush2.bf16.msra.mxu0 0
      %946 = vmatprep.subr.bf16.mxu0 0
      %947 = vmatpush2.bf16.msra.mxu0 0
      %948 = vmatprep.subr.bf16.mxu0 0
      %949 = vmatpush2.bf16.msra.mxu0 0
      %950 = vmatprep.mubr.bf16.mxu0 0
      %951 = vmatmul.mubr.bf16.gmra.mxu0 %v916
      %v952 = vpop.f32.mrf.mxu0
      %v953 = vadd.f32 0.0, %v952
      %v954 = vpop.f32.mrf.mxu0
      %v955 = vpop.f32.mrf.mxu0
      %v956 = vpop.f32.mrf.mxu0
      %957 = vdwg.mxu0
      %v958 = vadd.f32 %v861, %v953
      %s959 = scalar_lea.vmem %s195, 8
      %v960 = vld [vmem:[%s959] sm:$0x1]
      %v961 = vld [vmem:[%s959 + $0x2] sm:$0x1]
      %s962 = scalar_lea.vmem %s1, 224
      %v963 = vld [vmem:[%s962] sm:$0xf]
      %v964 = vld [vmem:[%s962 + $0x4] sm:$0xf]
      %v965 = vld [vmem:[%s962 + $0x8] sm:$0xf]
      %v966 = vld [vmem:[%s962 + $0xc] sm:$0xf]
      %v967 = vld [vmem:[%s962 + $0x10] sm:$0xf]
      %v968 = vld [vmem:[%s962 + $0x14] sm:$0xf]
      %v969 = vld [vmem:[%s962 + $0x18] sm:$0xf]
      %v970 = vld [vmem:[%s962 + $0x1c] sm:$0xf]
      %v973 = vcombine.low %v960, %v961
      %v975 = vunpack.c.l.s4 1966171168
      %v976 = vunpack.c.0.s8 %v975
      %v977 = vlaneseq
      %v978 = vshrl.u32 %v977, 7
      %v979 = vsub.s32 %v976, %v978
      %v980 = vrot.slane %v973, %v979
      %v982 = vunpack.c.l.s4 1966171168
      %v983 = vunpack.c.0.s8 %v982
      %v984 = vlaneseq
      %v985 = vshrl.u32 %v984, 7
      %v986 = vsub.s32 %v983, %v985
      %v987 = vrot.slane %v980, %v986
      %v996 = vunpack.c.l.b16 %v963
      %v997 = vunpack.c.l.b16 %v964
      %v998 = vunpack.c.l.b16 %v965
      %v999 = vunpack.c.l.b16 %v966
      %v1000 = vunpack.c.l.b16 %v967
      %v1001 = vunpack.c.l.b16 %v968
      %v1002 = vunpack.c.l.b16 %v969
      %v1003 = vunpack.c.l.b16 %v970
      %v1004 = vpack.c.b16 %v997, %v996
      %v1005 = vpack.c.b16 %v999, %v998
      %v1006 = vpack.c.b16 %v1001, %v1000
      %v1007 = vpack.c.b16 %v1003, %v1002
      %v1013 = vsel %vm265, %v987, 0
      %1015 = vmatprep.subr.bf16.mxu0 0
      %1016 = vmatpush1.bf16.msra.mxu0 0
      %1017 = vmatprep.subr.bf16.mxu0 0
      %1018 = vmatpush1.bf16.msra.mxu0 0
      %1019 = vmatprep.subr.bf16.mxu0 0
      %1020 = vmatpush1.bf16.msra.mxu0 0
      %1021 = vmatprep.subr.bf16.mxu0 0
      %1022 = vmatpush1.bf16.msra.mxu0 0
      %1023 = vmatprep.subr.bf16.mxu0 0
      %1024 = vmatpush1.bf16.msra.mxu0 %v1007
      %1025 = vmatprep.subr.bf16.mxu0 0
      %1026 = vmatpush1.bf16.msra.mxu0 %v1006
      %1027 = vmatprep.subr.bf16.mxu0 0
      %1028 = vmatpush1.bf16.msra.mxu0 %v1005
      %1029 = vmatprep.subr.bf16.mxu0 0
      %1030 = vmatpush1.bf16.msra.mxu0 %v1004
      %1031 = vmatprep.subr.bf16.mxu0 0
      %1032 = vmatpush2.bf16.msra.mxu0 0
      %1033 = vmatprep.subr.bf16.mxu0 0
      %1034 = vmatpush2.bf16.msra.mxu0 0
      %1035 = vmatprep.subr.bf16.mxu0 0
      %1036 = vmatpush2.bf16.msra.mxu0 0
      %1037 = vmatprep.subr.bf16.mxu0 0
      %1038 = vmatpush2.bf16.msra.mxu0 0
      %1039 = vmatprep.subr.bf16.mxu0 0
      %1040 = vmatpush2.bf16.msra.mxu0 0
      %1041 = vmatprep.subr.bf16.mxu0 0
      %1042 = vmatpush2.bf16.msra.mxu0 0
      %1043 = vmatprep.subr.bf16.mxu0 0
      %1044 = vmatpush2.bf16.msra.mxu0 0
      %1045 = vmatprep.subr.bf16.mxu0 0
      %1046 = vmatpush2.bf16.msra.mxu0 0
      %1047 = vmatprep.mubr.bf16.mxu0 0
      %1048 = vmatmul.mubr.bf16.gmra.mxu0 %v1013
      %v1049 = vpop.f32.mrf.mxu0
      %v1050 = vadd.f32 0.0, %v1049
      %v1051 = vpop.f32.mrf.mxu0
      %v1052 = vpop.f32.mrf.mxu0
      %v1053 = vpop.f32.mrf.mxu0
      %1054 = vdwg.mxu0
      %v1055 = vadd.f32 %v958, %v1050
      %v1056 = vld [vmem:[%s862] sm:$0x3]
      %v1057 = vld [vmem:[%s862 + $0x2] sm:$0x3]
      %v1061 = vunpack.c.l.s4 1966171168
      %v1062 = vunpack.c.0.s8 %v1061
      %v1063 = vlaneseq
      %v1064 = vshrl.u32 %v1063, 7
      %v1065 = vsub.s32 %v1062, %v1064
      %v1066 = vrot.slane %v1056, %v1065
      %v1067 = vcombine.high %v1066, %v1066
      %v1069 = vunpack.c.l.s4 1966171168
      %v1070 = vunpack.c.0.s8 %v1069
      %v1071 = vlaneseq
      %v1072 = vshrl.u32 %v1071, 7
      %v1073 = vsub.s32 %v1070, %v1072
      %v1074 = vrot.slane %v1057, %v1073
      %v1075 = vcombine.high %v1074, %v1074
      %v1077 = vshrl.u32 %v1066, 16
      %v1079 = vrot.slane %v1077, 7
      %v1080 = vrot.slane %v1079, 1
      %v1082 = vshll.u32 %v1067, 16
      %v1084 = vsel %vm427, %v1080, %v1082
      %v1086 = vshrl.u32 %v1074, 16
      %v1088 = vrot.slane %v1086, 7
      %v1089 = vrot.slane %v1088, 1
      %v1091 = vshll.u32 %v1075, 16
      %v1093 = vsel %vm427, %v1089, %v1091
      %s1094 = scalar_lea.vmem %s1, 256
      %v1095 = vld [vmem:[%s1094] sm:$0xf]
      %v1096 = vld [vmem:[%s1094 + $0x4] sm:$0xf]
      %v1097 = vld [vmem:[%s1094 + $0x8] sm:$0xf]
      %v1098 = vld [vmem:[%s1094 + $0xc] sm:$0xf]
      %v1099 = vld [vmem:[%s1094 + $0x10] sm:$0xf]
      %v1100 = vld [vmem:[%s1094 + $0x14] sm:$0xf]
      %v1101 = vld [vmem:[%s1094 + $0x18] sm:$0xf]
      %v1102 = vld [vmem:[%s1094 + $0x1c] sm:$0xf]
      %v1103 = vcombine.low %v1084, %v1093
      %v1105 = vunpack.c.l.s4 1966171168
      %v1106 = vunpack.c.0.s8 %v1105
      %v1107 = vlaneseq
      %v1108 = vshrl.u32 %v1107, 7
      %v1109 = vsub.s32 %v1106, %v1108
      %v1110 = vrot.slane %v1103, %v1109
      %v1112 = vunpack.c.l.s4 1966171168
      %v1113 = vunpack.c.0.s8 %v1112
      %v1114 = vlaneseq
      %v1115 = vshrl.u32 %v1114, 7
      %v1116 = vsub.s32 %v1113, %v1115
      %v1117 = vrot.slane %v1110, %v1116
      %v1126 = vunpack.c.l.b16 %v1095
      %v1127 = vunpack.c.l.b16 %v1096
      %v1128 = vunpack.c.l.b16 %v1097
      %v1129 = vunpack.c.l.b16 %v1098
      %v1130 = vunpack.c.l.b16 %v1099
      %v1131 = vunpack.c.l.b16 %v1100
      %v1132 = vunpack.c.l.b16 %v1101
      %v1133 = vunpack.c.l.b16 %v1102
      %v1134 = vpack.c.b16 %v1127, %v1126
      %v1135 = vpack.c.b16 %v1129, %v1128
      %v1136 = vpack.c.b16 %v1131, %v1130
      %v1137 = vpack.c.b16 %v1133, %v1132
      %v1143 = vsel %vm265, %v1117, 0
      %1145 = vmatprep.subr.bf16.mxu0 0
      %1146 = vmatpush1.bf16.msra.mxu0 0
      %1147 = vmatprep.subr.bf16.mxu0 0
      %1148 = vmatpush1.bf16.msra.mxu0 0
      %1149 = vmatprep.subr.bf16.mxu0 0
      %1150 = vmatpush1.bf16.msra.mxu0 0
      %1151 = vmatprep.subr.bf16.mxu0 0
      %1152 = vmatpush1.bf16.msra.mxu0 0
      %1153 = vmatprep.subr.bf16.mxu0 0
      %1154 = vmatpush1.bf16.msra.mxu0 %v1137
      %1155 = vmatprep.subr.bf16.mxu0 0
      %1156 = vmatpush1.bf16.msra.mxu0 %v1136
      %1157 = vmatprep.subr.bf16.mxu0 0
      %1158 = vmatpush1.bf16.msra.mxu0 %v1135
      %1159 = vmatprep.subr.bf16.mxu0 0
      %1160 = vmatpush1.bf16.msra.mxu0 %v1134
      %1161 = vmatprep.subr.bf16.mxu0 0
      %1162 = vmatpush2.bf16.msra.mxu0 0
      %1163 = vmatprep.subr.bf16.mxu0 0
      %1164 = vmatpush2.bf16.msra.mxu0 0
      %1165 = vmatprep.subr.bf16.mxu0 0
      %1166 = vmatpush2.bf16.msra.mxu0 0
      %1167 = vmatprep.subr.bf16.mxu0 0
      %1168 = vmatpush2.bf16.msra.mxu0 0
      %1169 = vmatprep.subr.bf16.mxu0 0
      %1170 = vmatpush2.bf16.msra.mxu0 0
      %1171 = vmatprep.subr.bf16.mxu0 0
      %1172 = vmatpush2.bf16.msra.mxu0 0
      %1173 = vmatprep.subr.bf16.mxu0 0
      %1174 = vmatpush2.bf16.msra.mxu0 0
      %1175 = vmatprep.subr.bf16.mxu0 0
      %1176 = vmatpush2.bf16.msra.mxu0 0
      %1177 = vmatprep.mubr.bf16.mxu0 0
      %1178 = vmatmul.mubr.bf16.gmra.mxu0 %v1143
      %v1179 = vpop.f32.mrf.mxu0
      %v1180 = vadd.f32 0.0, %v1179
      %v1181 = vpop.f32.mrf.mxu0
      %v1182 = vpop.f32.mrf.mxu0
      %v1183 = vpop.f32.mrf.mxu0
      %1184 = vdwg.mxu0
      %v1185 = vadd.f32 %v1055, %v1180
      %v1186 = vld [vmem:[%s2] sm:$0x1]
      %v1188 = vlaneseq
      %v1189 = vshrl.u32 %v1188, 7
      %v1190 = vsub.s32 0, %v1189
      %v1191 = vrot.slane %v1186, %v1190
      %v1193 = vmul.f32 %v1185, %v1191
      %v1194 = vld [vmem:[%s3] sm:$0x1]
      %v1196 = vlaneseq
      %v1197 = vshrl.u32 %v1196, 7
      %v1198 = vsub.s32 0, %v1197
      %v1199 = vrot.slane %v1194, %v1198
      %v1201 = vadd.f32 %v1193, %v1199
      %v1202 = vmax.f32 %v1201, 0.0
      %v1203 = vpack.c.bf16 %v1202, %v1202
      %1204 = vst [vmem:[%s200] sm:$0x3] %v1203
      %p1205 = scmp.lt.s32.totalorder %s15, 1
      %s1206 = scalar_select %p1205, %s15, 1
      %s1207 = smul.addr %s1206, 2
      %s1208 = scalar_lea.vmem %s4, %s1207
      // Predicated region
      $region37: #{run.10} parent=35 // pred_check
        %p1209 = pneg %p122
      $region38: #{run.10} parent=35 // pred_check_branch
        %1211 = sbr.rel (%p1209) target = $region40
      $region39: #{run.10} parent=35 // pred_region
        _
      $region40: #{run.10} parent=35 // pred_fallthru
        _
    $region36: #{run.10} parent=5 // pred_fallthru
      _
    %p1212 = scmp.le.s32.totalorder 2, %s10
    // Predicated region
    $region41: #{run.10} parent=5 // pred_check
      %p1213 = pneg %p1212
    $region42: #{run.10} parent=5 // pred_check_branch
      %1215 = sbr.rel (%p1213) target = $region44
    $region43: #{run.10} parent=5 // pred_region
      %s1216 = ssub.s32 %s10, 2
      // Predicated region
      $region45: #{run.10} parent=43 // pred_check
        %p1217 = pneg %p128
      $region46: #{run.10} parent=43 // pred_check_branch
        %1219 = sbr.rel (%p1217) target = $region48
      $region47: #{run.10} parent=43 // pred_region
        %p1220 = scmp.lt.s32.totalorder %s16, 1
        %s1221 = scalar_select %p1220, %s16, 1
        %s1222 = smul.addr %s1221, 2
        %s1223 = scalar_lea.vmem %s4, %s1222
      $region48: #{run.10} parent=43 // pred_fallthru
        _
    $region44: #{run.10} parent=5 // pred_fallthru
      _
  $region6: #{run.10} parent=0 // loop_footer
    %s14 = sadd.s32 1, %s10
  $region7: #{run.10} parent=0 // loop_footer_branch
    %9 = sbr.rel target = $region3
  $region8: #{run.10} parent=0 // loop_exit
    _

// kernel: run.11
$region0: #{run.11}
  #allocation0 [shape = 'u32[]', space=smem, size = 0x4, offset = 0x4, fixed_abs, tag = 'smem constant byte address 0x4 - core index']
  #allocation1 [shape = 'u32[144,128]{1,0:T(1,128)}', space=vmem, size = 0x12000, scoped, tag = 'internal scratch']
  %s0 = inlined_call_operand.vmem [shape: bf16[2,4,4,128], index: 0, kind: input, shape index: {}]
  %s1 = inlined_call_operand.vmem [shape: bf16[9,128,128], index: 1, kind: input, shape index: {}]
  %s2 = inlined_call_operand.vmem [shape: f32[1,128], index: 2, kind: input, shape index: {}]
  %s3 = inlined_call_operand.vmem [shape: f32[1,128], index: 3, kind: input, shape index: {}]
  %s4 = inlined_call_operand.vmem [shape: bf16[2,4,64], index: 4, kind: input, shape index: {}]
  %s5 = inlined_call_operand.vmem [shape: bf16[64,128], index: 5, kind: input, shape index: {}]
  %s6 = inlined_call_operand.vmem [shape: f32[1,128], index: 6, kind: input, shape index: {}]
  %s7 = inlined_call_operand.vmem [shape: f32[1,128], index: 7, kind: input, shape index: {}]
  %s8 = inlined_call_operand.vmem [shape: bf16[2,4,128], index: 8, kind: output, shape index: {}]
  %s9 = sld [smem:[#allocation0]]
  $region65: #{run.11} parent=0
    _
  %s11 = ssub.s32 1, %s9
  %s12 = scalar_select 0, %s11, %s9
  loop: start=0, step=1, limit=4
  $region2: #{run.11} parent=0 // loop_pre_header
    _
  $region3: #{run.11} parent=0 // loop_header
    %s14 = sphi 0, %s18
    %p15 = scmp.ge.s32.totalorder %s14, 4
    %s24 = sphi 0, %s26
    %s27 = sphi 0, %s24
    %s28 = sphi 0, %s27
    %s44 = sphi 0, %s28
    %s48 = sphi 0, %s48
    %s50 = sphi 0, %s48
    %s51 = sphi 0, %s50
    %s65 = sphi 0, %s51
    %s69 = sphi 0, %s69
    %s71 = sphi 0, %s69
    %s72 = sphi 0, %s71
    %s86 = sphi 0, %s72
    %s90 = sphi 0, %s90
    %s92 = sphi 0, %s90
    %s93 = sphi 0, %s92
    %s107 = sphi 0, %s93
    %s113 = sphi 0, %s115
    %s116 = sphi 0, %s113
    %s117 = sphi 0, %s116
    %s133 = sphi 0, %s117
    %s137 = sphi 0, %s137
    %s139 = sphi 0, %s137
    %s140 = sphi 0, %s139
    %s154 = sphi 0, %s140
    %s158 = sphi 0, %s158
    %s160 = sphi 0, %s158
    %s161 = sphi 0, %s160
    %s175 = sphi 0, %s161
    %s179 = sphi 0, %s179
    %s181 = sphi 0, %s179
    %s182 = sphi 0, %s181
    %s196 = sphi 0, %s182
    %s202 = sphi 0, %s204
    %s205 = sphi 0, %s202
    %s206 = sphi 0, %s205
    %s222 = sphi 0, %s206
  $region4: #{run.11} parent=0 // loop_header_branch
    %17 = sbr.rel (%p15) target = $region8
  $region5: #{run.11} parent=0 // loop_body
    %s19 = ssub.s32 %s14, 1
    %s20 = ssub.s32 %s14, 2
    %s21 = sadd.s32 %s14, 1
    %s22 = ssub.s32 %s14, %s21
    %p23 = scmp.eq.s32.totalorder %s22, 0
    %s25 = sadd.s32 %s24, 1
    %s26 = scalar_select %p23, %s24, %s25
    %p29 = pneg %p23
    %p30 = scmp.eq.s32.totalorder %s14, 1
    %p31 = por %p29, %p30
    %p32 = scmp.ne.s32.totalorder %s24, %s27
    %p33 = scmp.eq.s32.totalorder %s14, 0
    %p34 = por %p32, %p33
    %p35 = scmp.ne.s32.totalorder %s24, %s27
    %p36 = scmp.eq.s32.totalorder %s19, 1
    %p37 = por %p35, %p36
    %p38 = scmp.ne.s32.totalorder %s27, %s28
    %p39 = scmp.eq.s32.totalorder %s19, 0
    %p40 = por %p38, %p39
    %p41 = scmp.ne.s32.totalorder %s27, %s28
    %p42 = scmp.eq.s32.totalorder %s20, 1
    %p43 = por %p41, %p42
    %p45 = scmp.ne.s32.totalorder %s28, %s44
    %p46 = scmp.eq.s32.totalorder %s20, 0
    %p47 = por %p45, %p46
    %s49 = sadd.s32 %s48, 1
    %p52 = scmp.eq.s32.totalorder %s14, 1
    %p53 = scmp.ne.s32.totalorder %s48, %s50
    %p54 = scmp.eq.s32.totalorder %s14, 0
    %p55 = por %p53, %p54
    %p56 = scmp.ne.s32.totalorder %s48, %s50
    %p57 = scmp.eq.s32.totalorder %s19, 1
    %p58 = por %p56, %p57
    %p59 = scmp.ne.s32.totalorder %s50, %s51
    %p60 = scmp.eq.s32.totalorder %s19, 0
    %p61 = por %p59, %p60
    %p62 = scmp.ne.s32.totalorder %s50, %s51
    %p63 = scmp.eq.s32.totalorder %s20, 1
    %p64 = por %p62, %p63
    %p66 = scmp.ne.s32.totalorder %s51, %s65
    %p67 = scmp.eq.s32.totalorder %s20, 0
    %p68 = por %p66, %p67
    %s70 = sadd.s32 %s69, 1
    %p73 = scmp.eq.s32.totalorder %s14, 1
    %p74 = scmp.ne.s32.totalorder %s69, %s71
    %p75 = scmp.eq.s32.totalorder %s14, 0
    %p76 = por %p74, %p75
    %p77 = scmp.ne.s32.totalorder %s69, %s71
    %p78 = scmp.eq.s32.totalorder %s19, 1
    %p79 = por %p77, %p78
    %p80 = scmp.ne.s32.totalorder %s71, %s72
    %p81 = scmp.eq.s32.totalorder %s19, 0
    %p82 = por %p80, %p81
    %p83 = scmp.ne.s32.totalorder %s71, %s72
    %p84 = scmp.eq.s32.totalorder %s20, 1
    %p85 = por %p83, %p84
    %p87 = scmp.ne.s32.totalorder %s72, %s86
    %p88 = scmp.eq.s32.totalorder %s20, 0
    %p89 = por %p87, %p88
    %s91 = sadd.s32 %s90, 1
    %p94 = scmp.eq.s32.totalorder %s14, 1
    %p95 = scmp.ne.s32.totalorder %s90, %s92
    %p96 = scmp.eq.s32.totalorder %s14, 0
    %p97 = por %p95, %p96
    %p98 = scmp.ne.s32.totalorder %s90, %s92
    %p99 = scmp.eq.s32.totalorder %s19, 1
    %p100 = por %p98, %p99
    %p101 = scmp.ne.s32.totalorder %s92, %s93
    %p102 = scmp.eq.s32.totalorder %s19, 0
    %p103 = por %p101, %p102
    %p104 = scmp.ne.s32.totalorder %s92, %s93
    %p105 = scmp.eq.s32.totalorder %s20, 1
    %p106 = por %p104, %p105
    %p108 = scmp.ne.s32.totalorder %s93, %s107
    %p109 = scmp.eq.s32.totalorder %s20, 0
    %p110 = por %p108, %p109
    %s111 = ssub.s32 %s14, %s21
    %p112 = scmp.eq.s32.totalorder %s111, 0
    %s114 = sadd.s32 %s113, 1
    %s115 = scalar_select %p112, %s113, %s114
    %p118 = pneg %p112
    %p119 = scmp.eq.s32.totalorder %s14, 1
    %p120 = por %p118, %p119
    %p121 = scmp.ne.s32.totalorder %s113, %s116
    %p122 = scmp.eq.s32.totalorder %s14, 0
    %p123 = por %p121, %p122
    %p124 = scmp.ne.s32.totalorder %s113, %s116
    %p125 = scmp.eq.s32.totalorder %s19, 1
    %p126 = por %p124, %p125
    %p127 = scmp.ne.s32.totalorder %s116, %s117
    %p128 = scmp.eq.s32.totalorder %s19, 0
    %p129 = por %p127, %p128
    %p130 = scmp.ne.s32.totalorder %s116, %s117
    %p131 = scmp.eq.s32.totalorder %s20, 1
    %p132 = por %p130, %p131
    %p134 = scmp.ne.s32.totalorder %s117, %s133
    %p135 = scmp.eq.s32.totalorder %s20, 0
    %p136 = por %p134, %p135
    %s138 = sadd.s32 %s137, 1
    %p141 = scmp.eq.s32.totalorder %s14, 1
    %p142 = scmp.ne.s32.totalorder %s137, %s139
    %p143 = scmp.eq.s32.totalorder %s14, 0
    %p144 = por %p142, %p143
    %p145 = scmp.ne.s32.totalorder %s137, %s139
    %p146 = scmp.eq.s32.totalorder %s19, 1
    %p147 = por %p145, %p146
    %p148 = scmp.ne.s32.totalorder %s139, %s140
    %p149 = scmp.eq.s32.totalorder %s19, 0
    %p150 = por %p148, %p149
    %p151 = scmp.ne.s32.totalorder %s139, %s140
    %p152 = scmp.eq.s32.totalorder %s20, 1
    %p153 = por %p151, %p152
    %p155 = scmp.ne.s32.totalorder %s140, %s154
    %p156 = scmp.eq.s32.totalorder %s20, 0
    %p157 = por %p155, %p156
    %s159 = sadd.s32 %s158, 1
    %p162 = scmp.eq.s32.totalorder %s14, 1
    %p163 = scmp.ne.s32.totalorder %s158, %s160
    %p164 = scmp.eq.s32.totalorder %s14, 0
    %p165 = por %p163, %p164
    %p166 = scmp.ne.s32.totalorder %s158, %s160
    %p167 = scmp.eq.s32.totalorder %s19, 1
    %p168 = por %p166, %p167
    %p169 = scmp.ne.s32.totalorder %s160, %s161
    %p170 = scmp.eq.s32.totalorder %s19, 0
    %p171 = por %p169, %p170
    %p172 = scmp.ne.s32.totalorder %s160, %s161
    %p173 = scmp.eq.s32.totalorder %s20, 1
    %p174 = por %p172, %p173
    %p176 = scmp.ne.s32.totalorder %s161, %s175
    %p177 = scmp.eq.s32.totalorder %s20, 0
    %p178 = por %p176, %p177
    %s180 = sadd.s32 %s179, 1
    %p183 = scmp.eq.s32.totalorder %s14, 1
    %p184 = scmp.ne.s32.totalorder %s179, %s181
    %p185 = scmp.eq.s32.totalorder %s14, 0
    %p186 = por %p184, %p185
    %p187 = scmp.ne.s32.totalorder %s179, %s181
    %p188 = scmp.eq.s32.totalorder %s19, 1
    %p189 = por %p187, %p188
    %p190 = scmp.ne.s32.totalorder %s181, %s182
    %p191 = scmp.eq.s32.totalorder %s19, 0
    %p192 = por %p190, %p191
    %p193 = scmp.ne.s32.totalorder %s181, %s182
    %p194 = scmp.eq.s32.totalorder %s20, 1
    %p195 = por %p193, %p194
    %p197 = scmp.ne.s32.totalorder %s182, %s196
    %p198 = scmp.eq.s32.totalorder %s20, 0
    %p199 = por %p197, %p198
    %s200 = ssub.s32 %s14, %s21
    %p201 = scmp.eq.s32.totalorder %s200, 0
    %s203 = sadd.s32 %s202, 1
    %s204 = scalar_select %p201, %s202, %s203
    %p207 = pneg %p201
    %p208 = scmp.eq.s32.totalorder %s14, 1
    %p209 = por %p207, %p208
    %p210 = scmp.ne.s32.totalorder %s202, %s205
    %p211 = scmp.eq.s32.totalorder %s14, 0
    %p212 = por %p210, %p211
    %p213 = scmp.ne.s32.totalorder %s202, %s205
    %p214 = scmp.eq.s32.totalorder %s19, 1
    %p215 = por %p213, %p214
    %p216 = scmp.ne.s32.totalorder %s205, %s206
    %p217 = scmp.eq.s32.totalorder %s19, 0
    %p218 = por %p216, %p217
    %p219 = scmp.ne.s32.totalorder %s205, %s206
    %p220 = scmp.eq.s32.totalorder %s20, 1
    %p221 = por %p219, %p220
    %p223 = scmp.ne.s32.totalorder %s206, %s222
    %p224 = scmp.eq.s32.totalorder %s20, 0
    %p225 = por %p223, %p224
    %p226 = scmp.le.s32.totalorder 1, %s14
    %p227 = scmp.lt.s32.totalorder %s14, 3
    %p228 = pnand %p226, %p227
    %p229 = pneg %p228
    // Predicated region
    $region9: #{run.11} parent=5 // pred_check
      _
    $region10: #{run.11} parent=5 // pred_check_branch
      %231 = sbr.rel (%p228) target = $region12
    $region11: #{run.11} parent=5 // pred_region
      %s232 = ssub.s32 %s14, 1
      // Predicated region
      $region13: #{run.11} parent=11 // pred_check
        %p233 = pneg %p61
      $region14: #{run.11} parent=11 // pred_check_branch
        %235 = sbr.rel (%p233) target = $region16
      $region15: #{run.11} parent=11 // pred_region
        _
      $region16: #{run.11} parent=11 // pred_fallthru
        _
      // Predicated region
      $region17: #{run.11} parent=11 // pred_check
        %p236 = pneg %p82
      $region18: #{run.11} parent=11 // pred_check_branch
        %238 = sbr.rel (%p236) target = $region20
      $region19: #{run.11} parent=11 // pred_region
        _
      $region20: #{run.11} parent=11 // pred_fallthru
        _
      // Predicated region
      $region21: #{run.11} parent=11 // pred_check
        %p239 = pneg %p103
      $region22: #{run.11} parent=11 // pred_check_branch
        %241 = sbr.rel (%p239) target = $region24
      $region23: #{run.11} parent=11 // pred_region
        _
      $region24: #{run.11} parent=11 // pred_fallthru
        _
      // Predicated region
      $region25: #{run.11} parent=11 // pred_check
        %p242 = pneg %p150
      $region26: #{run.11} parent=11 // pred_check_branch
        %244 = sbr.rel (%p242) target = $region28
      $region27: #{run.11} parent=11 // pred_region
        _
      $region28: #{run.11} parent=11 // pred_fallthru
        _
      // Predicated region
      $region29: #{run.11} parent=11 // pred_check
        %p245 = pneg %p171
      $region30: #{run.11} parent=11 // pred_check_branch
        %247 = sbr.rel (%p245) target = $region32
      $region31: #{run.11} parent=11 // pred_region
        _
      $region32: #{run.11} parent=11 // pred_fallthru
        _
      // Predicated region
      $region33: #{run.11} parent=11 // pred_check
        %p248 = pneg %p192
      $region34: #{run.11} parent=11 // pred_check_branch
        %250 = sbr.rel (%p248) target = $region36
      $region35: #{run.11} parent=11 // pred_region
        _
      $region36: #{run.11} parent=11 // pred_fallthru
        _
    $region12: #{run.11} parent=5 // pred_fallthru
      _
    %p251 = scmp.lt.s32.totalorder %s14, 2
    // Predicated region
    $region37: #{run.11} parent=5 // pred_check
      %p252 = pneg %p251
    $region38: #{run.11} parent=5 // pred_check_branch
      %254 = sbr.rel (%p252) target = $region40
    $region39: #{run.11} parent=5 // pred_region
      // Predicated region
      $region41: #{run.11} parent=39 // pred_check
        %p255 = pneg %p34
      $region42: #{run.11} parent=39 // pred_check_branch
        %257 = sbr.rel (%p255) target = $region44
      $region43: #{run.11} parent=39 // pred_region
        %p258 = scmp.lt.s32.totalorder %s14, 1
        %s259 = scalar_select %p258, %s14, 1
        %s260 = smul.addr %s259, 4
        %s261 = smul.addr %s260, 2
        %s262 = scalar_lea.vmem %s0, %s261
      $region44: #{run.11} parent=39 // pred_fallthru
        _
      // Predicated region
      $region45: #{run.11} parent=39 // pred_check
        %p263 = pneg %p123
      $region46: #{run.11} parent=39 // pred_check_branch
        %265 = sbr.rel (%p263) target = $region48
      $region47: #{run.11} parent=39 // pred_region
        %p266 = scmp.lt.s32.totalorder %s14, 1
        %s267 = scalar_select %p266, %s14, 1
        %s268 = smul.addr %s267, 2
        %s269 = scalar_lea.vmem %s4, %s268
      $region48: #{run.11} parent=39 // pred_fallthru
        _
    $region40: #{run.11} parent=5 // pred_fallthru
      _
    %p270 = scmp.le.s32.totalorder 1, %s14
    %p271 = scmp.lt.s32.totalorder %s14, 3
    %p272 = pnand %p270, %p271
    %p273 = pneg %p272
    // Predicated region
    $region49: #{run.11} parent=5 // pred_check
      _
    $region50: #{run.11} parent=5 // pred_check_branch
      %275 = sbr.rel (%p272) target = $region52
    $region51: #{run.11} parent=5 // pred_region
      %s276 = ssub.s32 %s14, 1
      %p277 = scmp.lt.s32.totalorder %s19, 1
      %s278 = scalar_select %p277, %s19, 1
      %s279 = smul.addr %s278, 4
      %s280 = smul.addr %s279, 2
      %s281 = scalar_lea.vmem %s0, %s280
      %p282 = pneg %p40
      %p283 = pneg %p37
      %p284 = pneg %p61
      %p285 = pneg %p58
      %p286 = pneg %p82
      %p287 = pneg %p79
      %p288 = pneg %p103
      %p289 = pneg %p100
      %p290 = scmp.lt.s32.totalorder %s19, 1
      %s291 = scalar_select %p290, %s19, 1
      %s292 = smul.addr %s291, 2
      %s293 = scalar_lea.vmem %s4, %s292
      %p294 = pneg %p129
      %p295 = pneg %p126
      %p296 = pneg %p150
      %p297 = pneg %p147
      %p298 = pneg %p171
      %p299 = pneg %p168
      %p300 = pneg %p192
      %p301 = pneg %p189
      %p302 = pneg %p218
      %p303 = pneg %p215
      %p304 = scmp.lt.s32.totalorder %s19, 1
      %s305 = scalar_select %p304, %s19, 1
      %s306 = smul.addr %s305, 2
      %s307 = scalar_lea.vmem %s8, %s306
      %p308 = scmp.lt.s32.totalorder %s19, 1
      %s309 = scalar_select %p308, %s19, 1
      %s310 = smul.addr %s309, 4
      %s311 = smul.addr %s310, 2
      %s312 = scalar_lea.vmem %s0, %s311
      %p313 = scmp.lt.s32.totalorder %s19, 1
      %s314 = scalar_select %p313, %s19, 1
      %s315 = smul.addr %s314, 2
      %s316 = scalar_lea.vmem %s4, %s315
      %p317 = scmp.lt.s32.totalorder %s19, 1
      %s318 = scalar_select %p317, %s19, 1
      %s319 = smul.addr %s318, 2
      %s320 = scalar_lea.vmem %s8, %s319
      %v322 = vld [vmem:[%s312] sm:$0x1]
      %v323 = vld [vmem:[%s312 + $0x2] sm:$0x1]
      %v324 = vld [vmem:[%s1] sm:$0xf]
      %v325 = vld [vmem:[%s1 + $0x4] sm:$0xf]
      %v326 = vld [vmem:[%s1 + $0x8] sm:$0xf]
      %v327 = vld [vmem:[%s1 + $0xc] sm:$0xf]
      %v328 = vld [vmem:[%s1 + $0x10] sm:$0xf]
      %v329 = vld [vmem:[%s1 + $0x14] sm:$0xf]
      %v330 = vld [vmem:[%s1 + $0x18] sm:$0xf]
      %v331 = vld [vmem:[%s1 + $0x1c] sm:$0xf]
      %v332 = vld [vmem:[%s1 + $0x20] sm:$0xf]
      %v333 = vld [vmem:[%s1 + $0x24] sm:$0xf]
      %v334 = vld [vmem:[%s1 + $0x28] sm:$0xf]
      %v335 = vld [vmem:[%s1 + $0x2c] sm:$0xf]
      %v336 = vld [vmem:[%s1 + $0x30] sm:$0xf]
      %v337 = vld [vmem:[%s1 + $0x34] sm:$0xf]
      %v338 = vld [vmem:[%s1 + $0x38] sm:$0xf]
      %v339 = vld [vmem:[%s1 + $0x3c] sm:$0xf]
      %v340 = vld [vmem:[%s312] sm:$0x3]
      %v341 = vld [vmem:[%s312 + $0x2] sm:$0x3]
      %v345 = vunpack.c.l.s4 1966171168
      %v346 = vunpack.c.0.s8 %v345
      %v347 = vlaneseq
      %v348 = vshrl.u32 %v347, 7
      %v349 = vsub.s32 %v346, %v348
      %v350 = vrot.slane %v340, %v349
      %v351 = vcombine.high %v350, %v350
      %v353 = vunpack.c.l.s4 1966171168
      %v354 = vunpack.c.0.s8 %v353
      %v355 = vlaneseq
      %v356 = vshrl.u32 %v355, 7
      %v357 = vsub.s32 %v354, %v356
      %v358 = vrot.slane %v341, %v357
      %v359 = vcombine.high %v358, %v358
      %vm360 = vsmask.f32 256
      %vm361 = vsmask.f32 1284
      %vm362 = vmor %vm360, %vm361
      %vm363 = vsmask.f32 2312
      %vm364 = vmor %vm362, %vm363
      %vm365 = vsmask.f32 3340
      %vm366 = vmor %vm364, %vm365
      %vm367 = vsmask.f32 4368
      %vm368 = vmor %vm366, %vm367
      %vm369 = vsmask.f32 5396
      %vm370 = vmor %vm368, %vm369
      %vm371 = vsmask.f32 6424
      %vm372 = vmor %vm370, %vm371
      %vm373 = vsmask.f32 7452
      %vm374 = vmor %vm372, %vm373
      %v376 = vshrl.u32 %v350, 16
      %v378 = vrot.slane %v376, 7
      %v379 = vrot.slane %v378, 1
      %v381 = vshll.u32 %v351, 16
      %v383 = vsel %vm374, %v379, %v381
      %v385 = vshrl.u32 %v358, 16
      %v387 = vrot.slane %v385, 7
      %v388 = vrot.slane %v387, 1
      %v390 = vshll.u32 %v359, 16
      %v392 = vsel %vm374, %v388, %v390
      %s393 = scalar_lea.vmem %s1, 64
      %v394 = vld [vmem:[%s393] sm:$0xf]
      %v395 = vld [vmem:[%s393 + $0x4] sm:$0xf]
      %v396 = vld [vmem:[%s393 + $0x8] sm:$0xf]
      %v397 = vld [vmem:[%s393 + $0xc] sm:$0xf]
      %v398 = vld [vmem:[%s393 + $0x10] sm:$0xf]
      %v399 = vld [vmem:[%s393 + $0x14] sm:$0xf]
      %v400 = vld [vmem:[%s393 + $0x18] sm:$0xf]
      %v401 = vld [vmem:[%s393 + $0x1c] sm:$0xf]
      %v402 = vld [vmem:[%s393 + $0x20] sm:$0xf]
      %v403 = vld [vmem:[%s393 + $0x24] sm:$0xf]
      %v404 = vld [vmem:[%s393 + $0x28] sm:$0xf]
      %v405 = vld [vmem:[%s393 + $0x2c] sm:$0xf]
      %v406 = vld [vmem:[%s393 + $0x30] sm:$0xf]
      %v407 = vld [vmem:[%s393 + $0x34] sm:$0xf]
      %v408 = vld [vmem:[%s393 + $0x38] sm:$0xf]
      %v409 = vld [vmem:[%s393 + $0x3c] sm:$0xf]
      %v410 = vcombine.low %v383, %v392
      %v412 = vunpack.c.l.s4 1966171168
      %v413 = vunpack.c.0.s8 %v412
      %v414 = vlaneseq
      %v415 = vshrl.u32 %v414, 7
      %v416 = vsub.s32 %v413, %v415
      %v417 = vrot.slane %v410, %v416
      %v419 = vunpack.c.l.s4 1966171168
      %v420 = vunpack.c.0.s8 %v419
      %v421 = vlaneseq
      %v422 = vshrl.u32 %v421, 7
      %v423 = vsub.s32 %v420, %v422
      %v424 = vrot.slane %v417, %v423
      %v442 = vunpack.c.l.b16 %v394
      %v443 = vunpack.c.l.b16 %v395
      %v444 = vunpack.c.l.b16 %v396
      %v445 = vunpack.c.l.b16 %v397
      %v446 = vunpack.c.l.b16 %v398
      %v447 = vunpack.c.l.b16 %v399
      %v448 = vunpack.c.l.b16 %v400
      %v449 = vunpack.c.l.b16 %v401
      %v450 = vunpack.c.l.b16 %v402
      %v451 = vunpack.c.l.b16 %v403
      %v452 = vunpack.c.l.b16 %v404
      %v453 = vunpack.c.l.b16 %v405
      %v454 = vunpack.c.l.b16 %v406
      %v455 = vunpack.c.l.b16 %v407
      %v456 = vunpack.c.l.b16 %v408
      %v457 = vunpack.c.l.b16 %v409
      %v458 = vpack.c.b16 %v443, %v442
      %v459 = vpack.c.b16 %v445, %v444
      %v460 = vpack.c.b16 %v447, %v446
      %v461 = vpack.c.b16 %v449, %v448
      %v462 = vpack.c.b16 %v451, %v450
      %v463 = vpack.c.b16 %v453, %v452
      %v464 = vpack.c.b16 %v455, %v454
      %v465 = vpack.c.b16 %v457, %v456
      %474 = vmatprep.subr.bf16.mxu0 0
      %475 = vmatpush1.bf16.msra.mxu0 %v465
      %476 = vmatprep.subr.bf16.mxu0 0
      %477 = vmatpush1.bf16.msra.mxu0 %v464
      %478 = vmatprep.subr.bf16.mxu0 0
      %479 = vmatpush1.bf16.msra.mxu0 %v463
      %480 = vmatprep.subr.bf16.mxu0 0
      %481 = vmatpush1.bf16.msra.mxu0 %v462
      %482 = vmatprep.subr.bf16.mxu0 0
      %483 = vmatpush1.bf16.msra.mxu0 %v461
      %484 = vmatprep.subr.bf16.mxu0 0
      %485 = vmatpush1.bf16.msra.mxu0 %v460
      %486 = vmatprep.subr.bf16.mxu0 0
      %487 = vmatpush1.bf16.msra.mxu0 %v459
      %488 = vmatprep.subr.bf16.mxu0 0
      %489 = vmatpush1.bf16.msra.mxu0 %v458
      %490 = vmatprep.subr.bf16.mxu0 0
      %491 = vmatpush2.bf16.msra.mxu0 0
      %492 = vmatprep.subr.bf16.mxu0 0
      %493 = vmatpush2.bf16.msra.mxu0 0
      %494 = vmatprep.subr.bf16.mxu0 0
      %495 = vmatpush2.bf16.msra.mxu0 0
      %496 = vmatprep.subr.bf16.mxu0 0
      %497 = vmatpush2.bf16.msra.mxu0 0
      %498 = vmatprep.subr.bf16.mxu0 0
      %499 = vmatpush2.bf16.msra.mxu0 0
      %500 = vmatprep.subr.bf16.mxu0 0
      %501 = vmatpush2.bf16.msra.mxu0 0
      %502 = vmatprep.subr.bf16.mxu0 0
      %503 = vmatpush2.bf16.msra.mxu0 0
      %504 = vmatprep.subr.bf16.mxu0 0
      %505 = vmatpush2.bf16.msra.mxu0 0
      %506 = vmatprep.mubr.bf16.mxu0 0
      %507 = vmatmul.mubr.bf16.gmra.mxu0 %v424
      %v508 = vpop.f32.mrf.mxu0
      %v509 = vadd.f32 0.0, %v508
      %v510 = vpop.f32.mrf.mxu0
      %v511 = vpop.f32.mrf.mxu0
      %v512 = vpop.f32.mrf.mxu0
      %513 = vdwg.mxu0
      %v516 = vcombine.low %v322, %v323
      %v518 = vunpack.c.l.s4 1966171168
      %v519 = vunpack.c.0.s8 %v518
      %v520 = vlaneseq
      %v521 = vshrl.u32 %v520, 7
      %v522 = vsub.s32 %v519, %v521
      %v523 = vrot.slane %v516, %v522
      %v525 = vunpack.c.l.s4 1966171168
      %v526 = vunpack.c.0.s8 %v525
      %v527 = vlaneseq
      %v528 = vshrl.u32 %v527, 7
      %v529 = vsub.s32 %v526, %v528
      %v530 = vrot.slane %v523, %v529
      %v548 = vunpack.c.l.b16 %v324
      %v549 = vunpack.c.l.b16 %v325
      %v550 = vunpack.c.l.b16 %v326
      %v551 = vunpack.c.l.b16 %v327
      %v552 = vunpack.c.l.b16 %v328
      %v553 = vunpack.c.l.b16 %v329
      %v554 = vunpack.c.l.b16 %v330
      %v555 = vunpack.c.l.b16 %v331
      %v556 = vunpack.c.l.b16 %v332
      %v557 = vunpack.c.l.b16 %v333
      %v558 = vunpack.c.l.b16 %v334
      %v559 = vunpack.c.l.b16 %v335
      %v560 = vunpack.c.l.b16 %v336
      %v561 = vunpack.c.l.b16 %v337
      %v562 = vunpack.c.l.b16 %v338
      %v563 = vunpack.c.l.b16 %v339
      %v564 = vpack.c.b16 %v549, %v548
      %v565 = vpack.c.b16 %v551, %v550
      %v566 = vpack.c.b16 %v553, %v552
      %v567 = vpack.c.b16 %v555, %v554
      %v568 = vpack.c.b16 %v557, %v556
      %v569 = vpack.c.b16 %v559, %v558
      %v570 = vpack.c.b16 %v561, %v560
      %v571 = vpack.c.b16 %v563, %v562
      %580 = vmatprep.subr.bf16.mxu0 0
      %581 = vmatpush1.bf16.msra.mxu0 %v571
      %582 = vmatprep.subr.bf16.mxu0 0
      %583 = vmatpush1.bf16.msra.mxu0 %v570
      %584 = vmatprep.subr.bf16.mxu0 0
      %585 = vmatpush1.bf16.msra.mxu0 %v569
      %586 = vmatprep.subr.bf16.mxu0 0
      %587 = vmatpush1.bf16.msra.mxu0 %v568
      %588 = vmatprep.subr.bf16.mxu0 0
      %589 = vmatpush1.bf16.msra.mxu0 %v567
      %590 = vmatprep.subr.bf16.mxu0 0
      %591 = vmatpush1.bf16.msra.mxu0 %v566
      %592 = vmatprep.subr.bf16.mxu0 0
      %593 = vmatpush1.bf16.msra.mxu0 %v565
      %594 = vmatprep.subr.bf16.mxu0 0
      %595 = vmatpush1.bf16.msra.mxu0 %v564
      %596 = vmatprep.subr.bf16.mxu0 0
      %597 = vmatpush2.bf16.msra.mxu0 0
      %598 = vmatprep.subr.bf16.mxu0 0
      %599 = vmatpush2.bf16.msra.mxu0 0
      %600 = vmatprep.subr.bf16.mxu0 0
      %601 = vmatpush2.bf16.msra.mxu0 0
      %602 = vmatprep.subr.bf16.mxu0 0
      %603 = vmatpush2.bf16.msra.mxu0 0
      %604 = vmatprep.subr.bf16.mxu0 0
      %605 = vmatpush2.bf16.msra.mxu0 0
      %606 = vmatprep.subr.bf16.mxu0 0
      %607 = vmatpush2.bf16.msra.mxu0 0
      %608 = vmatprep.subr.bf16.mxu0 0
      %609 = vmatpush2.bf16.msra.mxu0 0
      %610 = vmatprep.subr.bf16.mxu0 0
      %611 = vmatpush2.bf16.msra.mxu0 0
      %612 = vmatprep.mubr.bf16.mxu0 0
      %613 = vmatmul.mubr.bf16.gmra.mxu0 %v530
      %v614 = vpop.f32.mrf.mxu0
      %v615 = vadd.f32 %v509, %v614
      %v616 = vpop.f32.mrf.mxu0
      %v617 = vpop.f32.mrf.mxu0
      %v618 = vpop.f32.mrf.mxu0
      %619 = vdwg.mxu0
      %v620 = vld [vmem:[%s312] sm:$0x2]
      %v621 = vld [vmem:[%s312 + $0x2] sm:$0x2]
      %v625 = vunpack.c.l.s4 1966171168
      %v626 = vunpack.c.0.s8 %v625
      %v627 = vlaneseq
      %v628 = vshrl.u32 %v627, 7
      %v629 = vsub.s32 %v626, %v628
      %v630 = vrot.slane %v620, %v629
      %v631 = vcombine.high %v630, %v630
      %v633 = vunpack.c.l.s4 1966171168
      %v634 = vunpack.c.0.s8 %v633
      %v635 = vlaneseq
      %v636 = vshrl.u32 %v635, 7
      %v637 = vsub.s32 %v634, %v636
      %v638 = vrot.slane %v621, %v637
      %v639 = vcombine.high %v638, %v638
      %s640 = scalar_lea.vmem %s1, 128
      %v641 = vld [vmem:[%s640] sm:$0xf]
      %v642 = vld [vmem:[%s640 + $0x4] sm:$0xf]
      %v643 = vld [vmem:[%s640 + $0x8] sm:$0xf]
      %v644 = vld [vmem:[%s640 + $0xc] sm:$0xf]
      %v645 = vld [vmem:[%s640 + $0x10] sm:$0xf]
      %v646 = vld [vmem:[%s640 + $0x14] sm:$0xf]
      %v647 = vld [vmem:[%s640 + $0x18] sm:$0xf]
      %v648 = vld [vmem:[%s640 + $0x1c] sm:$0xf]
      %v649 = vld [vmem:[%s640 + $0x20] sm:$0xf]
      %v650 = vld [vmem:[%s640 + $0x24] sm:$0xf]
      %v651 = vld [vmem:[%s640 + $0x28] sm:$0xf]
      %v652 = vld [vmem:[%s640 + $0x2c] sm:$0xf]
      %v653 = vld [vmem:[%s640 + $0x30] sm:$0xf]
      %v654 = vld [vmem:[%s640 + $0x34] sm:$0xf]
      %v655 = vld [vmem:[%s640 + $0x38] sm:$0xf]
      %v656 = vld [vmem:[%s640 + $0x3c] sm:$0xf]
      %v657 = vcombine.low %v631, %v639
      %v659 = vunpack.c.l.s4 1966171168
      %v660 = vunpack.c.0.s8 %v659
      %v661 = vlaneseq
      %v662 = vshrl.u32 %v661, 7
      %v663 = vsub.s32 %v660, %v662
      %v664 = vrot.slane %v657, %v663
      %v666 = vunpack.c.l.s4 1966171168
      %v667 = vunpack.c.0.s8 %v666
      %v668 = vlaneseq
      %v669 = vshrl.u32 %v668, 7
      %v670 = vsub.s32 %v667, %v669
      %v671 = vrot.slane %v664, %v670
      %v689 = vunpack.c.l.b16 %v641
      %v690 = vunpack.c.l.b16 %v642
      %v691 = vunpack.c.l.b16 %v643
      %v692 = vunpack.c.l.b16 %v644
      %v693 = vunpack.c.l.b16 %v645
      %v694 = vunpack.c.l.b16 %v646
      %v695 = vunpack.c.l.b16 %v647
      %v696 = vunpack.c.l.b16 %v648
      %v697 = vunpack.c.l.b16 %v649
      %v698 = vunpack.c.l.b16 %v650
      %v699 = vunpack.c.l.b16 %v651
      %v700 = vunpack.c.l.b16 %v652
      %v701 = vunpack.c.l.b16 %v653
      %v702 = vunpack.c.l.b16 %v654
      %v703 = vunpack.c.l.b16 %v655
      %v704 = vunpack.c.l.b16 %v656
      %v705 = vpack.c.b16 %v690, %v689
      %v706 = vpack.c.b16 %v692, %v691
      %v707 = vpack.c.b16 %v694, %v693
      %v708 = vpack.c.b16 %v696, %v695
      %v709 = vpack.c.b16 %v698, %v697
      %v710 = vpack.c.b16 %v700, %v699
      %v711 = vpack.c.b16 %v702, %v701
      %v712 = vpack.c.b16 %v704, %v703
      %721 = vmatprep.subr.bf16.mxu0 0
      %722 = vmatpush1.bf16.msra.mxu0 %v712
      %723 = vmatprep.subr.bf16.mxu0 0
      %724 = vmatpush1.bf16.msra.mxu0 %v711
      %725 = vmatprep.subr.bf16.mxu0 0
      %726 = vmatpush1.bf16.msra.mxu0 %v710
      %727 = vmatprep.subr.bf16.mxu0 0
      %728 = vmatpush1.bf16.msra.mxu0 %v709
      %729 = vmatprep.subr.bf16.mxu0 0
      %730 = vmatpush1.bf16.msra.mxu0 %v708
      %731 = vmatprep.subr.bf16.mxu0 0
      %732 = vmatpush1.bf16.msra.mxu0 %v707
      %733 = vmatprep.subr.bf16.mxu0 0
      %734 = vmatpush1.bf16.msra.mxu0 %v706
      %735 = vmatprep.subr.bf16.mxu0 0
      %736 = vmatpush1.bf16.msra.mxu0 %v705
      %737 = vmatprep.subr.bf16.mxu0 0
      %738 = vmatpush2.bf16.msra.mxu0 0
      %739 = vmatprep.subr.bf16.mxu0 0
      %740 = vmatpush2.bf16.msra.mxu0 0
      %741 = vmatprep.subr.bf16.mxu0 0
      %742 = vmatpush2.bf16.msra.mxu0 0
      %743 = vmatprep.subr.bf16.mxu0 0
      %744 = vmatpush2.bf16.msra.mxu0 0
      %745 = vmatprep.subr.bf16.mxu0 0
      %746 = vmatpush2.bf16.msra.mxu0 0
      %747 = vmatprep.subr.bf16.mxu0 0
      %748 = vmatpush2.bf16.msra.mxu0 0
      %749 = vmatprep.subr.bf16.mxu0 0
      %750 = vmatpush2.bf16.msra.mxu0 0
      %751 = vmatprep.subr.bf16.mxu0 0
      %752 = vmatpush2.bf16.msra.mxu0 0
      %753 = vmatprep.mubr.bf16.mxu0 0
      %754 = vmatmul.mubr.bf16.gmra.mxu0 %v671
      %v755 = vpop.f32.mrf.mxu0
      %v756 = vadd.f32 0.0, %v755
      %v757 = vpop.f32.mrf.mxu0
      %v758 = vpop.f32.mrf.mxu0
      %v759 = vpop.f32.mrf.mxu0
      %760 = vdwg.mxu0
      %v761 = vadd.f32 %v615, %v756
      %s762 = scalar_lea.vmem %s312, 2
      %v763 = vld [vmem:[%s762] sm:$0x1]
      %v764 = vld [vmem:[%s762 + $0x2] sm:$0x1]
      %s765 = scalar_lea.vmem %s1, 192
      %v766 = vld [vmem:[%s765] sm:$0xf]
      %v767 = vld [vmem:[%s765 + $0x4] sm:$0xf]
      %v768 = vld [vmem:[%s765 + $0x8] sm:$0xf]
      %v769 = vld [vmem:[%s765 + $0xc] sm:$0xf]
      %v770 = vld [vmem:[%s765 + $0x10] sm:$0xf]
      %v771 = vld [vmem:[%s765 + $0x14] sm:$0xf]
      %v772 = vld [vmem:[%s765 + $0x18] sm:$0xf]
      %v773 = vld [vmem:[%s765 + $0x1c] sm:$0xf]
      %v774 = vld [vmem:[%s765 + $0x20] sm:$0xf]
      %v775 = vld [vmem:[%s765 + $0x24] sm:$0xf]
      %v776 = vld [vmem:[%s765 + $0x28] sm:$0xf]
      %v777 = vld [vmem:[%s765 + $0x2c] sm:$0xf]
      %v778 = vld [vmem:[%s765 + $0x30] sm:$0xf]
      %v779 = vld [vmem:[%s765 + $0x34] sm:$0xf]
      %v780 = vld [vmem:[%s765 + $0x38] sm:$0xf]
      %v781 = vld [vmem:[%s765 + $0x3c] sm:$0xf]
      %v784 = vcombine.low %v763, %v764
      %v786 = vunpack.c.l.s4 1966171168
      %v787 = vunpack.c.0.s8 %v786
      %v788 = vlaneseq
      %v789 = vshrl.u32 %v788, 7
      %v790 = vsub.s32 %v787, %v789
      %v791 = vrot.slane %v784, %v790
      %v793 = vunpack.c.l.s4 1966171168
      %v794 = vunpack.c.0.s8 %v793
      %v795 = vlaneseq
      %v796 = vshrl.u32 %v795, 7
      %v797 = vsub.s32 %v794, %v796
      %v798 = vrot.slane %v791, %v797
      %v816 = vunpack.c.l.b16 %v766
      %v817 = vunpack.c.l.b16 %v767
      %v818 = vunpack.c.l.b16 %v768
      %v819 = vunpack.c.l.b16 %v769
      %v820 = vunpack.c.l.b16 %v770
      %v821 = vunpack.c.l.b16 %v771
      %v822 = vunpack.c.l.b16 %v772
      %v823 = vunpack.c.l.b16 %v773
      %v824 = vunpack.c.l.b16 %v774
      %v825 = vunpack.c.l.b16 %v775
      %v826 = vunpack.c.l.b16 %v776
      %v827 = vunpack.c.l.b16 %v777
      %v828 = vunpack.c.l.b16 %v778
      %v829 = vunpack.c.l.b16 %v779
      %v830 = vunpack.c.l.b16 %v780
      %v831 = vunpack.c.l.b16 %v781
      %v832 = vpack.c.b16 %v817, %v816
      %v833 = vpack.c.b16 %v819, %v818
      %v834 = vpack.c.b16 %v821, %v820
      %v835 = vpack.c.b16 %v823, %v822
      %v836 = vpack.c.b16 %v825, %v824
      %v837 = vpack.c.b16 %v827, %v826
      %v838 = vpack.c.b16 %v829, %v828
      %v839 = vpack.c.b16 %v831, %v830
      %848 = vmatprep.subr.bf16.mxu0 0
      %849 = vmatpush1.bf16.msra.mxu0 %v839
      %850 = vmatprep.subr.bf16.mxu0 0
      %851 = vmatpush1.bf16.msra.mxu0 %v838
      %852 = vmatprep.subr.bf16.mxu0 0
      %853 = vmatpush1.bf16.msra.mxu0 %v837
      %854 = vmatprep.subr.bf16.mxu0 0
      %855 = vmatpush1.bf16.msra.mxu0 %v836
      %856 = vmatprep.subr.bf16.mxu0 0
      %857 = vmatpush1.bf16.msra.mxu0 %v835
      %858 = vmatprep.subr.bf16.mxu0 0
      %859 = vmatpush1.bf16.msra.mxu0 %v834
      %860 = vmatprep.subr.bf16.mxu0 0
      %861 = vmatpush1.bf16.msra.mxu0 %v833
      %862 = vmatprep.subr.bf16.mxu0 0
      %863 = vmatpush1.bf16.msra.mxu0 %v832
      %864 = vmatprep.subr.bf16.mxu0 0
      %865 = vmatpush2.bf16.msra.mxu0 0
      %866 = vmatprep.subr.bf16.mxu0 0
      %867 = vmatpush2.bf16.msra.mxu0 0
      %868 = vmatprep.subr.bf16.mxu0 0
      %869 = vmatpush2.bf16.msra.mxu0 0
      %870 = vmatprep.subr.bf16.mxu0 0
      %871 = vmatpush2.bf16.msra.mxu0 0
      %872 = vmatprep.subr.bf16.mxu0 0
      %873 = vmatpush2.bf16.msra.mxu0 0
      %874 = vmatprep.subr.bf16.mxu0 0
      %875 = vmatpush2.bf16.msra.mxu0 0
      %876 = vmatprep.subr.bf16.mxu0 0
      %877 = vmatpush2.bf16.msra.mxu0 0
      %878 = vmatprep.subr.bf16.mxu0 0
      %879 = vmatpush2.bf16.msra.mxu0 0
      %880 = vmatprep.mubr.bf16.mxu0 0
      %881 = vmatmul.mubr.bf16.gmra.mxu0 %v798
      %v882 = vpop.f32.mrf.mxu0
      %v883 = vadd.f32 0.0, %v882
      %v884 = vpop.f32.mrf.mxu0
      %v885 = vpop.f32.mrf.mxu0
      %v886 = vpop.f32.mrf.mxu0
      %887 = vdwg.mxu0
      %v888 = vadd.f32 %v761, %v883
      %v889 = vld [vmem:[%s762] sm:$0x3]
      %v890 = vld [vmem:[%s762 + $0x2] sm:$0x3]
      %v894 = vunpack.c.l.s4 1966171168
      %v895 = vunpack.c.0.s8 %v894
      %v896 = vlaneseq
      %v897 = vshrl.u32 %v896, 7
      %v898 = vsub.s32 %v895, %v897
      %v899 = vrot.slane %v889, %v898
      %v900 = vcombine.high %v899, %v899
      %v902 = vunpack.c.l.s4 1966171168
      %v903 = vunpack.c.0.s8 %v902
      %v904 = vlaneseq
      %v905 = vshrl.u32 %v904, 7
      %v906 = vsub.s32 %v903, %v905
      %v907 = vrot.slane %v890, %v906
      %v908 = vcombine.high %v907, %v907
      %v910 = vshrl.u32 %v899, 16
      %v912 = vrot.slane %v910, 7
      %v913 = vrot.slane %v912, 1
      %v915 = vshll.u32 %v900, 16
      %v917 = vsel %vm374, %v913, %v915
      %v919 = vshrl.u32 %v907, 16
      %v921 = vrot.slane %v919, 7
      %v922 = vrot.slane %v921, 1
      %v924 = vshll.u32 %v908, 16
      %v926 = vsel %vm374, %v922, %v924
      %s927 = scalar_lea.vmem %s1, 256
      %v928 = vld [vmem:[%s927] sm:$0xf]
      %v929 = vld [vmem:[%s927 + $0x4] sm:$0xf]
      %v930 = vld [vmem:[%s927 + $0x8] sm:$0xf]
      %v931 = vld [vmem:[%s927 + $0xc] sm:$0xf]
      %v932 = vld [vmem:[%s927 + $0x10] sm:$0xf]
      %v933 = vld [vmem:[%s927 + $0x14] sm:$0xf]
      %v934 = vld [vmem:[%s927 + $0x18] sm:$0xf]
      %v935 = vld [vmem:[%s927 + $0x1c] sm:$0xf]
      %v936 = vld [vmem:[%s927 + $0x20] sm:$0xf]
      %v937 = vld [vmem:[%s927 + $0x24] sm:$0xf]
      %v938 = vld [vmem:[%s927 + $0x28] sm:$0xf]
      %v939 = vld [vmem:[%s927 + $0x2c] sm:$0xf]
      %v940 = vld [vmem:[%s927 + $0x30] sm:$0xf]
      %v941 = vld [vmem:[%s927 + $0x34] sm:$0xf]
      %v942 = vld [vmem:[%s927 + $0x38] sm:$0xf]
      %v943 = vld [vmem:[%s927 + $0x3c] sm:$0xf]
      %v944 = vcombine.low %v917, %v926
      %v946 = vunpack.c.l.s4 1966171168
      %v947 = vunpack.c.0.s8 %v946
      %v948 = vlaneseq
      %v949 = vshrl.u32 %v948, 7
      %v950 = vsub.s32 %v947, %v949
      %v951 = vrot.slane %v944, %v950
      %v953 = vunpack.c.l.s4 1966171168
      %v954 = vunpack.c.0.s8 %v953
      %v955 = vlaneseq
      %v956 = vshrl.u32 %v955, 7
      %v957 = vsub.s32 %v954, %v956
      %v958 = vrot.slane %v951, %v957
      %v976 = vunpack.c.l.b16 %v928
      %v977 = vunpack.c.l.b16 %v929
      %v978 = vunpack.c.l.b16 %v930
      %v979 = vunpack.c.l.b16 %v931
      %v980 = vunpack.c.l.b16 %v932
      %v981 = vunpack.c.l.b16 %v933
      %v982 = vunpack.c.l.b16 %v934
      %v983 = vunpack.c.l.b16 %v935
      %v984 = vunpack.c.l.b16 %v936
      %v985 = vunpack.c.l.b16 %v937
      %v986 = vunpack.c.l.b16 %v938
      %v987 = vunpack.c.l.b16 %v939
      %v988 = vunpack.c.l.b16 %v940
      %v989 = vunpack.c.l.b16 %v941
      %v990 = vunpack.c.l.b16 %v942
      %v991 = vunpack.c.l.b16 %v943
      %v992 = vpack.c.b16 %v977, %v976
      %v993 = vpack.c.b16 %v979, %v978
      %v994 = vpack.c.b16 %v981, %v980
      %v995 = vpack.c.b16 %v983, %v982
      %v996 = vpack.c.b16 %v985, %v984
      %v997 = vpack.c.b16 %v987, %v986
      %v998 = vpack.c.b16 %v989, %v988
      %v999 = vpack.c.b16 %v991, %v990
      %1008 = vmatprep.subr.bf16.mxu0 0
      %1009 = vmatpush1.bf16.msra.mxu0 %v999
      %1010 = vmatprep.subr.bf16.mxu0 0
      %1011 = vmatpush1.bf16.msra.mxu0 %v998
      %1012 = vmatprep.subr.bf16.mxu0 0
      %1013 = vmatpush1.bf16.msra.mxu0 %v997
      %1014 = vmatprep.subr.bf16.mxu0 0
      %1015 = vmatpush1.bf16.msra.mxu0 %v996
      %1016 = vmatprep.subr.bf16.mxu0 0
      %1017 = vmatpush1.bf16.msra.mxu0 %v995
      %1018 = vmatprep.subr.bf16.mxu0 0
      %1019 = vmatpush1.bf16.msra.mxu0 %v994
      %1020 = vmatprep.subr.bf16.mxu0 0
      %1021 = vmatpush1.bf16.msra.mxu0 %v993
      %1022 = vmatprep.subr.bf16.mxu0 0
      %1023 = vmatpush1.bf16.msra.mxu0 %v992
      %1024 = vmatprep.subr.bf16.mxu0 0
      %1025 = vmatpush2.bf16.msra.mxu0 0
      %1026 = vmatprep.subr.bf16.mxu0 0
      %1027 = vmatpush2.bf16.msra.mxu0 0
      %1028 = vmatprep.subr.bf16.mxu0 0
      %1029 = vmatpush2.bf16.msra.mxu0 0
      %1030 = vmatprep.subr.bf16.mxu0 0
      %1031 = vmatpush2.bf16.msra.mxu0 0
      %1032 = vmatprep.subr.bf16.mxu0 0
      %1033 = vmatpush2.bf16.msra.mxu0 0
      %1034 = vmatprep.subr.bf16.mxu0 0
      %1035 = vmatpush2.bf16.msra.mxu0 0
      %1036 = vmatprep.subr.bf16.mxu0 0
      %1037 = vmatpush2.bf16.msra.mxu0 0
      %1038 = vmatprep.subr.bf16.mxu0 0
      %1039 = vmatpush2.bf16.msra.mxu0 0
      %1040 = vmatprep.mubr.bf16.mxu0 0
      %1041 = vmatmul.mubr.bf16.gmra.mxu0 %v958
      %v1042 = vpop.f32.mrf.mxu0
      %v1043 = vadd.f32 0.0, %v1042
      %v1044 = vpop.f32.mrf.mxu0
      %v1045 = vpop.f32.mrf.mxu0
      %v1046 = vpop.f32.mrf.mxu0
      %1047 = vdwg.mxu0
      %v1048 = vadd.f32 %v888, %v1043
      %v1049 = vld [vmem:[%s762] sm:$0x2]
      %v1050 = vld [vmem:[%s762 + $0x2] sm:$0x2]
      %v1054 = vunpack.c.l.s4 1966171168
      %v1055 = vunpack.c.0.s8 %v1054
      %v1056 = vlaneseq
      %v1057 = vshrl.u32 %v1056, 7
      %v1058 = vsub.s32 %v1055, %v1057
      %v1059 = vrot.slane %v1049, %v1058
      %v1060 = vcombine.high %v1059, %v1059
      %v1062 = vunpack.c.l.s4 1966171168
      %v1063 = vunpack.c.0.s8 %v1062
      %v1064 = vlaneseq
      %v1065 = vshrl.u32 %v1064, 7
      %v1066 = vsub.s32 %v1063, %v1065
      %v1067 = vrot.slane %v1050, %v1066
      %v1068 = vcombine.high %v1067, %v1067
      %s1069 = scalar_lea.vmem %s1, 320
      %v1070 = vld [vmem:[%s1069] sm:$0xf]
      %v1071 = vld [vmem:[%s1069 + $0x4] sm:$0xf]
      %v1072 = vld [vmem:[%s1069 + $0x8] sm:$0xf]
      %v1073 = vld [vmem:[%s1069 + $0xc] sm:$0xf]
      %v1074 = vld [vmem:[%s1069 + $0x10] sm:$0xf]
      %v1075 = vld [vmem:[%s1069 + $0x14] sm:$0xf]
      %v1076 = vld [vmem:[%s1069 + $0x18] sm:$0xf]
      %v1077 = vld [vmem:[%s1069 + $0x1c] sm:$0xf]
      %v1078 = vld [vmem:[%s1069 + $0x20] sm:$0xf]
      %v1079 = vld [vmem:[%s1069 + $0x24] sm:$0xf]
      %v1080 = vld [vmem:[%s1069 + $0x28] sm:$0xf]
      %v1081 = vld [vmem:[%s1069 + $0x2c] sm:$0xf]
      %v1082 = vld [vmem:[%s1069 + $0x30] sm:$0xf]
      %v1083 = vld [vmem:[%s1069 + $0x34] sm:$0xf]
      %v1084 = vld [vmem:[%s1069 + $0x38] sm:$0xf]
      %v1085 = vld [vmem:[%s1069 + $0x3c] sm:$0xf]
      %v1086 = vcombine.low %v1060, %v1068
      %v1088 = vunpack.c.l.s4 1966171168
      %v1089 = vunpack.c.0.s8 %v1088
      %v1090 = vlaneseq
      %v1091 = vshrl.u32 %v1090, 7
      %v1092 = vsub.s32 %v1089, %v1091
      %v1093 = vrot.slane %v1086, %v1092
      %v1095 = vunpack.c.l.s4 1966171168
      %v1096 = vunpack.c.0.s8 %v1095
      %v1097 = vlaneseq
      %v1098 = vshrl.u32 %v1097, 7
      %v1099 = vsub.s32 %v1096, %v1098
      %v1100 = vrot.slane %v1093, %v1099
      %v1118 = vunpack.c.l.b16 %v1070
      %v1119 = vunpack.c.l.b16 %v1071
      %v1120 = vunpack.c.l.b16 %v1072
      %v1121 = vunpack.c.l.b16 %v1073
      %v1122 = vunpack.c.l.b16 %v1074
      %v1123 = vunpack.c.l.b16 %v1075
      %v1124 = vunpack.c.l.b16 %v1076
      %v1125 = vunpack.c.l.b16 %v1077
      %v1126 = vunpack.c.l.b16 %v1078
      %v1127 = vunpack.c.l.b16 %v1079
      %v1128 = vunpack.c.l.b16 %v1080
      %v1129 = vunpack.c.l.b16 %v1081
      %v1130 = vunpack.c.l.b16 %v1082
      %v1131 = vunpack.c.l.b16 %v1083
      %v1132 = vunpack.c.l.b16 %v1084
      %v1133 = vunpack.c.l.b16 %v1085
      %v1134 = vpack.c.b16 %v1119, %v1118
      %v1135 = vpack.c.b16 %v1121, %v1120
      %v1136 = vpack.c.b16 %v1123, %v1122
      %v1137 = vpack.c.b16 %v1125, %v1124
      %v1138 = vpack.c.b16 %v1127, %v1126
      %v1139 = vpack.c.b16 %v1129, %v1128
      %v1140 = vpack.c.b16 %v1131, %v1130
      %v1141 = vpack.c.b16 %v1133, %v1132
      %1150 = vmatprep.subr.bf16.mxu0 0
      %1151 = vmatpush1.bf16.msra.mxu0 %v1141
      %1152 = vmatprep.subr.bf16.mxu0 0
      %1153 = vmatpush1.bf16.msra.mxu0 %v1140
      %1154 = vmatprep.subr.bf16.mxu0 0
      %1155 = vmatpush1.bf16.msra.mxu0 %v1139
      %1156 = vmatprep.subr.bf16.mxu0 0
      %1157 = vmatpush1.bf16.msra.mxu0 %v1138
      %1158 = vmatprep.subr.bf16.mxu0 0
      %1159 = vmatpush1.bf16.msra.mxu0 %v1137
      %1160 = vmatprep.subr.bf16.mxu0 0
      %1161 = vmatpush1.bf16.msra.mxu0 %v1136
      %1162 = vmatprep.subr.bf16.mxu0 0
      %1163 = vmatpush1.bf16.msra.mxu0 %v1135
      %1164 = vmatprep.subr.bf16.mxu0 0
      %1165 = vmatpush1.bf16.msra.mxu0 %v1134
      %1166 = vmatprep.subr.bf16.mxu0 0
      %1167 = vmatpush2.bf16.msra.mxu0 0
      %1168 = vmatprep.subr.bf16.mxu0 0
      %1169 = vmatpush2.bf16.msra.mxu0 0
      %1170 = vmatprep.subr.bf16.mxu0 0
      %1171 = vmatpush2.bf16.msra.mxu0 0
      %1172 = vmatprep.subr.bf16.mxu0 0
      %1173 = vmatpush2.bf16.msra.mxu0 0
      %1174 = vmatprep.subr.bf16.mxu0 0
      %1175 = vmatpush2.bf16.msra.mxu0 0
      %1176 = vmatprep.subr.bf16.mxu0 0
      %1177 = vmatpush2.bf16.msra.mxu0 0
      %1178 = vmatprep.subr.bf16.mxu0 0
      %1179 = vmatpush2.bf16.msra.mxu0 0
      %1180 = vmatprep.subr.bf16.mxu0 0
      %1181 = vmatpush2.bf16.msra.mxu0 0
      %1182 = vmatprep.mubr.bf16.mxu0 0
      %1183 = vmatmul.mubr.bf16.gmra.mxu0 %v1100
      %v1184 = vpop.f32.mrf.mxu0
      %v1185 = vadd.f32 0.0, %v1184
      %v1186 = vpop.f32.mrf.mxu0
      %v1187 = vpop.f32.mrf.mxu0
      %v1188 = vpop.f32.mrf.mxu0
      %1189 = vdwg.mxu0
      %v1190 = vadd.f32 %v1048, %v1185
      %s1191 = scalar_lea.vmem %s312, 4
      %v1192 = vld [vmem:[%s1191] sm:$0x1]
      %v1193 = vld [vmem:[%s1191 + $0x2] sm:$0x1]
      %s1194 = scalar_lea.vmem %s1, 384
      %v1195 = vld [vmem:[%s1194] sm:$0xf]
      %v1196 = vld [vmem:[%s1194 + $0x4] sm:$0xf]
      %v1197 = vld [vmem:[%s1194 + $0x8] sm:$0xf]
      %v1198 = vld [vmem:[%s1194 + $0xc] sm:$0xf]
      %v1199 = vld [vmem:[%s1194 + $0x10] sm:$0xf]
      %v1200 = vld [vmem:[%s1194 + $0x14] sm:$0xf]
      %v1201 = vld [vmem:[%s1194 + $0x18] sm:$0xf]
      %v1202 = vld [vmem:[%s1194 + $0x1c] sm:$0xf]
      %v1203 = vld [vmem:[%s1194 + $0x20] sm:$0xf]
      %v1204 = vld [vmem:[%s1194 + $0x24] sm:$0xf]
      %v1205 = vld [vmem:[%s1194 + $0x28] sm:$0xf]
      %v1206 = vld [vmem:[%s1194 + $0x2c] sm:$0xf]
      %v1207 = vld [vmem:[%s1194 + $0x30] sm:$0xf]
      %v1208 = vld [vmem:[%s1194 + $0x34] sm:$0xf]
      %v1209 = vld [vmem:[%s1194 + $0x38] sm:$0xf]
      %v1210 = vld [vmem:[%s1194 + $0x3c] sm:$0xf]
      %v1213 = vcombine.low %v1192, %v1193
      %v1215 = vunpack.c.l.s4 1966171168
      %v1216 = vunpack.c.0.s8 %v1215
      %v1217 = vlaneseq
      %v1218 = vshrl.u32 %v1217, 7
      %v1219 = vsub.s32 %v1216, %v1218
      %v1220 = vrot.slane %v1213, %v1219
      %v1222 = vunpack.c.l.s4 1966171168
      %v1223 = vunpack.c.0.s8 %v1222
      %v1224 = vlaneseq
      %v1225 = vshrl.u32 %v1224, 7
      %v1226 = vsub.s32 %v1223, %v1225
      %v1227 = vrot.slane %v1220, %v1226
      %v1245 = vunpack.c.l.b16 %v1195
      %v1246 = vunpack.c.l.b16 %v1196
      %v1247 = vunpack.c.l.b16 %v1197
      %v1248 = vunpack.c.l.b16 %v1198
      %v1249 = vunpack.c.l.b16 %v1199
      %v1250 = vunpack.c.l.b16 %v1200
      %v1251 = vunpack.c.l.b16 %v1201
      %v1252 = vunpack.c.l.b16 %v1202
      %v1253 = vunpack.c.l.b16 %v1203
      %v1254 = vunpack.c.l.b16 %v1204
      %v1255 = vunpack.c.l.b16 %v1205
      %v1256 = vunpack.c.l.b16 %v1206
      %v1257 = vunpack.c.l.b16 %v1207
      %v1258 = vunpack.c.l.b16 %v1208
      %v1259 = vunpack.c.l.b16 %v1209
      %v1260 = vunpack.c.l.b16 %v1210
      %v1261 = vpack.c.b16 %v1246, %v1245
      %v1262 = vpack.c.b16 %v1248, %v1247
      %v1263 = vpack.c.b16 %v1250, %v1249
      %v1264 = vpack.c.b16 %v1252, %v1251
      %v1265 = vpack.c.b16 %v1254, %v1253
      %v1266 = vpack.c.b16 %v1256, %v1255
      %v1267 = vpack.c.b16 %v1258, %v1257
      %v1268 = vpack.c.b16 %v1260, %v1259
      %1277 = vmatprep.subr.bf16.mxu0 0
      %1278 = vmatpush1.bf16.msra.mxu0 %v1268
      %1279 = vmatprep.subr.bf16.mxu0 0
      %1280 = vmatpush1.bf16.msra.mxu0 %v1267
      %1281 = vmatprep.subr.bf16.mxu0 0
      %1282 = vmatpush1.bf16.msra.mxu0 %v1266
      %1283 = vmatprep.subr.bf16.mxu0 0
      %1284 = vmatpush1.bf16.msra.mxu0 %v1265
      %1285 = vmatprep.subr.bf16.mxu0 0
      %1286 = vmatpush1.bf16.msra.mxu0 %v1264
      %1287 = vmatprep.subr.bf16.mxu0 0
      %1288 = vmatpush1.bf16.msra.mxu0 %v1263
      %1289 = vmatprep.subr.bf16.mxu0 0
      %1290 = vmatpush1.bf16.msra.mxu0 %v1262
      %1291 = vmatprep.subr.bf16.mxu0 0
      %1292 = vmatpush1.bf16.msra.mxu0 %v1261
      %1293 = vmatprep.subr.bf16.mxu0 0
      %1294 = vmatpush2.bf16.msra.mxu0 0
      %1295 = vmatprep.subr.bf16.mxu0 0
      %1296 = vmatpush2.bf16.msra.mxu0 0
      %1297 = vmatprep.subr.bf16.mxu0 0
      %1298 = vmatpush2.bf16.msra.mxu0 0
      %1299 = vmatprep.subr.bf16.mxu0 0
      %1300 = vmatpush2.bf16.msra.mxu0 0
      %1301 = vmatprep.subr.bf16.mxu0 0
      %1302 = vmatpush2.bf16.msra.mxu0 0
      %1303 = vmatprep.subr.bf16.mxu0 0
      %1304 = vmatpush2.bf16.msra.mxu0 0
      %1305 = vmatprep.subr.bf16.mxu0 0
      %1306 = vmatpush2.bf16.msra.mxu0 0
      %1307 = vmatprep.subr.bf16.mxu0 0
      %1308 = vmatpush2.bf16.msra.mxu0 0
      %1309 = vmatprep.mubr.bf16.mxu0 0
      %1310 = vmatmul.mubr.bf16.gmra.mxu0 %v1227
      %v1311 = vpop.f32.mrf.mxu0
      %v1312 = vadd.f32 0.0, %v1311
      %v1313 = vpop.f32.mrf.mxu0
      %v1314 = vpop.f32.mrf.mxu0
      %v1315 = vpop.f32.mrf.mxu0
      %1316 = vdwg.mxu0
      %v1317 = vadd.f32 %v1190, %v1312
      %v1318 = vld [vmem:[%s1191] sm:$0x3]
      %v1319 = vld [vmem:[%s1191 + $0x2] sm:$0x3]
      %v1323 = vunpack.c.l.s4 1966171168
      %v1324 = vunpack.c.0.s8 %v1323
      %v1325 = vlaneseq
      %v1326 = vshrl.u32 %v1325, 7
      %v1327 = vsub.s32 %v1324, %v1326
      %v1328 = vrot.slane %v1318, %v1327
      %v1329 = vcombine.high %v1328, %v1328
      %v1331 = vunpack.c.l.s4 1966171168
      %v1332 = vunpack.c.0.s8 %v1331
      %v1333 = vlaneseq
      %v1334 = vshrl.u32 %v1333, 7
      %v1335 = vsub.s32 %v1332, %v1334
      %v1336 = vrot.slane %v1319, %v1335
      %v1337 = vcombine.high %v1336, %v1336
      %v1339 = vshrl.u32 %v1328, 16
      %v1341 = vrot.slane %v1339, 7
      %v1342 = vrot.slane %v1341, 1
      %v1344 = vshll.u32 %v1329, 16
      %v1346 = vsel %vm374, %v1342, %v1344
      %v1348 = vshrl.u32 %v1336, 16
      %v1350 = vrot.slane %v1348, 7
      %v1351 = vrot.slane %v1350, 1
      %v1353 = vshll.u32 %v1337, 16
      %v1355 = vsel %vm374, %v1351, %v1353
      %s1356 = scalar_lea.vmem %s1, 448
      %v1357 = vld [vmem:[%s1356] sm:$0xf]
      %v1358 = vld [vmem:[%s1356 + $0x4] sm:$0xf]
      %v1359 = vld [vmem:[%s1356 + $0x8] sm:$0xf]
      %v1360 = vld [vmem:[%s1356 + $0xc] sm:$0xf]
      %v1361 = vld [vmem:[%s1356 + $0x10] sm:$0xf]
      %v1362 = vld [vmem:[%s1356 + $0x14] sm:$0xf]
      %v1363 = vld [vmem:[%s1356 + $0x18] sm:$0xf]
      %v1364 = vld [vmem:[%s1356 + $0x1c] sm:$0xf]
      %v1365 = vld [vmem:[%s1356 + $0x20] sm:$0xf]
      %v1366 = vld [vmem:[%s1356 + $0x24] sm:$0xf]
      %v1367 = vld [vmem:[%s1356 + $0x28] sm:$0xf]
      %v1368 = vld [vmem:[%s1356 + $0x2c] sm:$0xf]
      %v1369 = vld [vmem:[%s1356 + $0x30] sm:$0xf]
      %v1370 = vld [vmem:[%s1356 + $0x34] sm:$0xf]
      %v1371 = vld [vmem:[%s1356 + $0x38] sm:$0xf]
      %v1372 = vld [vmem:[%s1356 + $0x3c] sm:$0xf]
      %v1373 = vcombine.low %v1346, %v1355
      %v1375 = vunpack.c.l.s4 1966171168
      %v1376 = vunpack.c.0.s8 %v1375
      %v1377 = vlaneseq
      %v1378 = vshrl.u32 %v1377, 7
      %v1379 = vsub.s32 %v1376, %v1378
      %v1380 = vrot.slane %v1373, %v1379
      %v1382 = vunpack.c.l.s4 1966171168
      %v1383 = vunpack.c.0.s8 %v1382
      %v1384 = vlaneseq
      %v1385 = vshrl.u32 %v1384, 7
      %v1386 = vsub.s32 %v1383, %v1385
      %v1387 = vrot.slane %v1380, %v1386
      %v1405 = vunpack.c.l.b16 %v1357
      %v1406 = vunpack.c.l.b16 %v1358
      %v1407 = vunpack.c.l.b16 %v1359
      %v1408 = vunpack.c.l.b16 %v1360
      %v1409 = vunpack.c.l.b16 %v1361
      %v1410 = vunpack.c.l.b16 %v1362
      %v1411 = vunpack.c.l.b16 %v1363
      %v1412 = vunpack.c.l.b16 %v1364
      %v1413 = vunpack.c.l.b16 %v1365
      %v1414 = vunpack.c.l.b16 %v1366
      %v1415 = vunpack.c.l.b16 %v1367
      %v1416 = vunpack.c.l.b16 %v1368
      %v1417 = vunpack.c.l.b16 %v1369
      %v1418 = vunpack.c.l.b16 %v1370
      %v1419 = vunpack.c.l.b16 %v1371
      %v1420 = vunpack.c.l.b16 %v1372
      %v1421 = vpack.c.b16 %v1406, %v1405
      %v1422 = vpack.c.b16 %v1408, %v1407
      %v1423 = vpack.c.b16 %v1410, %v1409
      %v1424 = vpack.c.b16 %v1412, %v1411
      %v1425 = vpack.c.b16 %v1414, %v1413
      %v1426 = vpack.c.b16 %v1416, %v1415
      %v1427 = vpack.c.b16 %v1418, %v1417
      %v1428 = vpack.c.b16 %v1420, %v1419
      %1437 = vmatprep.subr.bf16.mxu0 0
      %1438 = vmatpush1.bf16.msra.mxu0 %v1428
      %1439 = vmatprep.subr.bf16.mxu0 0
      %1440 = vmatpush1.bf16.msra.mxu0 %v1427
      %1441 = vmatprep.subr.bf16.mxu0 0
      %1442 = vmatpush1.bf16.msra.mxu0 %v1426
      %1443 = vmatprep.subr.bf16.mxu0 0
      %1444 = vmatpush1.bf16.msra.mxu0 %v1425
      %1445 = vmatprep.subr.bf16.mxu0 0
      %1446 = vmatpush1.bf16.msra.mxu0 %v1424
      %1447 = vmatprep.subr.bf16.mxu0 0
      %1448 = vmatpush1.bf16.msra.mxu0 %v1423
      %1449 = vmatprep.subr.bf16.mxu0 0
      %1450 = vmatpush1.bf16.msra.mxu0 %v1422
      %1451 = vmatprep.subr.bf16.mxu0 0
      %1452 = vmatpush1.bf16.msra.mxu0 %v1421
      %1453 = vmatprep.subr.bf16.mxu0 0
      %1454 = vmatpush2.bf16.msra.mxu0 0
      %1455 = vmatprep.subr.bf16.mxu0 0
      %1456 = vmatpush2.bf16.msra.mxu0 0
      %1457 = vmatprep.subr.bf16.mxu0 0
      %1458 = vmatpush2.bf16.msra.mxu0 0
      %1459 = vmatprep.subr.bf16.mxu0 0
      %1460 = vmatpush2.bf16.msra.mxu0 0
      %1461 = vmatprep.subr.bf16.mxu0 0
      %1462 = vmatpush2.bf16.msra.mxu0 0
      %1463 = vmatprep.subr.bf16.mxu0 0
      %1464 = vmatpush2.bf16.msra.mxu0 0
      %1465 = vmatprep.subr.bf16.mxu0 0
      %1466 = vmatpush2.bf16.msra.mxu0 0
      %1467 = vmatprep.subr.bf16.mxu0 0
      %1468 = vmatpush2.bf16.msra.mxu0 0
      %1469 = vmatprep.mubr.bf16.mxu0 0
      %1470 = vmatmul.mubr.bf16.gmra.mxu0 %v1387
      %v1471 = vpop.f32.mrf.mxu0
      %v1472 = vadd.f32 0.0, %v1471
      %v1473 = vpop.f32.mrf.mxu0
      %v1474 = vpop.f32.mrf.mxu0
      %v1475 = vpop.f32.mrf.mxu0
      %1476 = vdwg.mxu0
      %v1477 = vadd.f32 %v1317, %v1472
      %v1478 = vld [vmem:[%s1191] sm:$0x2]
      %v1479 = vld [vmem:[%s1191 + $0x2] sm:$0x2]
      %v1483 = vunpack.c.l.s4 1966171168
      %v1484 = vunpack.c.0.s8 %v1483
      %v1485 = vlaneseq
      %v1486 = vshrl.u32 %v1485, 7
      %v1487 = vsub.s32 %v1484, %v1486
      %v1488 = vrot.slane %v1478, %v1487
      %v1489 = vcombine.high %v1488, %v1488
      %v1491 = vunpack.c.l.s4 1966171168
      %v1492 = vunpack.c.0.s8 %v1491
      %v1493 = vlaneseq
      %v1494 = vshrl.u32 %v1493, 7
      %v1495 = vsub.s32 %v1492, %v1494
      %v1496 = vrot.slane %v1479, %v1495
      %v1497 = vcombine.high %v1496, %v1496
      %s1498 = scalar_lea.vmem %s1, 512
      %v1499 = vld [vmem:[%s1498] sm:$0xf]
      %v1500 = vld [vmem:[%s1498 + $0x4] sm:$0xf]
      %v1501 = vld [vmem:[%s1498 + $0x8] sm:$0xf]
      %v1502 = vld [vmem:[%s1498 + $0xc] sm:$0xf]
      %v1503 = vld [vmem:[%s1498 + $0x10] sm:$0xf]
      %v1504 = vld [vmem:[%s1498 + $0x14] sm:$0xf]
      %v1505 = vld [vmem:[%s1498 + $0x18] sm:$0xf]
      %v1506 = vld [vmem:[%s1498 + $0x1c] sm:$0xf]
      %v1507 = vld [vmem:[%s1498 + $0x20] sm:$0xf]
      %v1508 = vld [vmem:[%s1498 + $0x24] sm:$0xf]
      %v1509 = vld [vmem:[%s1498 + $0x28] sm:$0xf]
      %v1510 = vld [vmem:[%s1498 + $0x2c] sm:$0xf]
      %v1511 = vld [vmem:[%s1498 + $0x30] sm:$0xf]
      %v1512 = vld [vmem:[%s1498 + $0x34] sm:$0xf]
      %v1513 = vld [vmem:[%s1498 + $0x38] sm:$0xf]
      %v1514 = vld [vmem:[%s1498 + $0x3c] sm:$0xf]
      %v1515 = vcombine.low %v1489, %v1497
      %v1517 = vunpack.c.l.s4 1966171168
      %v1518 = vunpack.c.0.s8 %v1517
      %v1519 = vlaneseq
      %v1520 = vshrl.u32 %v1519, 7
      %v1521 = vsub.s32 %v1518, %v1520
      %v1522 = vrot.slane %v1515, %v1521
      %v1524 = vunpack.c.l.s4 1966171168
      %v1525 = vunpack.c.0.s8 %v1524
      %v1526 = vlaneseq
      %v1527 = vshrl.u32 %v1526, 7
      %v1528 = vsub.s32 %v1525, %v1527
      %v1529 = vrot.slane %v1522, %v1528
      %v1547 = vunpack.c.l.b16 %v1499
      %v1548 = vunpack.c.l.b16 %v1500
      %v1549 = vunpack.c.l.b16 %v1501
      %v1550 = vunpack.c.l.b16 %v1502
      %v1551 = vunpack.c.l.b16 %v1503
      %v1552 = vunpack.c.l.b16 %v1504
      %v1553 = vunpack.c.l.b16 %v1505
      %v1554 = vunpack.c.l.b16 %v1506
      %v1555 = vunpack.c.l.b16 %v1507
      %v1556 = vunpack.c.l.b16 %v1508
      %v1557 = vunpack.c.l.b16 %v1509
      %v1558 = vunpack.c.l.b16 %v1510
      %v1559 = vunpack.c.l.b16 %v1511
      %v1560 = vunpack.c.l.b16 %v1512
      %v1561 = vunpack.c.l.b16 %v1513
      %v1562 = vunpack.c.l.b16 %v1514
      %v1563 = vpack.c.b16 %v1548, %v1547
      %v1564 = vpack.c.b16 %v1550, %v1549
      %v1565 = vpack.c.b16 %v1552, %v1551
      %v1566 = vpack.c.b16 %v1554, %v1553
      %v1567 = vpack.c.b16 %v1556, %v1555
      %v1568 = vpack.c.b16 %v1558, %v1557
      %v1569 = vpack.c.b16 %v1560, %v1559
      %v1570 = vpack.c.b16 %v1562, %v1561
      %1579 = vmatprep.subr.bf16.mxu0 0
      %1580 = vmatpush1.bf16.msra.mxu0 %v1570
      %1581 = vmatprep.subr.bf16.mxu0 0
      %1582 = vmatpush1.bf16.msra.mxu0 %v1569
      %1583 = vmatprep.subr.bf16.mxu0 0
      %1584 = vmatpush1.bf16.msra.mxu0 %v1568
      %1585 = vmatprep.subr.bf16.mxu0 0
      %1586 = vmatpush1.bf16.msra.mxu0 %v1567
      %1587 = vmatprep.subr.bf16.mxu0 0
      %1588 = vmatpush1.bf16.msra.mxu0 %v1566
      %1589 = vmatprep.subr.bf16.mxu0 0
      %1590 = vmatpush1.bf16.msra.mxu0 %v1565
      %1591 = vmatprep.subr.bf16.mxu0 0
      %1592 = vmatpush1.bf16.msra.mxu0 %v1564
      %1593 = vmatprep.subr.bf16.mxu0 0
      %1594 = vmatpush1.bf16.msra.mxu0 %v1563
      %1595 = vmatprep.subr.bf16.mxu0 0
      %1596 = vmatpush2.bf16.msra.mxu0 0
      %1597 = vmatprep.subr.bf16.mxu0 0
      %1598 = vmatpush2.bf16.msra.mxu0 0
      %1599 = vmatprep.subr.bf16.mxu0 0
      %1600 = vmatpush2.bf16.msra.mxu0 0
      %1601 = vmatprep.subr.bf16.mxu0 0
      %1602 = vmatpush2.bf16.msra.mxu0 0
      %1603 = vmatprep.subr.bf16.mxu0 0
      %1604 = vmatpush2.bf16.msra.mxu0 0
      %1605 = vmatprep.subr.bf16.mxu0 0
      %1606 = vmatpush2.bf16.msra.mxu0 0
      %1607 = vmatprep.subr.bf16.mxu0 0
      %1608 = vmatpush2.bf16.msra.mxu0 0
      %1609 = vmatprep.subr.bf16.mxu0 0
      %1610 = vmatpush2.bf16.msra.mxu0 0
      %1611 = vmatprep.mubr.bf16.mxu0 0
      %1612 = vmatmul.mubr.bf16.gmra.mxu0 %v1529
      %v1613 = vpop.f32.mrf.mxu0
      %v1614 = vadd.f32 0.0, %v1613
      %v1615 = vpop.f32.mrf.mxu0
      %v1616 = vpop.f32.mrf.mxu0
      %v1617 = vpop.f32.mrf.mxu0
      %1618 = vdwg.mxu0
      %v1619 = vadd.f32 %v1477, %v1614
      %v1620 = vld [vmem:[%s2] sm:$0x1]
      %v1622 = vlaneseq
      %v1623 = vshrl.u32 %v1622, 7
      %v1624 = vsub.s32 0, %v1623
      %v1625 = vrot.slane %v1620, %v1624
      %v1627 = vmul.f32 %v1619, %v1625
      %v1628 = vld [vmem:[%s3] sm:$0x1]
      %v1630 = vlaneseq
      %v1631 = vshrl.u32 %v1630, 7
      %v1632 = vsub.s32 0, %v1631
      %v1633 = vrot.slane %v1628, %v1632
      %v1635 = vadd.f32 %v1627, %v1633
      %v1636 = vld [vmem:[%s316] sm:$0x3]
      %v1637 = vld [vmem:[%s5] sm:$0xf]
      %v1638 = vld [vmem:[%s5 + $0x4] sm:$0xf]
      %v1639 = vld [vmem:[%s5 + $0x8] sm:$0xf]
      %v1640 = vld [vmem:[%s5 + $0xc] sm:$0xf]
      %v1641 = vld [vmem:[%s5 + $0x10] sm:$0xf]
      %v1642 = vld [vmem:[%s5 + $0x14] sm:$0xf]
      %v1643 = vld [vmem:[%s5 + $0x18] sm:$0xf]
      %v1644 = vld [vmem:[%s5 + $0x1c] sm:$0xf]
      %v1653 = vunpack.c.l.b16 %v1637
      %v1654 = vunpack.c.l.b16 %v1638
      %v1655 = vunpack.c.l.b16 %v1639
      %v1656 = vunpack.c.l.b16 %v1640
      %v1657 = vunpack.c.l.b16 %v1641
      %v1658 = vunpack.c.l.b16 %v1642
      %v1659 = vunpack.c.l.b16 %v1643
      %v1660 = vunpack.c.l.b16 %v1644
      %v1661 = vpack.c.b16 %v1654, %v1653
      %v1662 = vpack.c.b16 %v1656, %v1655
      %v1663 = vpack.c.b16 %v1658, %v1657
      %v1664 = vpack.c.b16 %v1660, %v1659
      %vm1669 = vcmask 523264
      %v1671 = vsel %vm1669, %v1636, 0
      %1673 = vmatprep.subr.bf16.mxu0 0
      %1674 = vmatpush1.bf16.msra.mxu0 0
      %1675 = vmatprep.subr.bf16.mxu0 0
      %1676 = vmatpush1.bf16.msra.mxu0 0
      %1677 = vmatprep.subr.bf16.mxu0 0
      %1678 = vmatpush1.bf16.msra.mxu0 0
      %1679 = vmatprep.subr.bf16.mxu0 0
      %1680 = vmatpush1.bf16.msra.mxu0 0
      %1681 = vmatprep.subr.bf16.mxu0 0
      %1682 = vmatpush1.bf16.msra.mxu0 %v1664
      %1683 = vmatprep.subr.bf16.mxu0 0
      %1684 = vmatpush1.bf16.msra.mxu0 %v1663
      %1685 = vmatprep.subr.bf16.mxu0 0
      %1686 = vmatpush1.bf16.msra.mxu0 %v1662
      %1687 = vmatprep.subr.bf16.mxu0 0
      %1688 = vmatpush1.bf16.msra.mxu0 %v1661
      %1689 = vmatprep.subr.bf16.mxu0 0
      %1690 = vmatpush2.bf16.msra.mxu0 0
      %1691 = vmatprep.subr.bf16.mxu0 0
      %1692 = vmatpush2.bf16.msra.mxu0 0
      %1693 = vmatprep.subr.bf16.mxu0 0
      %1694 = vmatpush2.bf16.msra.mxu0 0
      %1695 = vmatprep.subr.bf16.mxu0 0
      %1696 = vmatpush2.bf16.msra.mxu0 0
      %1697 = vmatprep.subr.bf16.mxu0 0
      %1698 = vmatpush2.bf16.msra.mxu0 0
      %1699 = vmatprep.subr.bf16.mxu0 0
      %1700 = vmatpush2.bf16.msra.mxu0 0
      %1701 = vmatprep.subr.bf16.mxu0 0
      %1702 = vmatpush2.bf16.msra.mxu0 0
      %1703 = vmatprep.subr.bf16.mxu0 0
      %1704 = vmatpush2.bf16.msra.mxu0 0
      %1705 = vmatprep.mubr.bf16.mxu0 0
      %1706 = vmatmul.mubr.bf16.gmra.mxu0 %v1671
      %v1707 = vpop.f32.mrf.mxu0
      %v1708 = vadd.f32 0.0, %v1707
      %v1709 = vpop.f32.mrf.mxu0
      %v1710 = vpop.f32.mrf.mxu0
      %v1711 = vpop.f32.mrf.mxu0
      %1712 = vdwg.mxu0
      %v1713 = vld [vmem:[%s6] sm:$0x1]
      %v1715 = vlaneseq
      %v1716 = vshrl.u32 %v1715, 7
      %v1717 = vsub.s32 0, %v1716
      %v1718 = vrot.slane %v1713, %v1717
      %v1720 = vmul.f32 %v1708, %v1718
      %v1721 = vadd.f32 %v1635, %v1720
      %v1722 = vld [vmem:[%s7] sm:$0x1]
      %v1724 = vlaneseq
      %v1725 = vshrl.u32 %v1724, 7
      %v1726 = vsub.s32 0, %v1725
      %v1727 = vrot.slane %v1722, %v1726
      %v1729 = vadd.f32 %v1721, %v1727
      %v1730 = vmax.f32 %v1729, 0.0
      %v1731 = vpack.c.bf16 %v1730, %v1730
      %1732 = vst [vmem:[%s320] sm:$0x3] %v1731
      %p1733 = scmp.lt.s32.totalorder %s19, 1
      %s1734 = scalar_select %p1733, %s19, 1
      %s1735 = smul.addr %s1734, 2
      %s1736 = scalar_lea.vmem %s8, %s1735
      // Predicated region
      $region53: #{run.11} parent=51 // pred_check
        %p1737 = pneg %p215
      $region54: #{run.11} parent=51 // pred_check_branch
        %1739 = sbr.rel (%p1737) target = $region56
      $region55: #{run.11} parent=51 // pred_region
        _
      $region56: #{run.11} parent=51 // pred_fallthru
        _
    $region52: #{run.11} parent=5 // pred_fallthru
      _
    %p1740 = scmp.le.s32.totalorder 2, %s14
    // Predicated region
    $region57: #{run.11} parent=5 // pred_check
      %p1741 = pneg %p1740
    $region58: #{run.11} parent=5 // pred_check_branch
      %1743 = sbr.rel (%p1741) target = $region60
    $region59: #{run.11} parent=5 // pred_region
      %s1744 = ssub.s32 %s14, 2
      // Predicated region
      $region61: #{run.11} parent=59 // pred_check
        %p1745 = pneg %p221
      $region62: #{run.11} parent=59 // pred_check_branch
        %1747 = sbr.rel (%p1745) target = $region64
      $region63: #{run.11} parent=59 // pred_region
        %p1748 = scmp.lt.s32.totalorder %s20, 1
        %s1749 = scalar_select %p1748, %s20, 1
        %s1750 = smul.addr %s1749, 2
        %s1751 = scalar_lea.vmem %s8, %s1750
      $region64: #{run.11} parent=59 // pred_fallthru
        _
    $region60: #{run.11} parent=5 // pred_fallthru
      _
  $region6: #{run.11} parent=0 // loop_footer
    %s18 = sadd.s32 1, %s14
  $region7: #{run.11} parent=0 // loop_footer_branch
    %13 = sbr.rel target = $region3
  $region8: #{run.11} parent=0 // loop_exit
    _

</llo_original>
